<compile_context>
chip_gen: v7x
topology: tpu7x:2x2x1
jax: 0.10.0
libtpu: 0.0.40
codegen_flags: <defaults>
</compile_context>

<pallas_src>
import functools

import jax
import jax.numpy as jnp
from jax.experimental import pallas as pl
from jax.experimental.pallas import tpu as pltpu


def _loss_kernel(z_ref, t_ref, out_ref, *, tile_p, tiles_per_split, dhw,
                 approx_recip):
    """One (n, split, tile) grid step.

    z_ref  : (C, TP) raw logits (input dtype; cast to f32 in-kernel)
    t_ref  : (1, TP) int8 encoded labels: value in [0, C) for selected pixels,
             -1 for unselected / padded lanes
    out_ref: (C, 4) f32 running sums for this (n, split):
             [:,0] intersect = sum(s*y), [:,1] sum(s^2) over selected,
             [:,2] sum(y) (= #selected pixels), [:,3] BCE numerator sum
    """
    h = pl.program_id(1)
    i = pl.program_id(2)

    @pl.when(i == 0)
    def _():
        out_ref[...] = jnp.zeros_like(out_ref)

    # Tiles whose element offset lies entirely past DHW are pure padding
    # (their label lanes are all -1) -> skip all EUP/VPU work (scalar-only gate,
    # no SMEM flag stream needed).
    @pl.when((h * tiles_per_split + i) * tile_p < dhw)
    def _():
        z = z_ref[...].astype(jnp.float32)            # (C, TP)
        tval = t_ref[...].astype(jnp.int32)           # (1, TP)
        C, TP = z.shape

        sel = tval >= 0                               # (1, TP) balance mask
        ch_idx = jax.lax.broadcasted_iota(jnp.int32, (C, TP), 0)
        y = (ch_idx == tval).astype(jnp.float32)      # one-hot target, 0 off-mask

        # x = sigmoid(z) fused in-kernel.  Only 3 heavy EUP ops per element
        # (exp, log1p, exp); both divides are (approx) reciprocals.
        e = jnp.exp(-jnp.abs(z))                      # exp(-|z|) in (0, 1]
        sp = jnp.maximum(z, 0.0) + jnp.log1p(e)       # softplus(z)
        logx_c = jnp.maximum(z - sp, -100.0)          # log(sigmoid(z)), BCE clamp
        log1mx_c = jnp.maximum(-sp, -100.0)           # log(1 - sigmoid(z))

        r = pl.reciprocal(1.0 + e, approx=approx_recip)
        x = jnp.where(z >= 0.0, r, e * r)             # sigmoid(z), reuses e

        # DiceLoss applies an EXTRA sigmoid on top of the probabilities
        # (intentional reproduction of the PyTorch module).
        s = pl.reciprocal(1.0 + jnp.exp(-x), approx=approx_recip)
        # where-select (NOT multiply-by-mask) so garbage tail lanes of the
        # partial / clamped z block can never poison the sums (0 * NaN hazard).
        s = jnp.where(sel, s, 0.0)

        bce_elem = jnp.where(sel, -(log1mx_c + y * (logx_c - log1mx_c)), 0.0)

        out_ref[:, 0:1] += jnp.sum(s * y, axis=-1, keepdims=True)
        out_ref[:, 1:2] += jnp.sum(s * s, axis=-1, keepdims=True)
        out_ref[:, 2:3] += jnp.sum(y, axis=-1, keepdims=True)
        out_ref[:, 3:4] += jnp.sum(bce_elem, axis=-1, keepdims=True)


def bce_dice_balance_loss_pallas(logits, tval_enc, *, alpha=0.5, beta=0.5,
                                 tile_p=16384, eps=1e-6, num_core_splits=2,
                                 approx_recip=True):
    """logits  : (N, C, D, H, W) raw network logits (bf16 recommended; the
                 module's upstream sigmoid is fused into the kernel).
       tval_enc: (N, D, H, W) integer, focal-weighted label in [0, C) for pixels
                 selected by the balance mask, -1 otherwise (values fit int8)."""
    N, C = logits.shape[0], logits.shape[1]
    DHW = 1
    for d in logits.shape[2:]:
        DHW *= d

    # Transpose-free, copy-free layout for the big stream: reshape only, no
    # dtype cast and NO padding of the logits.
    z = logits.reshape(N, C, DHW)
    t = tval_enc.reshape(N, 1, DHW)
    if t.dtype != jnp.int8:
        t = t.astype(jnp.int8)        # {-1} U [0, C) fits; 1 byte/pixel in HBM

    LANES = 128
    dhw_up = ((DHW + LANES - 1) // LANES) * LANES
    tp = min(int(tile_p), dhw_up)
    tp = max(LANES, (tp // LANES) * LANES)
    num_tiles = (DHW + tp - 1) // tp

    # Split the tile axis across (up to) 2 TensorCores so v7x stays busy even
    # for N == 1; harmless on single-TC v5e/v6e.
    ns = max(1, min(int(num_core_splits), num_tiles))
    tiles_per_split = (num_tiles + ns - 1) // ns

    # Pad only the tiny label stream (~1/(2C) of the logits bytes) so every
    # label tile is in-bounds; padded lanes carry -1 (mask off).
    t_len = ns * tiles_per_split * tp
    if t_len != DHW:
        t = jnp.pad(t, ((0, 0), (0, 0), (0, t_len - DHW)), constant_values=-1)

    # Clamp the logits index_map to the last in-bounds tile so no DMA is issued
    # fully out of bounds (duplicate reads are masked off by the -1 labels).
    z_last_block = (DHW - 1) // tp

    def z_map(n, h, i):
        return (n, 0, jnp.minimum(h * tiles_per_split + i, z_last_block))

    def t_map(n, h, i):
        return (n, 0, h * tiles_per_split + i)

    def o_map(n, h, i):
        return (n, h, 0, 0)

    kernel = functools.partial(_loss_kernel, tile_p=tp,
                               tiles_per_split=tiles_per_split, dhw=DHW,
                               approx_recip=bool(approx_recip))

    parts = pl.pallas_call(
        kernel,
        out_shape=jax.ShapeDtypeStruct((N, ns, C, 4), jnp.float32),
        grid=(N, ns, tiles_per_split),
        in_specs=[
            pl.BlockSpec((pl.Squeezed(), C, tp), z_map),
            pl.BlockSpec((pl.Squeezed(), 1, tp), t_map),
        ],
        out_specs=pl.BlockSpec((pl.Squeezed(), pl.Squeezed(), C, 4), o_map),
        compiler_params=pltpu.CompilerParams(
            dimension_semantics=("parallel", "parallel", "arbitrary")),
    )(z, t)

    # Tiny finalize in plain JAX (keeps the per-(n, split) grid axes parallel).
    inter = jnp.sum(parts[..., 0], axis=(0, 1))       # (C,)
    d1 = jnp.sum(parts[..., 1], axis=(0, 1))
    d2 = jnp.sum(parts[..., 2], axis=(0, 1))
    bce_sum = jnp.sum(parts[..., 3])
    # #selected pixels == sum(y): every selected label lies in [0, C) because
    # focal_weight = arange(C) masked maps labels to {0, 3, 4} ⊂ [0, C).
    # cnt clamp guards an empty mask (torch would NaN) -- documented divergence.
    cnt = jnp.maximum(jnp.sum(d2), 1.0)
    bce = bce_sum / (cnt * C)
    dice_per_ch = 2.0 * inter / jnp.maximum(d1 + d2, eps)
    dice_loss = 1.0 - jnp.mean(dice_per_ch)
    return alpha * bce + beta * dice_loss


def build_balance_mask(key, target_weighted, max_negat_ratio=100):
    """Plain-JAX glue mirroring the torch.randperm negative subsampling."""
    flat_t = target_weighted.reshape(-1)
    sample_mask = flat_t > 0
    num_posit = jnp.sum(sample_mask)
    num_neg_avail = flat_t.size - num_posit
    k_ratio, k_perm = jax.random.split(key)
    ratio = jax.random.uniform(k_ratio, (), minval=10.0, maxval=float(max_negat_ratio))
    num_negat = jnp.minimum(
        num_neg_avail,
        jnp.floor(num_posit.astype(jnp.float32) * ratio).astype(jnp.int32))
    # random subset (without replacement) of the negatives
    scores = jax.random.uniform(k_perm, (flat_t.size,))
    scores = jnp.where(sample_mask, 2.0, scores)      # positives sort last
    ranks = jnp.argsort(jnp.argsort(scores))
    neg_sel = ranks < num_negat
    return (sample_mask | neg_sel).reshape(target_weighted.shape)


def reference_loss(logits, tval_enc, alpha, beta, eps=1e-6):
    """Pure-JAX reference: probabilities -> torch-style BCE + double-sigmoid Dice."""
    N, C = logits.shape[0], logits.shape[1]
    x = jax.nn.sigmoid(logits.reshape(N, C, -1).astype(jnp.float32))
    t = tval_enc.reshape(N, 1, -1).astype(jnp.int32)
    m = (t >= 0).astype(jnp.float32)
    ch = jnp.arange(C, dtype=jnp.int32)[None, :, None]
    y = (ch == t).astype(jnp.float32)
    msel = jnp.sum(m)
    logx = jnp.maximum(jnp.log(x), -100.0)
    log1mx = jnp.maximum(jnp.log(1.0 - x), -100.0)
    bce = jnp.sum(-(y * logx + (1.0 - y) * log1mx) * m) / (msel * C)
    s = jax.nn.sigmoid(x)
    inter = jnp.sum(s * y, axis=(0, 2))
    denom = jnp.maximum(jnp.sum(s * s * m, axis=(0, 2)) + jnp.sum(y, axis=(0, 2)), eps)
    dice = 1.0 - jnp.mean(2.0 * inter / denom)
    return alpha * bce + beta * dice


if __name__ == "__main__":
    # DHW = 18432 is NOT a multiple of tile_p -> exercises the pad-free partial
    # last tile, the 2-way core split, and the label-only padding path.
    N, C, D, H, W = 2, 8, 8, 48, 48
    alpha, beta = 0.5, 0.5

    key = jax.random.PRNGKey(0)
    k_in, k_lab, k_pos, k_cls, k_mask = jax.random.split(key, 5)

    # network output: raw logits in bf16 (narrow HBM stream; sigmoid fused in-kernel)
    logits = jax.random.normal(k_in, (N, C, D, H, W), dtype=jnp.float32)
    logits = logits.astype(jnp.bfloat16)

    # integer labels in [0, C); positive classes (3, 4) made rare
    base = jax.random.randint(k_lab, (N, D, H, W), 0, 3)
    pos = jax.random.bernoulli(k_pos, 0.01, (N, D, H, W))
    pos_cls = jax.random.randint(k_cls, (N, D, H, W), 3, 5)
    target = jnp.where(pos, pos_cls, base).astype(jnp.int32)
    target = target.at[0, 0, 0, 0].set(3)        # guarantee at least one positive

    # focal_weight = arange(C); [:3] = 0; [5:] = 0
    focal_weight = jnp.arange(C, dtype=jnp.int32).at[:3].set(0).at[5:].set(0)
    t_weighted = focal_weight[target]            # values in {0, 3, 4}

    # TODO(synk): torch.randperm-based negative subsampling has no in-kernel
    # equivalent (data-dependent ragged selection) -- done as plain-JAX glue.
    balance_mask = build_balance_mask(k_mask, t_weighted, max_negat_ratio=100)

    # fold the mask into the (int8) label stream: -1 marks unselected pixels
    tval_enc = jnp.where(balance_mask, t_weighted, -1).astype(jnp.int8)

    ref = reference_loss(logits, tval_enc, alpha, beta)

    # Exact-reciprocal run: strict correctness check against the JAX reference.
    loss_exact = bce_dice_balance_loss_pallas(
        logits, tval_enc, alpha=alpha, beta=beta, approx_recip=False)
    loss_exact = jax.block_until_ready(loss_exact)
    assert jnp.allclose(loss_exact, ref, atol=1e-4, rtol=1e-4), (
        float(loss_exact), float(ref))

    # Default fast path (approx EUP reciprocal on the sigmoid/Dice branch):
    # error bounded by the vrcp approximation, well under 5e-3 on the loss.
    loss_fast = bce_dice_balance_loss_pallas(
        logits, tval_enc, alpha=alpha, beta=beta)
    loss_fast = jax.block_until_ready(loss_fast)
    assert jnp.allclose(loss_fast, ref, atol=5e-3, rtol=5e-3), (
        float(loss_fast), float(ref))

    print("KERNEL_OK")
</pallas_src>

<mosaic_0001>
module attributes {stable_mosaic.version = 11 : i64} {
  func.func @_loss_kernel(%arg0: i32, %arg1: i32, %arg2: i32, %arg3: memref<1x8x16384xbf16, #tpu.memory_space<vmem>>, %arg4: memref<1x1x16384xi8, #tpu.memory_space<vmem>>, %arg5: memref<1x1x8x4xf32, #tpu.memory_space<vmem>>) attributes {dimension_semantics = [#tpu.dimension_semantics<parallel>, #tpu.dimension_semantics<parallel>, #tpu.dimension_semantics<arbitrary>], iteration_bounds = array<i64: 2, 2, 1>, scalar_prefetch = 0 : i64, scratch_operands = 0 : i64, tpu.core_type = #tpu.core_type<tc>, window_params = [{transform_indices = @transform_0, window_bounds = array<i64: 1, 8, 16384>}, {transform_indices = @transform_1, window_bounds = array<i64: 1, 1, 16384>}, {transform_indices = @transform_2, window_bounds = array<i64: 1, 1, 8, 4>}]} {
    %c0_i32 = arith.constant 0 : i32
    %0 = arith.cmpi eq, %arg2, %c0_i32 : i32
    %1 = arith.extui %0 : i1 to i32
    %c0_i32_0 = arith.constant 0 : i32
    %2 = arith.cmpi ne, %1, %c0_i32_0 : i32
    scf.if %2 {
      %cst = arith.constant 0.000000e+00 : f32
      %9 = vector.broadcast %cst : f32 to vector<8x4xf32>
      %c0 = arith.constant 0 : index
      %c0_2 = arith.constant 0 : index
      %c0_3 = arith.constant 0 : index
      %c0_4 = arith.constant 0 : index
      %10 = vector.load %arg5[%c0, %c0_2, %c0_3, %c0_4] : memref<1x1x8x4xf32, #tpu.memory_space<vmem>>, vector<1x1x8x4xf32>
      %11 = vector.shape_cast %10 : vector<1x1x8x4xf32> to vector<8x4xf32>
      %12 = vector.shape_cast %9 : vector<8x4xf32> to vector<1x1x8x4xf32>
      tpu.vector_store %arg5[%c0, %c0_2, %c0_3, %c0_4], %12 {strides = array<i32>} : memref<1x1x8x4xf32, #tpu.memory_space<vmem>>, vector<1x1x8x4xf32>,
    } else {
    }
    %c1_i32 = arith.constant 1 : i32
    %3 = arith.muli %arg1, %c1_i32 : i32
    %4 = arith.addi %3, %arg2 : i32
    %c16384_i32 = arith.constant 16384 : i32
    %5 = arith.muli %4, %c16384_i32 : i32
    %c18432_i32 = arith.constant 18432 : i32
    %6 = arith.cmpi slt, %5, %c18432_i32 : i32
    %7 = arith.extui %6 : i1 to i32
    %c0_i32_1 = arith.constant 0 : i32
    %8 = arith.cmpi ne, %7, %c0_i32_1 : i32
    scf.if %8 {
      %c0 = arith.constant 0 : index
      %c0_2 = arith.constant 0 : index
      %c0_3 = arith.constant 0 : index
      %9 = vector.load %arg3[%c0, %c0_2, %c0_3] : memref<1x8x16384xbf16, #tpu.memory_space<vmem>>, vector<1x8x16384xbf16>
      %10 = vector.shape_cast %9 : vector<1x8x16384xbf16> to vector<8x16384xbf16>
      %11 = arith.extf %10 : vector<8x16384xbf16> to vector<8x16384xf32>
      %c0_4 = arith.constant 0 : index
      %c0_5 = arith.constant 0 : index
      %c0_6 = arith.constant 0 : index
      %12 = vector.load %arg4[%c0_4, %c0_5, %c0_6] : memref<1x1x16384xi8, #tpu.memory_space<vmem>>, vector<1x1x16384xi8>
      %13 = vector.shape_cast %12 : vector<1x1x16384xi8> to vector<1x16384xi8>
      %14 = arith.extsi %13 : vector<1x16384xi8> to vector<1x16384xi32>
      %c0_i32_7 = arith.constant 0 : i32
      %15 = vector.broadcast %c0_i32_7 : i32 to vector<1x16384xi32>
      %16 = arith.cmpi sge, %14, %15 : vector<1x16384xi32>
      %17 = tpu.iota {dimensions = array<i32: 0>} : vector<8x16384xi32>
      %18 = vector.broadcast %14 : vector<1x16384xi32> to vector<8x16384xi32>
      %19 = arith.cmpi eq, %17, %18 : vector<8x16384xi32>
      %20 = arith.extui %19 : vector<8x16384xi1> to vector<8x16384xi32>
      %21 = arith.sitofp %20 : vector<8x16384xi32> to vector<8x16384xf32>
      %22 = math.absf %11 : vector<8x16384xf32>
      %cst = arith.constant 0.000000e+00 : f32
      %23 = vector.broadcast %cst : f32 to vector<8x16384xf32>
      %24 = arith.subf %23, %22 : vector<8x16384xf32>
      %25 = math.exp %24 : vector<8x16384xf32>
      %cst_8 = arith.constant 0.000000e+00 : f32
      %26 = vector.broadcast %cst_8 : f32 to vector<8x16384xf32>
      %27 = arith.maximumf %11, %26 : vector<8x16384xf32>
      %28 = math.log1p %25 : vector<8x16384xf32>
      %29 = arith.addf %27, %28 : vector<8x16384xf32>
      %30 = arith.subf %11, %29 : vector<8x16384xf32>
      %cst_9 = arith.constant -1.000000e+02 : f32
      %31 = vector.broadcast %cst_9 : f32 to vector<8x16384xf32>
      %32 = arith.maximumf %30, %31 : vector<8x16384xf32>
      %cst_10 = arith.constant 0.000000e+00 : f32
      %33 = vector.broadcast %cst_10 : f32 to vector<8x16384xf32>
      %34 = arith.subf %33, %29 : vector<8x16384xf32>
      %cst_11 = arith.constant -1.000000e+02 : f32
      %35 = vector.broadcast %cst_11 : f32 to vector<8x16384xf32>
      %36 = arith.maximumf %34, %35 : vector<8x16384xf32>
      %cst_12 = arith.constant 1.000000e+00 : f32
      %37 = vector.broadcast %cst_12 : f32 to vector<8x16384xf32>
      %38 = arith.addf %37, %25 : vector<8x16384xf32>
      %39 = tpu.reciprocal %38 : vector<8x16384xf32> -> vector<8x16384xf32>
      %cst_13 = arith.constant 0.000000e+00 : f32
      %40 = vector.broadcast %cst_13 : f32 to vector<8x16384xf32>
      %41 = arith.cmpf oge, %11, %40 : vector<8x16384xf32>
      %42 = arith.mulf %25, %39 : vector<8x16384xf32>
      %43 = arith.select %41, %39, %42 : vector<8x16384xi1>, vector<8x16384xf32>
      %cst_14 = arith.constant 0.000000e+00 : f32
      %44 = vector.broadcast %cst_14 : f32 to vector<8x16384xf32>
      %45 = arith.subf %44, %43 : vector<8x16384xf32>
      %46 = math.exp %45 : vector<8x16384xf32>
      %cst_15 = arith.constant 1.000000e+00 : f32
      %47 = vector.broadcast %cst_15 : f32 to vector<8x16384xf32>
      %48 = arith.addf %47, %46 : vector<8x16384xf32>
      %49 = tpu.reciprocal %48 : vector<8x16384xf32> -> vector<8x16384xf32>
      %cst_16 = arith.constant 0.000000e+00 : f32
      %50 = vector.shape_cast %16 : vector<1x16384xi1> to vector<1x16384xi1>
      %51 = vector.broadcast %50 : vector<1x16384xi1> to vector<8x16384xi1>
      %52 = vector.broadcast %cst_16 : f32 to vector<8x16384xf32>
      %53 = arith.select %51, %49, %52 : vector<8x16384xi1>, vector<8x16384xf32>
      %54 = arith.subf %32, %36 : vector<8x16384xf32>
      %55 = arith.mulf %21, %54 : vector<8x16384xf32>
      %56 = arith.addf %36, %55 : vector<8x16384xf32>
      %cst_17 = arith.constant 0.000000e+00 : f32
      %57 = vector.broadcast %cst_17 : f32 to vector<8x16384xf32>
      %58 = arith.subf %57, %56 : vector<8x16384xf32>
      %cst_18 = arith.constant 0.000000e+00 : f32
      %59 = vector.shape_cast %16 : vector<1x16384xi1> to vector<1x16384xi1>
      %60 = vector.broadcast %59 : vector<1x16384xi1> to vector<8x16384xi1>
      %61 = vector.broadcast %cst_18 : f32 to vector<8x16384xf32>
      %62 = arith.select %60, %58, %61 : vector<8x16384xi1>, vector<8x16384xf32>
      %c0_19 = arith.constant 0 : index
      %c0_20 = arith.constant 0 : index
      %c0_21 = arith.constant 0 : index
      %c0_22 = arith.constant 0 : index
      %63 = vector.load %arg5[%c0_19, %c0_20, %c0_21, %c0_22] : memref<1x1x8x4xf32, #tpu.memory_space<vmem>>, vector<1x1x8x1xf32>
      %64 = vector.shape_cast %63 : vector<1x1x8x1xf32> to vector<8x1xf32>
      %65 = arith.mulf %53, %21 : vector<8x16384xf32>
      %cst_23 = arith.constant dense<0.000000e+00> : vector<8xf32>
      %66 = vector.multi_reduction <add>, %65, %cst_23 [1] : vector<8x16384xf32> to vector<8xf32>
      %67 = vector.shape_cast %66 : vector<8xf32> to vector<8x1xf32>
      %68 = arith.addf %64, %67 : vector<8x1xf32>
      %c0_24 = arith.constant 0 : index
      %c0_25 = arith.constant 0 : index
      %c0_26 = arith.constant 0 : index
      %c0_27 = arith.constant 0 : index
      %69 = vector.load %arg5[%c0_24, %c0_25, %c0_26, %c0_27] : memref<1x1x8x4xf32, #tpu.memory_space<vmem>>, vector<1x1x8x1xf32>
      %70 = vector.shape_cast %69 : vector<1x1x8x1xf32> to vector<8x1xf32>
      %71 = vector.shape_cast %68 : vector<8x1xf32> to vector<1x1x8x1xf32>
      tpu.vector_store %arg5[%c0_24, %c0_25, %c0_26, %c0_27], %71 {strides = array<i32>} : memref<1x1x8x4xf32, #tpu.memory_space<vmem>>, vector<1x1x8x1xf32>,
      %c0_28 = arith.constant 0 : index
      %c0_29 = arith.constant 0 : index
      %c0_30 = arith.constant 0 : index
      %c1 = arith.constant 1 : index
      %72 = vector.load %arg5[%c0_28, %c0_29, %c0_30, %c1] : memref<1x1x8x4xf32, #tpu.memory_space<vmem>>, vector<1x1x8x1xf32>
      %73 = vector.shape_cast %72 : vector<1x1x8x1xf32> to vector<8x1xf32>
      %74 = arith.mulf %53, %53 : vector<8x16384xf32>
      %cst_31 = arith.constant dense<0.000000e+00> : vector<8xf32>
      %75 = vector.multi_reduction <add>, %74, %cst_31 [1] : vector<8x16384xf32> to vector<8xf32>
      %76 = vector.shape_cast %75 : vector<8xf32> to vector<8x1xf32>
      %77 = arith.addf %73, %76 : vector<8x1xf32>
      %c0_32 = arith.constant 0 : index
      %c0_33 = arith.constant 0 : index
      %c0_34 = arith.constant 0 : index
      %c1_35 = arith.constant 1 : index
      %78 = vector.load %arg5[%c0_32, %c0_33, %c0_34, %c1_35] : memref<1x1x8x4xf32, #tpu.memory_space<vmem>>, vector<1x1x8x1xf32>
      %79 = vector.shape_cast %78 : vector<1x1x8x1xf32> to vector<8x1xf32>
      %80 = vector.shape_cast %77 : vector<8x1xf32> to vector<1x1x8x1xf32>
      tpu.vector_store %arg5[%c0_32, %c0_33, %c0_34, %c1_35], %80 {strides = array<i32>} : memref<1x1x8x4xf32, #tpu.memory_space<vmem>>, vector<1x1x8x1xf32>,
      %c0_36 = arith.constant 0 : index
      %c0_37 = arith.constant 0 : index
      %c0_38 = arith.constant 0 : index
      %c2 = arith.constant 2 : index
      %81 = vector.load %arg5[%c0_36, %c0_37, %c0_38, %c2] : memref<1x1x8x4xf32, #tpu.memory_space<vmem>>, vector<1x1x8x1xf32>
      %82 = vector.shape_cast %81 : vector<1x1x8x1xf32> to vector<8x1xf32>
      %cst_39 = arith.constant dense<0.000000e+00> : vector<8xf32>
      %83 = vector.multi_reduction <add>, %21, %cst_39 [1] : vector<8x16384xf32> to vector<8xf32>
      %84 = vector.shape_cast %83 : vector<8xf32> to vector<8x1xf32>
      %85 = arith.addf %82, %84 : vector<8x1xf32>
      %c0_40 = arith.constant 0 : index
      %c0_41 = arith.constant 0 : index
      %c0_42 = arith.constant 0 : index
      %c2_43 = arith.constant 2 : index
      %86 = vector.load %arg5[%c0_40, %c0_41, %c0_42, %c2_43] : memref<1x1x8x4xf32, #tpu.memory_space<vmem>>, vector<1x1x8x1xf32>
      %87 = vector.shape_cast %86 : vector<1x1x8x1xf32> to vector<8x1xf32>
      %88 = vector.shape_cast %85 : vector<8x1xf32> to vector<1x1x8x1xf32>
      tpu.vector_store %arg5[%c0_40, %c0_41, %c0_42, %c2_43], %88 {strides = array<i32>} : memref<1x1x8x4xf32, #tpu.memory_space<vmem>>, vector<1x1x8x1xf32>,
      %c0_44 = arith.constant 0 : index
      %c0_45 = arith.constant 0 : index
      %c0_46 = arith.constant 0 : index
      %c3 = arith.constant 3 : index
      %89 = vector.load %arg5[%c0_44, %c0_45, %c0_46, %c3] : memref<1x1x8x4xf32, #tpu.memory_space<vmem>>, vector<1x1x8x1xf32>
      %90 = vector.shape_cast %89 : vector<1x1x8x1xf32> to vector<8x1xf32>
      %cst_47 = arith.constant dense<0.000000e+00> : vector<8xf32>
      %91 = vector.multi_reduction <add>, %62, %cst_47 [1] : vector<8x16384xf32> to vector<8xf32>
      %92 = vector.shape_cast %91 : vector<8xf32> to vector<8x1xf32>
      %93 = arith.addf %90, %92 : vector<8x1xf32>
      %c0_48 = arith.constant 0 : index
      %c0_49 = arith.constant 0 : index
      %c0_50 = arith.constant 0 : index
      %c3_51 = arith.constant 3 : index
      %94 = vector.load %arg5[%c0_48, %c0_49, %c0_50, %c3_51] : memref<1x1x8x4xf32, #tpu.memory_space<vmem>>, vector<1x1x8x1xf32>
      %95 = vector.shape_cast %94 : vector<1x1x8x1xf32> to vector<8x1xf32>
      %96 = vector.shape_cast %93 : vector<8x1xf32> to vector<1x1x8x1xf32>
      tpu.vector_store %arg5[%c0_48, %c0_49, %c0_50, %c3_51], %96 {strides = array<i32>} : memref<1x1x8x4xf32, #tpu.memory_space<vmem>>, vector<1x1x8x1xf32>,
    } else {
    }
    return
  }
  func.func @transform_0(%arg0: i32, %arg1: i32, %arg2: i32) -> (i32, i32, i32) {
    %c1_i32 = arith.constant 1 : i32
    %0 = arith.muli %arg1, %c1_i32 : i32
    %1 = arith.addi %0, %arg2 : i32
    %c1_i32_0 = arith.constant 1 : i32
    %2 = arith.minsi %1, %c1_i32_0 : i32
    %c0_i32 = arith.constant 0 : i32
    %c0_i32_1 = arith.constant 0 : i32
    return %arg0, %c0_i32, %2 : i32, i32, i32
  }
  func.func @transform_1(%arg0: i32, %arg1: i32, %arg2: i32) -> (i32, i32, i32) {
    %c1_i32 = arith.constant 1 : i32
    %0 = arith.muli %arg1, %c1_i32 : i32
    %1 = arith.addi %0, %arg2 : i32
    %c0_i32 = arith.constant 0 : i32
    %c0_i32_0 = arith.constant 0 : i32
    return %arg0, %c0_i32, %1 : i32, i32, i32
  }
  func.func @transform_2(%arg0: i32, %arg1: i32, %arg2: i32) -> (i32, i32, i32, i32) {
    %c0_i32 = arith.constant 0 : i32
    %c0_i32_0 = arith.constant 0 : i32
    %c0_i32_1 = arith.constant 0 : i32
    return %arg0, %arg1, %c0_i32, %c0_i32_0 : i32, i32, i32, i32
  }
}

</mosaic_0001>

<llo_original>
// kernel: tpu_custom_call.1
$region0: #{tpu_custom_call.1}
  #allocation0 [shape = 'u32[]', space=smem, size = 0x4, offset = 0x4, fixed_abs, tag = 'smem constant byte address 0x4 - core index']
  #allocation1 [shape = 'u32[144,128]{1,0:T(1,128)}', space=vmem, size = 0x12000, scoped, tag = 'internal scratch']
  %s0 = inlined_call_operand.hbm [shape: bf16[2,8,18432], index: 0, kind: input, shape index: {}]
  %s1 = inlined_call_operand.vmem [shape: s8[2,1,32768], index: 1, kind: input, shape index: {}]
  %s2 = inlined_call_operand.vmem [shape: f32[2,2,8,4], index: 2, kind: output, shape index: {}]
  %s3 = sld [smem:[#allocation0]]
  $region53: #{tpu_custom_call.1} parent=0
    _
  %s5 = ssub.s32 1, %s3
  %s6 = scalar_select 0, %s5, %s3
  $region1: #{tpu_custom_call.1} parent=0
    #allocation2 [shape = 'u8[524288]{0}', space=vmem, size = 0x80000, scoped, tag = 'input window, operand 0']
    #allocation3 [shape = 's32[2]{0}', space=sflag, size = 0x8, scoped, tag = 'scoped memory for tpu_custom_call.1']
    %7 = vsyncpa [#allocation3], 0
    %s8 = scalar_lea.sflag [#allocation3], 1
    %9 = vsyncpa %s8, 0
    loop: start=0, step=1, limit=6
    $region2: #{tpu_custom_call.1} parent=1 // loop_pre_header
      _
    $region3: #{tpu_custom_call.1} parent=1 // loop_header
      %s11 = sphi 0, %s15
      %p12 = scmp.ge.s32.totalorder %s11, 6
      %s18 = sphi 0, %s37
      %s19 = sphi 0, %s33
      %s20 = sphi 0, %s29
      %s21 = sphi 0, %s18
      %s22 = sphi 0, %s19
      %s23 = sphi 0, %s20
      %s24 = sphi 0, %s21
      %s25 = sphi 0, %s22
      %s26 = sphi 0, %s23
      %s48 = sphi 0, %s50
      %s51 = sphi 0, %s48
      %s52 = sphi 0, %s51
      %s68 = sphi 0, %s52
      %s78 = sphi 0, %s80
      %s81 = sphi 0, %s78
      %s82 = sphi 0, %s81
      %s98 = sphi 0, %s82
      %s106 = sphi 0, %s108
      %s109 = sphi 0, %s106
      %s110 = sphi 0, %s109
      %s126 = sphi 0, %s110
    $region4: #{tpu_custom_call.1} parent=1 // loop_header_branch
      %14 = sbr.rel (%p12) target = $region8
    $region5: #{tpu_custom_call.1} parent=1 // loop_body
      %s16 = ssub.s32 %s11, 1
      %s17 = ssub.s32 %s11, 2
      %s27 = sadd.s32 1, %s20
      %p28 = scmp.ge.s32.totalorder %s27, 1
      %s29 = scalar_select %p28, 0, %s27
      %s30 = sadd.s32 1, %s19
      %s31 = scalar_select %p28, %s30, %s19
      %p32 = scmp.ge.s32.totalorder %s31, 2
      %s33 = scalar_select %p32, 0, %s31
      %s34 = sadd.s32 1, %s18
      %s35 = scalar_select %p32, %s34, %s18
      %p36 = scmp.ge.s32.totalorder %s35, 2
      %s37 = scalar_select %p36, 0, %s35
      %s38 = sadd.s32 %s19, %s20
      %p39 = scmp.lt.s32.totalorder %s38, 1
      %s40 = scalar_select %p39, %s38, 1
      %s41 = sadd.s32 %s33, %s29
      %p42 = scmp.lt.s32.totalorder %s41, 1
      %s43 = scalar_select %p42, %s41, 1
      %s44 = ssub.s32 %s18, %s37
      %s45 = ssub.s32 %s40, %s43
      %s46 = sor.u32 %s44, %s45
      %p47 = scmp.eq.s32.totalorder %s46, 0
      %s49 = sadd.s32 %s48, 1
      %s50 = scalar_select %p47, %s48, %s49
      %p53 = pneg %p47
      %p54 = scmp.eq.s32.totalorder %s11, 3
      %p55 = por %p53, %p54
      %p56 = scmp.ne.s32.totalorder %s48, %s51
      %p57 = scmp.eq.s32.totalorder %s11, 0
      %p58 = por %p56, %p57
      %p59 = scmp.ne.s32.totalorder %s48, %s51
      %p60 = scmp.eq.s32.totalorder %s16, 3
      %p61 = por %p59, %p60
      %p62 = scmp.ne.s32.totalorder %s51, %s52
      %p63 = scmp.eq.s32.totalorder %s16, 0
      %p64 = por %p62, %p63
      %p65 = scmp.ne.s32.totalorder %s51, %s52
      %p66 = scmp.eq.s32.totalorder %s17, 3
      %p67 = por %p65, %p66
      %p69 = scmp.ne.s32.totalorder %s52, %s68
      %p70 = scmp.eq.s32.totalorder %s17, 0
      %p71 = por %p69, %p70
      %s72 = sadd.s32 %s19, %s20
      %s73 = sadd.s32 %s33, %s29
      %s74 = ssub.s32 %s18, %s37
      %s75 = ssub.s32 %s72, %s73
      %s76 = sor.u32 %s74, %s75
      %p77 = scmp.eq.s32.totalorder %s76, 0
      %s79 = sadd.s32 %s78, 1
      %s80 = scalar_select %p77, %s78, %s79
      %p83 = pneg %p77
      %p84 = scmp.eq.s32.totalorder %s11, 3
      %p85 = por %p83, %p84
      %p86 = scmp.ne.s32.totalorder %s78, %s81
      %p87 = scmp.eq.s32.totalorder %s11, 0
      %p88 = por %p86, %p87
      %p89 = scmp.ne.s32.totalorder %s78, %s81
      %p90 = scmp.eq.s32.totalorder %s16, 3
      %p91 = por %p89, %p90
      %p92 = scmp.ne.s32.totalorder %s81, %s82
      %p93 = scmp.eq.s32.totalorder %s16, 0
      %p94 = por %p92, %p93
      %p95 = scmp.ne.s32.totalorder %s81, %s82
      %p96 = scmp.eq.s32.totalorder %s17, 3
      %p97 = por %p95, %p96
      %p99 = scmp.ne.s32.totalorder %s82, %s98
      %p100 = scmp.eq.s32.totalorder %s17, 0
      %p101 = por %p99, %p100
      %s102 = ssub.s32 %s18, %s37
      %s103 = ssub.s32 %s19, %s33
      %s104 = sor.u32 %s102, %s103
      %p105 = scmp.eq.s32.totalorder %s104, 0
      %s107 = sadd.s32 %s106, 1
      %s108 = scalar_select %p105, %s106, %s107
      %p111 = pneg %p105
      %p112 = scmp.eq.s32.totalorder %s11, 3
      %p113 = por %p111, %p112
      %p114 = scmp.ne.s32.totalorder %s106, %s109
      %p115 = scmp.eq.s32.totalorder %s11, 0
      %p116 = por %p114, %p115
      %p117 = scmp.ne.s32.totalorder %s106, %s109
      %p118 = scmp.eq.s32.totalorder %s16, 3
      %p119 = por %p117, %p118
      %p120 = scmp.ne.s32.totalorder %s109, %s110
      %p121 = scmp.eq.s32.totalorder %s16, 0
      %p122 = por %p120, %p121
      %p123 = scmp.ne.s32.totalorder %s109, %s110
      %p124 = scmp.eq.s32.totalorder %s17, 3
      %p125 = por %p123, %p124
      %p127 = scmp.ne.s32.totalorder %s110, %s126
      %p128 = scmp.eq.s32.totalorder %s17, 0
      %p129 = por %p127, %p128
      %p130 = scmp.le.s32.totalorder 1, %s11
      %p131 = scmp.lt.s32.totalorder %s11, 5
      %p132 = pnand %p130, %p131
      %p133 = pneg %p132
      // Predicated region
      $region9: #{tpu_custom_call.1} parent=5 // pred_check
        _
      $region10: #{tpu_custom_call.1} parent=5 // pred_check_branch
        %135 = sbr.rel (%p132) target = $region12
      $region11: #{tpu_custom_call.1} parent=5 // pred_region
        %s136 = ssub.s32 %s11, 1
      $region12: #{tpu_custom_call.1} parent=5 // pred_fallthru
        _
      %p137 = scmp.lt.s32.totalorder %s11, 4
      // Predicated region
      $region13: #{tpu_custom_call.1} parent=5 // pred_check
        %p138 = pneg %p137
      $region14: #{tpu_custom_call.1} parent=5 // pred_check_branch
        %140 = sbr.rel (%p138) target = $region16
      $region15: #{tpu_custom_call.1} parent=5 // pred_region
        // Predicated region
        $region17: #{tpu_custom_call.1} parent=15 // pred_check
          %p141 = pneg %p58
        $region18: #{tpu_custom_call.1} parent=15 // pred_check_branch
          %143 = sbr.rel (%p141) target = $region20
        $region19: #{tpu_custom_call.1} parent=15 // pred_region
          %s144 = sand.u32 %s48, 1
          %s145 = scalar_lea.sflag [#allocation3], %s144
          %s146 = sand.u32 %s48, 1
          %s147 = smul.addr %s146, 512
          %s148 = scalar_lea.vmem [#allocation2], %s147
          %s149 = sadd.s32 %s19, %s20
          %p150 = scmp.lt.s32.totalorder %s149, 1
          %s151 = scalar_select %p150, %s149, 1
          %s152 = smul.u32 128, %s151
          %s153 = ssub.s32 144, %s152
          %p154 = scmp.lt.s32.totalorder %s153, 128
          %s155 = scalar_select %p154, %s153, 128
          %s156 = smul.u32 64, %s155
          %s158 = ssub.s32 8192, %s156
          %159 = vsyncadd %s145, %s158
          %p160 = scmp.ne.s32.totalorder 0, %s156
          %s161 = smul.addr %s18, 144
          %s162 = sadd.s32 %s152, %s161
          %s163 = smul.addr %s162, 64
          %s164 = scalar_lea.hbm %s0, %s163
          %s165 = smul.u32 %s155, 4
          %s166 = sshll.u32 %s165, 4
          %s167 = sshll.u32 %s148, 4
          %s168 = int_to_ptr.vmem [resolvable:$true] %s167
          %170 = dma.hbm_to_vmem [thread:$0]  (%p160), %s164, %s166, %s168, %s145
        $region20: #{tpu_custom_call.1} parent=15 // pred_fallthru
          _
        // Predicated region
        $region21: #{tpu_custom_call.1} parent=15 // pred_check
          %p171 = pneg %p88
        $region22: #{tpu_custom_call.1} parent=15 // pred_check_branch
          %173 = sbr.rel (%p171) target = $region24
        $region23: #{tpu_custom_call.1} parent=15 // pred_region
          %s174 = sadd.s32 %s19, %s20
          %s175 = smul.u32 128, %s174
          %p176 = scmp.lt.s32.totalorder %s18, 1
          %s177 = scalar_select %p176, %s18, 1
          %p178 = scmp.lt.s32.totalorder %s175, 255
          %s179 = scalar_select %p178, %s175, 255
          %s180 = smul.addr %s177, 256
          %s181 = sadd.s32 %s179, %s180
          %s182 = scalar_lea.vmem %s1, %s181
          %s183 = sadd.s32 %s19, %s20
          %s184 = smul.u32 128, %s183
        $region24: #{tpu_custom_call.1} parent=15 // pred_fallthru
          _
      $region16: #{tpu_custom_call.1} parent=5 // pred_fallthru
        _
      %p185 = scmp.le.s32.totalorder 1, %s11
      %p186 = scmp.lt.s32.totalorder %s11, 5
      %p187 = pnand %p185, %p186
      %p188 = pneg %p187
      // Predicated region
      $region25: #{tpu_custom_call.1} parent=5 // pred_check
        _
      $region26: #{tpu_custom_call.1} parent=5 // pred_check_branch
        %190 = sbr.rel (%p187) target = $region28
      $region27: #{tpu_custom_call.1} parent=5 // pred_region
        %s191 = ssub.s32 %s11, 1
        %s192 = sand.u32 %s51, 1
        %s193 = scalar_lea.sflag [#allocation3], %s192
        %s194 = sand.u32 %s51, 1
        %s195 = smul.addr %s194, 512
        %s196 = scalar_lea.vmem [#allocation2], %s195
        // Predicated region
        $region29: #{tpu_custom_call.1} parent=27 // pred_check
          %p197 = pneg %p64
        $region30: #{tpu_custom_call.1} parent=27 // pred_check_branch
          %199 = sbr.rel (%p197) target = $region32
        $region31: #{tpu_custom_call.1} parent=27 // pred_region
          %200 = dma.done %s193, 8192
        $region32: #{tpu_custom_call.1} parent=27 // pred_fallthru
          _
        %s201 = sand.u32 %s51, 1
        %s202 = scalar_lea.sflag [#allocation3], %s201
        %s203 = sand.u32 %s51, 1
        %s204 = smul.addr %s203, 512
        %s205 = scalar_lea.vmem [#allocation2], %s204
        %p206 = pneg %p64
        %p207 = pneg %p61
        %s208 = sadd.s32 %s22, %s23
        %s209 = smul.u32 128, %s208
        %p210 = scmp.lt.s32.totalorder %s21, 1
        %s211 = scalar_select %p210, %s21, 1
        %p212 = scmp.lt.s32.totalorder %s209, 255
        %s213 = scalar_select %p212, %s209, 255
        %s214 = smul.addr %s211, 256
        %s215 = sadd.s32 %s213, %s214
        %s216 = scalar_lea.vmem %s1, %s215
        %p217 = pneg %p94
        %p218 = pneg %p91
        %p219 = pneg %p122
        %p220 = pneg %p119
        %p221 = scmp.lt.s32.totalorder %s21, 1
        %s222 = scalar_select %p221, %s21, 1
        %p223 = scmp.lt.s32.totalorder %s22, 1
        %s224 = scalar_select %p223, %s22, 1
        %s225 = smul.addr %s222, 2
        %s226 = sadd.s32 %s224, %s225
        %s227 = smul.addr %s226, 8
        %s228 = scalar_lea.vmem %s2, %s227
        %s229 = sadd.s32 %s22, %s23
        %p230 = scmp.lt.s32.totalorder %s229, 1
        %s231 = scalar_select %p230, %s229, 1
        %s232 = smul.u32 128, %s231
        %s233 = ssub.s32 144, %s232
        %p234 = scmp.lt.s32.totalorder %s233, 128
        %s235 = scalar_select %p234, %s233, 128
        %s236 = smul.u32 64, %s235
        %s237 = sadd.s32 %s22, %s23
        %s238 = smul.u32 128, %s237
        %p239 = scmp.lt.s32.totalorder %s21, 1
        %s240 = scalar_select %p239, %s21, 1
        %p241 = scmp.lt.s32.totalorder %s238, 255
        %s242 = scalar_select %p241, %s238, 255
        %s243 = smul.addr %s240, 256
        %s244 = sadd.s32 %s242, %s243
        %s245 = scalar_lea.vmem %s1, %s244
        %s246 = sadd.s32 %s22, %s23
        %s247 = smul.u32 128, %s246
        %p248 = scmp.lt.s32.totalorder %s21, 1
        %s249 = scalar_select %p248, %s21, 1
        %p250 = scmp.lt.s32.totalorder %s22, 1
        %s251 = scalar_select %p250, %s22, 1
        %s252 = smul.addr %s249, 2
        %s253 = sadd.s32 %s251, %s252
        %s254 = smul.addr %s253, 8
        %s255 = scalar_lea.vmem %s2, %s254
        %p256 = scmp.eq.s32.totalorder %s23, 0
        // Predicated region
        $region33: #{tpu_custom_call.1} parent=27 // pred_check
          %p257 = pneg %p256
        $region34: #{tpu_custom_call.1} parent=27 // pred_check_branch
          %259 = sbr.rel (%p257) target = $region36
        $region35: #{tpu_custom_call.1} parent=27 // pred_region
          %vm260 = vcmask 31744
          %261 = vst.msk [vmem:[%s255] sm:$0xff] %vm260, 0.0
        $region36: #{tpu_custom_call.1} parent=27 // pred_fallthru
          _
        %s262 = sadd.s32 %s22, %s23
        %s263 = smul.u32 %s262, 16384
        %p264 = scmp.lt.s32.totalorder %s263, 18432
        // Predicated region
        $region37: #{tpu_custom_call.1} parent=27 // pred_check
          %p265 = pneg %p264
        $region38: #{tpu_custom_call.1} parent=27 // pred_check_branch
          %267 = sbr.rel (%p265) target = $region40
        $region39: #{tpu_custom_call.1} parent=27 // pred_region
          %v268 = vld [vmem:[%s196] sm:$0xff]
          %v269 = vld [vmem:[%s196 + $0x8] sm:$0xff]
          %v270 = vld [vmem:[%s196 + $0x10] sm:$0xff]
          %v271 = vld [vmem:[%s196 + $0x18] sm:$0xff]
          %v272 = vld [vmem:[%s196 + $0x20] sm:$0xff]
          %v273 = vld [vmem:[%s196 + $0x28] sm:$0xff]
          %v274 = vld [vmem:[%s196 + $0x30] sm:$0xff]
          %v275 = vld [vmem:[%s196 + $0x38] sm:$0xff]
          %v276 = vld [vmem:[%s196 + $0x40] sm:$0xff]
          %v277 = vld [vmem:[%s196 + $0x48] sm:$0xff]
          %v278 = vld [vmem:[%s196 + $0x50] sm:$0xff]
          %v279 = vld [vmem:[%s196 + $0x58] sm:$0xff]
          %v280 = vld [vmem:[%s196 + $0x60] sm:$0xff]
          %v281 = vld [vmem:[%s196 + $0x68] sm:$0xff]
          %v282 = vld [vmem:[%s196 + $0x70] sm:$0xff]
          %v283 = vld [vmem:[%s196 + $0x78] sm:$0xff]
          %v284 = vld [vmem:[%s196 + $0x80] sm:$0xff]
          %v285 = vld [vmem:[%s196 + $0x88] sm:$0xff]
          %v286 = vld [vmem:[%s196 + $0x90] sm:$0xff]
          %v287 = vld [vmem:[%s196 + $0x98] sm:$0xff]
          %v288 = vld [vmem:[%s196 + $0xa0] sm:$0xff]
          %v289 = vld [vmem:[%s196 + $0xa8] sm:$0xff]
          %v290 = vld [vmem:[%s196 + $0xb0] sm:$0xff]
          %v291 = vld [vmem:[%s196 + $0xb8] sm:$0xff]
          %v292 = vld [vmem:[%s196 + $0xc0] sm:$0xff]
          %v293 = vld [vmem:[%s196 + $0xc8] sm:$0xff]
          %v294 = vld [vmem:[%s196 + $0xd0] sm:$0xff]
          %v295 = vld [vmem:[%s196 + $0xd8] sm:$0xff]
          %v296 = vld [vmem:[%s196 + $0xe0] sm:$0xff]
          %v297 = vld [vmem:[%s196 + $0xe8] sm:$0xff]
          %v298 = vld [vmem:[%s196 + $0xf0] sm:$0xff]
          %v299 = vld [vmem:[%s196 + $0xf8] sm:$0xff]
          %v300 = vld [vmem:[%s196 + $0x100] sm:$0xff]
          %v301 = vld [vmem:[%s196 + $0x108] sm:$0xff]
          %v302 = vld [vmem:[%s196 + $0x110] sm:$0xff]
          %v303 = vld [vmem:[%s196 + $0x118] sm:$0xff]
          %v304 = vld [vmem:[%s196 + $0x120] sm:$0xff]
          %v305 = vld [vmem:[%s196 + $0x128] sm:$0xff]
          %v306 = vld [vmem:[%s196 + $0x130] sm:$0xff]
          %v307 = vld [vmem:[%s196 + $0x138] sm:$0xff]
          %v308 = vld [vmem:[%s196 + $0x140] sm:$0xff]
          %v309 = vld [vmem:[%s196 + $0x148] sm:$0xff]
          %v310 = vld [vmem:[%s196 + $0x150] sm:$0xff]
          %v311 = vld [vmem:[%s196 + $0x158] sm:$0xff]
          %v312 = vld [vmem:[%s196 + $0x160] sm:$0xff]
          %v313 = vld [vmem:[%s196 + $0x168] sm:$0xff]
          %v314 = vld [vmem:[%s196 + $0x170] sm:$0xff]
          %v315 = vld [vmem:[%s196 + $0x178] sm:$0xff]
          %v316 = vld [vmem:[%s196 + $0x180] sm:$0xff]
          %v317 = vld [vmem:[%s196 + $0x188] sm:$0xff]
          %v318 = vld [vmem:[%s196 + $0x190] sm:$0xff]
          %v319 = vld [vmem:[%s196 + $0x198] sm:$0xff]
          %v320 = vld [vmem:[%s196 + $0x1a0] sm:$0xff]
          %v321 = vld [vmem:[%s196 + $0x1a8] sm:$0xff]
          %v322 = vld [vmem:[%s196 + $0x1b0] sm:$0xff]
          %v323 = vld [vmem:[%s196 + $0x1b8] sm:$0xff]
          %v324 = vld [vmem:[%s196 + $0x1c0] sm:$0xff]
          %v325 = vld [vmem:[%s196 + $0x1c8] sm:$0xff]
          %v326 = vld [vmem:[%s196 + $0x1d0] sm:$0xff]
          %v327 = vld [vmem:[%s196 + $0x1d8] sm:$0xff]
          %v328 = vld [vmem:[%s196 + $0x1e0] sm:$0xff]
          %v329 = vld [vmem:[%s196 + $0x1e8] sm:$0xff]
          %v330 = vld [vmem:[%s196 + $0x1f0] sm:$0xff]
          %v331 = vld [vmem:[%s196 + $0x1f8] sm:$0xff]
          %v332 = vunpack.c.l.bf16 %v268
          %v333 = vunpack.c.h.bf16 %v268
          %v334 = vunpack.c.l.bf16 %v269
          %v335 = vunpack.c.h.bf16 %v269
          %v336 = vunpack.c.l.bf16 %v270
          %v337 = vunpack.c.h.bf16 %v270
          %v338 = vunpack.c.l.bf16 %v271
          %v339 = vunpack.c.h.bf16 %v271
          %v340 = vunpack.c.l.bf16 %v272
          %v341 = vunpack.c.h.bf16 %v272
          %v342 = vunpack.c.l.bf16 %v273
          %v343 = vunpack.c.h.bf16 %v273
          %v344 = vunpack.c.l.bf16 %v274
          %v345 = vunpack.c.h.bf16 %v274
          %v346 = vunpack.c.l.bf16 %v275
          %v347 = vunpack.c.h.bf16 %v275
          %v348 = vunpack.c.l.bf16 %v276
          %v349 = vunpack.c.h.bf16 %v276
          %v350 = vunpack.c.l.bf16 %v277
          %v351 = vunpack.c.h.bf16 %v277
          %v352 = vunpack.c.l.bf16 %v278
          %v353 = vunpack.c.h.bf16 %v278
          %v354 = vunpack.c.l.bf16 %v279
          %v355 = vunpack.c.h.bf16 %v279
          %v356 = vunpack.c.l.bf16 %v280
          %v357 = vunpack.c.h.bf16 %v280
          %v358 = vunpack.c.l.bf16 %v281
          %v359 = vunpack.c.h.bf16 %v281
          %v360 = vunpack.c.l.bf16 %v282
          %v361 = vunpack.c.h.bf16 %v282
          %v362 = vunpack.c.l.bf16 %v283
          %v363 = vunpack.c.h.bf16 %v283
          %v364 = vunpack.c.l.bf16 %v284
          %v365 = vunpack.c.h.bf16 %v284
          %v366 = vunpack.c.l.bf16 %v285
          %v367 = vunpack.c.h.bf16 %v285
          %v368 = vunpack.c.l.bf16 %v286
          %v369 = vunpack.c.h.bf16 %v286
          %v370 = vunpack.c.l.bf16 %v287
          %v371 = vunpack.c.h.bf16 %v287
          %v372 = vunpack.c.l.bf16 %v288
          %v373 = vunpack.c.h.bf16 %v288
          %v374 = vunpack.c.l.bf16 %v289
          %v375 = vunpack.c.h.bf16 %v289
          %v376 = vunpack.c.l.bf16 %v290
          %v377 = vunpack.c.h.bf16 %v290
          %v378 = vunpack.c.l.bf16 %v291
          %v379 = vunpack.c.h.bf16 %v291
          %v380 = vunpack.c.l.bf16 %v292
          %v381 = vunpack.c.h.bf16 %v292
          %v382 = vunpack.c.l.bf16 %v293
          %v383 = vunpack.c.h.bf16 %v293
          %v384 = vunpack.c.l.bf16 %v294
          %v385 = vunpack.c.h.bf16 %v294
          %v386 = vunpack.c.l.bf16 %v295
          %v387 = vunpack.c.h.bf16 %v295
          %v388 = vunpack.c.l.bf16 %v296
          %v389 = vunpack.c.h.bf16 %v296
          %v390 = vunpack.c.l.bf16 %v297
          %v391 = vunpack.c.h.bf16 %v297
          %v392 = vunpack.c.l.bf16 %v298
          %v393 = vunpack.c.h.bf16 %v298
          %v394 = vunpack.c.l.bf16 %v299
          %v395 = vunpack.c.h.bf16 %v299
          %v396 = vunpack.c.l.bf16 %v300
          %v397 = vunpack.c.h.bf16 %v300
          %v398 = vunpack.c.l.bf16 %v301
          %v399 = vunpack.c.h.bf16 %v301
          %v400 = vunpack.c.l.bf16 %v302
          %v401 = vunpack.c.h.bf16 %v302
          %v402 = vunpack.c.l.bf16 %v303
          %v403 = vunpack.c.h.bf16 %v303
          %v404 = vunpack.c.l.bf16 %v304
          %v405 = vunpack.c.h.bf16 %v304
          %v406 = vunpack.c.l.bf16 %v305
          %v407 = vunpack.c.h.bf16 %v305
          %v408 = vunpack.c.l.bf16 %v306
          %v409 = vunpack.c.h.bf16 %v306
          %v410 = vunpack.c.l.bf16 %v307
          %v411 = vunpack.c.h.bf16 %v307
          %v412 = vunpack.c.l.bf16 %v308
          %v413 = vunpack.c.h.bf16 %v308
          %v414 = vunpack.c.l.bf16 %v309
          %v415 = vunpack.c.h.bf16 %v309
          %v416 = vunpack.c.l.bf16 %v310
          %v417 = vunpack.c.h.bf16 %v310
          %v418 = vunpack.c.l.bf16 %v311
          %v419 = vunpack.c.h.bf16 %v311
          %v420 = vunpack.c.l.bf16 %v312
          %v421 = vunpack.c.h.bf16 %v312
          %v422 = vunpack.c.l.bf16 %v313
          %v423 = vunpack.c.h.bf16 %v313
          %v424 = vunpack.c.l.bf16 %v314
          %v425 = vunpack.c.h.bf16 %v314
          %v426 = vunpack.c.l.bf16 %v315
          %v427 = vunpack.c.h.bf16 %v315
          %v428 = vunpack.c.l.bf16 %v316
          %v429 = vunpack.c.h.bf16 %v316
          %v430 = vunpack.c.l.bf16 %v317
          %v431 = vunpack.c.h.bf16 %v317
          %v432 = vunpack.c.l.bf16 %v318
          %v433 = vunpack.c.h.bf16 %v318
          %v434 = vunpack.c.l.bf16 %v319
          %v435 = vunpack.c.h.bf16 %v319
          %v436 = vunpack.c.l.bf16 %v320
          %v437 = vunpack.c.h.bf16 %v320
          %v438 = vunpack.c.l.bf16 %v321
          %v439 = vunpack.c.h.bf16 %v321
          %v440 = vunpack.c.l.bf16 %v322
          %v441 = vunpack.c.h.bf16 %v322
          %v442 = vunpack.c.l.bf16 %v323
          %v443 = vunpack.c.h.bf16 %v323
          %v444 = vunpack.c.l.bf16 %v324
          %v445 = vunpack.c.h.bf16 %v324
          %v446 = vunpack.c.l.bf16 %v325
          %v447 = vunpack.c.h.bf16 %v325
          %v448 = vunpack.c.l.bf16 %v326
          %v449 = vunpack.c.h.bf16 %v326
          %v450 = vunpack.c.l.bf16 %v327
          %v451 = vunpack.c.h.bf16 %v327
          %v452 = vunpack.c.l.bf16 %v328
          %v453 = vunpack.c.h.bf16 %v328
          %v454 = vunpack.c.l.bf16 %v329
          %v455 = vunpack.c.h.bf16 %v329
          %v456 = vunpack.c.l.bf16 %v330
          %v457 = vunpack.c.h.bf16 %v330
          %v458 = vunpack.c.l.bf16 %v331
          %v459 = vunpack.c.h.bf16 %v331
          %v460 = vld [vmem:[%s245] sm:$0xff]
          %v461 = vld [vmem:[%s245 + $0x8] sm:$0xff]
          %v462 = vld [vmem:[%s245 + $0x10] sm:$0xff]
          %v463 = vld [vmem:[%s245 + $0x18] sm:$0xff]
          %v464 = vld [vmem:[%s245 + $0x20] sm:$0xff]
          %v465 = vld [vmem:[%s245 + $0x28] sm:$0xff]
          %v466 = vld [vmem:[%s245 + $0x30] sm:$0xff]
          %v467 = vld [vmem:[%s245 + $0x38] sm:$0xff]
          %v468 = vld [vmem:[%s245 + $0x40] sm:$0xff]
          %v469 = vld [vmem:[%s245 + $0x48] sm:$0xff]
          %v470 = vld [vmem:[%s245 + $0x50] sm:$0xff]
          %v471 = vld [vmem:[%s245 + $0x58] sm:$0xff]
          %v472 = vld [vmem:[%s245 + $0x60] sm:$0xff]
          %v473 = vld [vmem:[%s245 + $0x68] sm:$0xff]
          %v474 = vld [vmem:[%s245 + $0x70] sm:$0xff]
          %v475 = vld [vmem:[%s245 + $0x78] sm:$0xff]
          %v476 = vunpack.c.0.s8 %v460
          %v477 = vunpack.c.1.s8 %v460
          %v478 = vunpack.c.2.s8 %v460
          %v479 = vunpack.c.3.s8 %v460
          %v480 = vunpack.c.0.s8 %v461
          %v481 = vunpack.c.1.s8 %v461
          %v482 = vunpack.c.2.s8 %v461
          %v483 = vunpack.c.3.s8 %v461
          %v484 = vunpack.c.0.s8 %v462
          %v485 = vunpack.c.1.s8 %v462
          %v486 = vunpack.c.2.s8 %v462
          %v487 = vunpack.c.3.s8 %v462
          %v488 = vunpack.c.0.s8 %v463
          %v489 = vunpack.c.1.s8 %v463
          %v490 = vunpack.c.2.s8 %v463
          %v491 = vunpack.c.3.s8 %v463
          %v492 = vunpack.c.0.s8 %v464
          %v493 = vunpack.c.1.s8 %v464
          %v494 = vunpack.c.2.s8 %v464
          %v495 = vunpack.c.3.s8 %v464
          %v496 = vunpack.c.0.s8 %v465
          %v497 = vunpack.c.1.s8 %v465
          %v498 = vunpack.c.2.s8 %v465
          %v499 = vunpack.c.3.s8 %v465
          %v500 = vunpack.c.0.s8 %v466
          %v501 = vunpack.c.1.s8 %v466
          %v502 = vunpack.c.2.s8 %v466
          %v503 = vunpack.c.3.s8 %v466
          %v504 = vunpack.c.0.s8 %v467
          %v505 = vunpack.c.1.s8 %v467
          %v506 = vunpack.c.2.s8 %v467
          %v507 = vunpack.c.3.s8 %v467
          %v508 = vunpack.c.0.s8 %v468
          %v509 = vunpack.c.1.s8 %v468
          %v510 = vunpack.c.2.s8 %v468
          %v511 = vunpack.c.3.s8 %v468
          %v512 = vunpack.c.0.s8 %v469
          %v513 = vunpack.c.1.s8 %v469
          %v514 = vunpack.c.2.s8 %v469
          %v515 = vunpack.c.3.s8 %v469
          %v516 = vunpack.c.0.s8 %v470
          %v517 = vunpack.c.1.s8 %v470
          %v518 = vunpack.c.2.s8 %v470
          %v519 = vunpack.c.3.s8 %v470
          %v520 = vunpack.c.0.s8 %v471
          %v521 = vunpack.c.1.s8 %v471
          %v522 = vunpack.c.2.s8 %v471
          %v523 = vunpack.c.3.s8 %v471
          %v524 = vunpack.c.0.s8 %v472
          %v525 = vunpack.c.1.s8 %v472
          %v526 = vunpack.c.2.s8 %v472
          %v527 = vunpack.c.3.s8 %v472
          %v528 = vunpack.c.0.s8 %v473
          %v529 = vunpack.c.1.s8 %v473
          %v530 = vunpack.c.2.s8 %v473
          %v531 = vunpack.c.3.s8 %v473
          %v532 = vunpack.c.0.s8 %v474
          %v533 = vunpack.c.1.s8 %v474
          %v534 = vunpack.c.2.s8 %v474
          %v535 = vunpack.c.3.s8 %v474
          %v536 = vunpack.c.0.s8 %v475
          %v537 = vunpack.c.1.s8 %v475
          %v538 = vunpack.c.2.s8 %v475
          %v539 = vunpack.c.3.s8 %v475
          %vm540 = vcmp.ge.s32.totalorder %v476, 0
          %vm541 = vcmp.ge.s32.totalorder %v477, 0
          %vm542 = vcmp.ge.s32.totalorder %v478, 0
          %vm543 = vcmp.ge.s32.totalorder %v479, 0
          %vm544 = vcmp.ge.s32.totalorder %v480, 0
          %vm545 = vcmp.ge.s32.totalorder %v481, 0
          %vm546 = vcmp.ge.s32.totalorder %v482, 0
          %vm547 = vcmp.ge.s32.totalorder %v483, 0
          %vm548 = vcmp.ge.s32.totalorder %v484, 0
          %vm549 = vcmp.ge.s32.totalorder %v485, 0
          %vm550 = vcmp.ge.s32.totalorder %v486, 0
          %vm551 = vcmp.ge.s32.totalorder %v487, 0
          %vm552 = vcmp.ge.s32.totalorder %v488, 0
          %vm553 = vcmp.ge.s32.totalorder %v489, 0
          %vm554 = vcmp.ge.s32.totalorder %v490, 0
          %vm555 = vcmp.ge.s32.totalorder %v491, 0
          %vm556 = vcmp.ge.s32.totalorder %v492, 0
          %vm557 = vcmp.ge.s32.totalorder %v493, 0
          %vm558 = vcmp.ge.s32.totalorder %v494, 0
          %vm559 = vcmp.ge.s32.totalorder %v495, 0
          %vm560 = vcmp.ge.s32.totalorder %v496, 0
          %vm561 = vcmp.ge.s32.totalorder %v497, 0
          %vm562 = vcmp.ge.s32.totalorder %v498, 0
          %vm563 = vcmp.ge.s32.totalorder %v499, 0
          %vm564 = vcmp.ge.s32.totalorder %v500, 0
          %vm565 = vcmp.ge.s32.totalorder %v501, 0
          %vm566 = vcmp.ge.s32.totalorder %v502, 0
          %vm567 = vcmp.ge.s32.totalorder %v503, 0
          %vm568 = vcmp.ge.s32.totalorder %v504, 0
          %vm569 = vcmp.ge.s32.totalorder %v505, 0
          %vm570 = vcmp.ge.s32.totalorder %v506, 0
          %vm571 = vcmp.ge.s32.totalorder %v507, 0
          %vm572 = vcmp.ge.s32.totalorder %v508, 0
          %vm573 = vcmp.ge.s32.totalorder %v509, 0
          %vm574 = vcmp.ge.s32.totalorder %v510, 0
          %vm575 = vcmp.ge.s32.totalorder %v511, 0
          %vm576 = vcmp.ge.s32.totalorder %v512, 0
          %vm577 = vcmp.ge.s32.totalorder %v513, 0
          %vm578 = vcmp.ge.s32.totalorder %v514, 0
          %vm579 = vcmp.ge.s32.totalorder %v515, 0
          %vm580 = vcmp.ge.s32.totalorder %v516, 0
          %vm581 = vcmp.ge.s32.totalorder %v517, 0
          %vm582 = vcmp.ge.s32.totalorder %v518, 0
          %vm583 = vcmp.ge.s32.totalorder %v519, 0
          %vm584 = vcmp.ge.s32.totalorder %v520, 0
          %vm585 = vcmp.ge.s32.totalorder %v521, 0
          %vm586 = vcmp.ge.s32.totalorder %v522, 0
          %vm587 = vcmp.ge.s32.totalorder %v523, 0
          %vm588 = vcmp.ge.s32.totalorder %v524, 0
          %vm589 = vcmp.ge.s32.totalorder %v525, 0
          %vm590 = vcmp.ge.s32.totalorder %v526, 0
          %vm591 = vcmp.ge.s32.totalorder %v527, 0
          %vm592 = vcmp.ge.s32.totalorder %v528, 0
          %vm593 = vcmp.ge.s32.totalorder %v529, 0
          %vm594 = vcmp.ge.s32.totalorder %v530, 0
          %vm595 = vcmp.ge.s32.totalorder %v531, 0
          %vm596 = vcmp.ge.s32.totalorder %v532, 0
          %vm597 = vcmp.ge.s32.totalorder %v533, 0
          %vm598 = vcmp.ge.s32.totalorder %v534, 0
          %vm599 = vcmp.ge.s32.totalorder %v535, 0
          %vm600 = vcmp.ge.s32.totalorder %v536, 0
          %vm601 = vcmp.ge.s32.totalorder %v537, 0
          %vm602 = vcmp.ge.s32.totalorder %v538, 0
          %vm603 = vcmp.ge.s32.totalorder %v539, 0
          %v604 = vlaneseq
          %v605 = vshrl.u32 %v604, 7
          %v606 = vlaneseq
          %v607 = vshrl.u32 %v606, 7
          %v608 = vsub.s32 0, %v607
          %v609 = vrot.slane %v476, %v608
          %v610 = vlaneseq
          %v611 = vshrl.u32 %v610, 7
          %v612 = vsub.s32 4, %v611
          %v613 = vrot.slane %v476, %v612
          %v614 = vlaneseq
          %v615 = vshrl.u32 %v614, 7
          %v616 = vsub.s32 0, %v615
          %v617 = vrot.slane %v477, %v616
          %v618 = vlaneseq
          %v619 = vshrl.u32 %v618, 7
          %v620 = vsub.s32 4, %v619
          %v621 = vrot.slane %v477, %v620
          %v622 = vlaneseq
          %v623 = vshrl.u32 %v622, 7
          %v624 = vsub.s32 0, %v623
          %v625 = vrot.slane %v478, %v624
          %v626 = vlaneseq
          %v627 = vshrl.u32 %v626, 7
          %v628 = vsub.s32 4, %v627
          %v629 = vrot.slane %v478, %v628
          %v630 = vlaneseq
          %v631 = vshrl.u32 %v630, 7
          %v632 = vsub.s32 0, %v631
          %v633 = vrot.slane %v479, %v632
          %v634 = vlaneseq
          %v635 = vshrl.u32 %v634, 7
          %v636 = vsub.s32 4, %v635
          %v637 = vrot.slane %v479, %v636
          %v638 = vlaneseq
          %v639 = vshrl.u32 %v638, 7
          %v640 = vsub.s32 0, %v639
          %v641 = vrot.slane %v480, %v640
          %v642 = vlaneseq
          %v643 = vshrl.u32 %v642, 7
          %v644 = vsub.s32 4, %v643
          %v645 = vrot.slane %v480, %v644
          %v646 = vlaneseq
          %v647 = vshrl.u32 %v646, 7
          %v648 = vsub.s32 0, %v647
          %v649 = vrot.slane %v481, %v648
          %v650 = vlaneseq
          %v651 = vshrl.u32 %v650, 7
          %v652 = vsub.s32 4, %v651
          %v653 = vrot.slane %v481, %v652
          %v654 = vlaneseq
          %v655 = vshrl.u32 %v654, 7
          %v656 = vsub.s32 0, %v655
          %v657 = vrot.slane %v482, %v656
          %v658 = vlaneseq
          %v659 = vshrl.u32 %v658, 7
          %v660 = vsub.s32 4, %v659
          %v661 = vrot.slane %v482, %v660
          %v662 = vlaneseq
          %v663 = vshrl.u32 %v662, 7
          %v664 = vsub.s32 0, %v663
          %v665 = vrot.slane %v483, %v664
          %v666 = vlaneseq
          %v667 = vshrl.u32 %v666, 7
          %v668 = vsub.s32 4, %v667
          %v669 = vrot.slane %v483, %v668
          %v670 = vlaneseq
          %v671 = vshrl.u32 %v670, 7
          %v672 = vsub.s32 0, %v671
          %v673 = vrot.slane %v484, %v672
          %v674 = vlaneseq
          %v675 = vshrl.u32 %v674, 7
          %v676 = vsub.s32 4, %v675
          %v677 = vrot.slane %v484, %v676
          %v678 = vlaneseq
          %v679 = vshrl.u32 %v678, 7
          %v680 = vsub.s32 0, %v679
          %v681 = vrot.slane %v485, %v680
          %v682 = vlaneseq
          %v683 = vshrl.u32 %v682, 7
          %v684 = vsub.s32 4, %v683
          %v685 = vrot.slane %v485, %v684
          %v686 = vlaneseq
          %v687 = vshrl.u32 %v686, 7
          %v688 = vsub.s32 0, %v687
          %v689 = vrot.slane %v486, %v688
          %v690 = vlaneseq
          %v691 = vshrl.u32 %v690, 7
          %v692 = vsub.s32 4, %v691
          %v693 = vrot.slane %v486, %v692
          %v694 = vlaneseq
          %v695 = vshrl.u32 %v694, 7
          %v696 = vsub.s32 0, %v695
          %v697 = vrot.slane %v487, %v696
          %v698 = vlaneseq
          %v699 = vshrl.u32 %v698, 7
          %v700 = vsub.s32 4, %v699
          %v701 = vrot.slane %v487, %v700
          %v702 = vlaneseq
          %v703 = vshrl.u32 %v702, 7
          %v704 = vsub.s32 0, %v703
          %v705 = vrot.slane %v488, %v704
          %v706 = vlaneseq
          %v707 = vshrl.u32 %v706, 7
          %v708 = vsub.s32 4, %v707
          %v709 = vrot.slane %v488, %v708
          %v710 = vlaneseq
          %v711 = vshrl.u32 %v710, 7
          %v712 = vsub.s32 0, %v711
          %v713 = vrot.slane %v489, %v712
          %v714 = vlaneseq
          %v715 = vshrl.u32 %v714, 7
          %v716 = vsub.s32 4, %v715
          %v717 = vrot.slane %v489, %v716
          %v718 = vlaneseq
          %v719 = vshrl.u32 %v718, 7
          %v720 = vsub.s32 0, %v719
          %v721 = vrot.slane %v490, %v720
          %v722 = vlaneseq
          %v723 = vshrl.u32 %v722, 7
          %v724 = vsub.s32 4, %v723
          %v725 = vrot.slane %v490, %v724
          %v726 = vlaneseq
          %v727 = vshrl.u32 %v726, 7
          %v728 = vsub.s32 0, %v727
          %v729 = vrot.slane %v491, %v728
          %v730 = vlaneseq
          %v731 = vshrl.u32 %v730, 7
          %v732 = vsub.s32 4, %v731
          %v733 = vrot.slane %v491, %v732
          %v734 = vlaneseq
          %v735 = vshrl.u32 %v734, 7
          %v736 = vsub.s32 0, %v735
          %v737 = vrot.slane %v492, %v736
          %v738 = vlaneseq
          %v739 = vshrl.u32 %v738, 7
          %v740 = vsub.s32 4, %v739
          %v741 = vrot.slane %v492, %v740
          %v742 = vlaneseq
          %v743 = vshrl.u32 %v742, 7
          %v744 = vsub.s32 0, %v743
          %v745 = vrot.slane %v493, %v744
          %v746 = vlaneseq
          %v747 = vshrl.u32 %v746, 7
          %v748 = vsub.s32 4, %v747
          %v749 = vrot.slane %v493, %v748
          %v750 = vlaneseq
          %v751 = vshrl.u32 %v750, 7
          %v752 = vsub.s32 0, %v751
          %v753 = vrot.slane %v494, %v752
          %v754 = vlaneseq
          %v755 = vshrl.u32 %v754, 7
          %v756 = vsub.s32 4, %v755
          %v757 = vrot.slane %v494, %v756
          %v758 = vlaneseq
          %v759 = vshrl.u32 %v758, 7
          %v760 = vsub.s32 0, %v759
          %v761 = vrot.slane %v495, %v760
          %v762 = vlaneseq
          %v763 = vshrl.u32 %v762, 7
          %v764 = vsub.s32 4, %v763
          %v765 = vrot.slane %v495, %v764
          %v766 = vlaneseq
          %v767 = vshrl.u32 %v766, 7
          %v768 = vsub.s32 0, %v767
          %v769 = vrot.slane %v496, %v768
          %v770 = vlaneseq
          %v771 = vshrl.u32 %v770, 7
          %v772 = vsub.s32 4, %v771
          %v773 = vrot.slane %v496, %v772
          %v774 = vlaneseq
          %v775 = vshrl.u32 %v774, 7
          %v776 = vsub.s32 0, %v775
          %v777 = vrot.slane %v497, %v776
          %v778 = vlaneseq
          %v779 = vshrl.u32 %v778, 7
          %v780 = vsub.s32 4, %v779
          %v781 = vrot.slane %v497, %v780
          %v782 = vlaneseq
          %v783 = vshrl.u32 %v782, 7
          %v784 = vsub.s32 0, %v783
          %v785 = vrot.slane %v498, %v784
          %v786 = vlaneseq
          %v787 = vshrl.u32 %v786, 7
          %v788 = vsub.s32 4, %v787
          %v789 = vrot.slane %v498, %v788
          %v790 = vlaneseq
          %v791 = vshrl.u32 %v790, 7
          %v792 = vsub.s32 0, %v791
          %v793 = vrot.slane %v499, %v792
          %v794 = vlaneseq
          %v795 = vshrl.u32 %v794, 7
          %v796 = vsub.s32 4, %v795
          %v797 = vrot.slane %v499, %v796
          %v798 = vlaneseq
          %v799 = vshrl.u32 %v798, 7
          %v800 = vsub.s32 0, %v799
          %v801 = vrot.slane %v500, %v800
          %v802 = vlaneseq
          %v803 = vshrl.u32 %v802, 7
          %v804 = vsub.s32 4, %v803
          %v805 = vrot.slane %v500, %v804
          %v806 = vlaneseq
          %v807 = vshrl.u32 %v806, 7
          %v808 = vsub.s32 0, %v807
          %v809 = vrot.slane %v501, %v808
          %v810 = vlaneseq
          %v811 = vshrl.u32 %v810, 7
          %v812 = vsub.s32 4, %v811
          %v813 = vrot.slane %v501, %v812
          %v814 = vlaneseq
          %v815 = vshrl.u32 %v814, 7
          %v816 = vsub.s32 0, %v815
          %v817 = vrot.slane %v502, %v816
          %v818 = vlaneseq
          %v819 = vshrl.u32 %v818, 7
          %v820 = vsub.s32 4, %v819
          %v821 = vrot.slane %v502, %v820
          %v822 = vlaneseq
          %v823 = vshrl.u32 %v822, 7
          %v824 = vsub.s32 0, %v823
          %v825 = vrot.slane %v503, %v824
          %v826 = vlaneseq
          %v827 = vshrl.u32 %v826, 7
          %v828 = vsub.s32 4, %v827
          %v829 = vrot.slane %v503, %v828
          %v830 = vlaneseq
          %v831 = vshrl.u32 %v830, 7
          %v832 = vsub.s32 0, %v831
          %v833 = vrot.slane %v504, %v832
          %v834 = vlaneseq
          %v835 = vshrl.u32 %v834, 7
          %v836 = vsub.s32 4, %v835
          %v837 = vrot.slane %v504, %v836
          %v838 = vlaneseq
          %v839 = vshrl.u32 %v838, 7
          %v840 = vsub.s32 0, %v839
          %v841 = vrot.slane %v505, %v840
          %v842 = vlaneseq
          %v843 = vshrl.u32 %v842, 7
          %v844 = vsub.s32 4, %v843
          %v845 = vrot.slane %v505, %v844
          %v846 = vlaneseq
          %v847 = vshrl.u32 %v846, 7
          %v848 = vsub.s32 0, %v847
          %v849 = vrot.slane %v506, %v848
          %v850 = vlaneseq
          %v851 = vshrl.u32 %v850, 7
          %v852 = vsub.s32 4, %v851
          %v853 = vrot.slane %v506, %v852
          %v854 = vlaneseq
          %v855 = vshrl.u32 %v854, 7
          %v856 = vsub.s32 0, %v855
          %v857 = vrot.slane %v507, %v856
          %v858 = vlaneseq
          %v859 = vshrl.u32 %v858, 7
          %v860 = vsub.s32 4, %v859
          %v861 = vrot.slane %v507, %v860
          %v862 = vlaneseq
          %v863 = vshrl.u32 %v862, 7
          %v864 = vsub.s32 0, %v863
          %v865 = vrot.slane %v508, %v864
          %v866 = vlaneseq
          %v867 = vshrl.u32 %v866, 7
          %v868 = vsub.s32 4, %v867
          %v869 = vrot.slane %v508, %v868
          %v870 = vlaneseq
          %v871 = vshrl.u32 %v870, 7
          %v872 = vsub.s32 0, %v871
          %v873 = vrot.slane %v509, %v872
          %v874 = vlaneseq
          %v875 = vshrl.u32 %v874, 7
          %v876 = vsub.s32 4, %v875
          %v877 = vrot.slane %v509, %v876
          %v878 = vlaneseq
          %v879 = vshrl.u32 %v878, 7
          %v880 = vsub.s32 0, %v879
          %v881 = vrot.slane %v510, %v880
          %v882 = vlaneseq
          %v883 = vshrl.u32 %v882, 7
          %v884 = vsub.s32 4, %v883
          %v885 = vrot.slane %v510, %v884
          %v886 = vlaneseq
          %v887 = vshrl.u32 %v886, 7
          %v888 = vsub.s32 0, %v887
          %v889 = vrot.slane %v511, %v888
          %v890 = vlaneseq
          %v891 = vshrl.u32 %v890, 7
          %v892 = vsub.s32 4, %v891
          %v893 = vrot.slane %v511, %v892
          %v894 = vlaneseq
          %v895 = vshrl.u32 %v894, 7
          %v896 = vsub.s32 0, %v895
          %v897 = vrot.slane %v512, %v896
          %v898 = vlaneseq
          %v899 = vshrl.u32 %v898, 7
          %v900 = vsub.s32 4, %v899
          %v901 = vrot.slane %v512, %v900
          %v902 = vlaneseq
          %v903 = vshrl.u32 %v902, 7
          %v904 = vsub.s32 0, %v903
          %v905 = vrot.slane %v513, %v904
          %v906 = vlaneseq
          %v907 = vshrl.u32 %v906, 7
          %v908 = vsub.s32 4, %v907
          %v909 = vrot.slane %v513, %v908
          %v910 = vlaneseq
          %v911 = vshrl.u32 %v910, 7
          %v912 = vsub.s32 0, %v911
          %v913 = vrot.slane %v514, %v912
          %v914 = vlaneseq
          %v915 = vshrl.u32 %v914, 7
          %v916 = vsub.s32 4, %v915
          %v917 = vrot.slane %v514, %v916
          %v918 = vlaneseq
          %v919 = vshrl.u32 %v918, 7
          %v920 = vsub.s32 0, %v919
          %v921 = vrot.slane %v515, %v920
          %v922 = vlaneseq
          %v923 = vshrl.u32 %v922, 7
          %v924 = vsub.s32 4, %v923
          %v925 = vrot.slane %v515, %v924
          %v926 = vlaneseq
          %v927 = vshrl.u32 %v926, 7
          %v928 = vsub.s32 0, %v927
          %v929 = vrot.slane %v516, %v928
          %v930 = vlaneseq
          %v931 = vshrl.u32 %v930, 7
          %v932 = vsub.s32 4, %v931
          %v933 = vrot.slane %v516, %v932
          %v934 = vlaneseq
          %v935 = vshrl.u32 %v934, 7
          %v936 = vsub.s32 0, %v935
          %v937 = vrot.slane %v517, %v936
          %v938 = vlaneseq
          %v939 = vshrl.u32 %v938, 7
          %v940 = vsub.s32 4, %v939
          %v941 = vrot.slane %v517, %v940
          %v942 = vlaneseq
          %v943 = vshrl.u32 %v942, 7
          %v944 = vsub.s32 0, %v943
          %v945 = vrot.slane %v518, %v944
          %v946 = vlaneseq
          %v947 = vshrl.u32 %v946, 7
          %v948 = vsub.s32 4, %v947
          %v949 = vrot.slane %v518, %v948
          %v950 = vlaneseq
          %v951 = vshrl.u32 %v950, 7
          %v952 = vsub.s32 0, %v951
          %v953 = vrot.slane %v519, %v952
          %v954 = vlaneseq
          %v955 = vshrl.u32 %v954, 7
          %v956 = vsub.s32 4, %v955
          %v957 = vrot.slane %v519, %v956
          %v958 = vlaneseq
          %v959 = vshrl.u32 %v958, 7
          %v960 = vsub.s32 0, %v959
          %v961 = vrot.slane %v520, %v960
          %v962 = vlaneseq
          %v963 = vshrl.u32 %v962, 7
          %v964 = vsub.s32 4, %v963
          %v965 = vrot.slane %v520, %v964
          %v966 = vlaneseq
          %v967 = vshrl.u32 %v966, 7
          %v968 = vsub.s32 0, %v967
          %v969 = vrot.slane %v521, %v968
          %v970 = vlaneseq
          %v971 = vshrl.u32 %v970, 7
          %v972 = vsub.s32 4, %v971
          %v973 = vrot.slane %v521, %v972
          %v974 = vlaneseq
          %v975 = vshrl.u32 %v974, 7
          %v976 = vsub.s32 0, %v975
          %v977 = vrot.slane %v522, %v976
          %v978 = vlaneseq
          %v979 = vshrl.u32 %v978, 7
          %v980 = vsub.s32 4, %v979
          %v981 = vrot.slane %v522, %v980
          %v982 = vlaneseq
          %v983 = vshrl.u32 %v982, 7
          %v984 = vsub.s32 0, %v983
          %v985 = vrot.slane %v523, %v984
          %v986 = vlaneseq
          %v987 = vshrl.u32 %v986, 7
          %v988 = vsub.s32 4, %v987
          %v989 = vrot.slane %v523, %v988
          %v990 = vlaneseq
          %v991 = vshrl.u32 %v990, 7
          %v992 = vsub.s32 0, %v991
          %v993 = vrot.slane %v524, %v992
          %v994 = vlaneseq
          %v995 = vshrl.u32 %v994, 7
          %v996 = vsub.s32 4, %v995
          %v997 = vrot.slane %v524, %v996
          %v998 = vlaneseq
          %v999 = vshrl.u32 %v998, 7
          %v1000 = vsub.s32 0, %v999
          %v1001 = vrot.slane %v525, %v1000
          %v1002 = vlaneseq
          %v1003 = vshrl.u32 %v1002, 7
          %v1004 = vsub.s32 4, %v1003
          %v1005 = vrot.slane %v525, %v1004
          %v1006 = vlaneseq
          %v1007 = vshrl.u32 %v1006, 7
          %v1008 = vsub.s32 0, %v1007
          %v1009 = vrot.slane %v526, %v1008
          %v1010 = vlaneseq
          %v1011 = vshrl.u32 %v1010, 7
          %v1012 = vsub.s32 4, %v1011
          %v1013 = vrot.slane %v526, %v1012
          %v1014 = vlaneseq
          %v1015 = vshrl.u32 %v1014, 7
          %v1016 = vsub.s32 0, %v1015
          %v1017 = vrot.slane %v527, %v1016
          %v1018 = vlaneseq
          %v1019 = vshrl.u32 %v1018, 7
          %v1020 = vsub.s32 4, %v1019
          %v1021 = vrot.slane %v527, %v1020
          %v1022 = vlaneseq
          %v1023 = vshrl.u32 %v1022, 7
          %v1024 = vsub.s32 0, %v1023
          %v1025 = vrot.slane %v528, %v1024
          %v1026 = vlaneseq
          %v1027 = vshrl.u32 %v1026, 7
          %v1028 = vsub.s32 4, %v1027
          %v1029 = vrot.slane %v528, %v1028
          %v1030 = vlaneseq
          %v1031 = vshrl.u32 %v1030, 7
          %v1032 = vsub.s32 0, %v1031
          %v1033 = vrot.slane %v529, %v1032
          %v1034 = vlaneseq
          %v1035 = vshrl.u32 %v1034, 7
          %v1036 = vsub.s32 4, %v1035
          %v1037 = vrot.slane %v529, %v1036
          %v1038 = vlaneseq
          %v1039 = vshrl.u32 %v1038, 7
          %v1040 = vsub.s32 0, %v1039
          %v1041 = vrot.slane %v530, %v1040
          %v1042 = vlaneseq
          %v1043 = vshrl.u32 %v1042, 7
          %v1044 = vsub.s32 4, %v1043
          %v1045 = vrot.slane %v530, %v1044
          %v1046 = vlaneseq
          %v1047 = vshrl.u32 %v1046, 7
          %v1048 = vsub.s32 0, %v1047
          %v1049 = vrot.slane %v531, %v1048
          %v1050 = vlaneseq
          %v1051 = vshrl.u32 %v1050, 7
          %v1052 = vsub.s32 4, %v1051
          %v1053 = vrot.slane %v531, %v1052
          %v1054 = vlaneseq
          %v1055 = vshrl.u32 %v1054, 7
          %v1056 = vsub.s32 0, %v1055
          %v1057 = vrot.slane %v532, %v1056
          %v1058 = vlaneseq
          %v1059 = vshrl.u32 %v1058, 7
          %v1060 = vsub.s32 4, %v1059
          %v1061 = vrot.slane %v532, %v1060
          %v1062 = vlaneseq
          %v1063 = vshrl.u32 %v1062, 7
          %v1064 = vsub.s32 0, %v1063
          %v1065 = vrot.slane %v533, %v1064
          %v1066 = vlaneseq
          %v1067 = vshrl.u32 %v1066, 7
          %v1068 = vsub.s32 4, %v1067
          %v1069 = vrot.slane %v533, %v1068
          %v1070 = vlaneseq
          %v1071 = vshrl.u32 %v1070, 7
          %v1072 = vsub.s32 0, %v1071
          %v1073 = vrot.slane %v534, %v1072
          %v1074 = vlaneseq
          %v1075 = vshrl.u32 %v1074, 7
          %v1076 = vsub.s32 4, %v1075
          %v1077 = vrot.slane %v534, %v1076
          %v1078 = vlaneseq
          %v1079 = vshrl.u32 %v1078, 7
          %v1080 = vsub.s32 0, %v1079
          %v1081 = vrot.slane %v535, %v1080
          %v1082 = vlaneseq
          %v1083 = vshrl.u32 %v1082, 7
          %v1084 = vsub.s32 4, %v1083
          %v1085 = vrot.slane %v535, %v1084
          %v1086 = vlaneseq
          %v1087 = vshrl.u32 %v1086, 7
          %v1088 = vsub.s32 0, %v1087
          %v1089 = vrot.slane %v536, %v1088
          %v1090 = vlaneseq
          %v1091 = vshrl.u32 %v1090, 7
          %v1092 = vsub.s32 4, %v1091
          %v1093 = vrot.slane %v536, %v1092
          %v1094 = vlaneseq
          %v1095 = vshrl.u32 %v1094, 7
          %v1096 = vsub.s32 0, %v1095
          %v1097 = vrot.slane %v537, %v1096
          %v1098 = vlaneseq
          %v1099 = vshrl.u32 %v1098, 7
          %v1100 = vsub.s32 4, %v1099
          %v1101 = vrot.slane %v537, %v1100
          %v1102 = vlaneseq
          %v1103 = vshrl.u32 %v1102, 7
          %v1104 = vsub.s32 0, %v1103
          %v1105 = vrot.slane %v538, %v1104
          %v1106 = vlaneseq
          %v1107 = vshrl.u32 %v1106, 7
          %v1108 = vsub.s32 4, %v1107
          %v1109 = vrot.slane %v538, %v1108
          %v1110 = vlaneseq
          %v1111 = vshrl.u32 %v1110, 7
          %v1112 = vsub.s32 0, %v1111
          %v1113 = vrot.slane %v539, %v1112
          %v1114 = vlaneseq
          %v1115 = vshrl.u32 %v1114, 7
          %v1116 = vsub.s32 4, %v1115
          %v1117 = vrot.slane %v539, %v1116
          %v1118 = vlaneseq
          %v1119 = vshrl.u32 %v1118, 7
          %v1120 = vsub.s32 0, %v1119
          %v1121 = vrot.slane %v609, %v1120
          %v1122 = vlaneseq
          %v1123 = vshrl.u32 %v1122, 7
          %v1124 = vsub.s32 0, %v1123
          %v1125 = vrot.slane %v613, %v1124
          %v1126 = vlaneseq
          %v1127 = vshrl.u32 %v1126, 7
          %v1128 = vsub.s32 0, %v1127
          %v1129 = vrot.slane %v617, %v1128
          %v1130 = vlaneseq
          %v1131 = vshrl.u32 %v1130, 7
          %v1132 = vsub.s32 0, %v1131
          %v1133 = vrot.slane %v621, %v1132
          %v1134 = vlaneseq
          %v1135 = vshrl.u32 %v1134, 7
          %v1136 = vsub.s32 0, %v1135
          %v1137 = vrot.slane %v625, %v1136
          %v1138 = vlaneseq
          %v1139 = vshrl.u32 %v1138, 7
          %v1140 = vsub.s32 0, %v1139
          %v1141 = vrot.slane %v629, %v1140
          %v1142 = vlaneseq
          %v1143 = vshrl.u32 %v1142, 7
          %v1144 = vsub.s32 0, %v1143
          %v1145 = vrot.slane %v633, %v1144
          %v1146 = vlaneseq
          %v1147 = vshrl.u32 %v1146, 7
          %v1148 = vsub.s32 0, %v1147
          %v1149 = vrot.slane %v637, %v1148
          %v1150 = vlaneseq
          %v1151 = vshrl.u32 %v1150, 7
          %v1152 = vsub.s32 0, %v1151
          %v1153 = vrot.slane %v641, %v1152
          %v1154 = vlaneseq
          %v1155 = vshrl.u32 %v1154, 7
          %v1156 = vsub.s32 0, %v1155
          %v1157 = vrot.slane %v645, %v1156
          %v1158 = vlaneseq
          %v1159 = vshrl.u32 %v1158, 7
          %v1160 = vsub.s32 0, %v1159
          %v1161 = vrot.slane %v649, %v1160
          %v1162 = vlaneseq
          %v1163 = vshrl.u32 %v1162, 7
          %v1164 = vsub.s32 0, %v1163
          %v1165 = vrot.slane %v653, %v1164
          %v1166 = vlaneseq
          %v1167 = vshrl.u32 %v1166, 7
          %v1168 = vsub.s32 0, %v1167
          %v1169 = vrot.slane %v657, %v1168
          %v1170 = vlaneseq
          %v1171 = vshrl.u32 %v1170, 7
          %v1172 = vsub.s32 0, %v1171
          %v1173 = vrot.slane %v661, %v1172
          %v1174 = vlaneseq
          %v1175 = vshrl.u32 %v1174, 7
          %v1176 = vsub.s32 0, %v1175
          %v1177 = vrot.slane %v665, %v1176
          %v1178 = vlaneseq
          %v1179 = vshrl.u32 %v1178, 7
          %v1180 = vsub.s32 0, %v1179
          %v1181 = vrot.slane %v669, %v1180
          %v1182 = vlaneseq
          %v1183 = vshrl.u32 %v1182, 7
          %v1184 = vsub.s32 0, %v1183
          %v1185 = vrot.slane %v673, %v1184
          %v1186 = vlaneseq
          %v1187 = vshrl.u32 %v1186, 7
          %v1188 = vsub.s32 0, %v1187
          %v1189 = vrot.slane %v677, %v1188
          %v1190 = vlaneseq
          %v1191 = vshrl.u32 %v1190, 7
          %v1192 = vsub.s32 0, %v1191
          %v1193 = vrot.slane %v681, %v1192
          %v1194 = vlaneseq
          %v1195 = vshrl.u32 %v1194, 7
          %v1196 = vsub.s32 0, %v1195
          %v1197 = vrot.slane %v685, %v1196
          %v1198 = vlaneseq
          %v1199 = vshrl.u32 %v1198, 7
          %v1200 = vsub.s32 0, %v1199
          %v1201 = vrot.slane %v689, %v1200
          %v1202 = vlaneseq
          %v1203 = vshrl.u32 %v1202, 7
          %v1204 = vsub.s32 0, %v1203
          %v1205 = vrot.slane %v693, %v1204
          %v1206 = vlaneseq
          %v1207 = vshrl.u32 %v1206, 7
          %v1208 = vsub.s32 0, %v1207
          %v1209 = vrot.slane %v697, %v1208
          %v1210 = vlaneseq
          %v1211 = vshrl.u32 %v1210, 7
          %v1212 = vsub.s32 0, %v1211
          %v1213 = vrot.slane %v701, %v1212
          %v1214 = vlaneseq
          %v1215 = vshrl.u32 %v1214, 7
          %v1216 = vsub.s32 0, %v1215
          %v1217 = vrot.slane %v705, %v1216
          %v1218 = vlaneseq
          %v1219 = vshrl.u32 %v1218, 7
          %v1220 = vsub.s32 0, %v1219
          %v1221 = vrot.slane %v709, %v1220
          %v1222 = vlaneseq
          %v1223 = vshrl.u32 %v1222, 7
          %v1224 = vsub.s32 0, %v1223
          %v1225 = vrot.slane %v713, %v1224
          %v1226 = vlaneseq
          %v1227 = vshrl.u32 %v1226, 7
          %v1228 = vsub.s32 0, %v1227
          %v1229 = vrot.slane %v717, %v1228
          %v1230 = vlaneseq
          %v1231 = vshrl.u32 %v1230, 7
          %v1232 = vsub.s32 0, %v1231
          %v1233 = vrot.slane %v721, %v1232
          %v1234 = vlaneseq
          %v1235 = vshrl.u32 %v1234, 7
          %v1236 = vsub.s32 0, %v1235
          %v1237 = vrot.slane %v725, %v1236
          %v1238 = vlaneseq
          %v1239 = vshrl.u32 %v1238, 7
          %v1240 = vsub.s32 0, %v1239
          %v1241 = vrot.slane %v729, %v1240
          %v1242 = vlaneseq
          %v1243 = vshrl.u32 %v1242, 7
          %v1244 = vsub.s32 0, %v1243
          %v1245 = vrot.slane %v733, %v1244
          %v1246 = vlaneseq
          %v1247 = vshrl.u32 %v1246, 7
          %v1248 = vsub.s32 0, %v1247
          %v1249 = vrot.slane %v737, %v1248
          %v1250 = vlaneseq
          %v1251 = vshrl.u32 %v1250, 7
          %v1252 = vsub.s32 0, %v1251
          %v1253 = vrot.slane %v741, %v1252
          %v1254 = vlaneseq
          %v1255 = vshrl.u32 %v1254, 7
          %v1256 = vsub.s32 0, %v1255
          %v1257 = vrot.slane %v745, %v1256
          %v1258 = vlaneseq
          %v1259 = vshrl.u32 %v1258, 7
          %v1260 = vsub.s32 0, %v1259
          %v1261 = vrot.slane %v749, %v1260
          %v1262 = vlaneseq
          %v1263 = vshrl.u32 %v1262, 7
          %v1264 = vsub.s32 0, %v1263
          %v1265 = vrot.slane %v753, %v1264
          %v1266 = vlaneseq
          %v1267 = vshrl.u32 %v1266, 7
          %v1268 = vsub.s32 0, %v1267
          %v1269 = vrot.slane %v757, %v1268
          %v1270 = vlaneseq
          %v1271 = vshrl.u32 %v1270, 7
          %v1272 = vsub.s32 0, %v1271
          %v1273 = vrot.slane %v761, %v1272
          %v1274 = vlaneseq
          %v1275 = vshrl.u32 %v1274, 7
          %v1276 = vsub.s32 0, %v1275
          %v1277 = vrot.slane %v765, %v1276
          %v1278 = vlaneseq
          %v1279 = vshrl.u32 %v1278, 7
          %v1280 = vsub.s32 0, %v1279
          %v1281 = vrot.slane %v769, %v1280
          %v1282 = vlaneseq
          %v1283 = vshrl.u32 %v1282, 7
          %v1284 = vsub.s32 0, %v1283
          %v1285 = vrot.slane %v773, %v1284
          %v1286 = vlaneseq
          %v1287 = vshrl.u32 %v1286, 7
          %v1288 = vsub.s32 0, %v1287
          %v1289 = vrot.slane %v777, %v1288
          %v1290 = vlaneseq
          %v1291 = vshrl.u32 %v1290, 7
          %v1292 = vsub.s32 0, %v1291
          %v1293 = vrot.slane %v781, %v1292
          %v1294 = vlaneseq
          %v1295 = vshrl.u32 %v1294, 7
          %v1296 = vsub.s32 0, %v1295
          %v1297 = vrot.slane %v785, %v1296
          %v1298 = vlaneseq
          %v1299 = vshrl.u32 %v1298, 7
          %v1300 = vsub.s32 0, %v1299
          %v1301 = vrot.slane %v789, %v1300
          %v1302 = vlaneseq
          %v1303 = vshrl.u32 %v1302, 7
          %v1304 = vsub.s32 0, %v1303
          %v1305 = vrot.slane %v793, %v1304
          %v1306 = vlaneseq
          %v1307 = vshrl.u32 %v1306, 7
          %v1308 = vsub.s32 0, %v1307
          %v1309 = vrot.slane %v797, %v1308
          %v1310 = vlaneseq
          %v1311 = vshrl.u32 %v1310, 7
          %v1312 = vsub.s32 0, %v1311
          %v1313 = vrot.slane %v801, %v1312
          %v1314 = vlaneseq
          %v1315 = vshrl.u32 %v1314, 7
          %v1316 = vsub.s32 0, %v1315
          %v1317 = vrot.slane %v805, %v1316
          %v1318 = vlaneseq
          %v1319 = vshrl.u32 %v1318, 7
          %v1320 = vsub.s32 0, %v1319
          %v1321 = vrot.slane %v809, %v1320
          %v1322 = vlaneseq
          %v1323 = vshrl.u32 %v1322, 7
          %v1324 = vsub.s32 0, %v1323
          %v1325 = vrot.slane %v813, %v1324
          %v1326 = vlaneseq
          %v1327 = vshrl.u32 %v1326, 7
          %v1328 = vsub.s32 0, %v1327
          %v1329 = vrot.slane %v817, %v1328
          %v1330 = vlaneseq
          %v1331 = vshrl.u32 %v1330, 7
          %v1332 = vsub.s32 0, %v1331
          %v1333 = vrot.slane %v821, %v1332
          %v1334 = vlaneseq
          %v1335 = vshrl.u32 %v1334, 7
          %v1336 = vsub.s32 0, %v1335
          %v1337 = vrot.slane %v825, %v1336
          %v1338 = vlaneseq
          %v1339 = vshrl.u32 %v1338, 7
          %v1340 = vsub.s32 0, %v1339
          %v1341 = vrot.slane %v829, %v1340
          %v1342 = vlaneseq
          %v1343 = vshrl.u32 %v1342, 7
          %v1344 = vsub.s32 0, %v1343
          %v1345 = vrot.slane %v833, %v1344
          %v1346 = vlaneseq
          %v1347 = vshrl.u32 %v1346, 7
          %v1348 = vsub.s32 0, %v1347
          %v1349 = vrot.slane %v837, %v1348
          %v1350 = vlaneseq
          %v1351 = vshrl.u32 %v1350, 7
          %v1352 = vsub.s32 0, %v1351
          %v1353 = vrot.slane %v841, %v1352
          %v1354 = vlaneseq
          %v1355 = vshrl.u32 %v1354, 7
          %v1356 = vsub.s32 0, %v1355
          %v1357 = vrot.slane %v845, %v1356
          %v1358 = vlaneseq
          %v1359 = vshrl.u32 %v1358, 7
          %v1360 = vsub.s32 0, %v1359
          %v1361 = vrot.slane %v849, %v1360
          %v1362 = vlaneseq
          %v1363 = vshrl.u32 %v1362, 7
          %v1364 = vsub.s32 0, %v1363
          %v1365 = vrot.slane %v853, %v1364
          %v1366 = vlaneseq
          %v1367 = vshrl.u32 %v1366, 7
          %v1368 = vsub.s32 0, %v1367
          %v1369 = vrot.slane %v857, %v1368
          %v1370 = vlaneseq
          %v1371 = vshrl.u32 %v1370, 7
          %v1372 = vsub.s32 0, %v1371
          %v1373 = vrot.slane %v861, %v1372
          %v1374 = vlaneseq
          %v1375 = vshrl.u32 %v1374, 7
          %v1376 = vsub.s32 0, %v1375
          %v1377 = vrot.slane %v865, %v1376
          %v1378 = vlaneseq
          %v1379 = vshrl.u32 %v1378, 7
          %v1380 = vsub.s32 0, %v1379
          %v1381 = vrot.slane %v869, %v1380
          %v1382 = vlaneseq
          %v1383 = vshrl.u32 %v1382, 7
          %v1384 = vsub.s32 0, %v1383
          %v1385 = vrot.slane %v873, %v1384
          %v1386 = vlaneseq
          %v1387 = vshrl.u32 %v1386, 7
          %v1388 = vsub.s32 0, %v1387
          %v1389 = vrot.slane %v877, %v1388
          %v1390 = vlaneseq
          %v1391 = vshrl.u32 %v1390, 7
          %v1392 = vsub.s32 0, %v1391
          %v1393 = vrot.slane %v881, %v1392
          %v1394 = vlaneseq
          %v1395 = vshrl.u32 %v1394, 7
          %v1396 = vsub.s32 0, %v1395
          %v1397 = vrot.slane %v885, %v1396
          %v1398 = vlaneseq
          %v1399 = vshrl.u32 %v1398, 7
          %v1400 = vsub.s32 0, %v1399
          %v1401 = vrot.slane %v889, %v1400
          %v1402 = vlaneseq
          %v1403 = vshrl.u32 %v1402, 7
          %v1404 = vsub.s32 0, %v1403
          %v1405 = vrot.slane %v893, %v1404
          %v1406 = vlaneseq
          %v1407 = vshrl.u32 %v1406, 7
          %v1408 = vsub.s32 0, %v1407
          %v1409 = vrot.slane %v897, %v1408
          %v1410 = vlaneseq
          %v1411 = vshrl.u32 %v1410, 7
          %v1412 = vsub.s32 0, %v1411
          %v1413 = vrot.slane %v901, %v1412
          %v1414 = vlaneseq
          %v1415 = vshrl.u32 %v1414, 7
          %v1416 = vsub.s32 0, %v1415
          %v1417 = vrot.slane %v905, %v1416
          %v1418 = vlaneseq
          %v1419 = vshrl.u32 %v1418, 7
          %v1420 = vsub.s32 0, %v1419
          %v1421 = vrot.slane %v909, %v1420
          %v1422 = vlaneseq
          %v1423 = vshrl.u32 %v1422, 7
          %v1424 = vsub.s32 0, %v1423
          %v1425 = vrot.slane %v913, %v1424
          %v1426 = vlaneseq
          %v1427 = vshrl.u32 %v1426, 7
          %v1428 = vsub.s32 0, %v1427
          %v1429 = vrot.slane %v917, %v1428
          %v1430 = vlaneseq
          %v1431 = vshrl.u32 %v1430, 7
          %v1432 = vsub.s32 0, %v1431
          %v1433 = vrot.slane %v921, %v1432
          %v1434 = vlaneseq
          %v1435 = vshrl.u32 %v1434, 7
          %v1436 = vsub.s32 0, %v1435
          %v1437 = vrot.slane %v925, %v1436
          %v1438 = vlaneseq
          %v1439 = vshrl.u32 %v1438, 7
          %v1440 = vsub.s32 0, %v1439
          %v1441 = vrot.slane %v929, %v1440
          %v1442 = vlaneseq
          %v1443 = vshrl.u32 %v1442, 7
          %v1444 = vsub.s32 0, %v1443
          %v1445 = vrot.slane %v933, %v1444
          %v1446 = vlaneseq
          %v1447 = vshrl.u32 %v1446, 7
          %v1448 = vsub.s32 0, %v1447
          %v1449 = vrot.slane %v937, %v1448
          %v1450 = vlaneseq
          %v1451 = vshrl.u32 %v1450, 7
          %v1452 = vsub.s32 0, %v1451
          %v1453 = vrot.slane %v941, %v1452
          %v1454 = vlaneseq
          %v1455 = vshrl.u32 %v1454, 7
          %v1456 = vsub.s32 0, %v1455
          %v1457 = vrot.slane %v945, %v1456
          %v1458 = vlaneseq
          %v1459 = vshrl.u32 %v1458, 7
          %v1460 = vsub.s32 0, %v1459
          %v1461 = vrot.slane %v949, %v1460
          %v1462 = vlaneseq
          %v1463 = vshrl.u32 %v1462, 7
          %v1464 = vsub.s32 0, %v1463
          %v1465 = vrot.slane %v953, %v1464
          %v1466 = vlaneseq
          %v1467 = vshrl.u32 %v1466, 7
          %v1468 = vsub.s32 0, %v1467
          %v1469 = vrot.slane %v957, %v1468
          %v1470 = vlaneseq
          %v1471 = vshrl.u32 %v1470, 7
          %v1472 = vsub.s32 0, %v1471
          %v1473 = vrot.slane %v961, %v1472
          %v1474 = vlaneseq
          %v1475 = vshrl.u32 %v1474, 7
          %v1476 = vsub.s32 0, %v1475
          %v1477 = vrot.slane %v965, %v1476
          %v1478 = vlaneseq
          %v1479 = vshrl.u32 %v1478, 7
          %v1480 = vsub.s32 0, %v1479
          %v1481 = vrot.slane %v969, %v1480
          %v1482 = vlaneseq
          %v1483 = vshrl.u32 %v1482, 7
          %v1484 = vsub.s32 0, %v1483
          %v1485 = vrot.slane %v973, %v1484
          %v1486 = vlaneseq
          %v1487 = vshrl.u32 %v1486, 7
          %v1488 = vsub.s32 0, %v1487
          %v1489 = vrot.slane %v977, %v1488
          %v1490 = vlaneseq
          %v1491 = vshrl.u32 %v1490, 7
          %v1492 = vsub.s32 0, %v1491
          %v1493 = vrot.slane %v981, %v1492
          %v1494 = vlaneseq
          %v1495 = vshrl.u32 %v1494, 7
          %v1496 = vsub.s32 0, %v1495
          %v1497 = vrot.slane %v985, %v1496
          %v1498 = vlaneseq
          %v1499 = vshrl.u32 %v1498, 7
          %v1500 = vsub.s32 0, %v1499
          %v1501 = vrot.slane %v989, %v1500
          %v1502 = vlaneseq
          %v1503 = vshrl.u32 %v1502, 7
          %v1504 = vsub.s32 0, %v1503
          %v1505 = vrot.slane %v993, %v1504
          %v1506 = vlaneseq
          %v1507 = vshrl.u32 %v1506, 7
          %v1508 = vsub.s32 0, %v1507
          %v1509 = vrot.slane %v997, %v1508
          %v1510 = vlaneseq
          %v1511 = vshrl.u32 %v1510, 7
          %v1512 = vsub.s32 0, %v1511
          %v1513 = vrot.slane %v1001, %v1512
          %v1514 = vlaneseq
          %v1515 = vshrl.u32 %v1514, 7
          %v1516 = vsub.s32 0, %v1515
          %v1517 = vrot.slane %v1005, %v1516
          %v1518 = vlaneseq
          %v1519 = vshrl.u32 %v1518, 7
          %v1520 = vsub.s32 0, %v1519
          %v1521 = vrot.slane %v1009, %v1520
          %v1522 = vlaneseq
          %v1523 = vshrl.u32 %v1522, 7
          %v1524 = vsub.s32 0, %v1523
          %v1525 = vrot.slane %v1013, %v1524
          %v1526 = vlaneseq
          %v1527 = vshrl.u32 %v1526, 7
          %v1528 = vsub.s32 0, %v1527
          %v1529 = vrot.slane %v1017, %v1528
          %v1530 = vlaneseq
          %v1531 = vshrl.u32 %v1530, 7
          %v1532 = vsub.s32 0, %v1531
          %v1533 = vrot.slane %v1021, %v1532
          %v1534 = vlaneseq
          %v1535 = vshrl.u32 %v1534, 7
          %v1536 = vsub.s32 0, %v1535
          %v1537 = vrot.slane %v1025, %v1536
          %v1538 = vlaneseq
          %v1539 = vshrl.u32 %v1538, 7
          %v1540 = vsub.s32 0, %v1539
          %v1541 = vrot.slane %v1029, %v1540
          %v1542 = vlaneseq
          %v1543 = vshrl.u32 %v1542, 7
          %v1544 = vsub.s32 0, %v1543
          %v1545 = vrot.slane %v1033, %v1544
          %v1546 = vlaneseq
          %v1547 = vshrl.u32 %v1546, 7
          %v1548 = vsub.s32 0, %v1547
          %v1549 = vrot.slane %v1037, %v1548
          %v1550 = vlaneseq
          %v1551 = vshrl.u32 %v1550, 7
          %v1552 = vsub.s32 0, %v1551
          %v1553 = vrot.slane %v1041, %v1552
          %v1554 = vlaneseq
          %v1555 = vshrl.u32 %v1554, 7
          %v1556 = vsub.s32 0, %v1555
          %v1557 = vrot.slane %v1045, %v1556
          %v1558 = vlaneseq
          %v1559 = vshrl.u32 %v1558, 7
          %v1560 = vsub.s32 0, %v1559
          %v1561 = vrot.slane %v1049, %v1560
          %v1562 = vlaneseq
          %v1563 = vshrl.u32 %v1562, 7
          %v1564 = vsub.s32 0, %v1563
          %v1565 = vrot.slane %v1053, %v1564
          %v1566 = vlaneseq
          %v1567 = vshrl.u32 %v1566, 7
          %v1568 = vsub.s32 0, %v1567
          %v1569 = vrot.slane %v1057, %v1568
          %v1570 = vlaneseq
          %v1571 = vshrl.u32 %v1570, 7
          %v1572 = vsub.s32 0, %v1571
          %v1573 = vrot.slane %v1061, %v1572
          %v1574 = vlaneseq
          %v1575 = vshrl.u32 %v1574, 7
          %v1576 = vsub.s32 0, %v1575
          %v1577 = vrot.slane %v1065, %v1576
          %v1578 = vlaneseq
          %v1579 = vshrl.u32 %v1578, 7
          %v1580 = vsub.s32 0, %v1579
          %v1581 = vrot.slane %v1069, %v1580
          %v1582 = vlaneseq
          %v1583 = vshrl.u32 %v1582, 7
          %v1584 = vsub.s32 0, %v1583
          %v1585 = vrot.slane %v1073, %v1584
          %v1586 = vlaneseq
          %v1587 = vshrl.u32 %v1586, 7
          %v1588 = vsub.s32 0, %v1587
          %v1589 = vrot.slane %v1077, %v1588
          %v1590 = vlaneseq
          %v1591 = vshrl.u32 %v1590, 7
          %v1592 = vsub.s32 0, %v1591
          %v1593 = vrot.slane %v1081, %v1592
          %v1594 = vlaneseq
          %v1595 = vshrl.u32 %v1594, 7
          %v1596 = vsub.s32 0, %v1595
          %v1597 = vrot.slane %v1085, %v1596
          %v1598 = vlaneseq
          %v1599 = vshrl.u32 %v1598, 7
          %v1600 = vsub.s32 0, %v1599
          %v1601 = vrot.slane %v1089, %v1600
          %v1602 = vlaneseq
          %v1603 = vshrl.u32 %v1602, 7
          %v1604 = vsub.s32 0, %v1603
          %v1605 = vrot.slane %v1093, %v1604
          %v1606 = vlaneseq
          %v1607 = vshrl.u32 %v1606, 7
          %v1608 = vsub.s32 0, %v1607
          %v1609 = vrot.slane %v1097, %v1608
          %v1610 = vlaneseq
          %v1611 = vshrl.u32 %v1610, 7
          %v1612 = vsub.s32 0, %v1611
          %v1613 = vrot.slane %v1101, %v1612
          %v1614 = vlaneseq
          %v1615 = vshrl.u32 %v1614, 7
          %v1616 = vsub.s32 0, %v1615
          %v1617 = vrot.slane %v1105, %v1616
          %v1618 = vlaneseq
          %v1619 = vshrl.u32 %v1618, 7
          %v1620 = vsub.s32 0, %v1619
          %v1621 = vrot.slane %v1109, %v1620
          %v1622 = vlaneseq
          %v1623 = vshrl.u32 %v1622, 7
          %v1624 = vsub.s32 0, %v1623
          %v1625 = vrot.slane %v1113, %v1624
          %v1626 = vlaneseq
          %v1627 = vshrl.u32 %v1626, 7
          %v1628 = vsub.s32 0, %v1627
          %v1629 = vrot.slane %v1117, %v1628
          %vm1630 = vcmp.eq.s32.totalorder %v605, %v1121
          %vm1631 = vcmp.eq.s32.totalorder %v605, %v1125
          %vm1632 = vcmp.eq.s32.totalorder %v605, %v1129
          %vm1633 = vcmp.eq.s32.totalorder %v605, %v1133
          %vm1634 = vcmp.eq.s32.totalorder %v605, %v1137
          %vm1635 = vcmp.eq.s32.totalorder %v605, %v1141
          %vm1636 = vcmp.eq.s32.totalorder %v605, %v1145
          %vm1637 = vcmp.eq.s32.totalorder %v605, %v1149
          %vm1638 = vcmp.eq.s32.totalorder %v605, %v1153
          %vm1639 = vcmp.eq.s32.totalorder %v605, %v1157
          %vm1640 = vcmp.eq.s32.totalorder %v605, %v1161
          %vm1641 = vcmp.eq.s32.totalorder %v605, %v1165
          %vm1642 = vcmp.eq.s32.totalorder %v605, %v1169
          %vm1643 = vcmp.eq.s32.totalorder %v605, %v1173
          %vm1644 = vcmp.eq.s32.totalorder %v605, %v1177
          %vm1645 = vcmp.eq.s32.totalorder %v605, %v1181
          %vm1646 = vcmp.eq.s32.totalorder %v605, %v1185
          %vm1647 = vcmp.eq.s32.totalorder %v605, %v1189
          %vm1648 = vcmp.eq.s32.totalorder %v605, %v1193
          %vm1649 = vcmp.eq.s32.totalorder %v605, %v1197
          %vm1650 = vcmp.eq.s32.totalorder %v605, %v1201
          %vm1651 = vcmp.eq.s32.totalorder %v605, %v1205
          %vm1652 = vcmp.eq.s32.totalorder %v605, %v1209
          %vm1653 = vcmp.eq.s32.totalorder %v605, %v1213
          %vm1654 = vcmp.eq.s32.totalorder %v605, %v1217
          %vm1655 = vcmp.eq.s32.totalorder %v605, %v1221
          %vm1656 = vcmp.eq.s32.totalorder %v605, %v1225
          %vm1657 = vcmp.eq.s32.totalorder %v605, %v1229
          %vm1658 = vcmp.eq.s32.totalorder %v605, %v1233
          %vm1659 = vcmp.eq.s32.totalorder %v605, %v1237
          %vm1660 = vcmp.eq.s32.totalorder %v605, %v1241
          %vm1661 = vcmp.eq.s32.totalorder %v605, %v1245
          %vm1662 = vcmp.eq.s32.totalorder %v605, %v1249
          %vm1663 = vcmp.eq.s32.totalorder %v605, %v1253
          %vm1664 = vcmp.eq.s32.totalorder %v605, %v1257
          %vm1665 = vcmp.eq.s32.totalorder %v605, %v1261
          %vm1666 = vcmp.eq.s32.totalorder %v605, %v1265
          %vm1667 = vcmp.eq.s32.totalorder %v605, %v1269
          %vm1668 = vcmp.eq.s32.totalorder %v605, %v1273
          %vm1669 = vcmp.eq.s32.totalorder %v605, %v1277
          %vm1670 = vcmp.eq.s32.totalorder %v605, %v1281
          %vm1671 = vcmp.eq.s32.totalorder %v605, %v1285
          %vm1672 = vcmp.eq.s32.totalorder %v605, %v1289
          %vm1673 = vcmp.eq.s32.totalorder %v605, %v1293
          %vm1674 = vcmp.eq.s32.totalorder %v605, %v1297
          %vm1675 = vcmp.eq.s32.totalorder %v605, %v1301
          %vm1676 = vcmp.eq.s32.totalorder %v605, %v1305
          %vm1677 = vcmp.eq.s32.totalorder %v605, %v1309
          %vm1678 = vcmp.eq.s32.totalorder %v605, %v1313
          %vm1679 = vcmp.eq.s32.totalorder %v605, %v1317
          %vm1680 = vcmp.eq.s32.totalorder %v605, %v1321
          %vm1681 = vcmp.eq.s32.totalorder %v605, %v1325
          %vm1682 = vcmp.eq.s32.totalorder %v605, %v1329
          %vm1683 = vcmp.eq.s32.totalorder %v605, %v1333
          %vm1684 = vcmp.eq.s32.totalorder %v605, %v1337
          %vm1685 = vcmp.eq.s32.totalorder %v605, %v1341
          %vm1686 = vcmp.eq.s32.totalorder %v605, %v1345
          %vm1687 = vcmp.eq.s32.totalorder %v605, %v1349
          %vm1688 = vcmp.eq.s32.totalorder %v605, %v1353
          %vm1689 = vcmp.eq.s32.totalorder %v605, %v1357
          %vm1690 = vcmp.eq.s32.totalorder %v605, %v1361
          %vm1691 = vcmp.eq.s32.totalorder %v605, %v1365
          %vm1692 = vcmp.eq.s32.totalorder %v605, %v1369
          %vm1693 = vcmp.eq.s32.totalorder %v605, %v1373
          %vm1694 = vcmp.eq.s32.totalorder %v605, %v1377
          %vm1695 = vcmp.eq.s32.totalorder %v605, %v1381
          %vm1696 = vcmp.eq.s32.totalorder %v605, %v1385
          %vm1697 = vcmp.eq.s32.totalorder %v605, %v1389
          %vm1698 = vcmp.eq.s32.totalorder %v605, %v1393
          %vm1699 = vcmp.eq.s32.totalorder %v605, %v1397
          %vm1700 = vcmp.eq.s32.totalorder %v605, %v1401
          %vm1701 = vcmp.eq.s32.totalorder %v605, %v1405
          %vm1702 = vcmp.eq.s32.totalorder %v605, %v1409
          %vm1703 = vcmp.eq.s32.totalorder %v605, %v1413
          %vm1704 = vcmp.eq.s32.totalorder %v605, %v1417
          %vm1705 = vcmp.eq.s32.totalorder %v605, %v1421
          %vm1706 = vcmp.eq.s32.totalorder %v605, %v1425
          %vm1707 = vcmp.eq.s32.totalorder %v605, %v1429
          %vm1708 = vcmp.eq.s32.totalorder %v605, %v1433
          %vm1709 = vcmp.eq.s32.totalorder %v605, %v1437
          %vm1710 = vcmp.eq.s32.totalorder %v605, %v1441
          %vm1711 = vcmp.eq.s32.totalorder %v605, %v1445
          %vm1712 = vcmp.eq.s32.totalorder %v605, %v1449
          %vm1713 = vcmp.eq.s32.totalorder %v605, %v1453
          %vm1714 = vcmp.eq.s32.totalorder %v605, %v1457
          %vm1715 = vcmp.eq.s32.totalorder %v605, %v1461
          %vm1716 = vcmp.eq.s32.totalorder %v605, %v1465
          %vm1717 = vcmp.eq.s32.totalorder %v605, %v1469
          %vm1718 = vcmp.eq.s32.totalorder %v605, %v1473
          %vm1719 = vcmp.eq.s32.totalorder %v605, %v1477
          %vm1720 = vcmp.eq.s32.totalorder %v605, %v1481
          %vm1721 = vcmp.eq.s32.totalorder %v605, %v1485
          %vm1722 = vcmp.eq.s32.totalorder %v605, %v1489
          %vm1723 = vcmp.eq.s32.totalorder %v605, %v1493
          %vm1724 = vcmp.eq.s32.totalorder %v605, %v1497
          %vm1725 = vcmp.eq.s32.totalorder %v605, %v1501
          %vm1726 = vcmp.eq.s32.totalorder %v605, %v1505
          %vm1727 = vcmp.eq.s32.totalorder %v605, %v1509
          %vm1728 = vcmp.eq.s32.totalorder %v605, %v1513
          %vm1729 = vcmp.eq.s32.totalorder %v605, %v1517
          %vm1730 = vcmp.eq.s32.totalorder %v605, %v1521
          %vm1731 = vcmp.eq.s32.totalorder %v605, %v1525
          %vm1732 = vcmp.eq.s32.totalorder %v605, %v1529
          %vm1733 = vcmp.eq.s32.totalorder %v605, %v1533
          %vm1734 = vcmp.eq.s32.totalorder %v605, %v1537
          %vm1735 = vcmp.eq.s32.totalorder %v605, %v1541
          %vm1736 = vcmp.eq.s32.totalorder %v605, %v1545
          %vm1737 = vcmp.eq.s32.totalorder %v605, %v1549
          %vm1738 = vcmp.eq.s32.totalorder %v605, %v1553
          %vm1739 = vcmp.eq.s32.totalorder %v605, %v1557
          %vm1740 = vcmp.eq.s32.totalorder %v605, %v1561
          %vm1741 = vcmp.eq.s32.totalorder %v605, %v1565
          %vm1742 = vcmp.eq.s32.totalorder %v605, %v1569
          %vm1743 = vcmp.eq.s32.totalorder %v605, %v1573
          %vm1744 = vcmp.eq.s32.totalorder %v605, %v1577
          %vm1745 = vcmp.eq.s32.totalorder %v605, %v1581
          %vm1746 = vcmp.eq.s32.totalorder %v605, %v1585
          %vm1747 = vcmp.eq.s32.totalorder %v605, %v1589
          %vm1748 = vcmp.eq.s32.totalorder %v605, %v1593
          %vm1749 = vcmp.eq.s32.totalorder %v605, %v1597
          %vm1750 = vcmp.eq.s32.totalorder %v605, %v1601
          %vm1751 = vcmp.eq.s32.totalorder %v605, %v1605
          %vm1752 = vcmp.eq.s32.totalorder %v605, %v1609
          %vm1753 = vcmp.eq.s32.totalorder %v605, %v1613
          %vm1754 = vcmp.eq.s32.totalorder %v605, %v1617
          %vm1755 = vcmp.eq.s32.totalorder %v605, %v1621
          %vm1756 = vcmp.eq.s32.totalorder %v605, %v1625
          %vm1757 = vcmp.eq.s32.totalorder %v605, %v1629
          %v1758 = vsel %vm1630, 1, 0
          %v1759 = vsel %vm1631, 1, 0
          %v1760 = vsel %vm1632, 1, 0
          %v1761 = vsel %vm1633, 1, 0
          %v1762 = vsel %vm1634, 1, 0
          %v1763 = vsel %vm1635, 1, 0
          %v1764 = vsel %vm1636, 1, 0
          %v1765 = vsel %vm1637, 1, 0
          %v1766 = vsel %vm1638, 1, 0
          %v1767 = vsel %vm1639, 1, 0
          %v1768 = vsel %vm1640, 1, 0
          %v1769 = vsel %vm1641, 1, 0
          %v1770 = vsel %vm1642, 1, 0
          %v1771 = vsel %vm1643, 1, 0
          %v1772 = vsel %vm1644, 1, 0
          %v1773 = vsel %vm1645, 1, 0
          %v1774 = vsel %vm1646, 1, 0
          %v1775 = vsel %vm1647, 1, 0
          %v1776 = vsel %vm1648, 1, 0
          %v1777 = vsel %vm1649, 1, 0
          %v1778 = vsel %vm1650, 1, 0
          %v1779 = vsel %vm1651, 1, 0
          %v1780 = vsel %vm1652, 1, 0
          %v1781 = vsel %vm1653, 1, 0
          %v1782 = vsel %vm1654, 1, 0
          %v1783 = vsel %vm1655, 1, 0
          %v1784 = vsel %vm1656, 1, 0
          %v1785 = vsel %vm1657, 1, 0
          %v1786 = vsel %vm1658, 1, 0
          %v1787 = vsel %vm1659, 1, 0
          %v1788 = vsel %vm1660, 1, 0
          %v1789 = vsel %vm1661, 1, 0
          %v1790 = vsel %vm1662, 1, 0
          %v1791 = vsel %vm1663, 1, 0
          %v1792 = vsel %vm1664, 1, 0
          %v1793 = vsel %vm1665, 1, 0
          %v1794 = vsel %vm1666, 1, 0
          %v1795 = vsel %vm1667, 1, 0
          %v1796 = vsel %vm1668, 1, 0
          %v1797 = vsel %vm1669, 1, 0
          %v1798 = vsel %vm1670, 1, 0
          %v1799 = vsel %vm1671, 1, 0
          %v1800 = vsel %vm1672, 1, 0
          %v1801 = vsel %vm1673, 1, 0
          %v1802 = vsel %vm1674, 1, 0
          %v1803 = vsel %vm1675, 1, 0
          %v1804 = vsel %vm1676, 1, 0
          %v1805 = vsel %vm1677, 1, 0
          %v1806 = vsel %vm1678, 1, 0
          %v1807 = vsel %vm1679, 1, 0
          %v1808 = vsel %vm1680, 1, 0
          %v1809 = vsel %vm1681, 1, 0
          %v1810 = vsel %vm1682, 1, 0
          %v1811 = vsel %vm1683, 1, 0
          %v1812 = vsel %vm1684, 1, 0
          %v1813 = vsel %vm1685, 1, 0
          %v1814 = vsel %vm1686, 1, 0
          %v1815 = vsel %vm1687, 1, 0
          %v1816 = vsel %vm1688, 1, 0
          %v1817 = vsel %vm1689, 1, 0
          %v1818 = vsel %vm1690, 1, 0
          %v1819 = vsel %vm1691, 1, 0
          %v1820 = vsel %vm1692, 1, 0
          %v1821 = vsel %vm1693, 1, 0
          %v1822 = vsel %vm1694, 1, 0
          %v1823 = vsel %vm1695, 1, 0
          %v1824 = vsel %vm1696, 1, 0
          %v1825 = vsel %vm1697, 1, 0
          %v1826 = vsel %vm1698, 1, 0
          %v1827 = vsel %vm1699, 1, 0
          %v1828 = vsel %vm1700, 1, 0
          %v1829 = vsel %vm1701, 1, 0
          %v1830 = vsel %vm1702, 1, 0
          %v1831 = vsel %vm1703, 1, 0
          %v1832 = vsel %vm1704, 1, 0
          %v1833 = vsel %vm1705, 1, 0
          %v1834 = vsel %vm1706, 1, 0
          %v1835 = vsel %vm1707, 1, 0
          %v1836 = vsel %vm1708, 1, 0
          %v1837 = vsel %vm1709, 1, 0
          %v1838 = vsel %vm1710, 1, 0
          %v1839 = vsel %vm1711, 1, 0
          %v1840 = vsel %vm1712, 1, 0
          %v1841 = vsel %vm1713, 1, 0
          %v1842 = vsel %vm1714, 1, 0
          %v1843 = vsel %vm1715, 1, 0
          %v1844 = vsel %vm1716, 1, 0
          %v1845 = vsel %vm1717, 1, 0
          %v1846 = vsel %vm1718, 1, 0
          %v1847 = vsel %vm1719, 1, 0
          %v1848 = vsel %vm1720, 1, 0
          %v1849 = vsel %vm1721, 1, 0
          %v1850 = vsel %vm1722, 1, 0
          %v1851 = vsel %vm1723, 1, 0
          %v1852 = vsel %vm1724, 1, 0
          %v1853 = vsel %vm1725, 1, 0
          %v1854 = vsel %vm1726, 1, 0
          %v1855 = vsel %vm1727, 1, 0
          %v1856 = vsel %vm1728, 1, 0
          %v1857 = vsel %vm1729, 1, 0
          %v1858 = vsel %vm1730, 1, 0
          %v1859 = vsel %vm1731, 1, 0
          %v1860 = vsel %vm1732, 1, 0
          %v1861 = vsel %vm1733, 1, 0
          %v1862 = vsel %vm1734, 1, 0
          %v1863 = vsel %vm1735, 1, 0
          %v1864 = vsel %vm1736, 1, 0
          %v1865 = vsel %vm1737, 1, 0
          %v1866 = vsel %vm1738, 1, 0
          %v1867 = vsel %vm1739, 1, 0
          %v1868 = vsel %vm1740, 1, 0
          %v1869 = vsel %vm1741, 1, 0
          %v1870 = vsel %vm1742, 1, 0
          %v1871 = vsel %vm1743, 1, 0
          %v1872 = vsel %vm1744, 1, 0
          %v1873 = vsel %vm1745, 1, 0
          %v1874 = vsel %vm1746, 1, 0
          %v1875 = vsel %vm1747, 1, 0
          %v1876 = vsel %vm1748, 1, 0
          %v1877 = vsel %vm1749, 1, 0
          %v1878 = vsel %vm1750, 1, 0
          %v1879 = vsel %vm1751, 1, 0
          %v1880 = vsel %vm1752, 1, 0
          %v1881 = vsel %vm1753, 1, 0
          %v1882 = vsel %vm1754, 1, 0
          %v1883 = vsel %vm1755, 1, 0
          %v1884 = vsel %vm1756, 1, 0
          %v1885 = vsel %vm1757, 1, 0
          %v1886 = vcvt.s32.f32 %v1758
          %v1887 = vcvt.s32.f32 %v1759
          %v1888 = vcvt.s32.f32 %v1760
          %v1889 = vcvt.s32.f32 %v1761
          %v1890 = vcvt.s32.f32 %v1762
          %v1891 = vcvt.s32.f32 %v1763
          %v1892 = vcvt.s32.f32 %v1764
          %v1893 = vcvt.s32.f32 %v1765
          %v1894 = vcvt.s32.f32 %v1766
          %v1895 = vcvt.s32.f32 %v1767
          %v1896 = vcvt.s32.f32 %v1768
          %v1897 = vcvt.s32.f32 %v1769
          %v1898 = vcvt.s32.f32 %v1770
          %v1899 = vcvt.s32.f32 %v1771
          %v1900 = vcvt.s32.f32 %v1772
          %v1901 = vcvt.s32.f32 %v1773
          %v1902 = vcvt.s32.f32 %v1774
          %v1903 = vcvt.s32.f32 %v1775
          %v1904 = vcvt.s32.f32 %v1776
          %v1905 = vcvt.s32.f32 %v1777
          %v1906 = vcvt.s32.f32 %v1778
          %v1907 = vcvt.s32.f32 %v1779
          %v1908 = vcvt.s32.f32 %v1780
          %v1909 = vcvt.s32.f32 %v1781
          %v1910 = vcvt.s32.f32 %v1782
          %v1911 = vcvt.s32.f32 %v1783
          %v1912 = vcvt.s32.f32 %v1784
          %v1913 = vcvt.s32.f32 %v1785
          %v1914 = vcvt.s32.f32 %v1786
          %v1915 = vcvt.s32.f32 %v1787
          %v1916 = vcvt.s32.f32 %v1788
          %v1917 = vcvt.s32.f32 %v1789
          %v1918 = vcvt.s32.f32 %v1790
          %v1919 = vcvt.s32.f32 %v1791
          %v1920 = vcvt.s32.f32 %v1792
          %v1921 = vcvt.s32.f32 %v1793
          %v1922 = vcvt.s32.f32 %v1794
          %v1923 = vcvt.s32.f32 %v1795
          %v1924 = vcvt.s32.f32 %v1796
          %v1925 = vcvt.s32.f32 %v1797
          %v1926 = vcvt.s32.f32 %v1798
          %v1927 = vcvt.s32.f32 %v1799
          %v1928 = vcvt.s32.f32 %v1800
          %v1929 = vcvt.s32.f32 %v1801
          %v1930 = vcvt.s32.f32 %v1802
          %v1931 = vcvt.s32.f32 %v1803
          %v1932 = vcvt.s32.f32 %v1804
          %v1933 = vcvt.s32.f32 %v1805
          %v1934 = vcvt.s32.f32 %v1806
          %v1935 = vcvt.s32.f32 %v1807
          %v1936 = vcvt.s32.f32 %v1808
          %v1937 = vcvt.s32.f32 %v1809
          %v1938 = vcvt.s32.f32 %v1810
          %v1939 = vcvt.s32.f32 %v1811
          %v1940 = vcvt.s32.f32 %v1812
          %v1941 = vcvt.s32.f32 %v1813
          %v1942 = vcvt.s32.f32 %v1814
          %v1943 = vcvt.s32.f32 %v1815
          %v1944 = vcvt.s32.f32 %v1816
          %v1945 = vcvt.s32.f32 %v1817
          %v1946 = vcvt.s32.f32 %v1818
          %v1947 = vcvt.s32.f32 %v1819
          %v1948 = vcvt.s32.f32 %v1820
          %v1949 = vcvt.s32.f32 %v1821
          %v1950 = vcvt.s32.f32 %v1822
          %v1951 = vcvt.s32.f32 %v1823
          %v1952 = vcvt.s32.f32 %v1824
          %v1953 = vcvt.s32.f32 %v1825
          %v1954 = vcvt.s32.f32 %v1826
          %v1955 = vcvt.s32.f32 %v1827
          %v1956 = vcvt.s32.f32 %v1828
          %v1957 = vcvt.s32.f32 %v1829
          %v1958 = vcvt.s32.f32 %v1830
          %v1959 = vcvt.s32.f32 %v1831
          %v1960 = vcvt.s32.f32 %v1832
          %v1961 = vcvt.s32.f32 %v1833
          %v1962 = vcvt.s32.f32 %v1834
          %v1963 = vcvt.s32.f32 %v1835
          %v1964 = vcvt.s32.f32 %v1836
          %v1965 = vcvt.s32.f32 %v1837
          %v1966 = vcvt.s32.f32 %v1838
          %v1967 = vcvt.s32.f32 %v1839
          %v1968 = vcvt.s32.f32 %v1840
          %v1969 = vcvt.s32.f32 %v1841
          %v1970 = vcvt.s32.f32 %v1842
          %v1971 = vcvt.s32.f32 %v1843
          %v1972 = vcvt.s32.f32 %v1844
          %v1973 = vcvt.s32.f32 %v1845
          %v1974 = vcvt.s32.f32 %v1846
          %v1975 = vcvt.s32.f32 %v1847
          %v1976 = vcvt.s32.f32 %v1848
          %v1977 = vcvt.s32.f32 %v1849
          %v1978 = vcvt.s32.f32 %v1850
          %v1979 = vcvt.s32.f32 %v1851
          %v1980 = vcvt.s32.f32 %v1852
          %v1981 = vcvt.s32.f32 %v1853
          %v1982 = vcvt.s32.f32 %v1854
          %v1983 = vcvt.s32.f32 %v1855
          %v1984 = vcvt.s32.f32 %v1856
          %v1985 = vcvt.s32.f32 %v1857
          %v1986 = vcvt.s32.f32 %v1858
          %v1987 = vcvt.s32.f32 %v1859
          %v1988 = vcvt.s32.f32 %v1860
          %v1989 = vcvt.s32.f32 %v1861
          %v1990 = vcvt.s32.f32 %v1862
          %v1991 = vcvt.s32.f32 %v1863
          %v1992 = vcvt.s32.f32 %v1864
          %v1993 = vcvt.s32.f32 %v1865
          %v1994 = vcvt.s32.f32 %v1866
          %v1995 = vcvt.s32.f32 %v1867
          %v1996 = vcvt.s32.f32 %v1868
          %v1997 = vcvt.s32.f32 %v1869
          %v1998 = vcvt.s32.f32 %v1870
          %v1999 = vcvt.s32.f32 %v1871
          %v2000 = vcvt.s32.f32 %v1872
          %v2001 = vcvt.s32.f32 %v1873
          %v2002 = vcvt.s32.f32 %v1874
          %v2003 = vcvt.s32.f32 %v1875
          %v2004 = vcvt.s32.f32 %v1876
          %v2005 = vcvt.s32.f32 %v1877
          %v2006 = vcvt.s32.f32 %v1878
          %v2007 = vcvt.s32.f32 %v1879
          %v2008 = vcvt.s32.f32 %v1880
          %v2009 = vcvt.s32.f32 %v1881
          %v2010 = vcvt.s32.f32 %v1882
          %v2011 = vcvt.s32.f32 %v1883
          %v2012 = vcvt.s32.f32 %v1884
          %v2013 = vcvt.s32.f32 %v1885
          %v2014 = vand.u32 2147483647, %v332
          %v2015 = vand.u32 2147483647, %v333
          %v2016 = vand.u32 2147483647, %v334
          %v2017 = vand.u32 2147483647, %v335
          %v2018 = vand.u32 2147483647, %v336
          %v2019 = vand.u32 2147483647, %v337
          %v2020 = vand.u32 2147483647, %v338
          %v2021 = vand.u32 2147483647, %v339
          %v2022 = vand.u32 2147483647, %v340
          %v2023 = vand.u32 2147483647, %v341
          %v2024 = vand.u32 2147483647, %v342
          %v2025 = vand.u32 2147483647, %v343
          %v2026 = vand.u32 2147483647, %v344
          %v2027 = vand.u32 2147483647, %v345
          %v2028 = vand.u32 2147483647, %v346
          %v2029 = vand.u32 2147483647, %v347
          %v2030 = vand.u32 2147483647, %v348
          %v2031 = vand.u32 2147483647, %v349
          %v2032 = vand.u32 2147483647, %v350
          %v2033 = vand.u32 2147483647, %v351
          %v2034 = vand.u32 2147483647, %v352
          %v2035 = vand.u32 2147483647, %v353
          %v2036 = vand.u32 2147483647, %v354
          %v2037 = vand.u32 2147483647, %v355
          %v2038 = vand.u32 2147483647, %v356
          %v2039 = vand.u32 2147483647, %v357
          %v2040 = vand.u32 2147483647, %v358
          %v2041 = vand.u32 2147483647, %v359
          %v2042 = vand.u32 2147483647, %v360
          %v2043 = vand.u32 2147483647, %v361
          %v2044 = vand.u32 2147483647, %v362
          %v2045 = vand.u32 2147483647, %v363
          %v2046 = vand.u32 2147483647, %v364
          %v2047 = vand.u32 2147483647, %v365
          %v2048 = vand.u32 2147483647, %v366
          %v2049 = vand.u32 2147483647, %v367
          %v2050 = vand.u32 2147483647, %v368
          %v2051 = vand.u32 2147483647, %v369
          %v2052 = vand.u32 2147483647, %v370
          %v2053 = vand.u32 2147483647, %v371
          %v2054 = vand.u32 2147483647, %v372
          %v2055 = vand.u32 2147483647, %v373
          %v2056 = vand.u32 2147483647, %v374
          %v2057 = vand.u32 2147483647, %v375
          %v2058 = vand.u32 2147483647, %v376
          %v2059 = vand.u32 2147483647, %v377
          %v2060 = vand.u32 2147483647, %v378
          %v2061 = vand.u32 2147483647, %v379
          %v2062 = vand.u32 2147483647, %v380
          %v2063 = vand.u32 2147483647, %v381
          %v2064 = vand.u32 2147483647, %v382
          %v2065 = vand.u32 2147483647, %v383
          %v2066 = vand.u32 2147483647, %v384
          %v2067 = vand.u32 2147483647, %v385
          %v2068 = vand.u32 2147483647, %v386
          %v2069 = vand.u32 2147483647, %v387
          %v2070 = vand.u32 2147483647, %v388
          %v2071 = vand.u32 2147483647, %v389
          %v2072 = vand.u32 2147483647, %v390
          %v2073 = vand.u32 2147483647, %v391
          %v2074 = vand.u32 2147483647, %v392
          %v2075 = vand.u32 2147483647, %v393
          %v2076 = vand.u32 2147483647, %v394
          %v2077 = vand.u32 2147483647, %v395
          %v2078 = vand.u32 2147483647, %v396
          %v2079 = vand.u32 2147483647, %v397
          %v2080 = vand.u32 2147483647, %v398
          %v2081 = vand.u32 2147483647, %v399
          %v2082 = vand.u32 2147483647, %v400
          %v2083 = vand.u32 2147483647, %v401
          %v2084 = vand.u32 2147483647, %v402
          %v2085 = vand.u32 2147483647, %v403
          %v2086 = vand.u32 2147483647, %v404
          %v2087 = vand.u32 2147483647, %v405
          %v2088 = vand.u32 2147483647, %v406
          %v2089 = vand.u32 2147483647, %v407
          %v2090 = vand.u32 2147483647, %v408
          %v2091 = vand.u32 2147483647, %v409
          %v2092 = vand.u32 2147483647, %v410
          %v2093 = vand.u32 2147483647, %v411
          %v2094 = vand.u32 2147483647, %v412
          %v2095 = vand.u32 2147483647, %v413
          %v2096 = vand.u32 2147483647, %v414
          %v2097 = vand.u32 2147483647, %v415
          %v2098 = vand.u32 2147483647, %v416
          %v2099 = vand.u32 2147483647, %v417
          %v2100 = vand.u32 2147483647, %v418
          %v2101 = vand.u32 2147483647, %v419
          %v2102 = vand.u32 2147483647, %v420
          %v2103 = vand.u32 2147483647, %v421
          %v2104 = vand.u32 2147483647, %v422
          %v2105 = vand.u32 2147483647, %v423
          %v2106 = vand.u32 2147483647, %v424
          %v2107 = vand.u32 2147483647, %v425
          %v2108 = vand.u32 2147483647, %v426
          %v2109 = vand.u32 2147483647, %v427
          %v2110 = vand.u32 2147483647, %v428
          %v2111 = vand.u32 2147483647, %v429
          %v2112 = vand.u32 2147483647, %v430
          %v2113 = vand.u32 2147483647, %v431
          %v2114 = vand.u32 2147483647, %v432
          %v2115 = vand.u32 2147483647, %v433
          %v2116 = vand.u32 2147483647, %v434
          %v2117 = vand.u32 2147483647, %v435
          %v2118 = vand.u32 2147483647, %v436
          %v2119 = vand.u32 2147483647, %v437
          %v2120 = vand.u32 2147483647, %v438
          %v2121 = vand.u32 2147483647, %v439
          %v2122 = vand.u32 2147483647, %v440
          %v2123 = vand.u32 2147483647, %v441
          %v2124 = vand.u32 2147483647, %v442
          %v2125 = vand.u32 2147483647, %v443
          %v2126 = vand.u32 2147483647, %v444
          %v2127 = vand.u32 2147483647, %v445
          %v2128 = vand.u32 2147483647, %v446
          %v2129 = vand.u32 2147483647, %v447
          %v2130 = vand.u32 2147483647, %v448
          %v2131 = vand.u32 2147483647, %v449
          %v2132 = vand.u32 2147483647, %v450
          %v2133 = vand.u32 2147483647, %v451
          %v2134 = vand.u32 2147483647, %v452
          %v2135 = vand.u32 2147483647, %v453
          %v2136 = vand.u32 2147483647, %v454
          %v2137 = vand.u32 2147483647, %v455
          %v2138 = vand.u32 2147483647, %v456
          %v2139 = vand.u32 2147483647, %v457
          %v2140 = vand.u32 2147483647, %v458
          %v2141 = vand.u32 2147483647, %v459
          %v2142 = vsub.f32 0.0, %v2014
          %v2143 = vsub.f32 0.0, %v2015
          %v2144 = vsub.f32 0.0, %v2016
          %v2145 = vsub.f32 0.0, %v2017
          %v2146 = vsub.f32 0.0, %v2018
          %v2147 = vsub.f32 0.0, %v2019
          %v2148 = vsub.f32 0.0, %v2020
          %v2149 = vsub.f32 0.0, %v2021
          %v2150 = vsub.f32 0.0, %v2022
          %v2151 = vsub.f32 0.0, %v2023
          %v2152 = vsub.f32 0.0, %v2024
          %v2153 = vsub.f32 0.0, %v2025
          %v2154 = vsub.f32 0.0, %v2026
          %v2155 = vsub.f32 0.0, %v2027
          %v2156 = vsub.f32 0.0, %v2028
          %v2157 = vsub.f32 0.0, %v2029
          %v2158 = vsub.f32 0.0, %v2030
          %v2159 = vsub.f32 0.0, %v2031
          %v2160 = vsub.f32 0.0, %v2032
          %v2161 = vsub.f32 0.0, %v2033
          %v2162 = vsub.f32 0.0, %v2034
          %v2163 = vsub.f32 0.0, %v2035
          %v2164 = vsub.f32 0.0, %v2036
          %v2165 = vsub.f32 0.0, %v2037
          %v2166 = vsub.f32 0.0, %v2038
          %v2167 = vsub.f32 0.0, %v2039
          %v2168 = vsub.f32 0.0, %v2040
          %v2169 = vsub.f32 0.0, %v2041
          %v2170 = vsub.f32 0.0, %v2042
          %v2171 = vsub.f32 0.0, %v2043
          %v2172 = vsub.f32 0.0, %v2044
          %v2173 = vsub.f32 0.0, %v2045
          %v2174 = vsub.f32 0.0, %v2046
          %v2175 = vsub.f32 0.0, %v2047
          %v2176 = vsub.f32 0.0, %v2048
          %v2177 = vsub.f32 0.0, %v2049
          %v2178 = vsub.f32 0.0, %v2050
          %v2179 = vsub.f32 0.0, %v2051
          %v2180 = vsub.f32 0.0, %v2052
          %v2181 = vsub.f32 0.0, %v2053
          %v2182 = vsub.f32 0.0, %v2054
          %v2183 = vsub.f32 0.0, %v2055
          %v2184 = vsub.f32 0.0, %v2056
          %v2185 = vsub.f32 0.0, %v2057
          %v2186 = vsub.f32 0.0, %v2058
          %v2187 = vsub.f32 0.0, %v2059
          %v2188 = vsub.f32 0.0, %v2060
          %v2189 = vsub.f32 0.0, %v2061
          %v2190 = vsub.f32 0.0, %v2062
          %v2191 = vsub.f32 0.0, %v2063
          %v2192 = vsub.f32 0.0, %v2064
          %v2193 = vsub.f32 0.0, %v2065
          %v2194 = vsub.f32 0.0, %v2066
          %v2195 = vsub.f32 0.0, %v2067
          %v2196 = vsub.f32 0.0, %v2068
          %v2197 = vsub.f32 0.0, %v2069
          %v2198 = vsub.f32 0.0, %v2070
          %v2199 = vsub.f32 0.0, %v2071
          %v2200 = vsub.f32 0.0, %v2072
          %v2201 = vsub.f32 0.0, %v2073
          %v2202 = vsub.f32 0.0, %v2074
          %v2203 = vsub.f32 0.0, %v2075
          %v2204 = vsub.f32 0.0, %v2076
          %v2205 = vsub.f32 0.0, %v2077
          %v2206 = vsub.f32 0.0, %v2078
          %v2207 = vsub.f32 0.0, %v2079
          %v2208 = vsub.f32 0.0, %v2080
          %v2209 = vsub.f32 0.0, %v2081
          %v2210 = vsub.f32 0.0, %v2082
          %v2211 = vsub.f32 0.0, %v2083
          %v2212 = vsub.f32 0.0, %v2084
          %v2213 = vsub.f32 0.0, %v2085
          %v2214 = vsub.f32 0.0, %v2086
          %v2215 = vsub.f32 0.0, %v2087
          %v2216 = vsub.f32 0.0, %v2088
          %v2217 = vsub.f32 0.0, %v2089
          %v2218 = vsub.f32 0.0, %v2090
          %v2219 = vsub.f32 0.0, %v2091
          %v2220 = vsub.f32 0.0, %v2092
          %v2221 = vsub.f32 0.0, %v2093
          %v2222 = vsub.f32 0.0, %v2094
          %v2223 = vsub.f32 0.0, %v2095
          %v2224 = vsub.f32 0.0, %v2096
          %v2225 = vsub.f32 0.0, %v2097
          %v2226 = vsub.f32 0.0, %v2098
          %v2227 = vsub.f32 0.0, %v2099
          %v2228 = vsub.f32 0.0, %v2100
          %v2229 = vsub.f32 0.0, %v2101
          %v2230 = vsub.f32 0.0, %v2102
          %v2231 = vsub.f32 0.0, %v2103
          %v2232 = vsub.f32 0.0, %v2104
          %v2233 = vsub.f32 0.0, %v2105
          %v2234 = vsub.f32 0.0, %v2106
          %v2235 = vsub.f32 0.0, %v2107
          %v2236 = vsub.f32 0.0, %v2108
          %v2237 = vsub.f32 0.0, %v2109
          %v2238 = vsub.f32 0.0, %v2110
          %v2239 = vsub.f32 0.0, %v2111
          %v2240 = vsub.f32 0.0, %v2112
          %v2241 = vsub.f32 0.0, %v2113
          %v2242 = vsub.f32 0.0, %v2114
          %v2243 = vsub.f32 0.0, %v2115
          %v2244 = vsub.f32 0.0, %v2116
          %v2245 = vsub.f32 0.0, %v2117
          %v2246 = vsub.f32 0.0, %v2118
          %v2247 = vsub.f32 0.0, %v2119
          %v2248 = vsub.f32 0.0, %v2120
          %v2249 = vsub.f32 0.0, %v2121
          %v2250 = vsub.f32 0.0, %v2122
          %v2251 = vsub.f32 0.0, %v2123
          %v2252 = vsub.f32 0.0, %v2124
          %v2253 = vsub.f32 0.0, %v2125
          %v2254 = vsub.f32 0.0, %v2126
          %v2255 = vsub.f32 0.0, %v2127
          %v2256 = vsub.f32 0.0, %v2128
          %v2257 = vsub.f32 0.0, %v2129
          %v2258 = vsub.f32 0.0, %v2130
          %v2259 = vsub.f32 0.0, %v2131
          %v2260 = vsub.f32 0.0, %v2132
          %v2261 = vsub.f32 0.0, %v2133
          %v2262 = vsub.f32 0.0, %v2134
          %v2263 = vsub.f32 0.0, %v2135
          %v2264 = vsub.f32 0.0, %v2136
          %v2265 = vsub.f32 0.0, %v2137
          %v2266 = vsub.f32 0.0, %v2138
          %v2267 = vsub.f32 0.0, %v2139
          %v2268 = vsub.f32 0.0, %v2140
          %v2269 = vsub.f32 0.0, %v2141
          %v2270 = vmul.f32 %v2142, 1.442695
          %v2271 = vpow.pop %v2270
          %v2272 = vmul.f32 %v2143, 1.442695
          %v2273 = vpow.pop %v2272
          %v2274 = vmul.f32 %v2144, 1.442695
          %v2275 = vpow.pop %v2274
          %v2276 = vmul.f32 %v2145, 1.442695
          %v2277 = vpow.pop %v2276
          %v2278 = vmul.f32 %v2146, 1.442695
          %v2279 = vpow.pop %v2278
          %v2280 = vmul.f32 %v2147, 1.442695
          %v2281 = vpow.pop %v2280
          %v2282 = vmul.f32 %v2148, 1.442695
          %v2283 = vpow.pop %v2282
          %v2284 = vmul.f32 %v2149, 1.442695
          %v2285 = vpow.pop %v2284
          %v2286 = vmul.f32 %v2150, 1.442695
          %v2287 = vpow.pop %v2286
          %v2288 = vmul.f32 %v2151, 1.442695
          %v2289 = vpow.pop %v2288
          %v2290 = vmul.f32 %v2152, 1.442695
          %v2291 = vpow.pop %v2290
          %v2292 = vmul.f32 %v2153, 1.442695
          %v2293 = vpow.pop %v2292
          %v2294 = vmul.f32 %v2154, 1.442695
          %v2295 = vpow.pop %v2294
          %v2296 = vmul.f32 %v2155, 1.442695
          %v2297 = vpow.pop %v2296
          %v2298 = vmul.f32 %v2156, 1.442695
          %v2299 = vpow.pop %v2298
          %v2300 = vmul.f32 %v2157, 1.442695
          %v2301 = vpow.pop %v2300
          %v2302 = vmul.f32 %v2158, 1.442695
          %v2303 = vpow.pop %v2302
          %v2304 = vmul.f32 %v2159, 1.442695
          %v2305 = vpow.pop %v2304
          %v2306 = vmul.f32 %v2160, 1.442695
          %v2307 = vpow.pop %v2306
          %v2308 = vmul.f32 %v2161, 1.442695
          %v2309 = vpow.pop %v2308
          %v2310 = vmul.f32 %v2162, 1.442695
          %v2311 = vpow.pop %v2310
          %v2312 = vmul.f32 %v2163, 1.442695
          %v2313 = vpow.pop %v2312
          %v2314 = vmul.f32 %v2164, 1.442695
          %v2315 = vpow.pop %v2314
          %v2316 = vmul.f32 %v2165, 1.442695
          %v2317 = vpow.pop %v2316
          %v2318 = vmul.f32 %v2166, 1.442695
          %v2319 = vpow.pop %v2318
          %v2320 = vmul.f32 %v2167, 1.442695
          %v2321 = vpow.pop %v2320
          %v2322 = vmul.f32 %v2168, 1.442695
          %v2323 = vpow.pop %v2322
          %v2324 = vmul.f32 %v2169, 1.442695
          %v2325 = vpow.pop %v2324
          %v2326 = vmul.f32 %v2170, 1.442695
          %v2327 = vpow.pop %v2326
          %v2328 = vmul.f32 %v2171, 1.442695
          %v2329 = vpow.pop %v2328
          %v2330 = vmul.f32 %v2172, 1.442695
          %v2331 = vpow.pop %v2330
          %v2332 = vmul.f32 %v2173, 1.442695
          %v2333 = vpow.pop %v2332
          %v2334 = vmul.f32 %v2174, 1.442695
          %v2335 = vpow.pop %v2334
          %v2336 = vmul.f32 %v2175, 1.442695
          %v2337 = vpow.pop %v2336
          %v2338 = vmul.f32 %v2176, 1.442695
          %v2339 = vpow.pop %v2338
          %v2340 = vmul.f32 %v2177, 1.442695
          %v2341 = vpow.pop %v2340
          %v2342 = vmul.f32 %v2178, 1.442695
          %v2343 = vpow.pop %v2342
          %v2344 = vmul.f32 %v2179, 1.442695
          %v2345 = vpow.pop %v2344
          %v2346 = vmul.f32 %v2180, 1.442695
          %v2347 = vpow.pop %v2346
          %v2348 = vmul.f32 %v2181, 1.442695
          %v2349 = vpow.pop %v2348
          %v2350 = vmul.f32 %v2182, 1.442695
          %v2351 = vpow.pop %v2350
          %v2352 = vmul.f32 %v2183, 1.442695
          %v2353 = vpow.pop %v2352
          %v2354 = vmul.f32 %v2184, 1.442695
          %v2355 = vpow.pop %v2354
          %v2356 = vmul.f32 %v2185, 1.442695
          %v2357 = vpow.pop %v2356
          %v2358 = vmul.f32 %v2186, 1.442695
          %v2359 = vpow.pop %v2358
          %v2360 = vmul.f32 %v2187, 1.442695
          %v2361 = vpow.pop %v2360
          %v2362 = vmul.f32 %v2188, 1.442695
          %v2363 = vpow.pop %v2362
          %v2364 = vmul.f32 %v2189, 1.442695
          %v2365 = vpow.pop %v2364
          %v2366 = vmul.f32 %v2190, 1.442695
          %v2367 = vpow.pop %v2366
          %v2368 = vmul.f32 %v2191, 1.442695
          %v2369 = vpow.pop %v2368
          %v2370 = vmul.f32 %v2192, 1.442695
          %v2371 = vpow.pop %v2370
          %v2372 = vmul.f32 %v2193, 1.442695
          %v2373 = vpow.pop %v2372
          %v2374 = vmul.f32 %v2194, 1.442695
          %v2375 = vpow.pop %v2374
          %v2376 = vmul.f32 %v2195, 1.442695
          %v2377 = vpow.pop %v2376
          %v2378 = vmul.f32 %v2196, 1.442695
          %v2379 = vpow.pop %v2378
          %v2380 = vmul.f32 %v2197, 1.442695
          %v2381 = vpow.pop %v2380
          %v2382 = vmul.f32 %v2198, 1.442695
          %v2383 = vpow.pop %v2382
          %v2384 = vmul.f32 %v2199, 1.442695
          %v2385 = vpow.pop %v2384
          %v2386 = vmul.f32 %v2200, 1.442695
          %v2387 = vpow.pop %v2386
          %v2388 = vmul.f32 %v2201, 1.442695
          %v2389 = vpow.pop %v2388
          %v2390 = vmul.f32 %v2202, 1.442695
          %v2391 = vpow.pop %v2390
          %v2392 = vmul.f32 %v2203, 1.442695
          %v2393 = vpow.pop %v2392
          %v2394 = vmul.f32 %v2204, 1.442695
          %v2395 = vpow.pop %v2394
          %v2396 = vmul.f32 %v2205, 1.442695
          %v2397 = vpow.pop %v2396
          %v2398 = vmul.f32 %v2206, 1.442695
          %v2399 = vpow.pop %v2398
          %v2400 = vmul.f32 %v2207, 1.442695
          %v2401 = vpow.pop %v2400
          %v2402 = vmul.f32 %v2208, 1.442695
          %v2403 = vpow.pop %v2402
          %v2404 = vmul.f32 %v2209, 1.442695
          %v2405 = vpow.pop %v2404
          %v2406 = vmul.f32 %v2210, 1.442695
          %v2407 = vpow.pop %v2406
          %v2408 = vmul.f32 %v2211, 1.442695
          %v2409 = vpow.pop %v2408
          %v2410 = vmul.f32 %v2212, 1.442695
          %v2411 = vpow.pop %v2410
          %v2412 = vmul.f32 %v2213, 1.442695
          %v2413 = vpow.pop %v2412
          %v2414 = vmul.f32 %v2214, 1.442695
          %v2415 = vpow.pop %v2414
          %v2416 = vmul.f32 %v2215, 1.442695
          %v2417 = vpow.pop %v2416
          %v2418 = vmul.f32 %v2216, 1.442695
          %v2419 = vpow.pop %v2418
          %v2420 = vmul.f32 %v2217, 1.442695
          %v2421 = vpow.pop %v2420
          %v2422 = vmul.f32 %v2218, 1.442695
          %v2423 = vpow.pop %v2422
          %v2424 = vmul.f32 %v2219, 1.442695
          %v2425 = vpow.pop %v2424
          %v2426 = vmul.f32 %v2220, 1.442695
          %v2427 = vpow.pop %v2426
          %v2428 = vmul.f32 %v2221, 1.442695
          %v2429 = vpow.pop %v2428
          %v2430 = vmul.f32 %v2222, 1.442695
          %v2431 = vpow.pop %v2430
          %v2432 = vmul.f32 %v2223, 1.442695
          %v2433 = vpow.pop %v2432
          %v2434 = vmul.f32 %v2224, 1.442695
          %v2435 = vpow.pop %v2434
          %v2436 = vmul.f32 %v2225, 1.442695
          %v2437 = vpow.pop %v2436
          %v2438 = vmul.f32 %v2226, 1.442695
          %v2439 = vpow.pop %v2438
          %v2440 = vmul.f32 %v2227, 1.442695
          %v2441 = vpow.pop %v2440
          %v2442 = vmul.f32 %v2228, 1.442695
          %v2443 = vpow.pop %v2442
          %v2444 = vmul.f32 %v2229, 1.442695
          %v2445 = vpow.pop %v2444
          %v2446 = vmul.f32 %v2230, 1.442695
          %v2447 = vpow.pop %v2446
          %v2448 = vmul.f32 %v2231, 1.442695
          %v2449 = vpow.pop %v2448
          %v2450 = vmul.f32 %v2232, 1.442695
          %v2451 = vpow.pop %v2450
          %v2452 = vmul.f32 %v2233, 1.442695
          %v2453 = vpow.pop %v2452
          %v2454 = vmul.f32 %v2234, 1.442695
          %v2455 = vpow.pop %v2454
          %v2456 = vmul.f32 %v2235, 1.442695
          %v2457 = vpow.pop %v2456
          %v2458 = vmul.f32 %v2236, 1.442695
          %v2459 = vpow.pop %v2458
          %v2460 = vmul.f32 %v2237, 1.442695
          %v2461 = vpow.pop %v2460
          %v2462 = vmul.f32 %v2238, 1.442695
          %v2463 = vpow.pop %v2462
          %v2464 = vmul.f32 %v2239, 1.442695
          %v2465 = vpow.pop %v2464
          %v2466 = vmul.f32 %v2240, 1.442695
          %v2467 = vpow.pop %v2466
          %v2468 = vmul.f32 %v2241, 1.442695
          %v2469 = vpow.pop %v2468
          %v2470 = vmul.f32 %v2242, 1.442695
          %v2471 = vpow.pop %v2470
          %v2472 = vmul.f32 %v2243, 1.442695
          %v2473 = vpow.pop %v2472
          %v2474 = vmul.f32 %v2244, 1.442695
          %v2475 = vpow.pop %v2474
          %v2476 = vmul.f32 %v2245, 1.442695
          %v2477 = vpow.pop %v2476
          %v2478 = vmul.f32 %v2246, 1.442695
          %v2479 = vpow.pop %v2478
          %v2480 = vmul.f32 %v2247, 1.442695
          %v2481 = vpow.pop %v2480
          %v2482 = vmul.f32 %v2248, 1.442695
          %v2483 = vpow.pop %v2482
          %v2484 = vmul.f32 %v2249, 1.442695
          %v2485 = vpow.pop %v2484
          %v2486 = vmul.f32 %v2250, 1.442695
          %v2487 = vpow.pop %v2486
          %v2488 = vmul.f32 %v2251, 1.442695
          %v2489 = vpow.pop %v2488
          %v2490 = vmul.f32 %v2252, 1.442695
          %v2491 = vpow.pop %v2490
          %v2492 = vmul.f32 %v2253, 1.442695
          %v2493 = vpow.pop %v2492
          %v2494 = vmul.f32 %v2254, 1.442695
          %v2495 = vpow.pop %v2494
          %v2496 = vmul.f32 %v2255, 1.442695
          %v2497 = vpow.pop %v2496
          %v2498 = vmul.f32 %v2256, 1.442695
          %v2499 = vpow.pop %v2498
          %v2500 = vmul.f32 %v2257, 1.442695
          %v2501 = vpow.pop %v2500
          %v2502 = vmul.f32 %v2258, 1.442695
          %v2503 = vpow.pop %v2502
          %v2504 = vmul.f32 %v2259, 1.442695
          %v2505 = vpow.pop %v2504
          %v2506 = vmul.f32 %v2260, 1.442695
          %v2507 = vpow.pop %v2506
          %v2508 = vmul.f32 %v2261, 1.442695
          %v2509 = vpow.pop %v2508
          %v2510 = vmul.f32 %v2262, 1.442695
          %v2511 = vpow.pop %v2510
          %v2512 = vmul.f32 %v2263, 1.442695
          %v2513 = vpow.pop %v2512
          %v2514 = vmul.f32 %v2264, 1.442695
          %v2515 = vpow.pop %v2514
          %v2516 = vmul.f32 %v2265, 1.442695
          %v2517 = vpow.pop %v2516
          %v2518 = vmul.f32 %v2266, 1.442695
          %v2519 = vpow.pop %v2518
          %v2520 = vmul.f32 %v2267, 1.442695
          %v2521 = vpow.pop %v2520
          %v2522 = vmul.f32 %v2268, 1.442695
          %v2523 = vpow.pop %v2522
          %v2524 = vmul.f32 %v2269, 1.442695
          %v2525 = vpow.pop %v2524
          %v2526 = vmax.f32 %v332, 0.0
          %v2527 = vmax.f32 %v333, 0.0
          %v2528 = vmax.f32 %v334, 0.0
          %v2529 = vmax.f32 %v335, 0.0
          %v2530 = vmax.f32 %v336, 0.0
          %v2531 = vmax.f32 %v337, 0.0
          %v2532 = vmax.f32 %v338, 0.0
          %v2533 = vmax.f32 %v339, 0.0
          %v2534 = vmax.f32 %v340, 0.0
          %v2535 = vmax.f32 %v341, 0.0
          %v2536 = vmax.f32 %v342, 0.0
          %v2537 = vmax.f32 %v343, 0.0
          %v2538 = vmax.f32 %v344, 0.0
          %v2539 = vmax.f32 %v345, 0.0
          %v2540 = vmax.f32 %v346, 0.0
          %v2541 = vmax.f32 %v347, 0.0
          %v2542 = vmax.f32 %v348, 0.0
          %v2543 = vmax.f32 %v349, 0.0
          %v2544 = vmax.f32 %v350, 0.0
          %v2545 = vmax.f32 %v351, 0.0
          %v2546 = vmax.f32 %v352, 0.0
          %v2547 = vmax.f32 %v353, 0.0
          %v2548 = vmax.f32 %v354, 0.0
          %v2549 = vmax.f32 %v355, 0.0
          %v2550 = vmax.f32 %v356, 0.0
          %v2551 = vmax.f32 %v357, 0.0
          %v2552 = vmax.f32 %v358, 0.0
          %v2553 = vmax.f32 %v359, 0.0
          %v2554 = vmax.f32 %v360, 0.0
          %v2555 = vmax.f32 %v361, 0.0
          %v2556 = vmax.f32 %v362, 0.0
          %v2557 = vmax.f32 %v363, 0.0
          %v2558 = vmax.f32 %v364, 0.0
          %v2559 = vmax.f32 %v365, 0.0
          %v2560 = vmax.f32 %v366, 0.0
          %v2561 = vmax.f32 %v367, 0.0
          %v2562 = vmax.f32 %v368, 0.0
          %v2563 = vmax.f32 %v369, 0.0
          %v2564 = vmax.f32 %v370, 0.0
          %v2565 = vmax.f32 %v371, 0.0
          %v2566 = vmax.f32 %v372, 0.0
          %v2567 = vmax.f32 %v373, 0.0
          %v2568 = vmax.f32 %v374, 0.0
          %v2569 = vmax.f32 %v375, 0.0
          %v2570 = vmax.f32 %v376, 0.0
          %v2571 = vmax.f32 %v377, 0.0
          %v2572 = vmax.f32 %v378, 0.0
          %v2573 = vmax.f32 %v379, 0.0
          %v2574 = vmax.f32 %v380, 0.0
          %v2575 = vmax.f32 %v381, 0.0
          %v2576 = vmax.f32 %v382, 0.0
          %v2577 = vmax.f32 %v383, 0.0
          %v2578 = vmax.f32 %v384, 0.0
          %v2579 = vmax.f32 %v385, 0.0
          %v2580 = vmax.f32 %v386, 0.0
          %v2581 = vmax.f32 %v387, 0.0
          %v2582 = vmax.f32 %v388, 0.0
          %v2583 = vmax.f32 %v389, 0.0
          %v2584 = vmax.f32 %v390, 0.0
          %v2585 = vmax.f32 %v391, 0.0
          %v2586 = vmax.f32 %v392, 0.0
          %v2587 = vmax.f32 %v393, 0.0
          %v2588 = vmax.f32 %v394, 0.0
          %v2589 = vmax.f32 %v395, 0.0
          %v2590 = vmax.f32 %v396, 0.0
          %v2591 = vmax.f32 %v397, 0.0
          %v2592 = vmax.f32 %v398, 0.0
          %v2593 = vmax.f32 %v399, 0.0
          %v2594 = vmax.f32 %v400, 0.0
          %v2595 = vmax.f32 %v401, 0.0
          %v2596 = vmax.f32 %v402, 0.0
          %v2597 = vmax.f32 %v403, 0.0
          %v2598 = vmax.f32 %v404, 0.0
          %v2599 = vmax.f32 %v405, 0.0
          %v2600 = vmax.f32 %v406, 0.0
          %v2601 = vmax.f32 %v407, 0.0
          %v2602 = vmax.f32 %v408, 0.0
          %v2603 = vmax.f32 %v409, 0.0
          %v2604 = vmax.f32 %v410, 0.0
          %v2605 = vmax.f32 %v411, 0.0
          %v2606 = vmax.f32 %v412, 0.0
          %v2607 = vmax.f32 %v413, 0.0
          %v2608 = vmax.f32 %v414, 0.0
          %v2609 = vmax.f32 %v415, 0.0
          %v2610 = vmax.f32 %v416, 0.0
          %v2611 = vmax.f32 %v417, 0.0
          %v2612 = vmax.f32 %v418, 0.0
          %v2613 = vmax.f32 %v419, 0.0
          %v2614 = vmax.f32 %v420, 0.0
          %v2615 = vmax.f32 %v421, 0.0
          %v2616 = vmax.f32 %v422, 0.0
          %v2617 = vmax.f32 %v423, 0.0
          %v2618 = vmax.f32 %v424, 0.0
          %v2619 = vmax.f32 %v425, 0.0
          %v2620 = vmax.f32 %v426, 0.0
          %v2621 = vmax.f32 %v427, 0.0
          %v2622 = vmax.f32 %v428, 0.0
          %v2623 = vmax.f32 %v429, 0.0
          %v2624 = vmax.f32 %v430, 0.0
          %v2625 = vmax.f32 %v431, 0.0
          %v2626 = vmax.f32 %v432, 0.0
          %v2627 = vmax.f32 %v433, 0.0
          %v2628 = vmax.f32 %v434, 0.0
          %v2629 = vmax.f32 %v435, 0.0
          %v2630 = vmax.f32 %v436, 0.0
          %v2631 = vmax.f32 %v437, 0.0
          %v2632 = vmax.f32 %v438, 0.0
          %v2633 = vmax.f32 %v439, 0.0
          %v2634 = vmax.f32 %v440, 0.0
          %v2635 = vmax.f32 %v441, 0.0
          %v2636 = vmax.f32 %v442, 0.0
          %v2637 = vmax.f32 %v443, 0.0
          %v2638 = vmax.f32 %v444, 0.0
          %v2639 = vmax.f32 %v445, 0.0
          %v2640 = vmax.f32 %v446, 0.0
          %v2641 = vmax.f32 %v447, 0.0
          %v2642 = vmax.f32 %v448, 0.0
          %v2643 = vmax.f32 %v449, 0.0
          %v2644 = vmax.f32 %v450, 0.0
          %v2645 = vmax.f32 %v451, 0.0
          %v2646 = vmax.f32 %v452, 0.0
          %v2647 = vmax.f32 %v453, 0.0
          %v2648 = vmax.f32 %v454, 0.0
          %v2649 = vmax.f32 %v455, 0.0
          %v2650 = vmax.f32 %v456, 0.0
          %v2651 = vmax.f32 %v457, 0.0
          %v2652 = vmax.f32 %v458, 0.0
          %v2653 = vmax.f32 %v459, 0.0
          %v2654 = vadd.f32 %v2271, 1.0
          %v2655 = vlog2.pop %v2654
          %v2656 = vmul.f32 %v2655, 0.6931472
          %v2657 = vmul.f32 -0.5, %v2271
          %v2658 = vadd.f32 %v2657, 1.0
          %v2659 = vmul.f32 %v2658, %v2271
          %v2660 = vand.u32 2147483647, %v2271
          %vm2661 = vcmp.lt.f32.partialorder %v2660, 0.0004427343
          %v2662 = vsel %vm2661, %v2659, %v2656
          %v2663 = vadd.f32 %v2273, 1.0
          %v2664 = vlog2.pop %v2663
          %v2665 = vmul.f32 %v2664, 0.6931472
          %v2666 = vmul.f32 -0.5, %v2273
          %v2667 = vadd.f32 %v2666, 1.0
          %v2668 = vmul.f32 %v2667, %v2273
          %v2669 = vand.u32 2147483647, %v2273
          %vm2670 = vcmp.lt.f32.partialorder %v2669, 0.0004427343
          %v2671 = vsel %vm2670, %v2668, %v2665
          %v2672 = vadd.f32 %v2275, 1.0
          %v2673 = vlog2.pop %v2672
          %v2674 = vmul.f32 %v2673, 0.6931472
          %v2675 = vmul.f32 -0.5, %v2275
          %v2676 = vadd.f32 %v2675, 1.0
          %v2677 = vmul.f32 %v2676, %v2275
          %v2678 = vand.u32 2147483647, %v2275
          %vm2679 = vcmp.lt.f32.partialorder %v2678, 0.0004427343
          %v2680 = vsel %vm2679, %v2677, %v2674
          %v2681 = vadd.f32 %v2277, 1.0
          %v2682 = vlog2.pop %v2681
          %v2683 = vmul.f32 %v2682, 0.6931472
          %v2684 = vmul.f32 -0.5, %v2277
          %v2685 = vadd.f32 %v2684, 1.0
          %v2686 = vmul.f32 %v2685, %v2277
          %v2687 = vand.u32 2147483647, %v2277
          %vm2688 = vcmp.lt.f32.partialorder %v2687, 0.0004427343
          %v2689 = vsel %vm2688, %v2686, %v2683
          %v2690 = vadd.f32 %v2279, 1.0
          %v2691 = vlog2.pop %v2690
          %v2692 = vmul.f32 %v2691, 0.6931472
          %v2693 = vmul.f32 -0.5, %v2279
          %v2694 = vadd.f32 %v2693, 1.0
          %v2695 = vmul.f32 %v2694, %v2279
          %v2696 = vand.u32 2147483647, %v2279
          %vm2697 = vcmp.lt.f32.partialorder %v2696, 0.0004427343
          %v2698 = vsel %vm2697, %v2695, %v2692
          %v2699 = vadd.f32 %v2281, 1.0
          %v2700 = vlog2.pop %v2699
          %v2701 = vmul.f32 %v2700, 0.6931472
          %v2702 = vmul.f32 -0.5, %v2281
          %v2703 = vadd.f32 %v2702, 1.0
          %v2704 = vmul.f32 %v2703, %v2281
          %v2705 = vand.u32 2147483647, %v2281
          %vm2706 = vcmp.lt.f32.partialorder %v2705, 0.0004427343
          %v2707 = vsel %vm2706, %v2704, %v2701
          %v2708 = vadd.f32 %v2283, 1.0
          %v2709 = vlog2.pop %v2708
          %v2710 = vmul.f32 %v2709, 0.6931472
          %v2711 = vmul.f32 -0.5, %v2283
          %v2712 = vadd.f32 %v2711, 1.0
          %v2713 = vmul.f32 %v2712, %v2283
          %v2714 = vand.u32 2147483647, %v2283
          %vm2715 = vcmp.lt.f32.partialorder %v2714, 0.0004427343
          %v2716 = vsel %vm2715, %v2713, %v2710
          %v2717 = vadd.f32 %v2285, 1.0
          %v2718 = vlog2.pop %v2717
          %v2719 = vmul.f32 %v2718, 0.6931472
          %v2720 = vmul.f32 -0.5, %v2285
          %v2721 = vadd.f32 %v2720, 1.0
          %v2722 = vmul.f32 %v2721, %v2285
          %v2723 = vand.u32 2147483647, %v2285
          %vm2724 = vcmp.lt.f32.partialorder %v2723, 0.0004427343
          %v2725 = vsel %vm2724, %v2722, %v2719
          %v2726 = vadd.f32 %v2287, 1.0
          %v2727 = vlog2.pop %v2726
          %v2728 = vmul.f32 %v2727, 0.6931472
          %v2729 = vmul.f32 -0.5, %v2287
          %v2730 = vadd.f32 %v2729, 1.0
          %v2731 = vmul.f32 %v2730, %v2287
          %v2732 = vand.u32 2147483647, %v2287
          %vm2733 = vcmp.lt.f32.partialorder %v2732, 0.0004427343
          %v2734 = vsel %vm2733, %v2731, %v2728
          %v2735 = vadd.f32 %v2289, 1.0
          %v2736 = vlog2.pop %v2735
          %v2737 = vmul.f32 %v2736, 0.6931472
          %v2738 = vmul.f32 -0.5, %v2289
          %v2739 = vadd.f32 %v2738, 1.0
          %v2740 = vmul.f32 %v2739, %v2289
          %v2741 = vand.u32 2147483647, %v2289
          %vm2742 = vcmp.lt.f32.partialorder %v2741, 0.0004427343
          %v2743 = vsel %vm2742, %v2740, %v2737
          %v2744 = vadd.f32 %v2291, 1.0
          %v2745 = vlog2.pop %v2744
          %v2746 = vmul.f32 %v2745, 0.6931472
          %v2747 = vmul.f32 -0.5, %v2291
          %v2748 = vadd.f32 %v2747, 1.0
          %v2749 = vmul.f32 %v2748, %v2291
          %v2750 = vand.u32 2147483647, %v2291
          %vm2751 = vcmp.lt.f32.partialorder %v2750, 0.0004427343
          %v2752 = vsel %vm2751, %v2749, %v2746
          %v2753 = vadd.f32 %v2293, 1.0
          %v2754 = vlog2.pop %v2753
          %v2755 = vmul.f32 %v2754, 0.6931472
          %v2756 = vmul.f32 -0.5, %v2293
          %v2757 = vadd.f32 %v2756, 1.0
          %v2758 = vmul.f32 %v2757, %v2293
          %v2759 = vand.u32 2147483647, %v2293
          %vm2760 = vcmp.lt.f32.partialorder %v2759, 0.0004427343
          %v2761 = vsel %vm2760, %v2758, %v2755
          %v2762 = vadd.f32 %v2295, 1.0
          %v2763 = vlog2.pop %v2762
          %v2764 = vmul.f32 %v2763, 0.6931472
          %v2765 = vmul.f32 -0.5, %v2295
          %v2766 = vadd.f32 %v2765, 1.0
          %v2767 = vmul.f32 %v2766, %v2295
          %v2768 = vand.u32 2147483647, %v2295
          %vm2769 = vcmp.lt.f32.partialorder %v2768, 0.0004427343
          %v2770 = vsel %vm2769, %v2767, %v2764
          %v2771 = vadd.f32 %v2297, 1.0
          %v2772 = vlog2.pop %v2771
          %v2773 = vmul.f32 %v2772, 0.6931472
          %v2774 = vmul.f32 -0.5, %v2297
          %v2775 = vadd.f32 %v2774, 1.0
          %v2776 = vmul.f32 %v2775, %v2297
          %v2777 = vand.u32 2147483647, %v2297
          %vm2778 = vcmp.lt.f32.partialorder %v2777, 0.0004427343
          %v2779 = vsel %vm2778, %v2776, %v2773
          %v2780 = vadd.f32 %v2299, 1.0
          %v2781 = vlog2.pop %v2780
          %v2782 = vmul.f32 %v2781, 0.6931472
          %v2783 = vmul.f32 -0.5, %v2299
          %v2784 = vadd.f32 %v2783, 1.0
          %v2785 = vmul.f32 %v2784, %v2299
          %v2786 = vand.u32 2147483647, %v2299
          %vm2787 = vcmp.lt.f32.partialorder %v2786, 0.0004427343
          %v2788 = vsel %vm2787, %v2785, %v2782
          %v2789 = vadd.f32 %v2301, 1.0
          %v2790 = vlog2.pop %v2789
          %v2791 = vmul.f32 %v2790, 0.6931472
          %v2792 = vmul.f32 -0.5, %v2301
          %v2793 = vadd.f32 %v2792, 1.0
          %v2794 = vmul.f32 %v2793, %v2301
          %v2795 = vand.u32 2147483647, %v2301
          %vm2796 = vcmp.lt.f32.partialorder %v2795, 0.0004427343
          %v2797 = vsel %vm2796, %v2794, %v2791
          %v2798 = vadd.f32 %v2303, 1.0
          %v2799 = vlog2.pop %v2798
          %v2800 = vmul.f32 %v2799, 0.6931472
          %v2801 = vmul.f32 -0.5, %v2303
          %v2802 = vadd.f32 %v2801, 1.0
          %v2803 = vmul.f32 %v2802, %v2303
          %v2804 = vand.u32 2147483647, %v2303
          %vm2805 = vcmp.lt.f32.partialorder %v2804, 0.0004427343
          %v2806 = vsel %vm2805, %v2803, %v2800
          %v2807 = vadd.f32 %v2305, 1.0
          %v2808 = vlog2.pop %v2807
          %v2809 = vmul.f32 %v2808, 0.6931472
          %v2810 = vmul.f32 -0.5, %v2305
          %v2811 = vadd.f32 %v2810, 1.0
          %v2812 = vmul.f32 %v2811, %v2305
          %v2813 = vand.u32 2147483647, %v2305
          %vm2814 = vcmp.lt.f32.partialorder %v2813, 0.0004427343
          %v2815 = vsel %vm2814, %v2812, %v2809
          %v2816 = vadd.f32 %v2307, 1.0
          %v2817 = vlog2.pop %v2816
          %v2818 = vmul.f32 %v2817, 0.6931472
          %v2819 = vmul.f32 -0.5, %v2307
          %v2820 = vadd.f32 %v2819, 1.0
          %v2821 = vmul.f32 %v2820, %v2307
          %v2822 = vand.u32 2147483647, %v2307
          %vm2823 = vcmp.lt.f32.partialorder %v2822, 0.0004427343
          %v2824 = vsel %vm2823, %v2821, %v2818
          %v2825 = vadd.f32 %v2309, 1.0
          %v2826 = vlog2.pop %v2825
          %v2827 = vmul.f32 %v2826, 0.6931472
          %v2828 = vmul.f32 -0.5, %v2309
          %v2829 = vadd.f32 %v2828, 1.0
          %v2830 = vmul.f32 %v2829, %v2309
          %v2831 = vand.u32 2147483647, %v2309
          %vm2832 = vcmp.lt.f32.partialorder %v2831, 0.0004427343
          %v2833 = vsel %vm2832, %v2830, %v2827
          %v2834 = vadd.f32 %v2311, 1.0
          %v2835 = vlog2.pop %v2834
          %v2836 = vmul.f32 %v2835, 0.6931472
          %v2837 = vmul.f32 -0.5, %v2311
          %v2838 = vadd.f32 %v2837, 1.0
          %v2839 = vmul.f32 %v2838, %v2311
          %v2840 = vand.u32 2147483647, %v2311
          %vm2841 = vcmp.lt.f32.partialorder %v2840, 0.0004427343
          %v2842 = vsel %vm2841, %v2839, %v2836
          %v2843 = vadd.f32 %v2313, 1.0
          %v2844 = vlog2.pop %v2843
          %v2845 = vmul.f32 %v2844, 0.6931472
          %v2846 = vmul.f32 -0.5, %v2313
          %v2847 = vadd.f32 %v2846, 1.0
          %v2848 = vmul.f32 %v2847, %v2313
          %v2849 = vand.u32 2147483647, %v2313
          %vm2850 = vcmp.lt.f32.partialorder %v2849, 0.0004427343
          %v2851 = vsel %vm2850, %v2848, %v2845
          %v2852 = vadd.f32 %v2315, 1.0
          %v2853 = vlog2.pop %v2852
          %v2854 = vmul.f32 %v2853, 0.6931472
          %v2855 = vmul.f32 -0.5, %v2315
          %v2856 = vadd.f32 %v2855, 1.0
          %v2857 = vmul.f32 %v2856, %v2315
          %v2858 = vand.u32 2147483647, %v2315
          %vm2859 = vcmp.lt.f32.partialorder %v2858, 0.0004427343
          %v2860 = vsel %vm2859, %v2857, %v2854
          %v2861 = vadd.f32 %v2317, 1.0
          %v2862 = vlog2.pop %v2861
          %v2863 = vmul.f32 %v2862, 0.6931472
          %v2864 = vmul.f32 -0.5, %v2317
          %v2865 = vadd.f32 %v2864, 1.0
          %v2866 = vmul.f32 %v2865, %v2317
          %v2867 = vand.u32 2147483647, %v2317
          %vm2868 = vcmp.lt.f32.partialorder %v2867, 0.0004427343
          %v2869 = vsel %vm2868, %v2866, %v2863
          %v2870 = vadd.f32 %v2319, 1.0
          %v2871 = vlog2.pop %v2870
          %v2872 = vmul.f32 %v2871, 0.6931472
          %v2873 = vmul.f32 -0.5, %v2319
          %v2874 = vadd.f32 %v2873, 1.0
          %v2875 = vmul.f32 %v2874, %v2319
          %v2876 = vand.u32 2147483647, %v2319
          %vm2877 = vcmp.lt.f32.partialorder %v2876, 0.0004427343
          %v2878 = vsel %vm2877, %v2875, %v2872
          %v2879 = vadd.f32 %v2321, 1.0
          %v2880 = vlog2.pop %v2879
          %v2881 = vmul.f32 %v2880, 0.6931472
          %v2882 = vmul.f32 -0.5, %v2321
          %v2883 = vadd.f32 %v2882, 1.0
          %v2884 = vmul.f32 %v2883, %v2321
          %v2885 = vand.u32 2147483647, %v2321
          %vm2886 = vcmp.lt.f32.partialorder %v2885, 0.0004427343
          %v2887 = vsel %vm2886, %v2884, %v2881
          %v2888 = vadd.f32 %v2323, 1.0
          %v2889 = vlog2.pop %v2888
          %v2890 = vmul.f32 %v2889, 0.6931472
          %v2891 = vmul.f32 -0.5, %v2323
          %v2892 = vadd.f32 %v2891, 1.0
          %v2893 = vmul.f32 %v2892, %v2323
          %v2894 = vand.u32 2147483647, %v2323
          %vm2895 = vcmp.lt.f32.partialorder %v2894, 0.0004427343
          %v2896 = vsel %vm2895, %v2893, %v2890
          %v2897 = vadd.f32 %v2325, 1.0
          %v2898 = vlog2.pop %v2897
          %v2899 = vmul.f32 %v2898, 0.6931472
          %v2900 = vmul.f32 -0.5, %v2325
          %v2901 = vadd.f32 %v2900, 1.0
          %v2902 = vmul.f32 %v2901, %v2325
          %v2903 = vand.u32 2147483647, %v2325
          %vm2904 = vcmp.lt.f32.partialorder %v2903, 0.0004427343
          %v2905 = vsel %vm2904, %v2902, %v2899
          %v2906 = vadd.f32 %v2327, 1.0
          %v2907 = vlog2.pop %v2906
          %v2908 = vmul.f32 %v2907, 0.6931472
          %v2909 = vmul.f32 -0.5, %v2327
          %v2910 = vadd.f32 %v2909, 1.0
          %v2911 = vmul.f32 %v2910, %v2327
          %v2912 = vand.u32 2147483647, %v2327
          %vm2913 = vcmp.lt.f32.partialorder %v2912, 0.0004427343
          %v2914 = vsel %vm2913, %v2911, %v2908
          %v2915 = vadd.f32 %v2329, 1.0
          %v2916 = vlog2.pop %v2915
          %v2917 = vmul.f32 %v2916, 0.6931472
          %v2918 = vmul.f32 -0.5, %v2329
          %v2919 = vadd.f32 %v2918, 1.0
          %v2920 = vmul.f32 %v2919, %v2329
          %v2921 = vand.u32 2147483647, %v2329
          %vm2922 = vcmp.lt.f32.partialorder %v2921, 0.0004427343
          %v2923 = vsel %vm2922, %v2920, %v2917
          %v2924 = vadd.f32 %v2331, 1.0
          %v2925 = vlog2.pop %v2924
          %v2926 = vmul.f32 %v2925, 0.6931472
          %v2927 = vmul.f32 -0.5, %v2331
          %v2928 = vadd.f32 %v2927, 1.0
          %v2929 = vmul.f32 %v2928, %v2331
          %v2930 = vand.u32 2147483647, %v2331
          %vm2931 = vcmp.lt.f32.partialorder %v2930, 0.0004427343
          %v2932 = vsel %vm2931, %v2929, %v2926
          %v2933 = vadd.f32 %v2333, 1.0
          %v2934 = vlog2.pop %v2933
          %v2935 = vmul.f32 %v2934, 0.6931472
          %v2936 = vmul.f32 -0.5, %v2333
          %v2937 = vadd.f32 %v2936, 1.0
          %v2938 = vmul.f32 %v2937, %v2333
          %v2939 = vand.u32 2147483647, %v2333
          %vm2940 = vcmp.lt.f32.partialorder %v2939, 0.0004427343
          %v2941 = vsel %vm2940, %v2938, %v2935
          %v2942 = vadd.f32 %v2335, 1.0
          %v2943 = vlog2.pop %v2942
          %v2944 = vmul.f32 %v2943, 0.6931472
          %v2945 = vmul.f32 -0.5, %v2335
          %v2946 = vadd.f32 %v2945, 1.0
          %v2947 = vmul.f32 %v2946, %v2335
          %v2948 = vand.u32 2147483647, %v2335
          %vm2949 = vcmp.lt.f32.partialorder %v2948, 0.0004427343
          %v2950 = vsel %vm2949, %v2947, %v2944
          %v2951 = vadd.f32 %v2337, 1.0
          %v2952 = vlog2.pop %v2951
          %v2953 = vmul.f32 %v2952, 0.6931472
          %v2954 = vmul.f32 -0.5, %v2337
          %v2955 = vadd.f32 %v2954, 1.0
          %v2956 = vmul.f32 %v2955, %v2337
          %v2957 = vand.u32 2147483647, %v2337
          %vm2958 = vcmp.lt.f32.partialorder %v2957, 0.0004427343
          %v2959 = vsel %vm2958, %v2956, %v2953
          %v2960 = vadd.f32 %v2339, 1.0
          %v2961 = vlog2.pop %v2960
          %v2962 = vmul.f32 %v2961, 0.6931472
          %v2963 = vmul.f32 -0.5, %v2339
          %v2964 = vadd.f32 %v2963, 1.0
          %v2965 = vmul.f32 %v2964, %v2339
          %v2966 = vand.u32 2147483647, %v2339
          %vm2967 = vcmp.lt.f32.partialorder %v2966, 0.0004427343
          %v2968 = vsel %vm2967, %v2965, %v2962
          %v2969 = vadd.f32 %v2341, 1.0
          %v2970 = vlog2.pop %v2969
          %v2971 = vmul.f32 %v2970, 0.6931472
          %v2972 = vmul.f32 -0.5, %v2341
          %v2973 = vadd.f32 %v2972, 1.0
          %v2974 = vmul.f32 %v2973, %v2341
          %v2975 = vand.u32 2147483647, %v2341
          %vm2976 = vcmp.lt.f32.partialorder %v2975, 0.0004427343
          %v2977 = vsel %vm2976, %v2974, %v2971
          %v2978 = vadd.f32 %v2343, 1.0
          %v2979 = vlog2.pop %v2978
          %v2980 = vmul.f32 %v2979, 0.6931472
          %v2981 = vmul.f32 -0.5, %v2343
          %v2982 = vadd.f32 %v2981, 1.0
          %v2983 = vmul.f32 %v2982, %v2343
          %v2984 = vand.u32 2147483647, %v2343
          %vm2985 = vcmp.lt.f32.partialorder %v2984, 0.0004427343
          %v2986 = vsel %vm2985, %v2983, %v2980
          %v2987 = vadd.f32 %v2345, 1.0
          %v2988 = vlog2.pop %v2987
          %v2989 = vmul.f32 %v2988, 0.6931472
          %v2990 = vmul.f32 -0.5, %v2345
          %v2991 = vadd.f32 %v2990, 1.0
          %v2992 = vmul.f32 %v2991, %v2345
          %v2993 = vand.u32 2147483647, %v2345
          %vm2994 = vcmp.lt.f32.partialorder %v2993, 0.0004427343
          %v2995 = vsel %vm2994, %v2992, %v2989
          %v2996 = vadd.f32 %v2347, 1.0
          %v2997 = vlog2.pop %v2996
          %v2998 = vmul.f32 %v2997, 0.6931472
          %v2999 = vmul.f32 -0.5, %v2347
          %v3000 = vadd.f32 %v2999, 1.0
          %v3001 = vmul.f32 %v3000, %v2347
          %v3002 = vand.u32 2147483647, %v2347
          %vm3003 = vcmp.lt.f32.partialorder %v3002, 0.0004427343
          %v3004 = vsel %vm3003, %v3001, %v2998
          %v3005 = vadd.f32 %v2349, 1.0
          %v3006 = vlog2.pop %v3005
          %v3007 = vmul.f32 %v3006, 0.6931472
          %v3008 = vmul.f32 -0.5, %v2349
          %v3009 = vadd.f32 %v3008, 1.0
          %v3010 = vmul.f32 %v3009, %v2349
          %v3011 = vand.u32 2147483647, %v2349
          %vm3012 = vcmp.lt.f32.partialorder %v3011, 0.0004427343
          %v3013 = vsel %vm3012, %v3010, %v3007
          %v3014 = vadd.f32 %v2351, 1.0
          %v3015 = vlog2.pop %v3014
          %v3016 = vmul.f32 %v3015, 0.6931472
          %v3017 = vmul.f32 -0.5, %v2351
          %v3018 = vadd.f32 %v3017, 1.0
          %v3019 = vmul.f32 %v3018, %v2351
          %v3020 = vand.u32 2147483647, %v2351
          %vm3021 = vcmp.lt.f32.partialorder %v3020, 0.0004427343
          %v3022 = vsel %vm3021, %v3019, %v3016
          %v3023 = vadd.f32 %v2353, 1.0
          %v3024 = vlog2.pop %v3023
          %v3025 = vmul.f32 %v3024, 0.6931472
          %v3026 = vmul.f32 -0.5, %v2353
          %v3027 = vadd.f32 %v3026, 1.0
          %v3028 = vmul.f32 %v3027, %v2353
          %v3029 = vand.u32 2147483647, %v2353
          %vm3030 = vcmp.lt.f32.partialorder %v3029, 0.0004427343
          %v3031 = vsel %vm3030, %v3028, %v3025
          %v3032 = vadd.f32 %v2355, 1.0
          %v3033 = vlog2.pop %v3032
          %v3034 = vmul.f32 %v3033, 0.6931472
          %v3035 = vmul.f32 -0.5, %v2355
          %v3036 = vadd.f32 %v3035, 1.0
          %v3037 = vmul.f32 %v3036, %v2355
          %v3038 = vand.u32 2147483647, %v2355
          %vm3039 = vcmp.lt.f32.partialorder %v3038, 0.0004427343
          %v3040 = vsel %vm3039, %v3037, %v3034
          %v3041 = vadd.f32 %v2357, 1.0
          %v3042 = vlog2.pop %v3041
          %v3043 = vmul.f32 %v3042, 0.6931472
          %v3044 = vmul.f32 -0.5, %v2357
          %v3045 = vadd.f32 %v3044, 1.0
          %v3046 = vmul.f32 %v3045, %v2357
          %v3047 = vand.u32 2147483647, %v2357
          %vm3048 = vcmp.lt.f32.partialorder %v3047, 0.0004427343
          %v3049 = vsel %vm3048, %v3046, %v3043
          %v3050 = vadd.f32 %v2359, 1.0
          %v3051 = vlog2.pop %v3050
          %v3052 = vmul.f32 %v3051, 0.6931472
          %v3053 = vmul.f32 -0.5, %v2359
          %v3054 = vadd.f32 %v3053, 1.0
          %v3055 = vmul.f32 %v3054, %v2359
          %v3056 = vand.u32 2147483647, %v2359
          %vm3057 = vcmp.lt.f32.partialorder %v3056, 0.0004427343
          %v3058 = vsel %vm3057, %v3055, %v3052
          %v3059 = vadd.f32 %v2361, 1.0
          %v3060 = vlog2.pop %v3059
          %v3061 = vmul.f32 %v3060, 0.6931472
          %v3062 = vmul.f32 -0.5, %v2361
          %v3063 = vadd.f32 %v3062, 1.0
          %v3064 = vmul.f32 %v3063, %v2361
          %v3065 = vand.u32 2147483647, %v2361
          %vm3066 = vcmp.lt.f32.partialorder %v3065, 0.0004427343
          %v3067 = vsel %vm3066, %v3064, %v3061
          %v3068 = vadd.f32 %v2363, 1.0
          %v3069 = vlog2.pop %v3068
          %v3070 = vmul.f32 %v3069, 0.6931472
          %v3071 = vmul.f32 -0.5, %v2363
          %v3072 = vadd.f32 %v3071, 1.0
          %v3073 = vmul.f32 %v3072, %v2363
          %v3074 = vand.u32 2147483647, %v2363
          %vm3075 = vcmp.lt.f32.partialorder %v3074, 0.0004427343
          %v3076 = vsel %vm3075, %v3073, %v3070
          %v3077 = vadd.f32 %v2365, 1.0
          %v3078 = vlog2.pop %v3077
          %v3079 = vmul.f32 %v3078, 0.6931472
          %v3080 = vmul.f32 -0.5, %v2365
          %v3081 = vadd.f32 %v3080, 1.0
          %v3082 = vmul.f32 %v3081, %v2365
          %v3083 = vand.u32 2147483647, %v2365
          %vm3084 = vcmp.lt.f32.partialorder %v3083, 0.0004427343
          %v3085 = vsel %vm3084, %v3082, %v3079
          %v3086 = vadd.f32 %v2367, 1.0
          %v3087 = vlog2.pop %v3086
          %v3088 = vmul.f32 %v3087, 0.6931472
          %v3089 = vmul.f32 -0.5, %v2367
          %v3090 = vadd.f32 %v3089, 1.0
          %v3091 = vmul.f32 %v3090, %v2367
          %v3092 = vand.u32 2147483647, %v2367
          %vm3093 = vcmp.lt.f32.partialorder %v3092, 0.0004427343
          %v3094 = vsel %vm3093, %v3091, %v3088
          %v3095 = vadd.f32 %v2369, 1.0
          %v3096 = vlog2.pop %v3095
          %v3097 = vmul.f32 %v3096, 0.6931472
          %v3098 = vmul.f32 -0.5, %v2369
          %v3099 = vadd.f32 %v3098, 1.0
          %v3100 = vmul.f32 %v3099, %v2369
          %v3101 = vand.u32 2147483647, %v2369
          %vm3102 = vcmp.lt.f32.partialorder %v3101, 0.0004427343
          %v3103 = vsel %vm3102, %v3100, %v3097
          %v3104 = vadd.f32 %v2371, 1.0
          %v3105 = vlog2.pop %v3104
          %v3106 = vmul.f32 %v3105, 0.6931472
          %v3107 = vmul.f32 -0.5, %v2371
          %v3108 = vadd.f32 %v3107, 1.0
          %v3109 = vmul.f32 %v3108, %v2371
          %v3110 = vand.u32 2147483647, %v2371
          %vm3111 = vcmp.lt.f32.partialorder %v3110, 0.0004427343
          %v3112 = vsel %vm3111, %v3109, %v3106
          %v3113 = vadd.f32 %v2373, 1.0
          %v3114 = vlog2.pop %v3113
          %v3115 = vmul.f32 %v3114, 0.6931472
          %v3116 = vmul.f32 -0.5, %v2373
          %v3117 = vadd.f32 %v3116, 1.0
          %v3118 = vmul.f32 %v3117, %v2373
          %v3119 = vand.u32 2147483647, %v2373
          %vm3120 = vcmp.lt.f32.partialorder %v3119, 0.0004427343
          %v3121 = vsel %vm3120, %v3118, %v3115
          %v3122 = vadd.f32 %v2375, 1.0
          %v3123 = vlog2.pop %v3122
          %v3124 = vmul.f32 %v3123, 0.6931472
          %v3125 = vmul.f32 -0.5, %v2375
          %v3126 = vadd.f32 %v3125, 1.0
          %v3127 = vmul.f32 %v3126, %v2375
          %v3128 = vand.u32 2147483647, %v2375
          %vm3129 = vcmp.lt.f32.partialorder %v3128, 0.0004427343
          %v3130 = vsel %vm3129, %v3127, %v3124
          %v3131 = vadd.f32 %v2377, 1.0
          %v3132 = vlog2.pop %v3131
          %v3133 = vmul.f32 %v3132, 0.6931472
          %v3134 = vmul.f32 -0.5, %v2377
          %v3135 = vadd.f32 %v3134, 1.0
          %v3136 = vmul.f32 %v3135, %v2377
          %v3137 = vand.u32 2147483647, %v2377
          %vm3138 = vcmp.lt.f32.partialorder %v3137, 0.0004427343
          %v3139 = vsel %vm3138, %v3136, %v3133
          %v3140 = vadd.f32 %v2379, 1.0
          %v3141 = vlog2.pop %v3140
          %v3142 = vmul.f32 %v3141, 0.6931472
          %v3143 = vmul.f32 -0.5, %v2379
          %v3144 = vadd.f32 %v3143, 1.0
          %v3145 = vmul.f32 %v3144, %v2379
          %v3146 = vand.u32 2147483647, %v2379
          %vm3147 = vcmp.lt.f32.partialorder %v3146, 0.0004427343
          %v3148 = vsel %vm3147, %v3145, %v3142
          %v3149 = vadd.f32 %v2381, 1.0
          %v3150 = vlog2.pop %v3149
          %v3151 = vmul.f32 %v3150, 0.6931472
          %v3152 = vmul.f32 -0.5, %v2381
          %v3153 = vadd.f32 %v3152, 1.0
          %v3154 = vmul.f32 %v3153, %v2381
          %v3155 = vand.u32 2147483647, %v2381
          %vm3156 = vcmp.lt.f32.partialorder %v3155, 0.0004427343
          %v3157 = vsel %vm3156, %v3154, %v3151
          %v3158 = vadd.f32 %v2383, 1.0
          %v3159 = vlog2.pop %v3158
          %v3160 = vmul.f32 %v3159, 0.6931472
          %v3161 = vmul.f32 -0.5, %v2383
          %v3162 = vadd.f32 %v3161, 1.0
          %v3163 = vmul.f32 %v3162, %v2383
          %v3164 = vand.u32 2147483647, %v2383
          %vm3165 = vcmp.lt.f32.partialorder %v3164, 0.0004427343
          %v3166 = vsel %vm3165, %v3163, %v3160
          %v3167 = vadd.f32 %v2385, 1.0
          %v3168 = vlog2.pop %v3167
          %v3169 = vmul.f32 %v3168, 0.6931472
          %v3170 = vmul.f32 -0.5, %v2385
          %v3171 = vadd.f32 %v3170, 1.0
          %v3172 = vmul.f32 %v3171, %v2385
          %v3173 = vand.u32 2147483647, %v2385
          %vm3174 = vcmp.lt.f32.partialorder %v3173, 0.0004427343
          %v3175 = vsel %vm3174, %v3172, %v3169
          %v3176 = vadd.f32 %v2387, 1.0
          %v3177 = vlog2.pop %v3176
          %v3178 = vmul.f32 %v3177, 0.6931472
          %v3179 = vmul.f32 -0.5, %v2387
          %v3180 = vadd.f32 %v3179, 1.0
          %v3181 = vmul.f32 %v3180, %v2387
          %v3182 = vand.u32 2147483647, %v2387
          %vm3183 = vcmp.lt.f32.partialorder %v3182, 0.0004427343
          %v3184 = vsel %vm3183, %v3181, %v3178
          %v3185 = vadd.f32 %v2389, 1.0
          %v3186 = vlog2.pop %v3185
          %v3187 = vmul.f32 %v3186, 0.6931472
          %v3188 = vmul.f32 -0.5, %v2389
          %v3189 = vadd.f32 %v3188, 1.0
          %v3190 = vmul.f32 %v3189, %v2389
          %v3191 = vand.u32 2147483647, %v2389
          %vm3192 = vcmp.lt.f32.partialorder %v3191, 0.0004427343
          %v3193 = vsel %vm3192, %v3190, %v3187
          %v3194 = vadd.f32 %v2391, 1.0
          %v3195 = vlog2.pop %v3194
          %v3196 = vmul.f32 %v3195, 0.6931472
          %v3197 = vmul.f32 -0.5, %v2391
          %v3198 = vadd.f32 %v3197, 1.0
          %v3199 = vmul.f32 %v3198, %v2391
          %v3200 = vand.u32 2147483647, %v2391
          %vm3201 = vcmp.lt.f32.partialorder %v3200, 0.0004427343
          %v3202 = vsel %vm3201, %v3199, %v3196
          %v3203 = vadd.f32 %v2393, 1.0
          %v3204 = vlog2.pop %v3203
          %v3205 = vmul.f32 %v3204, 0.6931472
          %v3206 = vmul.f32 -0.5, %v2393
          %v3207 = vadd.f32 %v3206, 1.0
          %v3208 = vmul.f32 %v3207, %v2393
          %v3209 = vand.u32 2147483647, %v2393
          %vm3210 = vcmp.lt.f32.partialorder %v3209, 0.0004427343
          %v3211 = vsel %vm3210, %v3208, %v3205
          %v3212 = vadd.f32 %v2395, 1.0
          %v3213 = vlog2.pop %v3212
          %v3214 = vmul.f32 %v3213, 0.6931472
          %v3215 = vmul.f32 -0.5, %v2395
          %v3216 = vadd.f32 %v3215, 1.0
          %v3217 = vmul.f32 %v3216, %v2395
          %v3218 = vand.u32 2147483647, %v2395
          %vm3219 = vcmp.lt.f32.partialorder %v3218, 0.0004427343
          %v3220 = vsel %vm3219, %v3217, %v3214
          %v3221 = vadd.f32 %v2397, 1.0
          %v3222 = vlog2.pop %v3221
          %v3223 = vmul.f32 %v3222, 0.6931472
          %v3224 = vmul.f32 -0.5, %v2397
          %v3225 = vadd.f32 %v3224, 1.0
          %v3226 = vmul.f32 %v3225, %v2397
          %v3227 = vand.u32 2147483647, %v2397
          %vm3228 = vcmp.lt.f32.partialorder %v3227, 0.0004427343
          %v3229 = vsel %vm3228, %v3226, %v3223
          %v3230 = vadd.f32 %v2399, 1.0
          %v3231 = vlog2.pop %v3230
          %v3232 = vmul.f32 %v3231, 0.6931472
          %v3233 = vmul.f32 -0.5, %v2399
          %v3234 = vadd.f32 %v3233, 1.0
          %v3235 = vmul.f32 %v3234, %v2399
          %v3236 = vand.u32 2147483647, %v2399
          %vm3237 = vcmp.lt.f32.partialorder %v3236, 0.0004427343
          %v3238 = vsel %vm3237, %v3235, %v3232
          %v3239 = vadd.f32 %v2401, 1.0
          %v3240 = vlog2.pop %v3239
          %v3241 = vmul.f32 %v3240, 0.6931472
          %v3242 = vmul.f32 -0.5, %v2401
          %v3243 = vadd.f32 %v3242, 1.0
          %v3244 = vmul.f32 %v3243, %v2401
          %v3245 = vand.u32 2147483647, %v2401
          %vm3246 = vcmp.lt.f32.partialorder %v3245, 0.0004427343
          %v3247 = vsel %vm3246, %v3244, %v3241
          %v3248 = vadd.f32 %v2403, 1.0
          %v3249 = vlog2.pop %v3248
          %v3250 = vmul.f32 %v3249, 0.6931472
          %v3251 = vmul.f32 -0.5, %v2403
          %v3252 = vadd.f32 %v3251, 1.0
          %v3253 = vmul.f32 %v3252, %v2403
          %v3254 = vand.u32 2147483647, %v2403
          %vm3255 = vcmp.lt.f32.partialorder %v3254, 0.0004427343
          %v3256 = vsel %vm3255, %v3253, %v3250
          %v3257 = vadd.f32 %v2405, 1.0
          %v3258 = vlog2.pop %v3257
          %v3259 = vmul.f32 %v3258, 0.6931472
          %v3260 = vmul.f32 -0.5, %v2405
          %v3261 = vadd.f32 %v3260, 1.0
          %v3262 = vmul.f32 %v3261, %v2405
          %v3263 = vand.u32 2147483647, %v2405
          %vm3264 = vcmp.lt.f32.partialorder %v3263, 0.0004427343
          %v3265 = vsel %vm3264, %v3262, %v3259
          %v3266 = vadd.f32 %v2407, 1.0
          %v3267 = vlog2.pop %v3266
          %v3268 = vmul.f32 %v3267, 0.6931472
          %v3269 = vmul.f32 -0.5, %v2407
          %v3270 = vadd.f32 %v3269, 1.0
          %v3271 = vmul.f32 %v3270, %v2407
          %v3272 = vand.u32 2147483647, %v2407
          %vm3273 = vcmp.lt.f32.partialorder %v3272, 0.0004427343
          %v3274 = vsel %vm3273, %v3271, %v3268
          %v3275 = vadd.f32 %v2409, 1.0
          %v3276 = vlog2.pop %v3275
          %v3277 = vmul.f32 %v3276, 0.6931472
          %v3278 = vmul.f32 -0.5, %v2409
          %v3279 = vadd.f32 %v3278, 1.0
          %v3280 = vmul.f32 %v3279, %v2409
          %v3281 = vand.u32 2147483647, %v2409
          %vm3282 = vcmp.lt.f32.partialorder %v3281, 0.0004427343
          %v3283 = vsel %vm3282, %v3280, %v3277
          %v3284 = vadd.f32 %v2411, 1.0
          %v3285 = vlog2.pop %v3284
          %v3286 = vmul.f32 %v3285, 0.6931472
          %v3287 = vmul.f32 -0.5, %v2411
          %v3288 = vadd.f32 %v3287, 1.0
          %v3289 = vmul.f32 %v3288, %v2411
          %v3290 = vand.u32 2147483647, %v2411
          %vm3291 = vcmp.lt.f32.partialorder %v3290, 0.0004427343
          %v3292 = vsel %vm3291, %v3289, %v3286
          %v3293 = vadd.f32 %v2413, 1.0
          %v3294 = vlog2.pop %v3293
          %v3295 = vmul.f32 %v3294, 0.6931472
          %v3296 = vmul.f32 -0.5, %v2413
          %v3297 = vadd.f32 %v3296, 1.0
          %v3298 = vmul.f32 %v3297, %v2413
          %v3299 = vand.u32 2147483647, %v2413
          %vm3300 = vcmp.lt.f32.partialorder %v3299, 0.0004427343
          %v3301 = vsel %vm3300, %v3298, %v3295
          %v3302 = vadd.f32 %v2415, 1.0
          %v3303 = vlog2.pop %v3302
          %v3304 = vmul.f32 %v3303, 0.6931472
          %v3305 = vmul.f32 -0.5, %v2415
          %v3306 = vadd.f32 %v3305, 1.0
          %v3307 = vmul.f32 %v3306, %v2415
          %v3308 = vand.u32 2147483647, %v2415
          %vm3309 = vcmp.lt.f32.partialorder %v3308, 0.0004427343
          %v3310 = vsel %vm3309, %v3307, %v3304
          %v3311 = vadd.f32 %v2417, 1.0
          %v3312 = vlog2.pop %v3311
          %v3313 = vmul.f32 %v3312, 0.6931472
          %v3314 = vmul.f32 -0.5, %v2417
          %v3315 = vadd.f32 %v3314, 1.0
          %v3316 = vmul.f32 %v3315, %v2417
          %v3317 = vand.u32 2147483647, %v2417
          %vm3318 = vcmp.lt.f32.partialorder %v3317, 0.0004427343
          %v3319 = vsel %vm3318, %v3316, %v3313
          %v3320 = vadd.f32 %v2419, 1.0
          %v3321 = vlog2.pop %v3320
          %v3322 = vmul.f32 %v3321, 0.6931472
          %v3323 = vmul.f32 -0.5, %v2419
          %v3324 = vadd.f32 %v3323, 1.0
          %v3325 = vmul.f32 %v3324, %v2419
          %v3326 = vand.u32 2147483647, %v2419
          %vm3327 = vcmp.lt.f32.partialorder %v3326, 0.0004427343
          %v3328 = vsel %vm3327, %v3325, %v3322
          %v3329 = vadd.f32 %v2421, 1.0
          %v3330 = vlog2.pop %v3329
          %v3331 = vmul.f32 %v3330, 0.6931472
          %v3332 = vmul.f32 -0.5, %v2421
          %v3333 = vadd.f32 %v3332, 1.0
          %v3334 = vmul.f32 %v3333, %v2421
          %v3335 = vand.u32 2147483647, %v2421
          %vm3336 = vcmp.lt.f32.partialorder %v3335, 0.0004427343
          %v3337 = vsel %vm3336, %v3334, %v3331
          %v3338 = vadd.f32 %v2423, 1.0
          %v3339 = vlog2.pop %v3338
          %v3340 = vmul.f32 %v3339, 0.6931472
          %v3341 = vmul.f32 -0.5, %v2423
          %v3342 = vadd.f32 %v3341, 1.0
          %v3343 = vmul.f32 %v3342, %v2423
          %v3344 = vand.u32 2147483647, %v2423
          %vm3345 = vcmp.lt.f32.partialorder %v3344, 0.0004427343
          %v3346 = vsel %vm3345, %v3343, %v3340
          %v3347 = vadd.f32 %v2425, 1.0
          %v3348 = vlog2.pop %v3347
          %v3349 = vmul.f32 %v3348, 0.6931472
          %v3350 = vmul.f32 -0.5, %v2425
          %v3351 = vadd.f32 %v3350, 1.0
          %v3352 = vmul.f32 %v3351, %v2425
          %v3353 = vand.u32 2147483647, %v2425
          %vm3354 = vcmp.lt.f32.partialorder %v3353, 0.0004427343
          %v3355 = vsel %vm3354, %v3352, %v3349
          %v3356 = vadd.f32 %v2427, 1.0
          %v3357 = vlog2.pop %v3356
          %v3358 = vmul.f32 %v3357, 0.6931472
          %v3359 = vmul.f32 -0.5, %v2427
          %v3360 = vadd.f32 %v3359, 1.0
          %v3361 = vmul.f32 %v3360, %v2427
          %v3362 = vand.u32 2147483647, %v2427
          %vm3363 = vcmp.lt.f32.partialorder %v3362, 0.0004427343
          %v3364 = vsel %vm3363, %v3361, %v3358
          %v3365 = vadd.f32 %v2429, 1.0
          %v3366 = vlog2.pop %v3365
          %v3367 = vmul.f32 %v3366, 0.6931472
          %v3368 = vmul.f32 -0.5, %v2429
          %v3369 = vadd.f32 %v3368, 1.0
          %v3370 = vmul.f32 %v3369, %v2429
          %v3371 = vand.u32 2147483647, %v2429
          %vm3372 = vcmp.lt.f32.partialorder %v3371, 0.0004427343
          %v3373 = vsel %vm3372, %v3370, %v3367
          %v3374 = vadd.f32 %v2431, 1.0
          %v3375 = vlog2.pop %v3374
          %v3376 = vmul.f32 %v3375, 0.6931472
          %v3377 = vmul.f32 -0.5, %v2431
          %v3378 = vadd.f32 %v3377, 1.0
          %v3379 = vmul.f32 %v3378, %v2431
          %v3380 = vand.u32 2147483647, %v2431
          %vm3381 = vcmp.lt.f32.partialorder %v3380, 0.0004427343
          %v3382 = vsel %vm3381, %v3379, %v3376
          %v3383 = vadd.f32 %v2433, 1.0
          %v3384 = vlog2.pop %v3383
          %v3385 = vmul.f32 %v3384, 0.6931472
          %v3386 = vmul.f32 -0.5, %v2433
          %v3387 = vadd.f32 %v3386, 1.0
          %v3388 = vmul.f32 %v3387, %v2433
          %v3389 = vand.u32 2147483647, %v2433
          %vm3390 = vcmp.lt.f32.partialorder %v3389, 0.0004427343
          %v3391 = vsel %vm3390, %v3388, %v3385
          %v3392 = vadd.f32 %v2435, 1.0
          %v3393 = vlog2.pop %v3392
          %v3394 = vmul.f32 %v3393, 0.6931472
          %v3395 = vmul.f32 -0.5, %v2435
          %v3396 = vadd.f32 %v3395, 1.0
          %v3397 = vmul.f32 %v3396, %v2435
          %v3398 = vand.u32 2147483647, %v2435
          %vm3399 = vcmp.lt.f32.partialorder %v3398, 0.0004427343
          %v3400 = vsel %vm3399, %v3397, %v3394
          %v3401 = vadd.f32 %v2437, 1.0
          %v3402 = vlog2.pop %v3401
          %v3403 = vmul.f32 %v3402, 0.6931472
          %v3404 = vmul.f32 -0.5, %v2437
          %v3405 = vadd.f32 %v3404, 1.0
          %v3406 = vmul.f32 %v3405, %v2437
          %v3407 = vand.u32 2147483647, %v2437
          %vm3408 = vcmp.lt.f32.partialorder %v3407, 0.0004427343
          %v3409 = vsel %vm3408, %v3406, %v3403
          %v3410 = vadd.f32 %v2439, 1.0
          %v3411 = vlog2.pop %v3410
          %v3412 = vmul.f32 %v3411, 0.6931472
          %v3413 = vmul.f32 -0.5, %v2439
          %v3414 = vadd.f32 %v3413, 1.0
          %v3415 = vmul.f32 %v3414, %v2439
          %v3416 = vand.u32 2147483647, %v2439
          %vm3417 = vcmp.lt.f32.partialorder %v3416, 0.0004427343
          %v3418 = vsel %vm3417, %v3415, %v3412
          %v3419 = vadd.f32 %v2441, 1.0
          %v3420 = vlog2.pop %v3419
          %v3421 = vmul.f32 %v3420, 0.6931472
          %v3422 = vmul.f32 -0.5, %v2441
          %v3423 = vadd.f32 %v3422, 1.0
          %v3424 = vmul.f32 %v3423, %v2441
          %v3425 = vand.u32 2147483647, %v2441
          %vm3426 = vcmp.lt.f32.partialorder %v3425, 0.0004427343
          %v3427 = vsel %vm3426, %v3424, %v3421
          %v3428 = vadd.f32 %v2443, 1.0
          %v3429 = vlog2.pop %v3428
          %v3430 = vmul.f32 %v3429, 0.6931472
          %v3431 = vmul.f32 -0.5, %v2443
          %v3432 = vadd.f32 %v3431, 1.0
          %v3433 = vmul.f32 %v3432, %v2443
          %v3434 = vand.u32 2147483647, %v2443
          %vm3435 = vcmp.lt.f32.partialorder %v3434, 0.0004427343
          %v3436 = vsel %vm3435, %v3433, %v3430
          %v3437 = vadd.f32 %v2445, 1.0
          %v3438 = vlog2.pop %v3437
          %v3439 = vmul.f32 %v3438, 0.6931472
          %v3440 = vmul.f32 -0.5, %v2445
          %v3441 = vadd.f32 %v3440, 1.0
          %v3442 = vmul.f32 %v3441, %v2445
          %v3443 = vand.u32 2147483647, %v2445
          %vm3444 = vcmp.lt.f32.partialorder %v3443, 0.0004427343
          %v3445 = vsel %vm3444, %v3442, %v3439
          %v3446 = vadd.f32 %v2447, 1.0
          %v3447 = vlog2.pop %v3446
          %v3448 = vmul.f32 %v3447, 0.6931472
          %v3449 = vmul.f32 -0.5, %v2447
          %v3450 = vadd.f32 %v3449, 1.0
          %v3451 = vmul.f32 %v3450, %v2447
          %v3452 = vand.u32 2147483647, %v2447
          %vm3453 = vcmp.lt.f32.partialorder %v3452, 0.0004427343
          %v3454 = vsel %vm3453, %v3451, %v3448
          %v3455 = vadd.f32 %v2449, 1.0
          %v3456 = vlog2.pop %v3455
          %v3457 = vmul.f32 %v3456, 0.6931472
          %v3458 = vmul.f32 -0.5, %v2449
          %v3459 = vadd.f32 %v3458, 1.0
          %v3460 = vmul.f32 %v3459, %v2449
          %v3461 = vand.u32 2147483647, %v2449
          %vm3462 = vcmp.lt.f32.partialorder %v3461, 0.0004427343
          %v3463 = vsel %vm3462, %v3460, %v3457
          %v3464 = vadd.f32 %v2451, 1.0
          %v3465 = vlog2.pop %v3464
          %v3466 = vmul.f32 %v3465, 0.6931472
          %v3467 = vmul.f32 -0.5, %v2451
          %v3468 = vadd.f32 %v3467, 1.0
          %v3469 = vmul.f32 %v3468, %v2451
          %v3470 = vand.u32 2147483647, %v2451
          %vm3471 = vcmp.lt.f32.partialorder %v3470, 0.0004427343
          %v3472 = vsel %vm3471, %v3469, %v3466
          %v3473 = vadd.f32 %v2453, 1.0
          %v3474 = vlog2.pop %v3473
          %v3475 = vmul.f32 %v3474, 0.6931472
          %v3476 = vmul.f32 -0.5, %v2453
          %v3477 = vadd.f32 %v3476, 1.0
          %v3478 = vmul.f32 %v3477, %v2453
          %v3479 = vand.u32 2147483647, %v2453
          %vm3480 = vcmp.lt.f32.partialorder %v3479, 0.0004427343
          %v3481 = vsel %vm3480, %v3478, %v3475
          %v3482 = vadd.f32 %v2455, 1.0
          %v3483 = vlog2.pop %v3482
          %v3484 = vmul.f32 %v3483, 0.6931472
          %v3485 = vmul.f32 -0.5, %v2455
          %v3486 = vadd.f32 %v3485, 1.0
          %v3487 = vmul.f32 %v3486, %v2455
          %v3488 = vand.u32 2147483647, %v2455
          %vm3489 = vcmp.lt.f32.partialorder %v3488, 0.0004427343
          %v3490 = vsel %vm3489, %v3487, %v3484
          %v3491 = vadd.f32 %v2457, 1.0
          %v3492 = vlog2.pop %v3491
          %v3493 = vmul.f32 %v3492, 0.6931472
          %v3494 = vmul.f32 -0.5, %v2457
          %v3495 = vadd.f32 %v3494, 1.0
          %v3496 = vmul.f32 %v3495, %v2457
          %v3497 = vand.u32 2147483647, %v2457
          %vm3498 = vcmp.lt.f32.partialorder %v3497, 0.0004427343
          %v3499 = vsel %vm3498, %v3496, %v3493
          %v3500 = vadd.f32 %v2459, 1.0
          %v3501 = vlog2.pop %v3500
          %v3502 = vmul.f32 %v3501, 0.6931472
          %v3503 = vmul.f32 -0.5, %v2459
          %v3504 = vadd.f32 %v3503, 1.0
          %v3505 = vmul.f32 %v3504, %v2459
          %v3506 = vand.u32 2147483647, %v2459
          %vm3507 = vcmp.lt.f32.partialorder %v3506, 0.0004427343
          %v3508 = vsel %vm3507, %v3505, %v3502
          %v3509 = vadd.f32 %v2461, 1.0
          %v3510 = vlog2.pop %v3509
          %v3511 = vmul.f32 %v3510, 0.6931472
          %v3512 = vmul.f32 -0.5, %v2461
          %v3513 = vadd.f32 %v3512, 1.0
          %v3514 = vmul.f32 %v3513, %v2461
          %v3515 = vand.u32 2147483647, %v2461
          %vm3516 = vcmp.lt.f32.partialorder %v3515, 0.0004427343
          %v3517 = vsel %vm3516, %v3514, %v3511
          %v3518 = vadd.f32 %v2463, 1.0
          %v3519 = vlog2.pop %v3518
          %v3520 = vmul.f32 %v3519, 0.6931472
          %v3521 = vmul.f32 -0.5, %v2463
          %v3522 = vadd.f32 %v3521, 1.0
          %v3523 = vmul.f32 %v3522, %v2463
          %v3524 = vand.u32 2147483647, %v2463
          %vm3525 = vcmp.lt.f32.partialorder %v3524, 0.0004427343
          %v3526 = vsel %vm3525, %v3523, %v3520
          %v3527 = vadd.f32 %v2465, 1.0
          %v3528 = vlog2.pop %v3527
          %v3529 = vmul.f32 %v3528, 0.6931472
          %v3530 = vmul.f32 -0.5, %v2465
          %v3531 = vadd.f32 %v3530, 1.0
          %v3532 = vmul.f32 %v3531, %v2465
          %v3533 = vand.u32 2147483647, %v2465
          %vm3534 = vcmp.lt.f32.partialorder %v3533, 0.0004427343
          %v3535 = vsel %vm3534, %v3532, %v3529
          %v3536 = vadd.f32 %v2467, 1.0
          %v3537 = vlog2.pop %v3536
          %v3538 = vmul.f32 %v3537, 0.6931472
          %v3539 = vmul.f32 -0.5, %v2467
          %v3540 = vadd.f32 %v3539, 1.0
          %v3541 = vmul.f32 %v3540, %v2467
          %v3542 = vand.u32 2147483647, %v2467
          %vm3543 = vcmp.lt.f32.partialorder %v3542, 0.0004427343
          %v3544 = vsel %vm3543, %v3541, %v3538
          %v3545 = vadd.f32 %v2469, 1.0
          %v3546 = vlog2.pop %v3545
          %v3547 = vmul.f32 %v3546, 0.6931472
          %v3548 = vmul.f32 -0.5, %v2469
          %v3549 = vadd.f32 %v3548, 1.0
          %v3550 = vmul.f32 %v3549, %v2469
          %v3551 = vand.u32 2147483647, %v2469
          %vm3552 = vcmp.lt.f32.partialorder %v3551, 0.0004427343
          %v3553 = vsel %vm3552, %v3550, %v3547
          %v3554 = vadd.f32 %v2471, 1.0
          %v3555 = vlog2.pop %v3554
          %v3556 = vmul.f32 %v3555, 0.6931472
          %v3557 = vmul.f32 -0.5, %v2471
          %v3558 = vadd.f32 %v3557, 1.0
          %v3559 = vmul.f32 %v3558, %v2471
          %v3560 = vand.u32 2147483647, %v2471
          %vm3561 = vcmp.lt.f32.partialorder %v3560, 0.0004427343
          %v3562 = vsel %vm3561, %v3559, %v3556
          %v3563 = vadd.f32 %v2473, 1.0
          %v3564 = vlog2.pop %v3563
          %v3565 = vmul.f32 %v3564, 0.6931472
          %v3566 = vmul.f32 -0.5, %v2473
          %v3567 = vadd.f32 %v3566, 1.0
          %v3568 = vmul.f32 %v3567, %v2473
          %v3569 = vand.u32 2147483647, %v2473
          %vm3570 = vcmp.lt.f32.partialorder %v3569, 0.0004427343
          %v3571 = vsel %vm3570, %v3568, %v3565
          %v3572 = vadd.f32 %v2475, 1.0
          %v3573 = vlog2.pop %v3572
          %v3574 = vmul.f32 %v3573, 0.6931472
          %v3575 = vmul.f32 -0.5, %v2475
          %v3576 = vadd.f32 %v3575, 1.0
          %v3577 = vmul.f32 %v3576, %v2475
          %v3578 = vand.u32 2147483647, %v2475
          %vm3579 = vcmp.lt.f32.partialorder %v3578, 0.0004427343
          %v3580 = vsel %vm3579, %v3577, %v3574
          %v3581 = vadd.f32 %v2477, 1.0
          %v3582 = vlog2.pop %v3581
          %v3583 = vmul.f32 %v3582, 0.6931472
          %v3584 = vmul.f32 -0.5, %v2477
          %v3585 = vadd.f32 %v3584, 1.0
          %v3586 = vmul.f32 %v3585, %v2477
          %v3587 = vand.u32 2147483647, %v2477
          %vm3588 = vcmp.lt.f32.partialorder %v3587, 0.0004427343
          %v3589 = vsel %vm3588, %v3586, %v3583
          %v3590 = vadd.f32 %v2479, 1.0
          %v3591 = vlog2.pop %v3590
          %v3592 = vmul.f32 %v3591, 0.6931472
          %v3593 = vmul.f32 -0.5, %v2479
          %v3594 = vadd.f32 %v3593, 1.0
          %v3595 = vmul.f32 %v3594, %v2479
          %v3596 = vand.u32 2147483647, %v2479
          %vm3597 = vcmp.lt.f32.partialorder %v3596, 0.0004427343
          %v3598 = vsel %vm3597, %v3595, %v3592
          %v3599 = vadd.f32 %v2481, 1.0
          %v3600 = vlog2.pop %v3599
          %v3601 = vmul.f32 %v3600, 0.6931472
          %v3602 = vmul.f32 -0.5, %v2481
          %v3603 = vadd.f32 %v3602, 1.0
          %v3604 = vmul.f32 %v3603, %v2481
          %v3605 = vand.u32 2147483647, %v2481
          %vm3606 = vcmp.lt.f32.partialorder %v3605, 0.0004427343
          %v3607 = vsel %vm3606, %v3604, %v3601
          %v3608 = vadd.f32 %v2483, 1.0
          %v3609 = vlog2.pop %v3608
          %v3610 = vmul.f32 %v3609, 0.6931472
          %v3611 = vmul.f32 -0.5, %v2483
          %v3612 = vadd.f32 %v3611, 1.0
          %v3613 = vmul.f32 %v3612, %v2483
          %v3614 = vand.u32 2147483647, %v2483
          %vm3615 = vcmp.lt.f32.partialorder %v3614, 0.0004427343
          %v3616 = vsel %vm3615, %v3613, %v3610
          %v3617 = vadd.f32 %v2485, 1.0
          %v3618 = vlog2.pop %v3617
          %v3619 = vmul.f32 %v3618, 0.6931472
          %v3620 = vmul.f32 -0.5, %v2485
          %v3621 = vadd.f32 %v3620, 1.0
          %v3622 = vmul.f32 %v3621, %v2485
          %v3623 = vand.u32 2147483647, %v2485
          %vm3624 = vcmp.lt.f32.partialorder %v3623, 0.0004427343
          %v3625 = vsel %vm3624, %v3622, %v3619
          %v3626 = vadd.f32 %v2487, 1.0
          %v3627 = vlog2.pop %v3626
          %v3628 = vmul.f32 %v3627, 0.6931472
          %v3629 = vmul.f32 -0.5, %v2487
          %v3630 = vadd.f32 %v3629, 1.0
          %v3631 = vmul.f32 %v3630, %v2487
          %v3632 = vand.u32 2147483647, %v2487
          %vm3633 = vcmp.lt.f32.partialorder %v3632, 0.0004427343
          %v3634 = vsel %vm3633, %v3631, %v3628
          %v3635 = vadd.f32 %v2489, 1.0
          %v3636 = vlog2.pop %v3635
          %v3637 = vmul.f32 %v3636, 0.6931472
          %v3638 = vmul.f32 -0.5, %v2489
          %v3639 = vadd.f32 %v3638, 1.0
          %v3640 = vmul.f32 %v3639, %v2489
          %v3641 = vand.u32 2147483647, %v2489
          %vm3642 = vcmp.lt.f32.partialorder %v3641, 0.0004427343
          %v3643 = vsel %vm3642, %v3640, %v3637
          %v3644 = vadd.f32 %v2491, 1.0
          %v3645 = vlog2.pop %v3644
          %v3646 = vmul.f32 %v3645, 0.6931472
          %v3647 = vmul.f32 -0.5, %v2491
          %v3648 = vadd.f32 %v3647, 1.0
          %v3649 = vmul.f32 %v3648, %v2491
          %v3650 = vand.u32 2147483647, %v2491
          %vm3651 = vcmp.lt.f32.partialorder %v3650, 0.0004427343
          %v3652 = vsel %vm3651, %v3649, %v3646
          %v3653 = vadd.f32 %v2493, 1.0
          %v3654 = vlog2.pop %v3653
          %v3655 = vmul.f32 %v3654, 0.6931472
          %v3656 = vmul.f32 -0.5, %v2493
          %v3657 = vadd.f32 %v3656, 1.0
          %v3658 = vmul.f32 %v3657, %v2493
          %v3659 = vand.u32 2147483647, %v2493
          %vm3660 = vcmp.lt.f32.partialorder %v3659, 0.0004427343
          %v3661 = vsel %vm3660, %v3658, %v3655
          %v3662 = vadd.f32 %v2495, 1.0
          %v3663 = vlog2.pop %v3662
          %v3664 = vmul.f32 %v3663, 0.6931472
          %v3665 = vmul.f32 -0.5, %v2495
          %v3666 = vadd.f32 %v3665, 1.0
          %v3667 = vmul.f32 %v3666, %v2495
          %v3668 = vand.u32 2147483647, %v2495
          %vm3669 = vcmp.lt.f32.partialorder %v3668, 0.0004427343
          %v3670 = vsel %vm3669, %v3667, %v3664
          %v3671 = vadd.f32 %v2497, 1.0
          %v3672 = vlog2.pop %v3671
          %v3673 = vmul.f32 %v3672, 0.6931472
          %v3674 = vmul.f32 -0.5, %v2497
          %v3675 = vadd.f32 %v3674, 1.0
          %v3676 = vmul.f32 %v3675, %v2497
          %v3677 = vand.u32 2147483647, %v2497
          %vm3678 = vcmp.lt.f32.partialorder %v3677, 0.0004427343
          %v3679 = vsel %vm3678, %v3676, %v3673
          %v3680 = vadd.f32 %v2499, 1.0
          %v3681 = vlog2.pop %v3680
          %v3682 = vmul.f32 %v3681, 0.6931472
          %v3683 = vmul.f32 -0.5, %v2499
          %v3684 = vadd.f32 %v3683, 1.0
          %v3685 = vmul.f32 %v3684, %v2499
          %v3686 = vand.u32 2147483647, %v2499
          %vm3687 = vcmp.lt.f32.partialorder %v3686, 0.0004427343
          %v3688 = vsel %vm3687, %v3685, %v3682
          %v3689 = vadd.f32 %v2501, 1.0
          %v3690 = vlog2.pop %v3689
          %v3691 = vmul.f32 %v3690, 0.6931472
          %v3692 = vmul.f32 -0.5, %v2501
          %v3693 = vadd.f32 %v3692, 1.0
          %v3694 = vmul.f32 %v3693, %v2501
          %v3695 = vand.u32 2147483647, %v2501
          %vm3696 = vcmp.lt.f32.partialorder %v3695, 0.0004427343
          %v3697 = vsel %vm3696, %v3694, %v3691
          %v3698 = vadd.f32 %v2503, 1.0
          %v3699 = vlog2.pop %v3698
          %v3700 = vmul.f32 %v3699, 0.6931472
          %v3701 = vmul.f32 -0.5, %v2503
          %v3702 = vadd.f32 %v3701, 1.0
          %v3703 = vmul.f32 %v3702, %v2503
          %v3704 = vand.u32 2147483647, %v2503
          %vm3705 = vcmp.lt.f32.partialorder %v3704, 0.0004427343
          %v3706 = vsel %vm3705, %v3703, %v3700
          %v3707 = vadd.f32 %v2505, 1.0
          %v3708 = vlog2.pop %v3707
          %v3709 = vmul.f32 %v3708, 0.6931472
          %v3710 = vmul.f32 -0.5, %v2505
          %v3711 = vadd.f32 %v3710, 1.0
          %v3712 = vmul.f32 %v3711, %v2505
          %v3713 = vand.u32 2147483647, %v2505
          %vm3714 = vcmp.lt.f32.partialorder %v3713, 0.0004427343
          %v3715 = vsel %vm3714, %v3712, %v3709
          %v3716 = vadd.f32 %v2507, 1.0
          %v3717 = vlog2.pop %v3716
          %v3718 = vmul.f32 %v3717, 0.6931472
          %v3719 = vmul.f32 -0.5, %v2507
          %v3720 = vadd.f32 %v3719, 1.0
          %v3721 = vmul.f32 %v3720, %v2507
          %v3722 = vand.u32 2147483647, %v2507
          %vm3723 = vcmp.lt.f32.partialorder %v3722, 0.0004427343
          %v3724 = vsel %vm3723, %v3721, %v3718
          %v3725 = vadd.f32 %v2509, 1.0
          %v3726 = vlog2.pop %v3725
          %v3727 = vmul.f32 %v3726, 0.6931472
          %v3728 = vmul.f32 -0.5, %v2509
          %v3729 = vadd.f32 %v3728, 1.0
          %v3730 = vmul.f32 %v3729, %v2509
          %v3731 = vand.u32 2147483647, %v2509
          %vm3732 = vcmp.lt.f32.partialorder %v3731, 0.0004427343
          %v3733 = vsel %vm3732, %v3730, %v3727
          %v3734 = vadd.f32 %v2511, 1.0
          %v3735 = vlog2.pop %v3734
          %v3736 = vmul.f32 %v3735, 0.6931472
          %v3737 = vmul.f32 -0.5, %v2511
          %v3738 = vadd.f32 %v3737, 1.0
          %v3739 = vmul.f32 %v3738, %v2511
          %v3740 = vand.u32 2147483647, %v2511
          %vm3741 = vcmp.lt.f32.partialorder %v3740, 0.0004427343
          %v3742 = vsel %vm3741, %v3739, %v3736
          %v3743 = vadd.f32 %v2513, 1.0
          %v3744 = vlog2.pop %v3743
          %v3745 = vmul.f32 %v3744, 0.6931472
          %v3746 = vmul.f32 -0.5, %v2513
          %v3747 = vadd.f32 %v3746, 1.0
          %v3748 = vmul.f32 %v3747, %v2513
          %v3749 = vand.u32 2147483647, %v2513
          %vm3750 = vcmp.lt.f32.partialorder %v3749, 0.0004427343
          %v3751 = vsel %vm3750, %v3748, %v3745
          %v3752 = vadd.f32 %v2515, 1.0
          %v3753 = vlog2.pop %v3752
          %v3754 = vmul.f32 %v3753, 0.6931472
          %v3755 = vmul.f32 -0.5, %v2515
          %v3756 = vadd.f32 %v3755, 1.0
          %v3757 = vmul.f32 %v3756, %v2515
          %v3758 = vand.u32 2147483647, %v2515
          %vm3759 = vcmp.lt.f32.partialorder %v3758, 0.0004427343
          %v3760 = vsel %vm3759, %v3757, %v3754
          %v3761 = vadd.f32 %v2517, 1.0
          %v3762 = vlog2.pop %v3761
          %v3763 = vmul.f32 %v3762, 0.6931472
          %v3764 = vmul.f32 -0.5, %v2517
          %v3765 = vadd.f32 %v3764, 1.0
          %v3766 = vmul.f32 %v3765, %v2517
          %v3767 = vand.u32 2147483647, %v2517
          %vm3768 = vcmp.lt.f32.partialorder %v3767, 0.0004427343
          %v3769 = vsel %vm3768, %v3766, %v3763
          %v3770 = vadd.f32 %v2519, 1.0
          %v3771 = vlog2.pop %v3770
          %v3772 = vmul.f32 %v3771, 0.6931472
          %v3773 = vmul.f32 -0.5, %v2519
          %v3774 = vadd.f32 %v3773, 1.0
          %v3775 = vmul.f32 %v3774, %v2519
          %v3776 = vand.u32 2147483647, %v2519
          %vm3777 = vcmp.lt.f32.partialorder %v3776, 0.0004427343
          %v3778 = vsel %vm3777, %v3775, %v3772
          %v3779 = vadd.f32 %v2521, 1.0
          %v3780 = vlog2.pop %v3779
          %v3781 = vmul.f32 %v3780, 0.6931472
          %v3782 = vmul.f32 -0.5, %v2521
          %v3783 = vadd.f32 %v3782, 1.0
          %v3784 = vmul.f32 %v3783, %v2521
          %v3785 = vand.u32 2147483647, %v2521
          %vm3786 = vcmp.lt.f32.partialorder %v3785, 0.0004427343
          %v3787 = vsel %vm3786, %v3784, %v3781
          %v3788 = vadd.f32 %v2523, 1.0
          %v3789 = vlog2.pop %v3788
          %v3790 = vmul.f32 %v3789, 0.6931472
          %v3791 = vmul.f32 -0.5, %v2523
          %v3792 = vadd.f32 %v3791, 1.0
          %v3793 = vmul.f32 %v3792, %v2523
          %v3794 = vand.u32 2147483647, %v2523
          %vm3795 = vcmp.lt.f32.partialorder %v3794, 0.0004427343
          %v3796 = vsel %vm3795, %v3793, %v3790
          %v3797 = vadd.f32 %v2525, 1.0
          %v3798 = vlog2.pop %v3797
          %v3799 = vmul.f32 %v3798, 0.6931472
          %v3800 = vmul.f32 -0.5, %v2525
          %v3801 = vadd.f32 %v3800, 1.0
          %v3802 = vmul.f32 %v3801, %v2525
          %v3803 = vand.u32 2147483647, %v2525
          %vm3804 = vcmp.lt.f32.partialorder %v3803, 0.0004427343
          %v3805 = vsel %vm3804, %v3802, %v3799
          %v3806 = vadd.f32 %v2526, %v2662
          %v3807 = vadd.f32 %v2527, %v2671
          %v3808 = vadd.f32 %v2528, %v2680
          %v3809 = vadd.f32 %v2529, %v2689
          %v3810 = vadd.f32 %v2530, %v2698
          %v3811 = vadd.f32 %v2531, %v2707
          %v3812 = vadd.f32 %v2532, %v2716
          %v3813 = vadd.f32 %v2533, %v2725
          %v3814 = vadd.f32 %v2534, %v2734
          %v3815 = vadd.f32 %v2535, %v2743
          %v3816 = vadd.f32 %v2536, %v2752
          %v3817 = vadd.f32 %v2537, %v2761
          %v3818 = vadd.f32 %v2538, %v2770
          %v3819 = vadd.f32 %v2539, %v2779
          %v3820 = vadd.f32 %v2540, %v2788
          %v3821 = vadd.f32 %v2541, %v2797
          %v3822 = vadd.f32 %v2542, %v2806
          %v3823 = vadd.f32 %v2543, %v2815
          %v3824 = vadd.f32 %v2544, %v2824
          %v3825 = vadd.f32 %v2545, %v2833
          %v3826 = vadd.f32 %v2546, %v2842
          %v3827 = vadd.f32 %v2547, %v2851
          %v3828 = vadd.f32 %v2548, %v2860
          %v3829 = vadd.f32 %v2549, %v2869
          %v3830 = vadd.f32 %v2550, %v2878
          %v3831 = vadd.f32 %v2551, %v2887
          %v3832 = vadd.f32 %v2552, %v2896
          %v3833 = vadd.f32 %v2553, %v2905
          %v3834 = vadd.f32 %v2554, %v2914
          %v3835 = vadd.f32 %v2555, %v2923
          %v3836 = vadd.f32 %v2556, %v2932
          %v3837 = vadd.f32 %v2557, %v2941
          %v3838 = vadd.f32 %v2558, %v2950
          %v3839 = vadd.f32 %v2559, %v2959
          %v3840 = vadd.f32 %v2560, %v2968
          %v3841 = vadd.f32 %v2561, %v2977
          %v3842 = vadd.f32 %v2562, %v2986
          %v3843 = vadd.f32 %v2563, %v2995
          %v3844 = vadd.f32 %v2564, %v3004
          %v3845 = vadd.f32 %v2565, %v3013
          %v3846 = vadd.f32 %v2566, %v3022
          %v3847 = vadd.f32 %v2567, %v3031
          %v3848 = vadd.f32 %v2568, %v3040
          %v3849 = vadd.f32 %v2569, %v3049
          %v3850 = vadd.f32 %v2570, %v3058
          %v3851 = vadd.f32 %v2571, %v3067
          %v3852 = vadd.f32 %v2572, %v3076
          %v3853 = vadd.f32 %v2573, %v3085
          %v3854 = vadd.f32 %v2574, %v3094
          %v3855 = vadd.f32 %v2575, %v3103
          %v3856 = vadd.f32 %v2576, %v3112
          %v3857 = vadd.f32 %v2577, %v3121
          %v3858 = vadd.f32 %v2578, %v3130
          %v3859 = vadd.f32 %v2579, %v3139
          %v3860 = vadd.f32 %v2580, %v3148
          %v3861 = vadd.f32 %v2581, %v3157
          %v3862 = vadd.f32 %v2582, %v3166
          %v3863 = vadd.f32 %v2583, %v3175
          %v3864 = vadd.f32 %v2584, %v3184
          %v3865 = vadd.f32 %v2585, %v3193
          %v3866 = vadd.f32 %v2586, %v3202
          %v3867 = vadd.f32 %v2587, %v3211
          %v3868 = vadd.f32 %v2588, %v3220
          %v3869 = vadd.f32 %v2589, %v3229
          %v3870 = vadd.f32 %v2590, %v3238
          %v3871 = vadd.f32 %v2591, %v3247
          %v3872 = vadd.f32 %v2592, %v3256
          %v3873 = vadd.f32 %v2593, %v3265
          %v3874 = vadd.f32 %v2594, %v3274
          %v3875 = vadd.f32 %v2595, %v3283
          %v3876 = vadd.f32 %v2596, %v3292
          %v3877 = vadd.f32 %v2597, %v3301
          %v3878 = vadd.f32 %v2598, %v3310
          %v3879 = vadd.f32 %v2599, %v3319
          %v3880 = vadd.f32 %v2600, %v3328
          %v3881 = vadd.f32 %v2601, %v3337
          %v3882 = vadd.f32 %v2602, %v3346
          %v3883 = vadd.f32 %v2603, %v3355
          %v3884 = vadd.f32 %v2604, %v3364
          %v3885 = vadd.f32 %v2605, %v3373
          %v3886 = vadd.f32 %v2606, %v3382
          %v3887 = vadd.f32 %v2607, %v3391
          %v3888 = vadd.f32 %v2608, %v3400
          %v3889 = vadd.f32 %v2609, %v3409
          %v3890 = vadd.f32 %v2610, %v3418
          %v3891 = vadd.f32 %v2611, %v3427
          %v3892 = vadd.f32 %v2612, %v3436
          %v3893 = vadd.f32 %v2613, %v3445
          %v3894 = vadd.f32 %v2614, %v3454
          %v3895 = vadd.f32 %v2615, %v3463
          %v3896 = vadd.f32 %v2616, %v3472
          %v3897 = vadd.f32 %v2617, %v3481
          %v3898 = vadd.f32 %v2618, %v3490
          %v3899 = vadd.f32 %v2619, %v3499
          %v3900 = vadd.f32 %v2620, %v3508
          %v3901 = vadd.f32 %v2621, %v3517
          %v3902 = vadd.f32 %v2622, %v3526
          %v3903 = vadd.f32 %v2623, %v3535
          %v3904 = vadd.f32 %v2624, %v3544
          %v3905 = vadd.f32 %v2625, %v3553
          %v3906 = vadd.f32 %v2626, %v3562
          %v3907 = vadd.f32 %v2627, %v3571
          %v3908 = vadd.f32 %v2628, %v3580
          %v3909 = vadd.f32 %v2629, %v3589
          %v3910 = vadd.f32 %v2630, %v3598
          %v3911 = vadd.f32 %v2631, %v3607
          %v3912 = vadd.f32 %v2632, %v3616
          %v3913 = vadd.f32 %v2633, %v3625
          %v3914 = vadd.f32 %v2634, %v3634
          %v3915 = vadd.f32 %v2635, %v3643
          %v3916 = vadd.f32 %v2636, %v3652
          %v3917 = vadd.f32 %v2637, %v3661
          %v3918 = vadd.f32 %v2638, %v3670
          %v3919 = vadd.f32 %v2639, %v3679
          %v3920 = vadd.f32 %v2640, %v3688
          %v3921 = vadd.f32 %v2641, %v3697
          %v3922 = vadd.f32 %v2642, %v3706
          %v3923 = vadd.f32 %v2643, %v3715
          %v3924 = vadd.f32 %v2644, %v3724
          %v3925 = vadd.f32 %v2645, %v3733
          %v3926 = vadd.f32 %v2646, %v3742
          %v3927 = vadd.f32 %v2647, %v3751
          %v3928 = vadd.f32 %v2648, %v3760
          %v3929 = vadd.f32 %v2649, %v3769
          %v3930 = vadd.f32 %v2650, %v3778
          %v3931 = vadd.f32 %v2651, %v3787
          %v3932 = vadd.f32 %v2652, %v3796
          %v3933 = vadd.f32 %v2653, %v3805
          %v3934 = vsub.f32 %v332, %v3806
          %v3935 = vsub.f32 %v333, %v3807
          %v3936 = vsub.f32 %v334, %v3808
          %v3937 = vsub.f32 %v335, %v3809
          %v3938 = vsub.f32 %v336, %v3810
          %v3939 = vsub.f32 %v337, %v3811
          %v3940 = vsub.f32 %v338, %v3812
          %v3941 = vsub.f32 %v339, %v3813
          %v3942 = vsub.f32 %v340, %v3814
          %v3943 = vsub.f32 %v341, %v3815
          %v3944 = vsub.f32 %v342, %v3816
          %v3945 = vsub.f32 %v343, %v3817
          %v3946 = vsub.f32 %v344, %v3818
          %v3947 = vsub.f32 %v345, %v3819
          %v3948 = vsub.f32 %v346, %v3820
          %v3949 = vsub.f32 %v347, %v3821
          %v3950 = vsub.f32 %v348, %v3822
          %v3951 = vsub.f32 %v349, %v3823
          %v3952 = vsub.f32 %v350, %v3824
          %v3953 = vsub.f32 %v351, %v3825
          %v3954 = vsub.f32 %v352, %v3826
          %v3955 = vsub.f32 %v353, %v3827
          %v3956 = vsub.f32 %v354, %v3828
          %v3957 = vsub.f32 %v355, %v3829
          %v3958 = vsub.f32 %v356, %v3830
          %v3959 = vsub.f32 %v357, %v3831
          %v3960 = vsub.f32 %v358, %v3832
          %v3961 = vsub.f32 %v359, %v3833
          %v3962 = vsub.f32 %v360, %v3834
          %v3963 = vsub.f32 %v361, %v3835
          %v3964 = vsub.f32 %v362, %v3836
          %v3965 = vsub.f32 %v363, %v3837
          %v3966 = vsub.f32 %v364, %v3838
          %v3967 = vsub.f32 %v365, %v3839
          %v3968 = vsub.f32 %v366, %v3840
          %v3969 = vsub.f32 %v367, %v3841
          %v3970 = vsub.f32 %v368, %v3842
          %v3971 = vsub.f32 %v369, %v3843
          %v3972 = vsub.f32 %v370, %v3844
          %v3973 = vsub.f32 %v371, %v3845
          %v3974 = vsub.f32 %v372, %v3846
          %v3975 = vsub.f32 %v373, %v3847
          %v3976 = vsub.f32 %v374, %v3848
          %v3977 = vsub.f32 %v375, %v3849
          %v3978 = vsub.f32 %v376, %v3850
          %v3979 = vsub.f32 %v377, %v3851
          %v3980 = vsub.f32 %v378, %v3852
          %v3981 = vsub.f32 %v379, %v3853
          %v3982 = vsub.f32 %v380, %v3854
          %v3983 = vsub.f32 %v381, %v3855
          %v3984 = vsub.f32 %v382, %v3856
          %v3985 = vsub.f32 %v383, %v3857
          %v3986 = vsub.f32 %v384, %v3858
          %v3987 = vsub.f32 %v385, %v3859
          %v3988 = vsub.f32 %v386, %v3860
          %v3989 = vsub.f32 %v387, %v3861
          %v3990 = vsub.f32 %v388, %v3862
          %v3991 = vsub.f32 %v389, %v3863
          %v3992 = vsub.f32 %v390, %v3864
          %v3993 = vsub.f32 %v391, %v3865
          %v3994 = vsub.f32 %v392, %v3866
          %v3995 = vsub.f32 %v393, %v3867
          %v3996 = vsub.f32 %v394, %v3868
          %v3997 = vsub.f32 %v395, %v3869
          %v3998 = vsub.f32 %v396, %v3870
          %v3999 = vsub.f32 %v397, %v3871
          %v4000 = vsub.f32 %v398, %v3872
          %v4001 = vsub.f32 %v399, %v3873
          %v4002 = vsub.f32 %v400, %v3874
          %v4003 = vsub.f32 %v401, %v3875
          %v4004 = vsub.f32 %v402, %v3876
          %v4005 = vsub.f32 %v403, %v3877
          %v4006 = vsub.f32 %v404, %v3878
          %v4007 = vsub.f32 %v405, %v3879
          %v4008 = vsub.f32 %v406, %v3880
          %v4009 = vsub.f32 %v407, %v3881
          %v4010 = vsub.f32 %v408, %v3882
          %v4011 = vsub.f32 %v409, %v3883
          %v4012 = vsub.f32 %v410, %v3884
          %v4013 = vsub.f32 %v411, %v3885
          %v4014 = vsub.f32 %v412, %v3886
          %v4015 = vsub.f32 %v413, %v3887
          %v4016 = vsub.f32 %v414, %v3888
          %v4017 = vsub.f32 %v415, %v3889
          %v4018 = vsub.f32 %v416, %v3890
          %v4019 = vsub.f32 %v417, %v3891
          %v4020 = vsub.f32 %v418, %v3892
          %v4021 = vsub.f32 %v419, %v3893
          %v4022 = vsub.f32 %v420, %v3894
          %v4023 = vsub.f32 %v421, %v3895
          %v4024 = vsub.f32 %v422, %v3896
          %v4025 = vsub.f32 %v423, %v3897
          %v4026 = vsub.f32 %v424, %v3898
          %v4027 = vsub.f32 %v425, %v3899
          %v4028 = vsub.f32 %v426, %v3900
          %v4029 = vsub.f32 %v427, %v3901
          %v4030 = vsub.f32 %v428, %v3902
          %v4031 = vsub.f32 %v429, %v3903
          %v4032 = vsub.f32 %v430, %v3904
          %v4033 = vsub.f32 %v431, %v3905
          %v4034 = vsub.f32 %v432, %v3906
          %v4035 = vsub.f32 %v433, %v3907
          %v4036 = vsub.f32 %v434, %v3908
          %v4037 = vsub.f32 %v435, %v3909
          %v4038 = vsub.f32 %v436, %v3910
          %v4039 = vsub.f32 %v437, %v3911
          %v4040 = vsub.f32 %v438, %v3912
          %v4041 = vsub.f32 %v439, %v3913
          %v4042 = vsub.f32 %v440, %v3914
          %v4043 = vsub.f32 %v441, %v3915
          %v4044 = vsub.f32 %v442, %v3916
          %v4045 = vsub.f32 %v443, %v3917
          %v4046 = vsub.f32 %v444, %v3918
          %v4047 = vsub.f32 %v445, %v3919
          %v4048 = vsub.f32 %v446, %v3920
          %v4049 = vsub.f32 %v447, %v3921
          %v4050 = vsub.f32 %v448, %v3922
          %v4051 = vsub.f32 %v449, %v3923
          %v4052 = vsub.f32 %v450, %v3924
          %v4053 = vsub.f32 %v451, %v3925
          %v4054 = vsub.f32 %v452, %v3926
          %v4055 = vsub.f32 %v453, %v3927
          %v4056 = vsub.f32 %v454, %v3928
          %v4057 = vsub.f32 %v455, %v3929
          %v4058 = vsub.f32 %v456, %v3930
          %v4059 = vsub.f32 %v457, %v3931
          %v4060 = vsub.f32 %v458, %v3932
          %v4061 = vsub.f32 %v459, %v3933
          %v4062 = vmax.f32 %v3934, -100.0
          %v4063 = vmax.f32 %v3935, -100.0
          %v4064 = vmax.f32 %v3936, -100.0
          %v4065 = vmax.f32 %v3937, -100.0
          %v4066 = vmax.f32 %v3938, -100.0
          %v4067 = vmax.f32 %v3939, -100.0
          %v4068 = vmax.f32 %v3940, -100.0
          %v4069 = vmax.f32 %v3941, -100.0
          %v4070 = vmax.f32 %v3942, -100.0
          %v4071 = vmax.f32 %v3943, -100.0
          %v4072 = vmax.f32 %v3944, -100.0
          %v4073 = vmax.f32 %v3945, -100.0
          %v4074 = vmax.f32 %v3946, -100.0
          %v4075 = vmax.f32 %v3947, -100.0
          %v4076 = vmax.f32 %v3948, -100.0
          %v4077 = vmax.f32 %v3949, -100.0
          %v4078 = vmax.f32 %v3950, -100.0
          %v4079 = vmax.f32 %v3951, -100.0
          %v4080 = vmax.f32 %v3952, -100.0
          %v4081 = vmax.f32 %v3953, -100.0
          %v4082 = vmax.f32 %v3954, -100.0
          %v4083 = vmax.f32 %v3955, -100.0
          %v4084 = vmax.f32 %v3956, -100.0
          %v4085 = vmax.f32 %v3957, -100.0
          %v4086 = vmax.f32 %v3958, -100.0
          %v4087 = vmax.f32 %v3959, -100.0
          %v4088 = vmax.f32 %v3960, -100.0
          %v4089 = vmax.f32 %v3961, -100.0
          %v4090 = vmax.f32 %v3962, -100.0
          %v4091 = vmax.f32 %v3963, -100.0
          %v4092 = vmax.f32 %v3964, -100.0
          %v4093 = vmax.f32 %v3965, -100.0
          %v4094 = vmax.f32 %v3966, -100.0
          %v4095 = vmax.f32 %v3967, -100.0
          %v4096 = vmax.f32 %v3968, -100.0
          %v4097 = vmax.f32 %v3969, -100.0
          %v4098 = vmax.f32 %v3970, -100.0
          %v4099 = vmax.f32 %v3971, -100.0
          %v4100 = vmax.f32 %v3972, -100.0
          %v4101 = vmax.f32 %v3973, -100.0
          %v4102 = vmax.f32 %v3974, -100.0
          %v4103 = vmax.f32 %v3975, -100.0
          %v4104 = vmax.f32 %v3976, -100.0
          %v4105 = vmax.f32 %v3977, -100.0
          %v4106 = vmax.f32 %v3978, -100.0
          %v4107 = vmax.f32 %v3979, -100.0
          %v4108 = vmax.f32 %v3980, -100.0
          %v4109 = vmax.f32 %v3981, -100.0
          %v4110 = vmax.f32 %v3982, -100.0
          %v4111 = vmax.f32 %v3983, -100.0
          %v4112 = vmax.f32 %v3984, -100.0
          %v4113 = vmax.f32 %v3985, -100.0
          %v4114 = vmax.f32 %v3986, -100.0
          %v4115 = vmax.f32 %v3987, -100.0
          %v4116 = vmax.f32 %v3988, -100.0
          %v4117 = vmax.f32 %v3989, -100.0
          %v4118 = vmax.f32 %v3990, -100.0
          %v4119 = vmax.f32 %v3991, -100.0
          %v4120 = vmax.f32 %v3992, -100.0
          %v4121 = vmax.f32 %v3993, -100.0
          %v4122 = vmax.f32 %v3994, -100.0
          %v4123 = vmax.f32 %v3995, -100.0
          %v4124 = vmax.f32 %v3996, -100.0
          %v4125 = vmax.f32 %v3997, -100.0
          %v4126 = vmax.f32 %v3998, -100.0
          %v4127 = vmax.f32 %v3999, -100.0
          %v4128 = vmax.f32 %v4000, -100.0
          %v4129 = vmax.f32 %v4001, -100.0
          %v4130 = vmax.f32 %v4002, -100.0
          %v4131 = vmax.f32 %v4003, -100.0
          %v4132 = vmax.f32 %v4004, -100.0
          %v4133 = vmax.f32 %v4005, -100.0
          %v4134 = vmax.f32 %v4006, -100.0
          %v4135 = vmax.f32 %v4007, -100.0
          %v4136 = vmax.f32 %v4008, -100.0
          %v4137 = vmax.f32 %v4009, -100.0
          %v4138 = vmax.f32 %v4010, -100.0
          %v4139 = vmax.f32 %v4011, -100.0
          %v4140 = vmax.f32 %v4012, -100.0
          %v4141 = vmax.f32 %v4013, -100.0
          %v4142 = vmax.f32 %v4014, -100.0
          %v4143 = vmax.f32 %v4015, -100.0
          %v4144 = vmax.f32 %v4016, -100.0
          %v4145 = vmax.f32 %v4017, -100.0
          %v4146 = vmax.f32 %v4018, -100.0
          %v4147 = vmax.f32 %v4019, -100.0
          %v4148 = vmax.f32 %v4020, -100.0
          %v4149 = vmax.f32 %v4021, -100.0
          %v4150 = vmax.f32 %v4022, -100.0
          %v4151 = vmax.f32 %v4023, -100.0
          %v4152 = vmax.f32 %v4024, -100.0
          %v4153 = vmax.f32 %v4025, -100.0
          %v4154 = vmax.f32 %v4026, -100.0
          %v4155 = vmax.f32 %v4027, -100.0
          %v4156 = vmax.f32 %v4028, -100.0
          %v4157 = vmax.f32 %v4029, -100.0
          %v4158 = vmax.f32 %v4030, -100.0
          %v4159 = vmax.f32 %v4031, -100.0
          %v4160 = vmax.f32 %v4032, -100.0
          %v4161 = vmax.f32 %v4033, -100.0
          %v4162 = vmax.f32 %v4034, -100.0
          %v4163 = vmax.f32 %v4035, -100.0
          %v4164 = vmax.f32 %v4036, -100.0
          %v4165 = vmax.f32 %v4037, -100.0
          %v4166 = vmax.f32 %v4038, -100.0
          %v4167 = vmax.f32 %v4039, -100.0
          %v4168 = vmax.f32 %v4040, -100.0
          %v4169 = vmax.f32 %v4041, -100.0
          %v4170 = vmax.f32 %v4042, -100.0
          %v4171 = vmax.f32 %v4043, -100.0
          %v4172 = vmax.f32 %v4044, -100.0
          %v4173 = vmax.f32 %v4045, -100.0
          %v4174 = vmax.f32 %v4046, -100.0
          %v4175 = vmax.f32 %v4047, -100.0
          %v4176 = vmax.f32 %v4048, -100.0
          %v4177 = vmax.f32 %v4049, -100.0
          %v4178 = vmax.f32 %v4050, -100.0
          %v4179 = vmax.f32 %v4051, -100.0
          %v4180 = vmax.f32 %v4052, -100.0
          %v4181 = vmax.f32 %v4053, -100.0
          %v4182 = vmax.f32 %v4054, -100.0
          %v4183 = vmax.f32 %v4055, -100.0
          %v4184 = vmax.f32 %v4056, -100.0
          %v4185 = vmax.f32 %v4057, -100.0
          %v4186 = vmax.f32 %v4058, -100.0
          %v4187 = vmax.f32 %v4059, -100.0
          %v4188 = vmax.f32 %v4060, -100.0
          %v4189 = vmax.f32 %v4061, -100.0
          %v4190 = vsub.f32 0.0, %v3806
          %v4191 = vsub.f32 0.0, %v3807
          %v4192 = vsub.f32 0.0, %v3808
          %v4193 = vsub.f32 0.0, %v3809
          %v4194 = vsub.f32 0.0, %v3810
          %v4195 = vsub.f32 0.0, %v3811
          %v4196 = vsub.f32 0.0, %v3812
          %v4197 = vsub.f32 0.0, %v3813
          %v4198 = vsub.f32 0.0, %v3814
          %v4199 = vsub.f32 0.0, %v3815
          %v4200 = vsub.f32 0.0, %v3816
          %v4201 = vsub.f32 0.0, %v3817
          %v4202 = vsub.f32 0.0, %v3818
          %v4203 = vsub.f32 0.0, %v3819
          %v4204 = vsub.f32 0.0, %v3820
          %v4205 = vsub.f32 0.0, %v3821
          %v4206 = vsub.f32 0.0, %v3822
          %v4207 = vsub.f32 0.0, %v3823
          %v4208 = vsub.f32 0.0, %v3824
          %v4209 = vsub.f32 0.0, %v3825
          %v4210 = vsub.f32 0.0, %v3826
          %v4211 = vsub.f32 0.0, %v3827
          %v4212 = vsub.f32 0.0, %v3828
          %v4213 = vsub.f32 0.0, %v3829
          %v4214 = vsub.f32 0.0, %v3830
          %v4215 = vsub.f32 0.0, %v3831
          %v4216 = vsub.f32 0.0, %v3832
          %v4217 = vsub.f32 0.0, %v3833
          %v4218 = vsub.f32 0.0, %v3834
          %v4219 = vsub.f32 0.0, %v3835
          %v4220 = vsub.f32 0.0, %v3836
          %v4221 = vsub.f32 0.0, %v3837
          %v4222 = vsub.f32 0.0, %v3838
          %v4223 = vsub.f32 0.0, %v3839
          %v4224 = vsub.f32 0.0, %v3840
          %v4225 = vsub.f32 0.0, %v3841
          %v4226 = vsub.f32 0.0, %v3842
          %v4227 = vsub.f32 0.0, %v3843
          %v4228 = vsub.f32 0.0, %v3844
          %v4229 = vsub.f32 0.0, %v3845
          %v4230 = vsub.f32 0.0, %v3846
          %v4231 = vsub.f32 0.0, %v3847
          %v4232 = vsub.f32 0.0, %v3848
          %v4233 = vsub.f32 0.0, %v3849
          %v4234 = vsub.f32 0.0, %v3850
          %v4235 = vsub.f32 0.0, %v3851
          %v4236 = vsub.f32 0.0, %v3852
          %v4237 = vsub.f32 0.0, %v3853
          %v4238 = vsub.f32 0.0, %v3854
          %v4239 = vsub.f32 0.0, %v3855
          %v4240 = vsub.f32 0.0, %v3856
          %v4241 = vsub.f32 0.0, %v3857
          %v4242 = vsub.f32 0.0, %v3858
          %v4243 = vsub.f32 0.0, %v3859
          %v4244 = vsub.f32 0.0, %v3860
          %v4245 = vsub.f32 0.0, %v3861
          %v4246 = vsub.f32 0.0, %v3862
          %v4247 = vsub.f32 0.0, %v3863
          %v4248 = vsub.f32 0.0, %v3864
          %v4249 = vsub.f32 0.0, %v3865
          %v4250 = vsub.f32 0.0, %v3866
          %v4251 = vsub.f32 0.0, %v3867
          %v4252 = vsub.f32 0.0, %v3868
          %v4253 = vsub.f32 0.0, %v3869
          %v4254 = vsub.f32 0.0, %v3870
          %v4255 = vsub.f32 0.0, %v3871
          %v4256 = vsub.f32 0.0, %v3872
          %v4257 = vsub.f32 0.0, %v3873
          %v4258 = vsub.f32 0.0, %v3874
          %v4259 = vsub.f32 0.0, %v3875
          %v4260 = vsub.f32 0.0, %v3876
          %v4261 = vsub.f32 0.0, %v3877
          %v4262 = vsub.f32 0.0, %v3878
          %v4263 = vsub.f32 0.0, %v3879
          %v4264 = vsub.f32 0.0, %v3880
          %v4265 = vsub.f32 0.0, %v3881
          %v4266 = vsub.f32 0.0, %v3882
          %v4267 = vsub.f32 0.0, %v3883
          %v4268 = vsub.f32 0.0, %v3884
          %v4269 = vsub.f32 0.0, %v3885
          %v4270 = vsub.f32 0.0, %v3886
          %v4271 = vsub.f32 0.0, %v3887
          %v4272 = vsub.f32 0.0, %v3888
          %v4273 = vsub.f32 0.0, %v3889
          %v4274 = vsub.f32 0.0, %v3890
          %v4275 = vsub.f32 0.0, %v3891
          %v4276 = vsub.f32 0.0, %v3892
          %v4277 = vsub.f32 0.0, %v3893
          %v4278 = vsub.f32 0.0, %v3894
          %v4279 = vsub.f32 0.0, %v3895
          %v4280 = vsub.f32 0.0, %v3896
          %v4281 = vsub.f32 0.0, %v3897
          %v4282 = vsub.f32 0.0, %v3898
          %v4283 = vsub.f32 0.0, %v3899
          %v4284 = vsub.f32 0.0, %v3900
          %v4285 = vsub.f32 0.0, %v3901
          %v4286 = vsub.f32 0.0, %v3902
          %v4287 = vsub.f32 0.0, %v3903
          %v4288 = vsub.f32 0.0, %v3904
          %v4289 = vsub.f32 0.0, %v3905
          %v4290 = vsub.f32 0.0, %v3906
          %v4291 = vsub.f32 0.0, %v3907
          %v4292 = vsub.f32 0.0, %v3908
          %v4293 = vsub.f32 0.0, %v3909
          %v4294 = vsub.f32 0.0, %v3910
          %v4295 = vsub.f32 0.0, %v3911
          %v4296 = vsub.f32 0.0, %v3912
          %v4297 = vsub.f32 0.0, %v3913
          %v4298 = vsub.f32 0.0, %v3914
          %v4299 = vsub.f32 0.0, %v3915
          %v4300 = vsub.f32 0.0, %v3916
          %v4301 = vsub.f32 0.0, %v3917
          %v4302 = vsub.f32 0.0, %v3918
          %v4303 = vsub.f32 0.0, %v3919
          %v4304 = vsub.f32 0.0, %v3920
          %v4305 = vsub.f32 0.0, %v3921
          %v4306 = vsub.f32 0.0, %v3922
          %v4307 = vsub.f32 0.0, %v3923
          %v4308 = vsub.f32 0.0, %v3924
          %v4309 = vsub.f32 0.0, %v3925
          %v4310 = vsub.f32 0.0, %v3926
          %v4311 = vsub.f32 0.0, %v3927
          %v4312 = vsub.f32 0.0, %v3928
          %v4313 = vsub.f32 0.0, %v3929
          %v4314 = vsub.f32 0.0, %v3930
          %v4315 = vsub.f32 0.0, %v3931
          %v4316 = vsub.f32 0.0, %v3932
          %v4317 = vsub.f32 0.0, %v3933
          %v4318 = vmax.f32 %v4190, -100.0
          %v4319 = vmax.f32 %v4191, -100.0
          %v4320 = vmax.f32 %v4192, -100.0
          %v4321 = vmax.f32 %v4193, -100.0
          %v4322 = vmax.f32 %v4194, -100.0
          %v4323 = vmax.f32 %v4195, -100.0
          %v4324 = vmax.f32 %v4196, -100.0
          %v4325 = vmax.f32 %v4197, -100.0
          %v4326 = vmax.f32 %v4198, -100.0
          %v4327 = vmax.f32 %v4199, -100.0
          %v4328 = vmax.f32 %v4200, -100.0
          %v4329 = vmax.f32 %v4201, -100.0
          %v4330 = vmax.f32 %v4202, -100.0
          %v4331 = vmax.f32 %v4203, -100.0
          %v4332 = vmax.f32 %v4204, -100.0
          %v4333 = vmax.f32 %v4205, -100.0
          %v4334 = vmax.f32 %v4206, -100.0
          %v4335 = vmax.f32 %v4207, -100.0
          %v4336 = vmax.f32 %v4208, -100.0
          %v4337 = vmax.f32 %v4209, -100.0
          %v4338 = vmax.f32 %v4210, -100.0
          %v4339 = vmax.f32 %v4211, -100.0
          %v4340 = vmax.f32 %v4212, -100.0
          %v4341 = vmax.f32 %v4213, -100.0
          %v4342 = vmax.f32 %v4214, -100.0
          %v4343 = vmax.f32 %v4215, -100.0
          %v4344 = vmax.f32 %v4216, -100.0
          %v4345 = vmax.f32 %v4217, -100.0
          %v4346 = vmax.f32 %v4218, -100.0
          %v4347 = vmax.f32 %v4219, -100.0
          %v4348 = vmax.f32 %v4220, -100.0
          %v4349 = vmax.f32 %v4221, -100.0
          %v4350 = vmax.f32 %v4222, -100.0
          %v4351 = vmax.f32 %v4223, -100.0
          %v4352 = vmax.f32 %v4224, -100.0
          %v4353 = vmax.f32 %v4225, -100.0
          %v4354 = vmax.f32 %v4226, -100.0
          %v4355 = vmax.f32 %v4227, -100.0
          %v4356 = vmax.f32 %v4228, -100.0
          %v4357 = vmax.f32 %v4229, -100.0
          %v4358 = vmax.f32 %v4230, -100.0
          %v4359 = vmax.f32 %v4231, -100.0
          %v4360 = vmax.f32 %v4232, -100.0
          %v4361 = vmax.f32 %v4233, -100.0
          %v4362 = vmax.f32 %v4234, -100.0
          %v4363 = vmax.f32 %v4235, -100.0
          %v4364 = vmax.f32 %v4236, -100.0
          %v4365 = vmax.f32 %v4237, -100.0
          %v4366 = vmax.f32 %v4238, -100.0
          %v4367 = vmax.f32 %v4239, -100.0
          %v4368 = vmax.f32 %v4240, -100.0
          %v4369 = vmax.f32 %v4241, -100.0
          %v4370 = vmax.f32 %v4242, -100.0
          %v4371 = vmax.f32 %v4243, -100.0
          %v4372 = vmax.f32 %v4244, -100.0
          %v4373 = vmax.f32 %v4245, -100.0
          %v4374 = vmax.f32 %v4246, -100.0
          %v4375 = vmax.f32 %v4247, -100.0
          %v4376 = vmax.f32 %v4248, -100.0
          %v4377 = vmax.f32 %v4249, -100.0
          %v4378 = vmax.f32 %v4250, -100.0
          %v4379 = vmax.f32 %v4251, -100.0
          %v4380 = vmax.f32 %v4252, -100.0
          %v4381 = vmax.f32 %v4253, -100.0
          %v4382 = vmax.f32 %v4254, -100.0
          %v4383 = vmax.f32 %v4255, -100.0
          %v4384 = vmax.f32 %v4256, -100.0
          %v4385 = vmax.f32 %v4257, -100.0
          %v4386 = vmax.f32 %v4258, -100.0
          %v4387 = vmax.f32 %v4259, -100.0
          %v4388 = vmax.f32 %v4260, -100.0
          %v4389 = vmax.f32 %v4261, -100.0
          %v4390 = vmax.f32 %v4262, -100.0
          %v4391 = vmax.f32 %v4263, -100.0
          %v4392 = vmax.f32 %v4264, -100.0
          %v4393 = vmax.f32 %v4265, -100.0
          %v4394 = vmax.f32 %v4266, -100.0
          %v4395 = vmax.f32 %v4267, -100.0
          %v4396 = vmax.f32 %v4268, -100.0
          %v4397 = vmax.f32 %v4269, -100.0
          %v4398 = vmax.f32 %v4270, -100.0
          %v4399 = vmax.f32 %v4271, -100.0
          %v4400 = vmax.f32 %v4272, -100.0
          %v4401 = vmax.f32 %v4273, -100.0
          %v4402 = vmax.f32 %v4274, -100.0
          %v4403 = vmax.f32 %v4275, -100.0
          %v4404 = vmax.f32 %v4276, -100.0
          %v4405 = vmax.f32 %v4277, -100.0
          %v4406 = vmax.f32 %v4278, -100.0
          %v4407 = vmax.f32 %v4279, -100.0
          %v4408 = vmax.f32 %v4280, -100.0
          %v4409 = vmax.f32 %v4281, -100.0
          %v4410 = vmax.f32 %v4282, -100.0
          %v4411 = vmax.f32 %v4283, -100.0
          %v4412 = vmax.f32 %v4284, -100.0
          %v4413 = vmax.f32 %v4285, -100.0
          %v4414 = vmax.f32 %v4286, -100.0
          %v4415 = vmax.f32 %v4287, -100.0
          %v4416 = vmax.f32 %v4288, -100.0
          %v4417 = vmax.f32 %v4289, -100.0
          %v4418 = vmax.f32 %v4290, -100.0
          %v4419 = vmax.f32 %v4291, -100.0
          %v4420 = vmax.f32 %v4292, -100.0
          %v4421 = vmax.f32 %v4293, -100.0
          %v4422 = vmax.f32 %v4294, -100.0
          %v4423 = vmax.f32 %v4295, -100.0
          %v4424 = vmax.f32 %v4296, -100.0
          %v4425 = vmax.f32 %v4297, -100.0
          %v4426 = vmax.f32 %v4298, -100.0
          %v4427 = vmax.f32 %v4299, -100.0
          %v4428 = vmax.f32 %v4300, -100.0
          %v4429 = vmax.f32 %v4301, -100.0
          %v4430 = vmax.f32 %v4302, -100.0
          %v4431 = vmax.f32 %v4303, -100.0
          %v4432 = vmax.f32 %v4304, -100.0
          %v4433 = vmax.f32 %v4305, -100.0
          %v4434 = vmax.f32 %v4306, -100.0
          %v4435 = vmax.f32 %v4307, -100.0
          %v4436 = vmax.f32 %v4308, -100.0
          %v4437 = vmax.f32 %v4309, -100.0
          %v4438 = vmax.f32 %v4310, -100.0
          %v4439 = vmax.f32 %v4311, -100.0
          %v4440 = vmax.f32 %v4312, -100.0
          %v4441 = vmax.f32 %v4313, -100.0
          %v4442 = vmax.f32 %v4314, -100.0
          %v4443 = vmax.f32 %v4315, -100.0
          %v4444 = vmax.f32 %v4316, -100.0
          %v4445 = vmax.f32 %v4317, -100.0
          %v4446 = vadd.f32 %v2271, 1.0
          %v4447 = vadd.f32 %v2273, 1.0
          %v4448 = vadd.f32 %v2275, 1.0
          %v4449 = vadd.f32 %v2277, 1.0
          %v4450 = vadd.f32 %v2279, 1.0
          %v4451 = vadd.f32 %v2281, 1.0
          %v4452 = vadd.f32 %v2283, 1.0
          %v4453 = vadd.f32 %v2285, 1.0
          %v4454 = vadd.f32 %v2287, 1.0
          %v4455 = vadd.f32 %v2289, 1.0
          %v4456 = vadd.f32 %v2291, 1.0
          %v4457 = vadd.f32 %v2293, 1.0
          %v4458 = vadd.f32 %v2295, 1.0
          %v4459 = vadd.f32 %v2297, 1.0
          %v4460 = vadd.f32 %v2299, 1.0
          %v4461 = vadd.f32 %v2301, 1.0
          %v4462 = vadd.f32 %v2303, 1.0
          %v4463 = vadd.f32 %v2305, 1.0
          %v4464 = vadd.f32 %v2307, 1.0
          %v4465 = vadd.f32 %v2309, 1.0
          %v4466 = vadd.f32 %v2311, 1.0
          %v4467 = vadd.f32 %v2313, 1.0
          %v4468 = vadd.f32 %v2315, 1.0
          %v4469 = vadd.f32 %v2317, 1.0
          %v4470 = vadd.f32 %v2319, 1.0
          %v4471 = vadd.f32 %v2321, 1.0
          %v4472 = vadd.f32 %v2323, 1.0
          %v4473 = vadd.f32 %v2325, 1.0
          %v4474 = vadd.f32 %v2327, 1.0
          %v4475 = vadd.f32 %v2329, 1.0
          %v4476 = vadd.f32 %v2331, 1.0
          %v4477 = vadd.f32 %v2333, 1.0
          %v4478 = vadd.f32 %v2335, 1.0
          %v4479 = vadd.f32 %v2337, 1.0
          %v4480 = vadd.f32 %v2339, 1.0
          %v4481 = vadd.f32 %v2341, 1.0
          %v4482 = vadd.f32 %v2343, 1.0
          %v4483 = vadd.f32 %v2345, 1.0
          %v4484 = vadd.f32 %v2347, 1.0
          %v4485 = vadd.f32 %v2349, 1.0
          %v4486 = vadd.f32 %v2351, 1.0
          %v4487 = vadd.f32 %v2353, 1.0
          %v4488 = vadd.f32 %v2355, 1.0
          %v4489 = vadd.f32 %v2357, 1.0
          %v4490 = vadd.f32 %v2359, 1.0
          %v4491 = vadd.f32 %v2361, 1.0
          %v4492 = vadd.f32 %v2363, 1.0
          %v4493 = vadd.f32 %v2365, 1.0
          %v4494 = vadd.f32 %v2367, 1.0
          %v4495 = vadd.f32 %v2369, 1.0
          %v4496 = vadd.f32 %v2371, 1.0
          %v4497 = vadd.f32 %v2373, 1.0
          %v4498 = vadd.f32 %v2375, 1.0
          %v4499 = vadd.f32 %v2377, 1.0
          %v4500 = vadd.f32 %v2379, 1.0
          %v4501 = vadd.f32 %v2381, 1.0
          %v4502 = vadd.f32 %v2383, 1.0
          %v4503 = vadd.f32 %v2385, 1.0
          %v4504 = vadd.f32 %v2387, 1.0
          %v4505 = vadd.f32 %v2389, 1.0
          %v4506 = vadd.f32 %v2391, 1.0
          %v4507 = vadd.f32 %v2393, 1.0
          %v4508 = vadd.f32 %v2395, 1.0
          %v4509 = vadd.f32 %v2397, 1.0
          %v4510 = vadd.f32 %v2399, 1.0
          %v4511 = vadd.f32 %v2401, 1.0
          %v4512 = vadd.f32 %v2403, 1.0
          %v4513 = vadd.f32 %v2405, 1.0
          %v4514 = vadd.f32 %v2407, 1.0
          %v4515 = vadd.f32 %v2409, 1.0
          %v4516 = vadd.f32 %v2411, 1.0
          %v4517 = vadd.f32 %v2413, 1.0
          %v4518 = vadd.f32 %v2415, 1.0
          %v4519 = vadd.f32 %v2417, 1.0
          %v4520 = vadd.f32 %v2419, 1.0
          %v4521 = vadd.f32 %v2421, 1.0
          %v4522 = vadd.f32 %v2423, 1.0
          %v4523 = vadd.f32 %v2425, 1.0
          %v4524 = vadd.f32 %v2427, 1.0
          %v4525 = vadd.f32 %v2429, 1.0
          %v4526 = vadd.f32 %v2431, 1.0
          %v4527 = vadd.f32 %v2433, 1.0
          %v4528 = vadd.f32 %v2435, 1.0
          %v4529 = vadd.f32 %v2437, 1.0
          %v4530 = vadd.f32 %v2439, 1.0
          %v4531 = vadd.f32 %v2441, 1.0
          %v4532 = vadd.f32 %v2443, 1.0
          %v4533 = vadd.f32 %v2445, 1.0
          %v4534 = vadd.f32 %v2447, 1.0
          %v4535 = vadd.f32 %v2449, 1.0
          %v4536 = vadd.f32 %v2451, 1.0
          %v4537 = vadd.f32 %v2453, 1.0
          %v4538 = vadd.f32 %v2455, 1.0
          %v4539 = vadd.f32 %v2457, 1.0
          %v4540 = vadd.f32 %v2459, 1.0
          %v4541 = vadd.f32 %v2461, 1.0
          %v4542 = vadd.f32 %v2463, 1.0
          %v4543 = vadd.f32 %v2465, 1.0
          %v4544 = vadd.f32 %v2467, 1.0
          %v4545 = vadd.f32 %v2469, 1.0
          %v4546 = vadd.f32 %v2471, 1.0
          %v4547 = vadd.f32 %v2473, 1.0
          %v4548 = vadd.f32 %v2475, 1.0
          %v4549 = vadd.f32 %v2477, 1.0
          %v4550 = vadd.f32 %v2479, 1.0
          %v4551 = vadd.f32 %v2481, 1.0
          %v4552 = vadd.f32 %v2483, 1.0
          %v4553 = vadd.f32 %v2485, 1.0
          %v4554 = vadd.f32 %v2487, 1.0
          %v4555 = vadd.f32 %v2489, 1.0
          %v4556 = vadd.f32 %v2491, 1.0
          %v4557 = vadd.f32 %v2493, 1.0
          %v4558 = vadd.f32 %v2495, 1.0
          %v4559 = vadd.f32 %v2497, 1.0
          %v4560 = vadd.f32 %v2499, 1.0
          %v4561 = vadd.f32 %v2501, 1.0
          %v4562 = vadd.f32 %v2503, 1.0
          %v4563 = vadd.f32 %v2505, 1.0
          %v4564 = vadd.f32 %v2507, 1.0
          %v4565 = vadd.f32 %v2509, 1.0
          %v4566 = vadd.f32 %v2511, 1.0
          %v4567 = vadd.f32 %v2513, 1.0
          %v4568 = vadd.f32 %v2515, 1.0
          %v4569 = vadd.f32 %v2517, 1.0
          %v4570 = vadd.f32 %v2519, 1.0
          %v4571 = vadd.f32 %v2521, 1.0
          %v4572 = vadd.f32 %v2523, 1.0
          %v4573 = vadd.f32 %v2525, 1.0
          %v4574 = vrcp.pop %v4446
          %v4575 = vrcp.pop %v4447
          %v4576 = vrcp.pop %v4448
          %v4577 = vrcp.pop %v4449
          %v4578 = vrcp.pop %v4450
          %v4579 = vrcp.pop %v4451
          %v4580 = vrcp.pop %v4452
          %v4581 = vrcp.pop %v4453
          %v4582 = vrcp.pop %v4454
          %v4583 = vrcp.pop %v4455
          %v4584 = vrcp.pop %v4456
          %v4585 = vrcp.pop %v4457
          %v4586 = vrcp.pop %v4458
          %v4587 = vrcp.pop %v4459
          %v4588 = vrcp.pop %v4460
          %v4589 = vrcp.pop %v4461
          %v4590 = vrcp.pop %v4462
          %v4591 = vrcp.pop %v4463
          %v4592 = vrcp.pop %v4464
          %v4593 = vrcp.pop %v4465
          %v4594 = vrcp.pop %v4466
          %v4595 = vrcp.pop %v4467
          %v4596 = vrcp.pop %v4468
          %v4597 = vrcp.pop %v4469
          %v4598 = vrcp.pop %v4470
          %v4599 = vrcp.pop %v4471
          %v4600 = vrcp.pop %v4472
          %v4601 = vrcp.pop %v4473
          %v4602 = vrcp.pop %v4474
          %v4603 = vrcp.pop %v4475
          %v4604 = vrcp.pop %v4476
          %v4605 = vrcp.pop %v4477
          %v4606 = vrcp.pop %v4478
          %v4607 = vrcp.pop %v4479
          %v4608 = vrcp.pop %v4480
          %v4609 = vrcp.pop %v4481
          %v4610 = vrcp.pop %v4482
          %v4611 = vrcp.pop %v4483
          %v4612 = vrcp.pop %v4484
          %v4613 = vrcp.pop %v4485
          %v4614 = vrcp.pop %v4486
          %v4615 = vrcp.pop %v4487
          %v4616 = vrcp.pop %v4488
          %v4617 = vrcp.pop %v4489
          %v4618 = vrcp.pop %v4490
          %v4619 = vrcp.pop %v4491
          %v4620 = vrcp.pop %v4492
          %v4621 = vrcp.pop %v4493
          %v4622 = vrcp.pop %v4494
          %v4623 = vrcp.pop %v4495
          %v4624 = vrcp.pop %v4496
          %v4625 = vrcp.pop %v4497
          %v4626 = vrcp.pop %v4498
          %v4627 = vrcp.pop %v4499
          %v4628 = vrcp.pop %v4500
          %v4629 = vrcp.pop %v4501
          %v4630 = vrcp.pop %v4502
          %v4631 = vrcp.pop %v4503
          %v4632 = vrcp.pop %v4504
          %v4633 = vrcp.pop %v4505
          %v4634 = vrcp.pop %v4506
          %v4635 = vrcp.pop %v4507
          %v4636 = vrcp.pop %v4508
          %v4637 = vrcp.pop %v4509
          %v4638 = vrcp.pop %v4510
          %v4639 = vrcp.pop %v4511
          %v4640 = vrcp.pop %v4512
          %v4641 = vrcp.pop %v4513
          %v4642 = vrcp.pop %v4514
          %v4643 = vrcp.pop %v4515
          %v4644 = vrcp.pop %v4516
          %v4645 = vrcp.pop %v4517
          %v4646 = vrcp.pop %v4518
          %v4647 = vrcp.pop %v4519
          %v4648 = vrcp.pop %v4520
          %v4649 = vrcp.pop %v4521
          %v4650 = vrcp.pop %v4522
          %v4651 = vrcp.pop %v4523
          %v4652 = vrcp.pop %v4524
          %v4653 = vrcp.pop %v4525
          %v4654 = vrcp.pop %v4526
          %v4655 = vrcp.pop %v4527
          %v4656 = vrcp.pop %v4528
          %v4657 = vrcp.pop %v4529
          %v4658 = vrcp.pop %v4530
          %v4659 = vrcp.pop %v4531
          %v4660 = vrcp.pop %v4532
          %v4661 = vrcp.pop %v4533
          %v4662 = vrcp.pop %v4534
          %v4663 = vrcp.pop %v4535
          %v4664 = vrcp.pop %v4536
          %v4665 = vrcp.pop %v4537
          %v4666 = vrcp.pop %v4538
          %v4667 = vrcp.pop %v4539
          %v4668 = vrcp.pop %v4540
          %v4669 = vrcp.pop %v4541
          %v4670 = vrcp.pop %v4542
          %v4671 = vrcp.pop %v4543
          %v4672 = vrcp.pop %v4544
          %v4673 = vrcp.pop %v4545
          %v4674 = vrcp.pop %v4546
          %v4675 = vrcp.pop %v4547
          %v4676 = vrcp.pop %v4548
          %v4677 = vrcp.pop %v4549
          %v4678 = vrcp.pop %v4550
          %v4679 = vrcp.pop %v4551
          %v4680 = vrcp.pop %v4552
          %v4681 = vrcp.pop %v4553
          %v4682 = vrcp.pop %v4554
          %v4683 = vrcp.pop %v4555
          %v4684 = vrcp.pop %v4556
          %v4685 = vrcp.pop %v4557
          %v4686 = vrcp.pop %v4558
          %v4687 = vrcp.pop %v4559
          %v4688 = vrcp.pop %v4560
          %v4689 = vrcp.pop %v4561
          %v4690 = vrcp.pop %v4562
          %v4691 = vrcp.pop %v4563
          %v4692 = vrcp.pop %v4564
          %v4693 = vrcp.pop %v4565
          %v4694 = vrcp.pop %v4566
          %v4695 = vrcp.pop %v4567
          %v4696 = vrcp.pop %v4568
          %v4697 = vrcp.pop %v4569
          %v4698 = vrcp.pop %v4570
          %v4699 = vrcp.pop %v4571
          %v4700 = vrcp.pop %v4572
          %v4701 = vrcp.pop %v4573
          %vm4702 = vcmp.ge.f32.partialorder %v332, 0.0
          %vm4703 = vcmp.ge.f32.partialorder %v333, 0.0
          %vm4704 = vcmp.ge.f32.partialorder %v334, 0.0
          %vm4705 = vcmp.ge.f32.partialorder %v335, 0.0
          %vm4706 = vcmp.ge.f32.partialorder %v336, 0.0
          %vm4707 = vcmp.ge.f32.partialorder %v337, 0.0
          %vm4708 = vcmp.ge.f32.partialorder %v338, 0.0
          %vm4709 = vcmp.ge.f32.partialorder %v339, 0.0
          %vm4710 = vcmp.ge.f32.partialorder %v340, 0.0
          %vm4711 = vcmp.ge.f32.partialorder %v341, 0.0
          %vm4712 = vcmp.ge.f32.partialorder %v342, 0.0
          %vm4713 = vcmp.ge.f32.partialorder %v343, 0.0
          %vm4714 = vcmp.ge.f32.partialorder %v344, 0.0
          %vm4715 = vcmp.ge.f32.partialorder %v345, 0.0
          %vm4716 = vcmp.ge.f32.partialorder %v346, 0.0
          %vm4717 = vcmp.ge.f32.partialorder %v347, 0.0
          %vm4718 = vcmp.ge.f32.partialorder %v348, 0.0
          %vm4719 = vcmp.ge.f32.partialorder %v349, 0.0
          %vm4720 = vcmp.ge.f32.partialorder %v350, 0.0
          %vm4721 = vcmp.ge.f32.partialorder %v351, 0.0
          %vm4722 = vcmp.ge.f32.partialorder %v352, 0.0
          %vm4723 = vcmp.ge.f32.partialorder %v353, 0.0
          %vm4724 = vcmp.ge.f32.partialorder %v354, 0.0
          %vm4725 = vcmp.ge.f32.partialorder %v355, 0.0
          %vm4726 = vcmp.ge.f32.partialorder %v356, 0.0
          %vm4727 = vcmp.ge.f32.partialorder %v357, 0.0
          %vm4728 = vcmp.ge.f32.partialorder %v358, 0.0
          %vm4729 = vcmp.ge.f32.partialorder %v359, 0.0
          %vm4730 = vcmp.ge.f32.partialorder %v360, 0.0
          %vm4731 = vcmp.ge.f32.partialorder %v361, 0.0
          %vm4732 = vcmp.ge.f32.partialorder %v362, 0.0
          %vm4733 = vcmp.ge.f32.partialorder %v363, 0.0
          %vm4734 = vcmp.ge.f32.partialorder %v364, 0.0
          %vm4735 = vcmp.ge.f32.partialorder %v365, 0.0
          %vm4736 = vcmp.ge.f32.partialorder %v366, 0.0
          %vm4737 = vcmp.ge.f32.partialorder %v367, 0.0
          %vm4738 = vcmp.ge.f32.partialorder %v368, 0.0
          %vm4739 = vcmp.ge.f32.partialorder %v369, 0.0
          %vm4740 = vcmp.ge.f32.partialorder %v370, 0.0
          %vm4741 = vcmp.ge.f32.partialorder %v371, 0.0
          %vm4742 = vcmp.ge.f32.partialorder %v372, 0.0
          %vm4743 = vcmp.ge.f32.partialorder %v373, 0.0
          %vm4744 = vcmp.ge.f32.partialorder %v374, 0.0
          %vm4745 = vcmp.ge.f32.partialorder %v375, 0.0
          %vm4746 = vcmp.ge.f32.partialorder %v376, 0.0
          %vm4747 = vcmp.ge.f32.partialorder %v377, 0.0
          %vm4748 = vcmp.ge.f32.partialorder %v378, 0.0
          %vm4749 = vcmp.ge.f32.partialorder %v379, 0.0
          %vm4750 = vcmp.ge.f32.partialorder %v380, 0.0
          %vm4751 = vcmp.ge.f32.partialorder %v381, 0.0
          %vm4752 = vcmp.ge.f32.partialorder %v382, 0.0
          %vm4753 = vcmp.ge.f32.partialorder %v383, 0.0
          %vm4754 = vcmp.ge.f32.partialorder %v384, 0.0
          %vm4755 = vcmp.ge.f32.partialorder %v385, 0.0
          %vm4756 = vcmp.ge.f32.partialorder %v386, 0.0
          %vm4757 = vcmp.ge.f32.partialorder %v387, 0.0
          %vm4758 = vcmp.ge.f32.partialorder %v388, 0.0
          %vm4759 = vcmp.ge.f32.partialorder %v389, 0.0
          %vm4760 = vcmp.ge.f32.partialorder %v390, 0.0
          %vm4761 = vcmp.ge.f32.partialorder %v391, 0.0
          %vm4762 = vcmp.ge.f32.partialorder %v392, 0.0
          %vm4763 = vcmp.ge.f32.partialorder %v393, 0.0
          %vm4764 = vcmp.ge.f32.partialorder %v394, 0.0
          %vm4765 = vcmp.ge.f32.partialorder %v395, 0.0
          %vm4766 = vcmp.ge.f32.partialorder %v396, 0.0
          %vm4767 = vcmp.ge.f32.partialorder %v397, 0.0
          %vm4768 = vcmp.ge.f32.partialorder %v398, 0.0
          %vm4769 = vcmp.ge.f32.partialorder %v399, 0.0
          %vm4770 = vcmp.ge.f32.partialorder %v400, 0.0
          %vm4771 = vcmp.ge.f32.partialorder %v401, 0.0
          %vm4772 = vcmp.ge.f32.partialorder %v402, 0.0
          %vm4773 = vcmp.ge.f32.partialorder %v403, 0.0
          %vm4774 = vcmp.ge.f32.partialorder %v404, 0.0
          %vm4775 = vcmp.ge.f32.partialorder %v405, 0.0
          %vm4776 = vcmp.ge.f32.partialorder %v406, 0.0
          %vm4777 = vcmp.ge.f32.partialorder %v407, 0.0
          %vm4778 = vcmp.ge.f32.partialorder %v408, 0.0
          %vm4779 = vcmp.ge.f32.partialorder %v409, 0.0
          %vm4780 = vcmp.ge.f32.partialorder %v410, 0.0
          %vm4781 = vcmp.ge.f32.partialorder %v411, 0.0
          %vm4782 = vcmp.ge.f32.partialorder %v412, 0.0
          %vm4783 = vcmp.ge.f32.partialorder %v413, 0.0
          %vm4784 = vcmp.ge.f32.partialorder %v414, 0.0
          %vm4785 = vcmp.ge.f32.partialorder %v415, 0.0
          %vm4786 = vcmp.ge.f32.partialorder %v416, 0.0
          %vm4787 = vcmp.ge.f32.partialorder %v417, 0.0
          %vm4788 = vcmp.ge.f32.partialorder %v418, 0.0
          %vm4789 = vcmp.ge.f32.partialorder %v419, 0.0
          %vm4790 = vcmp.ge.f32.partialorder %v420, 0.0
          %vm4791 = vcmp.ge.f32.partialorder %v421, 0.0
          %vm4792 = vcmp.ge.f32.partialorder %v422, 0.0
          %vm4793 = vcmp.ge.f32.partialorder %v423, 0.0
          %vm4794 = vcmp.ge.f32.partialorder %v424, 0.0
          %vm4795 = vcmp.ge.f32.partialorder %v425, 0.0
          %vm4796 = vcmp.ge.f32.partialorder %v426, 0.0
          %vm4797 = vcmp.ge.f32.partialorder %v427, 0.0
          %vm4798 = vcmp.ge.f32.partialorder %v428, 0.0
          %vm4799 = vcmp.ge.f32.partialorder %v429, 0.0
          %vm4800 = vcmp.ge.f32.partialorder %v430, 0.0
          %vm4801 = vcmp.ge.f32.partialorder %v431, 0.0
          %vm4802 = vcmp.ge.f32.partialorder %v432, 0.0
          %vm4803 = vcmp.ge.f32.partialorder %v433, 0.0
          %vm4804 = vcmp.ge.f32.partialorder %v434, 0.0
          %vm4805 = vcmp.ge.f32.partialorder %v435, 0.0
          %vm4806 = vcmp.ge.f32.partialorder %v436, 0.0
          %vm4807 = vcmp.ge.f32.partialorder %v437, 0.0
          %vm4808 = vcmp.ge.f32.partialorder %v438, 0.0
          %vm4809 = vcmp.ge.f32.partialorder %v439, 0.0
          %vm4810 = vcmp.ge.f32.partialorder %v440, 0.0
          %vm4811 = vcmp.ge.f32.partialorder %v441, 0.0
          %vm4812 = vcmp.ge.f32.partialorder %v442, 0.0
          %vm4813 = vcmp.ge.f32.partialorder %v443, 0.0
          %vm4814 = vcmp.ge.f32.partialorder %v444, 0.0
          %vm4815 = vcmp.ge.f32.partialorder %v445, 0.0
          %vm4816 = vcmp.ge.f32.partialorder %v446, 0.0
          %vm4817 = vcmp.ge.f32.partialorder %v447, 0.0
          %vm4818 = vcmp.ge.f32.partialorder %v448, 0.0
          %vm4819 = vcmp.ge.f32.partialorder %v449, 0.0
          %vm4820 = vcmp.ge.f32.partialorder %v450, 0.0
          %vm4821 = vcmp.ge.f32.partialorder %v451, 0.0
          %vm4822 = vcmp.ge.f32.partialorder %v452, 0.0
          %vm4823 = vcmp.ge.f32.partialorder %v453, 0.0
          %vm4824 = vcmp.ge.f32.partialorder %v454, 0.0
          %vm4825 = vcmp.ge.f32.partialorder %v455, 0.0
          %vm4826 = vcmp.ge.f32.partialorder %v456, 0.0
          %vm4827 = vcmp.ge.f32.partialorder %v457, 0.0
          %vm4828 = vcmp.ge.f32.partialorder %v458, 0.0
          %vm4829 = vcmp.ge.f32.partialorder %v459, 0.0
          %v4830 = vmul.f32 %v2271, %v4574
          %v4831 = vmul.f32 %v2273, %v4575
          %v4832 = vmul.f32 %v2275, %v4576
          %v4833 = vmul.f32 %v2277, %v4577
          %v4834 = vmul.f32 %v2279, %v4578
          %v4835 = vmul.f32 %v2281, %v4579
          %v4836 = vmul.f32 %v2283, %v4580
          %v4837 = vmul.f32 %v2285, %v4581
          %v4838 = vmul.f32 %v2287, %v4582
          %v4839 = vmul.f32 %v2289, %v4583
          %v4840 = vmul.f32 %v2291, %v4584
          %v4841 = vmul.f32 %v2293, %v4585
          %v4842 = vmul.f32 %v2295, %v4586
          %v4843 = vmul.f32 %v2297, %v4587
          %v4844 = vmul.f32 %v2299, %v4588
          %v4845 = vmul.f32 %v2301, %v4589
          %v4846 = vmul.f32 %v2303, %v4590
          %v4847 = vmul.f32 %v2305, %v4591
          %v4848 = vmul.f32 %v2307, %v4592
          %v4849 = vmul.f32 %v2309, %v4593
          %v4850 = vmul.f32 %v2311, %v4594
          %v4851 = vmul.f32 %v2313, %v4595
          %v4852 = vmul.f32 %v2315, %v4596
          %v4853 = vmul.f32 %v2317, %v4597
          %v4854 = vmul.f32 %v2319, %v4598
          %v4855 = vmul.f32 %v2321, %v4599
          %v4856 = vmul.f32 %v2323, %v4600
          %v4857 = vmul.f32 %v2325, %v4601
          %v4858 = vmul.f32 %v2327, %v4602
          %v4859 = vmul.f32 %v2329, %v4603
          %v4860 = vmul.f32 %v2331, %v4604
          %v4861 = vmul.f32 %v2333, %v4605
          %v4862 = vmul.f32 %v2335, %v4606
          %v4863 = vmul.f32 %v2337, %v4607
          %v4864 = vmul.f32 %v2339, %v4608
          %v4865 = vmul.f32 %v2341, %v4609
          %v4866 = vmul.f32 %v2343, %v4610
          %v4867 = vmul.f32 %v2345, %v4611
          %v4868 = vmul.f32 %v2347, %v4612
          %v4869 = vmul.f32 %v2349, %v4613
          %v4870 = vmul.f32 %v2351, %v4614
          %v4871 = vmul.f32 %v2353, %v4615
          %v4872 = vmul.f32 %v2355, %v4616
          %v4873 = vmul.f32 %v2357, %v4617
          %v4874 = vmul.f32 %v2359, %v4618
          %v4875 = vmul.f32 %v2361, %v4619
          %v4876 = vmul.f32 %v2363, %v4620
          %v4877 = vmul.f32 %v2365, %v4621
          %v4878 = vmul.f32 %v2367, %v4622
          %v4879 = vmul.f32 %v2369, %v4623
          %v4880 = vmul.f32 %v2371, %v4624
          %v4881 = vmul.f32 %v2373, %v4625
          %v4882 = vmul.f32 %v2375, %v4626
          %v4883 = vmul.f32 %v2377, %v4627
          %v4884 = vmul.f32 %v2379, %v4628
          %v4885 = vmul.f32 %v2381, %v4629
          %v4886 = vmul.f32 %v2383, %v4630
          %v4887 = vmul.f32 %v2385, %v4631
          %v4888 = vmul.f32 %v2387, %v4632
          %v4889 = vmul.f32 %v2389, %v4633
          %v4890 = vmul.f32 %v2391, %v4634
          %v4891 = vmul.f32 %v2393, %v4635
          %v4892 = vmul.f32 %v2395, %v4636
          %v4893 = vmul.f32 %v2397, %v4637
          %v4894 = vmul.f32 %v2399, %v4638
          %v4895 = vmul.f32 %v2401, %v4639
          %v4896 = vmul.f32 %v2403, %v4640
          %v4897 = vmul.f32 %v2405, %v4641
          %v4898 = vmul.f32 %v2407, %v4642
          %v4899 = vmul.f32 %v2409, %v4643
          %v4900 = vmul.f32 %v2411, %v4644
          %v4901 = vmul.f32 %v2413, %v4645
          %v4902 = vmul.f32 %v2415, %v4646
          %v4903 = vmul.f32 %v2417, %v4647
          %v4904 = vmul.f32 %v2419, %v4648
          %v4905 = vmul.f32 %v2421, %v4649
          %v4906 = vmul.f32 %v2423, %v4650
          %v4907 = vmul.f32 %v2425, %v4651
          %v4908 = vmul.f32 %v2427, %v4652
          %v4909 = vmul.f32 %v2429, %v4653
          %v4910 = vmul.f32 %v2431, %v4654
          %v4911 = vmul.f32 %v2433, %v4655
          %v4912 = vmul.f32 %v2435, %v4656
          %v4913 = vmul.f32 %v2437, %v4657
          %v4914 = vmul.f32 %v2439, %v4658
          %v4915 = vmul.f32 %v2441, %v4659
          %v4916 = vmul.f32 %v2443, %v4660
          %v4917 = vmul.f32 %v2445, %v4661
          %v4918 = vmul.f32 %v2447, %v4662
          %v4919 = vmul.f32 %v2449, %v4663
          %v4920 = vmul.f32 %v2451, %v4664
          %v4921 = vmul.f32 %v2453, %v4665
          %v4922 = vmul.f32 %v2455, %v4666
          %v4923 = vmul.f32 %v2457, %v4667
          %v4924 = vmul.f32 %v2459, %v4668
          %v4925 = vmul.f32 %v2461, %v4669
          %v4926 = vmul.f32 %v2463, %v4670
          %v4927 = vmul.f32 %v2465, %v4671
          %v4928 = vmul.f32 %v2467, %v4672
          %v4929 = vmul.f32 %v2469, %v4673
          %v4930 = vmul.f32 %v2471, %v4674
          %v4931 = vmul.f32 %v2473, %v4675
          %v4932 = vmul.f32 %v2475, %v4676
          %v4933 = vmul.f32 %v2477, %v4677
          %v4934 = vmul.f32 %v2479, %v4678
          %v4935 = vmul.f32 %v2481, %v4679
          %v4936 = vmul.f32 %v2483, %v4680
          %v4937 = vmul.f32 %v2485, %v4681
          %v4938 = vmul.f32 %v2487, %v4682
          %v4939 = vmul.f32 %v2489, %v4683
          %v4940 = vmul.f32 %v2491, %v4684
          %v4941 = vmul.f32 %v2493, %v4685
          %v4942 = vmul.f32 %v2495, %v4686
          %v4943 = vmul.f32 %v2497, %v4687
          %v4944 = vmul.f32 %v2499, %v4688
          %v4945 = vmul.f32 %v2501, %v4689
          %v4946 = vmul.f32 %v2503, %v4690
          %v4947 = vmul.f32 %v2505, %v4691
          %v4948 = vmul.f32 %v2507, %v4692
          %v4949 = vmul.f32 %v2509, %v4693
          %v4950 = vmul.f32 %v2511, %v4694
          %v4951 = vmul.f32 %v2513, %v4695
          %v4952 = vmul.f32 %v2515, %v4696
          %v4953 = vmul.f32 %v2517, %v4697
          %v4954 = vmul.f32 %v2519, %v4698
          %v4955 = vmul.f32 %v2521, %v4699
          %v4956 = vmul.f32 %v2523, %v4700
          %v4957 = vmul.f32 %v2525, %v4701
          %v4958 = vsel %vm4702, %v4574, %v4830
          %v4959 = vsel %vm4703, %v4575, %v4831
          %v4960 = vsel %vm4704, %v4576, %v4832
          %v4961 = vsel %vm4705, %v4577, %v4833
          %v4962 = vsel %vm4706, %v4578, %v4834
          %v4963 = vsel %vm4707, %v4579, %v4835
          %v4964 = vsel %vm4708, %v4580, %v4836
          %v4965 = vsel %vm4709, %v4581, %v4837
          %v4966 = vsel %vm4710, %v4582, %v4838
          %v4967 = vsel %vm4711, %v4583, %v4839
          %v4968 = vsel %vm4712, %v4584, %v4840
          %v4969 = vsel %vm4713, %v4585, %v4841
          %v4970 = vsel %vm4714, %v4586, %v4842
          %v4971 = vsel %vm4715, %v4587, %v4843
          %v4972 = vsel %vm4716, %v4588, %v4844
          %v4973 = vsel %vm4717, %v4589, %v4845
          %v4974 = vsel %vm4718, %v4590, %v4846
          %v4975 = vsel %vm4719, %v4591, %v4847
          %v4976 = vsel %vm4720, %v4592, %v4848
          %v4977 = vsel %vm4721, %v4593, %v4849
          %v4978 = vsel %vm4722, %v4594, %v4850
          %v4979 = vsel %vm4723, %v4595, %v4851
          %v4980 = vsel %vm4724, %v4596, %v4852
          %v4981 = vsel %vm4725, %v4597, %v4853
          %v4982 = vsel %vm4726, %v4598, %v4854
          %v4983 = vsel %vm4727, %v4599, %v4855
          %v4984 = vsel %vm4728, %v4600, %v4856
          %v4985 = vsel %vm4729, %v4601, %v4857
          %v4986 = vsel %vm4730, %v4602, %v4858
          %v4987 = vsel %vm4731, %v4603, %v4859
          %v4988 = vsel %vm4732, %v4604, %v4860
          %v4989 = vsel %vm4733, %v4605, %v4861
          %v4990 = vsel %vm4734, %v4606, %v4862
          %v4991 = vsel %vm4735, %v4607, %v4863
          %v4992 = vsel %vm4736, %v4608, %v4864
          %v4993 = vsel %vm4737, %v4609, %v4865
          %v4994 = vsel %vm4738, %v4610, %v4866
          %v4995 = vsel %vm4739, %v4611, %v4867
          %v4996 = vsel %vm4740, %v4612, %v4868
          %v4997 = vsel %vm4741, %v4613, %v4869
          %v4998 = vsel %vm4742, %v4614, %v4870
          %v4999 = vsel %vm4743, %v4615, %v4871
          %v5000 = vsel %vm4744, %v4616, %v4872
          %v5001 = vsel %vm4745, %v4617, %v4873
          %v5002 = vsel %vm4746, %v4618, %v4874
          %v5003 = vsel %vm4747, %v4619, %v4875
          %v5004 = vsel %vm4748, %v4620, %v4876
          %v5005 = vsel %vm4749, %v4621, %v4877
          %v5006 = vsel %vm4750, %v4622, %v4878
          %v5007 = vsel %vm4751, %v4623, %v4879
          %v5008 = vsel %vm4752, %v4624, %v4880
          %v5009 = vsel %vm4753, %v4625, %v4881
          %v5010 = vsel %vm4754, %v4626, %v4882
          %v5011 = vsel %vm4755, %v4627, %v4883
          %v5012 = vsel %vm4756, %v4628, %v4884
          %v5013 = vsel %vm4757, %v4629, %v4885
          %v5014 = vsel %vm4758, %v4630, %v4886
          %v5015 = vsel %vm4759, %v4631, %v4887
          %v5016 = vsel %vm4760, %v4632, %v4888
          %v5017 = vsel %vm4761, %v4633, %v4889
          %v5018 = vsel %vm4762, %v4634, %v4890
          %v5019 = vsel %vm4763, %v4635, %v4891
          %v5020 = vsel %vm4764, %v4636, %v4892
          %v5021 = vsel %vm4765, %v4637, %v4893
          %v5022 = vsel %vm4766, %v4638, %v4894
          %v5023 = vsel %vm4767, %v4639, %v4895
          %v5024 = vsel %vm4768, %v4640, %v4896
          %v5025 = vsel %vm4769, %v4641, %v4897
          %v5026 = vsel %vm4770, %v4642, %v4898
          %v5027 = vsel %vm4771, %v4643, %v4899
          %v5028 = vsel %vm4772, %v4644, %v4900
          %v5029 = vsel %vm4773, %v4645, %v4901
          %v5030 = vsel %vm4774, %v4646, %v4902
          %v5031 = vsel %vm4775, %v4647, %v4903
          %v5032 = vsel %vm4776, %v4648, %v4904
          %v5033 = vsel %vm4777, %v4649, %v4905
          %v5034 = vsel %vm4778, %v4650, %v4906
          %v5035 = vsel %vm4779, %v4651, %v4907
          %v5036 = vsel %vm4780, %v4652, %v4908
          %v5037 = vsel %vm4781, %v4653, %v4909
          %v5038 = vsel %vm4782, %v4654, %v4910
          %v5039 = vsel %vm4783, %v4655, %v4911
          %v5040 = vsel %vm4784, %v4656, %v4912
          %v5041 = vsel %vm4785, %v4657, %v4913
          %v5042 = vsel %vm4786, %v4658, %v4914
          %v5043 = vsel %vm4787, %v4659, %v4915
          %v5044 = vsel %vm4788, %v4660, %v4916
          %v5045 = vsel %vm4789, %v4661, %v4917
          %v5046 = vsel %vm4790, %v4662, %v4918
          %v5047 = vsel %vm4791, %v4663, %v4919
          %v5048 = vsel %vm4792, %v4664, %v4920
          %v5049 = vsel %vm4793, %v4665, %v4921
          %v5050 = vsel %vm4794, %v4666, %v4922
          %v5051 = vsel %vm4795, %v4667, %v4923
          %v5052 = vsel %vm4796, %v4668, %v4924
          %v5053 = vsel %vm4797, %v4669, %v4925
          %v5054 = vsel %vm4798, %v4670, %v4926
          %v5055 = vsel %vm4799, %v4671, %v4927
          %v5056 = vsel %vm4800, %v4672, %v4928
          %v5057 = vsel %vm4801, %v4673, %v4929
          %v5058 = vsel %vm4802, %v4674, %v4930
          %v5059 = vsel %vm4803, %v4675, %v4931
          %v5060 = vsel %vm4804, %v4676, %v4932
          %v5061 = vsel %vm4805, %v4677, %v4933
          %v5062 = vsel %vm4806, %v4678, %v4934
          %v5063 = vsel %vm4807, %v4679, %v4935
          %v5064 = vsel %vm4808, %v4680, %v4936
          %v5065 = vsel %vm4809, %v4681, %v4937
          %v5066 = vsel %vm4810, %v4682, %v4938
          %v5067 = vsel %vm4811, %v4683, %v4939
          %v5068 = vsel %vm4812, %v4684, %v4940
          %v5069 = vsel %vm4813, %v4685, %v4941
          %v5070 = vsel %vm4814, %v4686, %v4942
          %v5071 = vsel %vm4815, %v4687, %v4943
          %v5072 = vsel %vm4816, %v4688, %v4944
          %v5073 = vsel %vm4817, %v4689, %v4945
          %v5074 = vsel %vm4818, %v4690, %v4946
          %v5075 = vsel %vm4819, %v4691, %v4947
          %v5076 = vsel %vm4820, %v4692, %v4948
          %v5077 = vsel %vm4821, %v4693, %v4949
          %v5078 = vsel %vm4822, %v4694, %v4950
          %v5079 = vsel %vm4823, %v4695, %v4951
          %v5080 = vsel %vm4824, %v4696, %v4952
          %v5081 = vsel %vm4825, %v4697, %v4953
          %v5082 = vsel %vm4826, %v4698, %v4954
          %v5083 = vsel %vm4827, %v4699, %v4955
          %v5084 = vsel %vm4828, %v4700, %v4956
          %v5085 = vsel %vm4829, %v4701, %v4957
          %v5086 = vsub.f32 0.0, %v4958
          %v5087 = vsub.f32 0.0, %v4959
          %v5088 = vsub.f32 0.0, %v4960
          %v5089 = vsub.f32 0.0, %v4961
          %v5090 = vsub.f32 0.0, %v4962
          %v5091 = vsub.f32 0.0, %v4963
          %v5092 = vsub.f32 0.0, %v4964
          %v5093 = vsub.f32 0.0, %v4965
          %v5094 = vsub.f32 0.0, %v4966
          %v5095 = vsub.f32 0.0, %v4967
          %v5096 = vsub.f32 0.0, %v4968
          %v5097 = vsub.f32 0.0, %v4969
          %v5098 = vsub.f32 0.0, %v4970
          %v5099 = vsub.f32 0.0, %v4971
          %v5100 = vsub.f32 0.0, %v4972
          %v5101 = vsub.f32 0.0, %v4973
          %v5102 = vsub.f32 0.0, %v4974
          %v5103 = vsub.f32 0.0, %v4975
          %v5104 = vsub.f32 0.0, %v4976
          %v5105 = vsub.f32 0.0, %v4977
          %v5106 = vsub.f32 0.0, %v4978
          %v5107 = vsub.f32 0.0, %v4979
          %v5108 = vsub.f32 0.0, %v4980
          %v5109 = vsub.f32 0.0, %v4981
          %v5110 = vsub.f32 0.0, %v4982
          %v5111 = vsub.f32 0.0, %v4983
          %v5112 = vsub.f32 0.0, %v4984
          %v5113 = vsub.f32 0.0, %v4985
          %v5114 = vsub.f32 0.0, %v4986
          %v5115 = vsub.f32 0.0, %v4987
          %v5116 = vsub.f32 0.0, %v4988
          %v5117 = vsub.f32 0.0, %v4989
          %v5118 = vsub.f32 0.0, %v4990
          %v5119 = vsub.f32 0.0, %v4991
          %v5120 = vsub.f32 0.0, %v4992
          %v5121 = vsub.f32 0.0, %v4993
          %v5122 = vsub.f32 0.0, %v4994
          %v5123 = vsub.f32 0.0, %v4995
          %v5124 = vsub.f32 0.0, %v4996
          %v5125 = vsub.f32 0.0, %v4997
          %v5126 = vsub.f32 0.0, %v4998
          %v5127 = vsub.f32 0.0, %v4999
          %v5128 = vsub.f32 0.0, %v5000
          %v5129 = vsub.f32 0.0, %v5001
          %v5130 = vsub.f32 0.0, %v5002
          %v5131 = vsub.f32 0.0, %v5003
          %v5132 = vsub.f32 0.0, %v5004
          %v5133 = vsub.f32 0.0, %v5005
          %v5134 = vsub.f32 0.0, %v5006
          %v5135 = vsub.f32 0.0, %v5007
          %v5136 = vsub.f32 0.0, %v5008
          %v5137 = vsub.f32 0.0, %v5009
          %v5138 = vsub.f32 0.0, %v5010
          %v5139 = vsub.f32 0.0, %v5011
          %v5140 = vsub.f32 0.0, %v5012
          %v5141 = vsub.f32 0.0, %v5013
          %v5142 = vsub.f32 0.0, %v5014
          %v5143 = vsub.f32 0.0, %v5015
          %v5144 = vsub.f32 0.0, %v5016
          %v5145 = vsub.f32 0.0, %v5017
          %v5146 = vsub.f32 0.0, %v5018
          %v5147 = vsub.f32 0.0, %v5019
          %v5148 = vsub.f32 0.0, %v5020
          %v5149 = vsub.f32 0.0, %v5021
          %v5150 = vsub.f32 0.0, %v5022
          %v5151 = vsub.f32 0.0, %v5023
          %v5152 = vsub.f32 0.0, %v5024
          %v5153 = vsub.f32 0.0, %v5025
          %v5154 = vsub.f32 0.0, %v5026
          %v5155 = vsub.f32 0.0, %v5027
          %v5156 = vsub.f32 0.0, %v5028
          %v5157 = vsub.f32 0.0, %v5029
          %v5158 = vsub.f32 0.0, %v5030
          %v5159 = vsub.f32 0.0, %v5031
          %v5160 = vsub.f32 0.0, %v5032
          %v5161 = vsub.f32 0.0, %v5033
          %v5162 = vsub.f32 0.0, %v5034
          %v5163 = vsub.f32 0.0, %v5035
          %v5164 = vsub.f32 0.0, %v5036
          %v5165 = vsub.f32 0.0, %v5037
          %v5166 = vsub.f32 0.0, %v5038
          %v5167 = vsub.f32 0.0, %v5039
          %v5168 = vsub.f32 0.0, %v5040
          %v5169 = vsub.f32 0.0, %v5041
          %v5170 = vsub.f32 0.0, %v5042
          %v5171 = vsub.f32 0.0, %v5043
          %v5172 = vsub.f32 0.0, %v5044
          %v5173 = vsub.f32 0.0, %v5045
          %v5174 = vsub.f32 0.0, %v5046
          %v5175 = vsub.f32 0.0, %v5047
          %v5176 = vsub.f32 0.0, %v5048
          %v5177 = vsub.f32 0.0, %v5049
          %v5178 = vsub.f32 0.0, %v5050
          %v5179 = vsub.f32 0.0, %v5051
          %v5180 = vsub.f32 0.0, %v5052
          %v5181 = vsub.f32 0.0, %v5053
          %v5182 = vsub.f32 0.0, %v5054
          %v5183 = vsub.f32 0.0, %v5055
          %v5184 = vsub.f32 0.0, %v5056
          %v5185 = vsub.f32 0.0, %v5057
          %v5186 = vsub.f32 0.0, %v5058
          %v5187 = vsub.f32 0.0, %v5059
          %v5188 = vsub.f32 0.0, %v5060
          %v5189 = vsub.f32 0.0, %v5061
          %v5190 = vsub.f32 0.0, %v5062
          %v5191 = vsub.f32 0.0, %v5063
          %v5192 = vsub.f32 0.0, %v5064
          %v5193 = vsub.f32 0.0, %v5065
          %v5194 = vsub.f32 0.0, %v5066
          %v5195 = vsub.f32 0.0, %v5067
          %v5196 = vsub.f32 0.0, %v5068
          %v5197 = vsub.f32 0.0, %v5069
          %v5198 = vsub.f32 0.0, %v5070
          %v5199 = vsub.f32 0.0, %v5071
          %v5200 = vsub.f32 0.0, %v5072
          %v5201 = vsub.f32 0.0, %v5073
          %v5202 = vsub.f32 0.0, %v5074
          %v5203 = vsub.f32 0.0, %v5075
          %v5204 = vsub.f32 0.0, %v5076
          %v5205 = vsub.f32 0.0, %v5077
          %v5206 = vsub.f32 0.0, %v5078
          %v5207 = vsub.f32 0.0, %v5079
          %v5208 = vsub.f32 0.0, %v5080
          %v5209 = vsub.f32 0.0, %v5081
          %v5210 = vsub.f32 0.0, %v5082
          %v5211 = vsub.f32 0.0, %v5083
          %v5212 = vsub.f32 0.0, %v5084
          %v5213 = vsub.f32 0.0, %v5085
          %v5214 = vmul.f32 %v5086, 1.442695
          %v5215 = vpow.pop %v5214
          %v5216 = vmul.f32 %v5087, 1.442695
          %v5217 = vpow.pop %v5216
          %v5218 = vmul.f32 %v5088, 1.442695
          %v5219 = vpow.pop %v5218
          %v5220 = vmul.f32 %v5089, 1.442695
          %v5221 = vpow.pop %v5220
          %v5222 = vmul.f32 %v5090, 1.442695
          %v5223 = vpow.pop %v5222
          %v5224 = vmul.f32 %v5091, 1.442695
          %v5225 = vpow.pop %v5224
          %v5226 = vmul.f32 %v5092, 1.442695
          %v5227 = vpow.pop %v5226
          %v5228 = vmul.f32 %v5093, 1.442695
          %v5229 = vpow.pop %v5228
          %v5230 = vmul.f32 %v5094, 1.442695
          %v5231 = vpow.pop %v5230
          %v5232 = vmul.f32 %v5095, 1.442695
          %v5233 = vpow.pop %v5232
          %v5234 = vmul.f32 %v5096, 1.442695
          %v5235 = vpow.pop %v5234
          %v5236 = vmul.f32 %v5097, 1.442695
          %v5237 = vpow.pop %v5236
          %v5238 = vmul.f32 %v5098, 1.442695
          %v5239 = vpow.pop %v5238
          %v5240 = vmul.f32 %v5099, 1.442695
          %v5241 = vpow.pop %v5240
          %v5242 = vmul.f32 %v5100, 1.442695
          %v5243 = vpow.pop %v5242
          %v5244 = vmul.f32 %v5101, 1.442695
          %v5245 = vpow.pop %v5244
          %v5246 = vmul.f32 %v5102, 1.442695
          %v5247 = vpow.pop %v5246
          %v5248 = vmul.f32 %v5103, 1.442695
          %v5249 = vpow.pop %v5248
          %v5250 = vmul.f32 %v5104, 1.442695
          %v5251 = vpow.pop %v5250
          %v5252 = vmul.f32 %v5105, 1.442695
          %v5253 = vpow.pop %v5252
          %v5254 = vmul.f32 %v5106, 1.442695
          %v5255 = vpow.pop %v5254
          %v5256 = vmul.f32 %v5107, 1.442695
          %v5257 = vpow.pop %v5256
          %v5258 = vmul.f32 %v5108, 1.442695
          %v5259 = vpow.pop %v5258
          %v5260 = vmul.f32 %v5109, 1.442695
          %v5261 = vpow.pop %v5260
          %v5262 = vmul.f32 %v5110, 1.442695
          %v5263 = vpow.pop %v5262
          %v5264 = vmul.f32 %v5111, 1.442695
          %v5265 = vpow.pop %v5264
          %v5266 = vmul.f32 %v5112, 1.442695
          %v5267 = vpow.pop %v5266
          %v5268 = vmul.f32 %v5113, 1.442695
          %v5269 = vpow.pop %v5268
          %v5270 = vmul.f32 %v5114, 1.442695
          %v5271 = vpow.pop %v5270
          %v5272 = vmul.f32 %v5115, 1.442695
          %v5273 = vpow.pop %v5272
          %v5274 = vmul.f32 %v5116, 1.442695
          %v5275 = vpow.pop %v5274
          %v5276 = vmul.f32 %v5117, 1.442695
          %v5277 = vpow.pop %v5276
          %v5278 = vmul.f32 %v5118, 1.442695
          %v5279 = vpow.pop %v5278
          %v5280 = vmul.f32 %v5119, 1.442695
          %v5281 = vpow.pop %v5280
          %v5282 = vmul.f32 %v5120, 1.442695
          %v5283 = vpow.pop %v5282
          %v5284 = vmul.f32 %v5121, 1.442695
          %v5285 = vpow.pop %v5284
          %v5286 = vmul.f32 %v5122, 1.442695
          %v5287 = vpow.pop %v5286
          %v5288 = vmul.f32 %v5123, 1.442695
          %v5289 = vpow.pop %v5288
          %v5290 = vmul.f32 %v5124, 1.442695
          %v5291 = vpow.pop %v5290
          %v5292 = vmul.f32 %v5125, 1.442695
          %v5293 = vpow.pop %v5292
          %v5294 = vmul.f32 %v5126, 1.442695
          %v5295 = vpow.pop %v5294
          %v5296 = vmul.f32 %v5127, 1.442695
          %v5297 = vpow.pop %v5296
          %v5298 = vmul.f32 %v5128, 1.442695
          %v5299 = vpow.pop %v5298
          %v5300 = vmul.f32 %v5129, 1.442695
          %v5301 = vpow.pop %v5300
          %v5302 = vmul.f32 %v5130, 1.442695
          %v5303 = vpow.pop %v5302
          %v5304 = vmul.f32 %v5131, 1.442695
          %v5305 = vpow.pop %v5304
          %v5306 = vmul.f32 %v5132, 1.442695
          %v5307 = vpow.pop %v5306
          %v5308 = vmul.f32 %v5133, 1.442695
          %v5309 = vpow.pop %v5308
          %v5310 = vmul.f32 %v5134, 1.442695
          %v5311 = vpow.pop %v5310
          %v5312 = vmul.f32 %v5135, 1.442695
          %v5313 = vpow.pop %v5312
          %v5314 = vmul.f32 %v5136, 1.442695
          %v5315 = vpow.pop %v5314
          %v5316 = vmul.f32 %v5137, 1.442695
          %v5317 = vpow.pop %v5316
          %v5318 = vmul.f32 %v5138, 1.442695
          %v5319 = vpow.pop %v5318
          %v5320 = vmul.f32 %v5139, 1.442695
          %v5321 = vpow.pop %v5320
          %v5322 = vmul.f32 %v5140, 1.442695
          %v5323 = vpow.pop %v5322
          %v5324 = vmul.f32 %v5141, 1.442695
          %v5325 = vpow.pop %v5324
          %v5326 = vmul.f32 %v5142, 1.442695
          %v5327 = vpow.pop %v5326
          %v5328 = vmul.f32 %v5143, 1.442695
          %v5329 = vpow.pop %v5328
          %v5330 = vmul.f32 %v5144, 1.442695
          %v5331 = vpow.pop %v5330
          %v5332 = vmul.f32 %v5145, 1.442695
          %v5333 = vpow.pop %v5332
          %v5334 = vmul.f32 %v5146, 1.442695
          %v5335 = vpow.pop %v5334
          %v5336 = vmul.f32 %v5147, 1.442695
          %v5337 = vpow.pop %v5336
          %v5338 = vmul.f32 %v5148, 1.442695
          %v5339 = vpow.pop %v5338
          %v5340 = vmul.f32 %v5149, 1.442695
          %v5341 = vpow.pop %v5340
          %v5342 = vmul.f32 %v5150, 1.442695
          %v5343 = vpow.pop %v5342
          %v5344 = vmul.f32 %v5151, 1.442695
          %v5345 = vpow.pop %v5344
          %v5346 = vmul.f32 %v5152, 1.442695
          %v5347 = vpow.pop %v5346
          %v5348 = vmul.f32 %v5153, 1.442695
          %v5349 = vpow.pop %v5348
          %v5350 = vmul.f32 %v5154, 1.442695
          %v5351 = vpow.pop %v5350
          %v5352 = vmul.f32 %v5155, 1.442695
          %v5353 = vpow.pop %v5352
          %v5354 = vmul.f32 %v5156, 1.442695
          %v5355 = vpow.pop %v5354
          %v5356 = vmul.f32 %v5157, 1.442695
          %v5357 = vpow.pop %v5356
          %v5358 = vmul.f32 %v5158, 1.442695
          %v5359 = vpow.pop %v5358
          %v5360 = vmul.f32 %v5159, 1.442695
          %v5361 = vpow.pop %v5360
          %v5362 = vmul.f32 %v5160, 1.442695
          %v5363 = vpow.pop %v5362
          %v5364 = vmul.f32 %v5161, 1.442695
          %v5365 = vpow.pop %v5364
          %v5366 = vmul.f32 %v5162, 1.442695
          %v5367 = vpow.pop %v5366
          %v5368 = vmul.f32 %v5163, 1.442695
          %v5369 = vpow.pop %v5368
          %v5370 = vmul.f32 %v5164, 1.442695
          %v5371 = vpow.pop %v5370
          %v5372 = vmul.f32 %v5165, 1.442695
          %v5373 = vpow.pop %v5372
          %v5374 = vmul.f32 %v5166, 1.442695
          %v5375 = vpow.pop %v5374
          %v5376 = vmul.f32 %v5167, 1.442695
          %v5377 = vpow.pop %v5376
          %v5378 = vmul.f32 %v5168, 1.442695
          %v5379 = vpow.pop %v5378
          %v5380 = vmul.f32 %v5169, 1.442695
          %v5381 = vpow.pop %v5380
          %v5382 = vmul.f32 %v5170, 1.442695
          %v5383 = vpow.pop %v5382
          %v5384 = vmul.f32 %v5171, 1.442695
          %v5385 = vpow.pop %v5384
          %v5386 = vmul.f32 %v5172, 1.442695
          %v5387 = vpow.pop %v5386
          %v5388 = vmul.f32 %v5173, 1.442695
          %v5389 = vpow.pop %v5388
          %v5390 = vmul.f32 %v5174, 1.442695
          %v5391 = vpow.pop %v5390
          %v5392 = vmul.f32 %v5175, 1.442695
          %v5393 = vpow.pop %v5392
          %v5394 = vmul.f32 %v5176, 1.442695
          %v5395 = vpow.pop %v5394
          %v5396 = vmul.f32 %v5177, 1.442695
          %v5397 = vpow.pop %v5396
          %v5398 = vmul.f32 %v5178, 1.442695
          %v5399 = vpow.pop %v5398
          %v5400 = vmul.f32 %v5179, 1.442695
          %v5401 = vpow.pop %v5400
          %v5402 = vmul.f32 %v5180, 1.442695
          %v5403 = vpow.pop %v5402
          %v5404 = vmul.f32 %v5181, 1.442695
          %v5405 = vpow.pop %v5404
          %v5406 = vmul.f32 %v5182, 1.442695
          %v5407 = vpow.pop %v5406
          %v5408 = vmul.f32 %v5183, 1.442695
          %v5409 = vpow.pop %v5408
          %v5410 = vmul.f32 %v5184, 1.442695
          %v5411 = vpow.pop %v5410
          %v5412 = vmul.f32 %v5185, 1.442695
          %v5413 = vpow.pop %v5412
          %v5414 = vmul.f32 %v5186, 1.442695
          %v5415 = vpow.pop %v5414
          %v5416 = vmul.f32 %v5187, 1.442695
          %v5417 = vpow.pop %v5416
          %v5418 = vmul.f32 %v5188, 1.442695
          %v5419 = vpow.pop %v5418
          %v5420 = vmul.f32 %v5189, 1.442695
          %v5421 = vpow.pop %v5420
          %v5422 = vmul.f32 %v5190, 1.442695
          %v5423 = vpow.pop %v5422
          %v5424 = vmul.f32 %v5191, 1.442695
          %v5425 = vpow.pop %v5424
          %v5426 = vmul.f32 %v5192, 1.442695
          %v5427 = vpow.pop %v5426
          %v5428 = vmul.f32 %v5193, 1.442695
          %v5429 = vpow.pop %v5428
          %v5430 = vmul.f32 %v5194, 1.442695
          %v5431 = vpow.pop %v5430
          %v5432 = vmul.f32 %v5195, 1.442695
          %v5433 = vpow.pop %v5432
          %v5434 = vmul.f32 %v5196, 1.442695
          %v5435 = vpow.pop %v5434
          %v5436 = vmul.f32 %v5197, 1.442695
          %v5437 = vpow.pop %v5436
          %v5438 = vmul.f32 %v5198, 1.442695
          %v5439 = vpow.pop %v5438
          %v5440 = vmul.f32 %v5199, 1.442695
          %v5441 = vpow.pop %v5440
          %v5442 = vmul.f32 %v5200, 1.442695
          %v5443 = vpow.pop %v5442
          %v5444 = vmul.f32 %v5201, 1.442695
          %v5445 = vpow.pop %v5444
          %v5446 = vmul.f32 %v5202, 1.442695
          %v5447 = vpow.pop %v5446
          %v5448 = vmul.f32 %v5203, 1.442695
          %v5449 = vpow.pop %v5448
          %v5450 = vmul.f32 %v5204, 1.442695
          %v5451 = vpow.pop %v5450
          %v5452 = vmul.f32 %v5205, 1.442695
          %v5453 = vpow.pop %v5452
          %v5454 = vmul.f32 %v5206, 1.442695
          %v5455 = vpow.pop %v5454
          %v5456 = vmul.f32 %v5207, 1.442695
          %v5457 = vpow.pop %v5456
          %v5458 = vmul.f32 %v5208, 1.442695
          %v5459 = vpow.pop %v5458
          %v5460 = vmul.f32 %v5209, 1.442695
          %v5461 = vpow.pop %v5460
          %v5462 = vmul.f32 %v5210, 1.442695
          %v5463 = vpow.pop %v5462
          %v5464 = vmul.f32 %v5211, 1.442695
          %v5465 = vpow.pop %v5464
          %v5466 = vmul.f32 %v5212, 1.442695
          %v5467 = vpow.pop %v5466
          %v5468 = vmul.f32 %v5213, 1.442695
          %v5469 = vpow.pop %v5468
          %v5470 = vadd.f32 %v5215, 1.0
          %v5471 = vadd.f32 %v5217, 1.0
          %v5472 = vadd.f32 %v5219, 1.0
          %v5473 = vadd.f32 %v5221, 1.0
          %v5474 = vadd.f32 %v5223, 1.0
          %v5475 = vadd.f32 %v5225, 1.0
          %v5476 = vadd.f32 %v5227, 1.0
          %v5477 = vadd.f32 %v5229, 1.0
          %v5478 = vadd.f32 %v5231, 1.0
          %v5479 = vadd.f32 %v5233, 1.0
          %v5480 = vadd.f32 %v5235, 1.0
          %v5481 = vadd.f32 %v5237, 1.0
          %v5482 = vadd.f32 %v5239, 1.0
          %v5483 = vadd.f32 %v5241, 1.0
          %v5484 = vadd.f32 %v5243, 1.0
          %v5485 = vadd.f32 %v5245, 1.0
          %v5486 = vadd.f32 %v5247, 1.0
          %v5487 = vadd.f32 %v5249, 1.0
          %v5488 = vadd.f32 %v5251, 1.0
          %v5489 = vadd.f32 %v5253, 1.0
          %v5490 = vadd.f32 %v5255, 1.0
          %v5491 = vadd.f32 %v5257, 1.0
          %v5492 = vadd.f32 %v5259, 1.0
          %v5493 = vadd.f32 %v5261, 1.0
          %v5494 = vadd.f32 %v5263, 1.0
          %v5495 = vadd.f32 %v5265, 1.0
          %v5496 = vadd.f32 %v5267, 1.0
          %v5497 = vadd.f32 %v5269, 1.0
          %v5498 = vadd.f32 %v5271, 1.0
          %v5499 = vadd.f32 %v5273, 1.0
          %v5500 = vadd.f32 %v5275, 1.0
          %v5501 = vadd.f32 %v5277, 1.0
          %v5502 = vadd.f32 %v5279, 1.0
          %v5503 = vadd.f32 %v5281, 1.0
          %v5504 = vadd.f32 %v5283, 1.0
          %v5505 = vadd.f32 %v5285, 1.0
          %v5506 = vadd.f32 %v5287, 1.0
          %v5507 = vadd.f32 %v5289, 1.0
          %v5508 = vadd.f32 %v5291, 1.0
          %v5509 = vadd.f32 %v5293, 1.0
          %v5510 = vadd.f32 %v5295, 1.0
          %v5511 = vadd.f32 %v5297, 1.0
          %v5512 = vadd.f32 %v5299, 1.0
          %v5513 = vadd.f32 %v5301, 1.0
          %v5514 = vadd.f32 %v5303, 1.0
          %v5515 = vadd.f32 %v5305, 1.0
          %v5516 = vadd.f32 %v5307, 1.0
          %v5517 = vadd.f32 %v5309, 1.0
          %v5518 = vadd.f32 %v5311, 1.0
          %v5519 = vadd.f32 %v5313, 1.0
          %v5520 = vadd.f32 %v5315, 1.0
          %v5521 = vadd.f32 %v5317, 1.0
          %v5522 = vadd.f32 %v5319, 1.0
          %v5523 = vadd.f32 %v5321, 1.0
          %v5524 = vadd.f32 %v5323, 1.0
          %v5525 = vadd.f32 %v5325, 1.0
          %v5526 = vadd.f32 %v5327, 1.0
          %v5527 = vadd.f32 %v5329, 1.0
          %v5528 = vadd.f32 %v5331, 1.0
          %v5529 = vadd.f32 %v5333, 1.0
          %v5530 = vadd.f32 %v5335, 1.0
          %v5531 = vadd.f32 %v5337, 1.0
          %v5532 = vadd.f32 %v5339, 1.0
          %v5533 = vadd.f32 %v5341, 1.0
          %v5534 = vadd.f32 %v5343, 1.0
          %v5535 = vadd.f32 %v5345, 1.0
          %v5536 = vadd.f32 %v5347, 1.0
          %v5537 = vadd.f32 %v5349, 1.0
          %v5538 = vadd.f32 %v5351, 1.0
          %v5539 = vadd.f32 %v5353, 1.0
          %v5540 = vadd.f32 %v5355, 1.0
          %v5541 = vadd.f32 %v5357, 1.0
          %v5542 = vadd.f32 %v5359, 1.0
          %v5543 = vadd.f32 %v5361, 1.0
          %v5544 = vadd.f32 %v5363, 1.0
          %v5545 = vadd.f32 %v5365, 1.0
          %v5546 = vadd.f32 %v5367, 1.0
          %v5547 = vadd.f32 %v5369, 1.0
          %v5548 = vadd.f32 %v5371, 1.0
          %v5549 = vadd.f32 %v5373, 1.0
          %v5550 = vadd.f32 %v5375, 1.0
          %v5551 = vadd.f32 %v5377, 1.0
          %v5552 = vadd.f32 %v5379, 1.0
          %v5553 = vadd.f32 %v5381, 1.0
          %v5554 = vadd.f32 %v5383, 1.0
          %v5555 = vadd.f32 %v5385, 1.0
          %v5556 = vadd.f32 %v5387, 1.0
          %v5557 = vadd.f32 %v5389, 1.0
          %v5558 = vadd.f32 %v5391, 1.0
          %v5559 = vadd.f32 %v5393, 1.0
          %v5560 = vadd.f32 %v5395, 1.0
          %v5561 = vadd.f32 %v5397, 1.0
          %v5562 = vadd.f32 %v5399, 1.0
          %v5563 = vadd.f32 %v5401, 1.0
          %v5564 = vadd.f32 %v5403, 1.0
          %v5565 = vadd.f32 %v5405, 1.0
          %v5566 = vadd.f32 %v5407, 1.0
          %v5567 = vadd.f32 %v5409, 1.0
          %v5568 = vadd.f32 %v5411, 1.0
          %v5569 = vadd.f32 %v5413, 1.0
          %v5570 = vadd.f32 %v5415, 1.0
          %v5571 = vadd.f32 %v5417, 1.0
          %v5572 = vadd.f32 %v5419, 1.0
          %v5573 = vadd.f32 %v5421, 1.0
          %v5574 = vadd.f32 %v5423, 1.0
          %v5575 = vadd.f32 %v5425, 1.0
          %v5576 = vadd.f32 %v5427, 1.0
          %v5577 = vadd.f32 %v5429, 1.0
          %v5578 = vadd.f32 %v5431, 1.0
          %v5579 = vadd.f32 %v5433, 1.0
          %v5580 = vadd.f32 %v5435, 1.0
          %v5581 = vadd.f32 %v5437, 1.0
          %v5582 = vadd.f32 %v5439, 1.0
          %v5583 = vadd.f32 %v5441, 1.0
          %v5584 = vadd.f32 %v5443, 1.0
          %v5585 = vadd.f32 %v5445, 1.0
          %v5586 = vadd.f32 %v5447, 1.0
          %v5587 = vadd.f32 %v5449, 1.0
          %v5588 = vadd.f32 %v5451, 1.0
          %v5589 = vadd.f32 %v5453, 1.0
          %v5590 = vadd.f32 %v5455, 1.0
          %v5591 = vadd.f32 %v5457, 1.0
          %v5592 = vadd.f32 %v5459, 1.0
          %v5593 = vadd.f32 %v5461, 1.0
          %v5594 = vadd.f32 %v5463, 1.0
          %v5595 = vadd.f32 %v5465, 1.0
          %v5596 = vadd.f32 %v5467, 1.0
          %v5597 = vadd.f32 %v5469, 1.0
          %v5598 = vrcp.pop %v5470
          %v5599 = vrcp.pop %v5471
          %v5600 = vrcp.pop %v5472
          %v5601 = vrcp.pop %v5473
          %v5602 = vrcp.pop %v5474
          %v5603 = vrcp.pop %v5475
          %v5604 = vrcp.pop %v5476
          %v5605 = vrcp.pop %v5477
          %v5606 = vrcp.pop %v5478
          %v5607 = vrcp.pop %v5479
          %v5608 = vrcp.pop %v5480
          %v5609 = vrcp.pop %v5481
          %v5610 = vrcp.pop %v5482
          %v5611 = vrcp.pop %v5483
          %v5612 = vrcp.pop %v5484
          %v5613 = vrcp.pop %v5485
          %v5614 = vrcp.pop %v5486
          %v5615 = vrcp.pop %v5487
          %v5616 = vrcp.pop %v5488
          %v5617 = vrcp.pop %v5489
          %v5618 = vrcp.pop %v5490
          %v5619 = vrcp.pop %v5491
          %v5620 = vrcp.pop %v5492
          %v5621 = vrcp.pop %v5493
          %v5622 = vrcp.pop %v5494
          %v5623 = vrcp.pop %v5495
          %v5624 = vrcp.pop %v5496
          %v5625 = vrcp.pop %v5497
          %v5626 = vrcp.pop %v5498
          %v5627 = vrcp.pop %v5499
          %v5628 = vrcp.pop %v5500
          %v5629 = vrcp.pop %v5501
          %v5630 = vrcp.pop %v5502
          %v5631 = vrcp.pop %v5503
          %v5632 = vrcp.pop %v5504
          %v5633 = vrcp.pop %v5505
          %v5634 = vrcp.pop %v5506
          %v5635 = vrcp.pop %v5507
          %v5636 = vrcp.pop %v5508
          %v5637 = vrcp.pop %v5509
          %v5638 = vrcp.pop %v5510
          %v5639 = vrcp.pop %v5511
          %v5640 = vrcp.pop %v5512
          %v5641 = vrcp.pop %v5513
          %v5642 = vrcp.pop %v5514
          %v5643 = vrcp.pop %v5515
          %v5644 = vrcp.pop %v5516
          %v5645 = vrcp.pop %v5517
          %v5646 = vrcp.pop %v5518
          %v5647 = vrcp.pop %v5519
          %v5648 = vrcp.pop %v5520
          %v5649 = vrcp.pop %v5521
          %v5650 = vrcp.pop %v5522
          %v5651 = vrcp.pop %v5523
          %v5652 = vrcp.pop %v5524
          %v5653 = vrcp.pop %v5525
          %v5654 = vrcp.pop %v5526
          %v5655 = vrcp.pop %v5527
          %v5656 = vrcp.pop %v5528
          %v5657 = vrcp.pop %v5529
          %v5658 = vrcp.pop %v5530
          %v5659 = vrcp.pop %v5531
          %v5660 = vrcp.pop %v5532
          %v5661 = vrcp.pop %v5533
          %v5662 = vrcp.pop %v5534
          %v5663 = vrcp.pop %v5535
          %v5664 = vrcp.pop %v5536
          %v5665 = vrcp.pop %v5537
          %v5666 = vrcp.pop %v5538
          %v5667 = vrcp.pop %v5539
          %v5668 = vrcp.pop %v5540
          %v5669 = vrcp.pop %v5541
          %v5670 = vrcp.pop %v5542
          %v5671 = vrcp.pop %v5543
          %v5672 = vrcp.pop %v5544
          %v5673 = vrcp.pop %v5545
          %v5674 = vrcp.pop %v5546
          %v5675 = vrcp.pop %v5547
          %v5676 = vrcp.pop %v5548
          %v5677 = vrcp.pop %v5549
          %v5678 = vrcp.pop %v5550
          %v5679 = vrcp.pop %v5551
          %v5680 = vrcp.pop %v5552
          %v5681 = vrcp.pop %v5553
          %v5682 = vrcp.pop %v5554
          %v5683 = vrcp.pop %v5555
          %v5684 = vrcp.pop %v5556
          %v5685 = vrcp.pop %v5557
          %v5686 = vrcp.pop %v5558
          %v5687 = vrcp.pop %v5559
          %v5688 = vrcp.pop %v5560
          %v5689 = vrcp.pop %v5561
          %v5690 = vrcp.pop %v5562
          %v5691 = vrcp.pop %v5563
          %v5692 = vrcp.pop %v5564
          %v5693 = vrcp.pop %v5565
          %v5694 = vrcp.pop %v5566
          %v5695 = vrcp.pop %v5567
          %v5696 = vrcp.pop %v5568
          %v5697 = vrcp.pop %v5569
          %v5698 = vrcp.pop %v5570
          %v5699 = vrcp.pop %v5571
          %v5700 = vrcp.pop %v5572
          %v5701 = vrcp.pop %v5573
          %v5702 = vrcp.pop %v5574
          %v5703 = vrcp.pop %v5575
          %v5704 = vrcp.pop %v5576
          %v5705 = vrcp.pop %v5577
          %v5706 = vrcp.pop %v5578
          %v5707 = vrcp.pop %v5579
          %v5708 = vrcp.pop %v5580
          %v5709 = vrcp.pop %v5581
          %v5710 = vrcp.pop %v5582
          %v5711 = vrcp.pop %v5583
          %v5712 = vrcp.pop %v5584
          %v5713 = vrcp.pop %v5585
          %v5714 = vrcp.pop %v5586
          %v5715 = vrcp.pop %v5587
          %v5716 = vrcp.pop %v5588
          %v5717 = vrcp.pop %v5589
          %v5718 = vrcp.pop %v5590
          %v5719 = vrcp.pop %v5591
          %v5720 = vrcp.pop %v5592
          %v5721 = vrcp.pop %v5593
          %v5722 = vrcp.pop %v5594
          %v5723 = vrcp.pop %v5595
          %v5724 = vrcp.pop %v5596
          %v5725 = vrcp.pop %v5597
          %v5726 = vsel %vm540, 1, 0
          %v5727 = vsel %vm541, 1, 0
          %v5728 = vsel %vm542, 1, 0
          %v5729 = vsel %vm543, 1, 0
          %v5730 = vsel %vm544, 1, 0
          %v5731 = vsel %vm545, 1, 0
          %v5732 = vsel %vm546, 1, 0
          %v5733 = vsel %vm547, 1, 0
          %v5734 = vsel %vm548, 1, 0
          %v5735 = vsel %vm549, 1, 0
          %v5736 = vsel %vm550, 1, 0
          %v5737 = vsel %vm551, 1, 0
          %v5738 = vsel %vm552, 1, 0
          %v5739 = vsel %vm553, 1, 0
          %v5740 = vsel %vm554, 1, 0
          %v5741 = vsel %vm555, 1, 0
          %v5742 = vsel %vm556, 1, 0
          %v5743 = vsel %vm557, 1, 0
          %v5744 = vsel %vm558, 1, 0
          %v5745 = vsel %vm559, 1, 0
          %v5746 = vsel %vm560, 1, 0
          %v5747 = vsel %vm561, 1, 0
          %v5748 = vsel %vm562, 1, 0
          %v5749 = vsel %vm563, 1, 0
          %v5750 = vsel %vm564, 1, 0
          %v5751 = vsel %vm565, 1, 0
          %v5752 = vsel %vm566, 1, 0
          %v5753 = vsel %vm567, 1, 0
          %v5754 = vsel %vm568, 1, 0
          %v5755 = vsel %vm569, 1, 0
          %v5756 = vsel %vm570, 1, 0
          %v5757 = vsel %vm571, 1, 0
          %v5758 = vsel %vm572, 1, 0
          %v5759 = vsel %vm573, 1, 0
          %v5760 = vsel %vm574, 1, 0
          %v5761 = vsel %vm575, 1, 0
          %v5762 = vsel %vm576, 1, 0
          %v5763 = vsel %vm577, 1, 0
          %v5764 = vsel %vm578, 1, 0
          %v5765 = vsel %vm579, 1, 0
          %v5766 = vsel %vm580, 1, 0
          %v5767 = vsel %vm581, 1, 0
          %v5768 = vsel %vm582, 1, 0
          %v5769 = vsel %vm583, 1, 0
          %v5770 = vsel %vm584, 1, 0
          %v5771 = vsel %vm585, 1, 0
          %v5772 = vsel %vm586, 1, 0
          %v5773 = vsel %vm587, 1, 0
          %v5774 = vsel %vm588, 1, 0
          %v5775 = vsel %vm589, 1, 0
          %v5776 = vsel %vm590, 1, 0
          %v5777 = vsel %vm591, 1, 0
          %v5778 = vsel %vm592, 1, 0
          %v5779 = vsel %vm593, 1, 0
          %v5780 = vsel %vm594, 1, 0
          %v5781 = vsel %vm595, 1, 0
          %v5782 = vsel %vm596, 1, 0
          %v5783 = vsel %vm597, 1, 0
          %v5784 = vsel %vm598, 1, 0
          %v5785 = vsel %vm599, 1, 0
          %v5786 = vsel %vm600, 1, 0
          %v5787 = vsel %vm601, 1, 0
          %v5788 = vsel %vm602, 1, 0
          %v5789 = vsel %vm603, 1, 0
          %v5790 = vlaneseq
          %v5791 = vshrl.u32 %v5790, 7
          %v5792 = vsub.s32 0, %v5791
          %v5793 = vrot.slane %v5726, %v5792
          %v5794 = vlaneseq
          %v5795 = vshrl.u32 %v5794, 7
          %v5796 = vsub.s32 4, %v5795
          %v5797 = vrot.slane %v5726, %v5796
          %v5798 = vlaneseq
          %v5799 = vshrl.u32 %v5798, 7
          %v5800 = vsub.s32 0, %v5799
          %v5801 = vrot.slane %v5727, %v5800
          %v5802 = vlaneseq
          %v5803 = vshrl.u32 %v5802, 7
          %v5804 = vsub.s32 4, %v5803
          %v5805 = vrot.slane %v5727, %v5804
          %v5806 = vlaneseq
          %v5807 = vshrl.u32 %v5806, 7
          %v5808 = vsub.s32 0, %v5807
          %v5809 = vrot.slane %v5728, %v5808
          %v5810 = vlaneseq
          %v5811 = vshrl.u32 %v5810, 7
          %v5812 = vsub.s32 4, %v5811
          %v5813 = vrot.slane %v5728, %v5812
          %v5814 = vlaneseq
          %v5815 = vshrl.u32 %v5814, 7
          %v5816 = vsub.s32 0, %v5815
          %v5817 = vrot.slane %v5729, %v5816
          %v5818 = vlaneseq
          %v5819 = vshrl.u32 %v5818, 7
          %v5820 = vsub.s32 4, %v5819
          %v5821 = vrot.slane %v5729, %v5820
          %v5822 = vlaneseq
          %v5823 = vshrl.u32 %v5822, 7
          %v5824 = vsub.s32 0, %v5823
          %v5825 = vrot.slane %v5730, %v5824
          %v5826 = vlaneseq
          %v5827 = vshrl.u32 %v5826, 7
          %v5828 = vsub.s32 4, %v5827
          %v5829 = vrot.slane %v5730, %v5828
          %v5830 = vlaneseq
          %v5831 = vshrl.u32 %v5830, 7
          %v5832 = vsub.s32 0, %v5831
          %v5833 = vrot.slane %v5731, %v5832
          %v5834 = vlaneseq
          %v5835 = vshrl.u32 %v5834, 7
          %v5836 = vsub.s32 4, %v5835
          %v5837 = vrot.slane %v5731, %v5836
          %v5838 = vlaneseq
          %v5839 = vshrl.u32 %v5838, 7
          %v5840 = vsub.s32 0, %v5839
          %v5841 = vrot.slane %v5732, %v5840
          %v5842 = vlaneseq
          %v5843 = vshrl.u32 %v5842, 7
          %v5844 = vsub.s32 4, %v5843
          %v5845 = vrot.slane %v5732, %v5844
          %v5846 = vlaneseq
          %v5847 = vshrl.u32 %v5846, 7
          %v5848 = vsub.s32 0, %v5847
          %v5849 = vrot.slane %v5733, %v5848
          %v5850 = vlaneseq
          %v5851 = vshrl.u32 %v5850, 7
          %v5852 = vsub.s32 4, %v5851
          %v5853 = vrot.slane %v5733, %v5852
          %v5854 = vlaneseq
          %v5855 = vshrl.u32 %v5854, 7
          %v5856 = vsub.s32 0, %v5855
          %v5857 = vrot.slane %v5734, %v5856
          %v5858 = vlaneseq
          %v5859 = vshrl.u32 %v5858, 7
          %v5860 = vsub.s32 4, %v5859
          %v5861 = vrot.slane %v5734, %v5860
          %v5862 = vlaneseq
          %v5863 = vshrl.u32 %v5862, 7
          %v5864 = vsub.s32 0, %v5863
          %v5865 = vrot.slane %v5735, %v5864
          %v5866 = vlaneseq
          %v5867 = vshrl.u32 %v5866, 7
          %v5868 = vsub.s32 4, %v5867
          %v5869 = vrot.slane %v5735, %v5868
          %v5870 = vlaneseq
          %v5871 = vshrl.u32 %v5870, 7
          %v5872 = vsub.s32 0, %v5871
          %v5873 = vrot.slane %v5736, %v5872
          %v5874 = vlaneseq
          %v5875 = vshrl.u32 %v5874, 7
          %v5876 = vsub.s32 4, %v5875
          %v5877 = vrot.slane %v5736, %v5876
          %v5878 = vlaneseq
          %v5879 = vshrl.u32 %v5878, 7
          %v5880 = vsub.s32 0, %v5879
          %v5881 = vrot.slane %v5737, %v5880
          %v5882 = vlaneseq
          %v5883 = vshrl.u32 %v5882, 7
          %v5884 = vsub.s32 4, %v5883
          %v5885 = vrot.slane %v5737, %v5884
          %v5886 = vlaneseq
          %v5887 = vshrl.u32 %v5886, 7
          %v5888 = vsub.s32 0, %v5887
          %v5889 = vrot.slane %v5738, %v5888
          %v5890 = vlaneseq
          %v5891 = vshrl.u32 %v5890, 7
          %v5892 = vsub.s32 4, %v5891
          %v5893 = vrot.slane %v5738, %v5892
          %v5894 = vlaneseq
          %v5895 = vshrl.u32 %v5894, 7
          %v5896 = vsub.s32 0, %v5895
          %v5897 = vrot.slane %v5739, %v5896
          %v5898 = vlaneseq
          %v5899 = vshrl.u32 %v5898, 7
          %v5900 = vsub.s32 4, %v5899
          %v5901 = vrot.slane %v5739, %v5900
          %v5902 = vlaneseq
          %v5903 = vshrl.u32 %v5902, 7
          %v5904 = vsub.s32 0, %v5903
          %v5905 = vrot.slane %v5740, %v5904
          %v5906 = vlaneseq
          %v5907 = vshrl.u32 %v5906, 7
          %v5908 = vsub.s32 4, %v5907
          %v5909 = vrot.slane %v5740, %v5908
          %v5910 = vlaneseq
          %v5911 = vshrl.u32 %v5910, 7
          %v5912 = vsub.s32 0, %v5911
          %v5913 = vrot.slane %v5741, %v5912
          %v5914 = vlaneseq
          %v5915 = vshrl.u32 %v5914, 7
          %v5916 = vsub.s32 4, %v5915
          %v5917 = vrot.slane %v5741, %v5916
          %v5918 = vlaneseq
          %v5919 = vshrl.u32 %v5918, 7
          %v5920 = vsub.s32 0, %v5919
          %v5921 = vrot.slane %v5742, %v5920
          %v5922 = vlaneseq
          %v5923 = vshrl.u32 %v5922, 7
          %v5924 = vsub.s32 4, %v5923
          %v5925 = vrot.slane %v5742, %v5924
          %v5926 = vlaneseq
          %v5927 = vshrl.u32 %v5926, 7
          %v5928 = vsub.s32 0, %v5927
          %v5929 = vrot.slane %v5743, %v5928
          %v5930 = vlaneseq
          %v5931 = vshrl.u32 %v5930, 7
          %v5932 = vsub.s32 4, %v5931
          %v5933 = vrot.slane %v5743, %v5932
          %v5934 = vlaneseq
          %v5935 = vshrl.u32 %v5934, 7
          %v5936 = vsub.s32 0, %v5935
          %v5937 = vrot.slane %v5744, %v5936
          %v5938 = vlaneseq
          %v5939 = vshrl.u32 %v5938, 7
          %v5940 = vsub.s32 4, %v5939
          %v5941 = vrot.slane %v5744, %v5940
          %v5942 = vlaneseq
          %v5943 = vshrl.u32 %v5942, 7
          %v5944 = vsub.s32 0, %v5943
          %v5945 = vrot.slane %v5745, %v5944
          %v5946 = vlaneseq
          %v5947 = vshrl.u32 %v5946, 7
          %v5948 = vsub.s32 4, %v5947
          %v5949 = vrot.slane %v5745, %v5948
          %v5950 = vlaneseq
          %v5951 = vshrl.u32 %v5950, 7
          %v5952 = vsub.s32 0, %v5951
          %v5953 = vrot.slane %v5746, %v5952
          %v5954 = vlaneseq
          %v5955 = vshrl.u32 %v5954, 7
          %v5956 = vsub.s32 4, %v5955
          %v5957 = vrot.slane %v5746, %v5956
          %v5958 = vlaneseq
          %v5959 = vshrl.u32 %v5958, 7
          %v5960 = vsub.s32 0, %v5959
          %v5961 = vrot.slane %v5747, %v5960
          %v5962 = vlaneseq
          %v5963 = vshrl.u32 %v5962, 7
          %v5964 = vsub.s32 4, %v5963
          %v5965 = vrot.slane %v5747, %v5964
          %v5966 = vlaneseq
          %v5967 = vshrl.u32 %v5966, 7
          %v5968 = vsub.s32 0, %v5967
          %v5969 = vrot.slane %v5748, %v5968
          %v5970 = vlaneseq
          %v5971 = vshrl.u32 %v5970, 7
          %v5972 = vsub.s32 4, %v5971
          %v5973 = vrot.slane %v5748, %v5972
          %v5974 = vlaneseq
          %v5975 = vshrl.u32 %v5974, 7
          %v5976 = vsub.s32 0, %v5975
          %v5977 = vrot.slane %v5749, %v5976
          %v5978 = vlaneseq
          %v5979 = vshrl.u32 %v5978, 7
          %v5980 = vsub.s32 4, %v5979
          %v5981 = vrot.slane %v5749, %v5980
          %v5982 = vlaneseq
          %v5983 = vshrl.u32 %v5982, 7
          %v5984 = vsub.s32 0, %v5983
          %v5985 = vrot.slane %v5750, %v5984
          %v5986 = vlaneseq
          %v5987 = vshrl.u32 %v5986, 7
          %v5988 = vsub.s32 4, %v5987
          %v5989 = vrot.slane %v5750, %v5988
          %v5990 = vlaneseq
          %v5991 = vshrl.u32 %v5990, 7
          %v5992 = vsub.s32 0, %v5991
          %v5993 = vrot.slane %v5751, %v5992
          %v5994 = vlaneseq
          %v5995 = vshrl.u32 %v5994, 7
          %v5996 = vsub.s32 4, %v5995
          %v5997 = vrot.slane %v5751, %v5996
          %v5998 = vlaneseq
          %v5999 = vshrl.u32 %v5998, 7
          %v6000 = vsub.s32 0, %v5999
          %v6001 = vrot.slane %v5752, %v6000
          %v6002 = vlaneseq
          %v6003 = vshrl.u32 %v6002, 7
          %v6004 = vsub.s32 4, %v6003
          %v6005 = vrot.slane %v5752, %v6004
          %v6006 = vlaneseq
          %v6007 = vshrl.u32 %v6006, 7
          %v6008 = vsub.s32 0, %v6007
          %v6009 = vrot.slane %v5753, %v6008
          %v6010 = vlaneseq
          %v6011 = vshrl.u32 %v6010, 7
          %v6012 = vsub.s32 4, %v6011
          %v6013 = vrot.slane %v5753, %v6012
          %v6014 = vlaneseq
          %v6015 = vshrl.u32 %v6014, 7
          %v6016 = vsub.s32 0, %v6015
          %v6017 = vrot.slane %v5754, %v6016
          %v6018 = vlaneseq
          %v6019 = vshrl.u32 %v6018, 7
          %v6020 = vsub.s32 4, %v6019
          %v6021 = vrot.slane %v5754, %v6020
          %v6022 = vlaneseq
          %v6023 = vshrl.u32 %v6022, 7
          %v6024 = vsub.s32 0, %v6023
          %v6025 = vrot.slane %v5755, %v6024
          %v6026 = vlaneseq
          %v6027 = vshrl.u32 %v6026, 7
          %v6028 = vsub.s32 4, %v6027
          %v6029 = vrot.slane %v5755, %v6028
          %v6030 = vlaneseq
          %v6031 = vshrl.u32 %v6030, 7
          %v6032 = vsub.s32 0, %v6031
          %v6033 = vrot.slane %v5756, %v6032
          %v6034 = vlaneseq
          %v6035 = vshrl.u32 %v6034, 7
          %v6036 = vsub.s32 4, %v6035
          %v6037 = vrot.slane %v5756, %v6036
          %v6038 = vlaneseq
          %v6039 = vshrl.u32 %v6038, 7
          %v6040 = vsub.s32 0, %v6039
          %v6041 = vrot.slane %v5757, %v6040
          %v6042 = vlaneseq
          %v6043 = vshrl.u32 %v6042, 7
          %v6044 = vsub.s32 4, %v6043
          %v6045 = vrot.slane %v5757, %v6044
          %v6046 = vlaneseq
          %v6047 = vshrl.u32 %v6046, 7
          %v6048 = vsub.s32 0, %v6047
          %v6049 = vrot.slane %v5758, %v6048
          %v6050 = vlaneseq
          %v6051 = vshrl.u32 %v6050, 7
          %v6052 = vsub.s32 4, %v6051
          %v6053 = vrot.slane %v5758, %v6052
          %v6054 = vlaneseq
          %v6055 = vshrl.u32 %v6054, 7
          %v6056 = vsub.s32 0, %v6055
          %v6057 = vrot.slane %v5759, %v6056
          %v6058 = vlaneseq
          %v6059 = vshrl.u32 %v6058, 7
          %v6060 = vsub.s32 4, %v6059
          %v6061 = vrot.slane %v5759, %v6060
          %v6062 = vlaneseq
          %v6063 = vshrl.u32 %v6062, 7
          %v6064 = vsub.s32 0, %v6063
          %v6065 = vrot.slane %v5760, %v6064
          %v6066 = vlaneseq
          %v6067 = vshrl.u32 %v6066, 7
          %v6068 = vsub.s32 4, %v6067
          %v6069 = vrot.slane %v5760, %v6068
          %v6070 = vlaneseq
          %v6071 = vshrl.u32 %v6070, 7
          %v6072 = vsub.s32 0, %v6071
          %v6073 = vrot.slane %v5761, %v6072
          %v6074 = vlaneseq
          %v6075 = vshrl.u32 %v6074, 7
          %v6076 = vsub.s32 4, %v6075
          %v6077 = vrot.slane %v5761, %v6076
          %v6078 = vlaneseq
          %v6079 = vshrl.u32 %v6078, 7
          %v6080 = vsub.s32 0, %v6079
          %v6081 = vrot.slane %v5762, %v6080
          %v6082 = vlaneseq
          %v6083 = vshrl.u32 %v6082, 7
          %v6084 = vsub.s32 4, %v6083
          %v6085 = vrot.slane %v5762, %v6084
          %v6086 = vlaneseq
          %v6087 = vshrl.u32 %v6086, 7
          %v6088 = vsub.s32 0, %v6087
          %v6089 = vrot.slane %v5763, %v6088
          %v6090 = vlaneseq
          %v6091 = vshrl.u32 %v6090, 7
          %v6092 = vsub.s32 4, %v6091
          %v6093 = vrot.slane %v5763, %v6092
          %v6094 = vlaneseq
          %v6095 = vshrl.u32 %v6094, 7
          %v6096 = vsub.s32 0, %v6095
          %v6097 = vrot.slane %v5764, %v6096
          %v6098 = vlaneseq
          %v6099 = vshrl.u32 %v6098, 7
          %v6100 = vsub.s32 4, %v6099
          %v6101 = vrot.slane %v5764, %v6100
          %v6102 = vlaneseq
          %v6103 = vshrl.u32 %v6102, 7
          %v6104 = vsub.s32 0, %v6103
          %v6105 = vrot.slane %v5765, %v6104
          %v6106 = vlaneseq
          %v6107 = vshrl.u32 %v6106, 7
          %v6108 = vsub.s32 4, %v6107
          %v6109 = vrot.slane %v5765, %v6108
          %v6110 = vlaneseq
          %v6111 = vshrl.u32 %v6110, 7
          %v6112 = vsub.s32 0, %v6111
          %v6113 = vrot.slane %v5766, %v6112
          %v6114 = vlaneseq
          %v6115 = vshrl.u32 %v6114, 7
          %v6116 = vsub.s32 4, %v6115
          %v6117 = vrot.slane %v5766, %v6116
          %v6118 = vlaneseq
          %v6119 = vshrl.u32 %v6118, 7
          %v6120 = vsub.s32 0, %v6119
          %v6121 = vrot.slane %v5767, %v6120
          %v6122 = vlaneseq
          %v6123 = vshrl.u32 %v6122, 7
          %v6124 = vsub.s32 4, %v6123
          %v6125 = vrot.slane %v5767, %v6124
          %v6126 = vlaneseq
          %v6127 = vshrl.u32 %v6126, 7
          %v6128 = vsub.s32 0, %v6127
          %v6129 = vrot.slane %v5768, %v6128
          %v6130 = vlaneseq
          %v6131 = vshrl.u32 %v6130, 7
          %v6132 = vsub.s32 4, %v6131
          %v6133 = vrot.slane %v5768, %v6132
          %v6134 = vlaneseq
          %v6135 = vshrl.u32 %v6134, 7
          %v6136 = vsub.s32 0, %v6135
          %v6137 = vrot.slane %v5769, %v6136
          %v6138 = vlaneseq
          %v6139 = vshrl.u32 %v6138, 7
          %v6140 = vsub.s32 4, %v6139
          %v6141 = vrot.slane %v5769, %v6140
          %v6142 = vlaneseq
          %v6143 = vshrl.u32 %v6142, 7
          %v6144 = vsub.s32 0, %v6143
          %v6145 = vrot.slane %v5770, %v6144
          %v6146 = vlaneseq
          %v6147 = vshrl.u32 %v6146, 7
          %v6148 = vsub.s32 4, %v6147
          %v6149 = vrot.slane %v5770, %v6148
          %v6150 = vlaneseq
          %v6151 = vshrl.u32 %v6150, 7
          %v6152 = vsub.s32 0, %v6151
          %v6153 = vrot.slane %v5771, %v6152
          %v6154 = vlaneseq
          %v6155 = vshrl.u32 %v6154, 7
          %v6156 = vsub.s32 4, %v6155
          %v6157 = vrot.slane %v5771, %v6156
          %v6158 = vlaneseq
          %v6159 = vshrl.u32 %v6158, 7
          %v6160 = vsub.s32 0, %v6159
          %v6161 = vrot.slane %v5772, %v6160
          %v6162 = vlaneseq
          %v6163 = vshrl.u32 %v6162, 7
          %v6164 = vsub.s32 4, %v6163
          %v6165 = vrot.slane %v5772, %v6164
          %v6166 = vlaneseq
          %v6167 = vshrl.u32 %v6166, 7
          %v6168 = vsub.s32 0, %v6167
          %v6169 = vrot.slane %v5773, %v6168
          %v6170 = vlaneseq
          %v6171 = vshrl.u32 %v6170, 7
          %v6172 = vsub.s32 4, %v6171
          %v6173 = vrot.slane %v5773, %v6172
          %v6174 = vlaneseq
          %v6175 = vshrl.u32 %v6174, 7
          %v6176 = vsub.s32 0, %v6175
          %v6177 = vrot.slane %v5774, %v6176
          %v6178 = vlaneseq
          %v6179 = vshrl.u32 %v6178, 7
          %v6180 = vsub.s32 4, %v6179
          %v6181 = vrot.slane %v5774, %v6180
          %v6182 = vlaneseq
          %v6183 = vshrl.u32 %v6182, 7
          %v6184 = vsub.s32 0, %v6183
          %v6185 = vrot.slane %v5775, %v6184
          %v6186 = vlaneseq
          %v6187 = vshrl.u32 %v6186, 7
          %v6188 = vsub.s32 4, %v6187
          %v6189 = vrot.slane %v5775, %v6188
          %v6190 = vlaneseq
          %v6191 = vshrl.u32 %v6190, 7
          %v6192 = vsub.s32 0, %v6191
          %v6193 = vrot.slane %v5776, %v6192
          %v6194 = vlaneseq
          %v6195 = vshrl.u32 %v6194, 7
          %v6196 = vsub.s32 4, %v6195
          %v6197 = vrot.slane %v5776, %v6196
          %v6198 = vlaneseq
          %v6199 = vshrl.u32 %v6198, 7
          %v6200 = vsub.s32 0, %v6199
          %v6201 = vrot.slane %v5777, %v6200
          %v6202 = vlaneseq
          %v6203 = vshrl.u32 %v6202, 7
          %v6204 = vsub.s32 4, %v6203
          %v6205 = vrot.slane %v5777, %v6204
          %v6206 = vlaneseq
          %v6207 = vshrl.u32 %v6206, 7
          %v6208 = vsub.s32 0, %v6207
          %v6209 = vrot.slane %v5778, %v6208
          %v6210 = vlaneseq
          %v6211 = vshrl.u32 %v6210, 7
          %v6212 = vsub.s32 4, %v6211
          %v6213 = vrot.slane %v5778, %v6212
          %v6214 = vlaneseq
          %v6215 = vshrl.u32 %v6214, 7
          %v6216 = vsub.s32 0, %v6215
          %v6217 = vrot.slane %v5779, %v6216
          %v6218 = vlaneseq
          %v6219 = vshrl.u32 %v6218, 7
          %v6220 = vsub.s32 4, %v6219
          %v6221 = vrot.slane %v5779, %v6220
          %v6222 = vlaneseq
          %v6223 = vshrl.u32 %v6222, 7
          %v6224 = vsub.s32 0, %v6223
          %v6225 = vrot.slane %v5780, %v6224
          %v6226 = vlaneseq
          %v6227 = vshrl.u32 %v6226, 7
          %v6228 = vsub.s32 4, %v6227
          %v6229 = vrot.slane %v5780, %v6228
          %v6230 = vlaneseq
          %v6231 = vshrl.u32 %v6230, 7
          %v6232 = vsub.s32 0, %v6231
          %v6233 = vrot.slane %v5781, %v6232
          %v6234 = vlaneseq
          %v6235 = vshrl.u32 %v6234, 7
          %v6236 = vsub.s32 4, %v6235
          %v6237 = vrot.slane %v5781, %v6236
          %v6238 = vlaneseq
          %v6239 = vshrl.u32 %v6238, 7
          %v6240 = vsub.s32 0, %v6239
          %v6241 = vrot.slane %v5782, %v6240
          %v6242 = vlaneseq
          %v6243 = vshrl.u32 %v6242, 7
          %v6244 = vsub.s32 4, %v6243
          %v6245 = vrot.slane %v5782, %v6244
          %v6246 = vlaneseq
          %v6247 = vshrl.u32 %v6246, 7
          %v6248 = vsub.s32 0, %v6247
          %v6249 = vrot.slane %v5783, %v6248
          %v6250 = vlaneseq
          %v6251 = vshrl.u32 %v6250, 7
          %v6252 = vsub.s32 4, %v6251
          %v6253 = vrot.slane %v5783, %v6252
          %v6254 = vlaneseq
          %v6255 = vshrl.u32 %v6254, 7
          %v6256 = vsub.s32 0, %v6255
          %v6257 = vrot.slane %v5784, %v6256
          %v6258 = vlaneseq
          %v6259 = vshrl.u32 %v6258, 7
          %v6260 = vsub.s32 4, %v6259
          %v6261 = vrot.slane %v5784, %v6260
          %v6262 = vlaneseq
          %v6263 = vshrl.u32 %v6262, 7
          %v6264 = vsub.s32 0, %v6263
          %v6265 = vrot.slane %v5785, %v6264
          %v6266 = vlaneseq
          %v6267 = vshrl.u32 %v6266, 7
          %v6268 = vsub.s32 4, %v6267
          %v6269 = vrot.slane %v5785, %v6268
          %v6270 = vlaneseq
          %v6271 = vshrl.u32 %v6270, 7
          %v6272 = vsub.s32 0, %v6271
          %v6273 = vrot.slane %v5786, %v6272
          %v6274 = vlaneseq
          %v6275 = vshrl.u32 %v6274, 7
          %v6276 = vsub.s32 4, %v6275
          %v6277 = vrot.slane %v5786, %v6276
          %v6278 = vlaneseq
          %v6279 = vshrl.u32 %v6278, 7
          %v6280 = vsub.s32 0, %v6279
          %v6281 = vrot.slane %v5787, %v6280
          %v6282 = vlaneseq
          %v6283 = vshrl.u32 %v6282, 7
          %v6284 = vsub.s32 4, %v6283
          %v6285 = vrot.slane %v5787, %v6284
          %v6286 = vlaneseq
          %v6287 = vshrl.u32 %v6286, 7
          %v6288 = vsub.s32 0, %v6287
          %v6289 = vrot.slane %v5788, %v6288
          %v6290 = vlaneseq
          %v6291 = vshrl.u32 %v6290, 7
          %v6292 = vsub.s32 4, %v6291
          %v6293 = vrot.slane %v5788, %v6292
          %v6294 = vlaneseq
          %v6295 = vshrl.u32 %v6294, 7
          %v6296 = vsub.s32 0, %v6295
          %v6297 = vrot.slane %v5789, %v6296
          %v6298 = vlaneseq
          %v6299 = vshrl.u32 %v6298, 7
          %v6300 = vsub.s32 4, %v6299
          %v6301 = vrot.slane %v5789, %v6300
          %v6302 = vlaneseq
          %v6303 = vshrl.u32 %v6302, 7
          %v6304 = vsub.s32 0, %v6303
          %v6305 = vrot.slane %v5793, %v6304
          %v6306 = vlaneseq
          %v6307 = vshrl.u32 %v6306, 7
          %v6308 = vsub.s32 0, %v6307
          %v6309 = vrot.slane %v5797, %v6308
          %v6310 = vlaneseq
          %v6311 = vshrl.u32 %v6310, 7
          %v6312 = vsub.s32 0, %v6311
          %v6313 = vrot.slane %v5801, %v6312
          %v6314 = vlaneseq
          %v6315 = vshrl.u32 %v6314, 7
          %v6316 = vsub.s32 0, %v6315
          %v6317 = vrot.slane %v5805, %v6316
          %v6318 = vlaneseq
          %v6319 = vshrl.u32 %v6318, 7
          %v6320 = vsub.s32 0, %v6319
          %v6321 = vrot.slane %v5809, %v6320
          %v6322 = vlaneseq
          %v6323 = vshrl.u32 %v6322, 7
          %v6324 = vsub.s32 0, %v6323
          %v6325 = vrot.slane %v5813, %v6324
          %v6326 = vlaneseq
          %v6327 = vshrl.u32 %v6326, 7
          %v6328 = vsub.s32 0, %v6327
          %v6329 = vrot.slane %v5817, %v6328
          %v6330 = vlaneseq
          %v6331 = vshrl.u32 %v6330, 7
          %v6332 = vsub.s32 0, %v6331
          %v6333 = vrot.slane %v5821, %v6332
          %v6334 = vlaneseq
          %v6335 = vshrl.u32 %v6334, 7
          %v6336 = vsub.s32 0, %v6335
          %v6337 = vrot.slane %v5825, %v6336
          %v6338 = vlaneseq
          %v6339 = vshrl.u32 %v6338, 7
          %v6340 = vsub.s32 0, %v6339
          %v6341 = vrot.slane %v5829, %v6340
          %v6342 = vlaneseq
          %v6343 = vshrl.u32 %v6342, 7
          %v6344 = vsub.s32 0, %v6343
          %v6345 = vrot.slane %v5833, %v6344
          %v6346 = vlaneseq
          %v6347 = vshrl.u32 %v6346, 7
          %v6348 = vsub.s32 0, %v6347
          %v6349 = vrot.slane %v5837, %v6348
          %v6350 = vlaneseq
          %v6351 = vshrl.u32 %v6350, 7
          %v6352 = vsub.s32 0, %v6351
          %v6353 = vrot.slane %v5841, %v6352
          %v6354 = vlaneseq
          %v6355 = vshrl.u32 %v6354, 7
          %v6356 = vsub.s32 0, %v6355
          %v6357 = vrot.slane %v5845, %v6356
          %v6358 = vlaneseq
          %v6359 = vshrl.u32 %v6358, 7
          %v6360 = vsub.s32 0, %v6359
          %v6361 = vrot.slane %v5849, %v6360
          %v6362 = vlaneseq
          %v6363 = vshrl.u32 %v6362, 7
          %v6364 = vsub.s32 0, %v6363
          %v6365 = vrot.slane %v5853, %v6364
          %v6366 = vlaneseq
          %v6367 = vshrl.u32 %v6366, 7
          %v6368 = vsub.s32 0, %v6367
          %v6369 = vrot.slane %v5857, %v6368
          %v6370 = vlaneseq
          %v6371 = vshrl.u32 %v6370, 7
          %v6372 = vsub.s32 0, %v6371
          %v6373 = vrot.slane %v5861, %v6372
          %v6374 = vlaneseq
          %v6375 = vshrl.u32 %v6374, 7
          %v6376 = vsub.s32 0, %v6375
          %v6377 = vrot.slane %v5865, %v6376
          %v6378 = vlaneseq
          %v6379 = vshrl.u32 %v6378, 7
          %v6380 = vsub.s32 0, %v6379
          %v6381 = vrot.slane %v5869, %v6380
          %v6382 = vlaneseq
          %v6383 = vshrl.u32 %v6382, 7
          %v6384 = vsub.s32 0, %v6383
          %v6385 = vrot.slane %v5873, %v6384
          %v6386 = vlaneseq
          %v6387 = vshrl.u32 %v6386, 7
          %v6388 = vsub.s32 0, %v6387
          %v6389 = vrot.slane %v5877, %v6388
          %v6390 = vlaneseq
          %v6391 = vshrl.u32 %v6390, 7
          %v6392 = vsub.s32 0, %v6391
          %v6393 = vrot.slane %v5881, %v6392
          %v6394 = vlaneseq
          %v6395 = vshrl.u32 %v6394, 7
          %v6396 = vsub.s32 0, %v6395
          %v6397 = vrot.slane %v5885, %v6396
          %v6398 = vlaneseq
          %v6399 = vshrl.u32 %v6398, 7
          %v6400 = vsub.s32 0, %v6399
          %v6401 = vrot.slane %v5889, %v6400
          %v6402 = vlaneseq
          %v6403 = vshrl.u32 %v6402, 7
          %v6404 = vsub.s32 0, %v6403
          %v6405 = vrot.slane %v5893, %v6404
          %v6406 = vlaneseq
          %v6407 = vshrl.u32 %v6406, 7
          %v6408 = vsub.s32 0, %v6407
          %v6409 = vrot.slane %v5897, %v6408
          %v6410 = vlaneseq
          %v6411 = vshrl.u32 %v6410, 7
          %v6412 = vsub.s32 0, %v6411
          %v6413 = vrot.slane %v5901, %v6412
          %v6414 = vlaneseq
          %v6415 = vshrl.u32 %v6414, 7
          %v6416 = vsub.s32 0, %v6415
          %v6417 = vrot.slane %v5905, %v6416
          %v6418 = vlaneseq
          %v6419 = vshrl.u32 %v6418, 7
          %v6420 = vsub.s32 0, %v6419
          %v6421 = vrot.slane %v5909, %v6420
          %v6422 = vlaneseq
          %v6423 = vshrl.u32 %v6422, 7
          %v6424 = vsub.s32 0, %v6423
          %v6425 = vrot.slane %v5913, %v6424
          %v6426 = vlaneseq
          %v6427 = vshrl.u32 %v6426, 7
          %v6428 = vsub.s32 0, %v6427
          %v6429 = vrot.slane %v5917, %v6428
          %v6430 = vlaneseq
          %v6431 = vshrl.u32 %v6430, 7
          %v6432 = vsub.s32 0, %v6431
          %v6433 = vrot.slane %v5921, %v6432
          %v6434 = vlaneseq
          %v6435 = vshrl.u32 %v6434, 7
          %v6436 = vsub.s32 0, %v6435
          %v6437 = vrot.slane %v5925, %v6436
          %v6438 = vlaneseq
          %v6439 = vshrl.u32 %v6438, 7
          %v6440 = vsub.s32 0, %v6439
          %v6441 = vrot.slane %v5929, %v6440
          %v6442 = vlaneseq
          %v6443 = vshrl.u32 %v6442, 7
          %v6444 = vsub.s32 0, %v6443
          %v6445 = vrot.slane %v5933, %v6444
          %v6446 = vlaneseq
          %v6447 = vshrl.u32 %v6446, 7
          %v6448 = vsub.s32 0, %v6447
          %v6449 = vrot.slane %v5937, %v6448
          %v6450 = vlaneseq
          %v6451 = vshrl.u32 %v6450, 7
          %v6452 = vsub.s32 0, %v6451
          %v6453 = vrot.slane %v5941, %v6452
          %v6454 = vlaneseq
          %v6455 = vshrl.u32 %v6454, 7
          %v6456 = vsub.s32 0, %v6455
          %v6457 = vrot.slane %v5945, %v6456
          %v6458 = vlaneseq
          %v6459 = vshrl.u32 %v6458, 7
          %v6460 = vsub.s32 0, %v6459
          %v6461 = vrot.slane %v5949, %v6460
          %v6462 = vlaneseq
          %v6463 = vshrl.u32 %v6462, 7
          %v6464 = vsub.s32 0, %v6463
          %v6465 = vrot.slane %v5953, %v6464
          %v6466 = vlaneseq
          %v6467 = vshrl.u32 %v6466, 7
          %v6468 = vsub.s32 0, %v6467
          %v6469 = vrot.slane %v5957, %v6468
          %v6470 = vlaneseq
          %v6471 = vshrl.u32 %v6470, 7
          %v6472 = vsub.s32 0, %v6471
          %v6473 = vrot.slane %v5961, %v6472
          %v6474 = vlaneseq
          %v6475 = vshrl.u32 %v6474, 7
          %v6476 = vsub.s32 0, %v6475
          %v6477 = vrot.slane %v5965, %v6476
          %v6478 = vlaneseq
          %v6479 = vshrl.u32 %v6478, 7
          %v6480 = vsub.s32 0, %v6479
          %v6481 = vrot.slane %v5969, %v6480
          %v6482 = vlaneseq
          %v6483 = vshrl.u32 %v6482, 7
          %v6484 = vsub.s32 0, %v6483
          %v6485 = vrot.slane %v5973, %v6484
          %v6486 = vlaneseq
          %v6487 = vshrl.u32 %v6486, 7
          %v6488 = vsub.s32 0, %v6487
          %v6489 = vrot.slane %v5977, %v6488
          %v6490 = vlaneseq
          %v6491 = vshrl.u32 %v6490, 7
          %v6492 = vsub.s32 0, %v6491
          %v6493 = vrot.slane %v5981, %v6492
          %v6494 = vlaneseq
          %v6495 = vshrl.u32 %v6494, 7
          %v6496 = vsub.s32 0, %v6495
          %v6497 = vrot.slane %v5985, %v6496
          %v6498 = vlaneseq
          %v6499 = vshrl.u32 %v6498, 7
          %v6500 = vsub.s32 0, %v6499
          %v6501 = vrot.slane %v5989, %v6500
          %v6502 = vlaneseq
          %v6503 = vshrl.u32 %v6502, 7
          %v6504 = vsub.s32 0, %v6503
          %v6505 = vrot.slane %v5993, %v6504
          %v6506 = vlaneseq
          %v6507 = vshrl.u32 %v6506, 7
          %v6508 = vsub.s32 0, %v6507
          %v6509 = vrot.slane %v5997, %v6508
          %v6510 = vlaneseq
          %v6511 = vshrl.u32 %v6510, 7
          %v6512 = vsub.s32 0, %v6511
          %v6513 = vrot.slane %v6001, %v6512
          %v6514 = vlaneseq
          %v6515 = vshrl.u32 %v6514, 7
          %v6516 = vsub.s32 0, %v6515
          %v6517 = vrot.slane %v6005, %v6516
          %v6518 = vlaneseq
          %v6519 = vshrl.u32 %v6518, 7
          %v6520 = vsub.s32 0, %v6519
          %v6521 = vrot.slane %v6009, %v6520
          %v6522 = vlaneseq
          %v6523 = vshrl.u32 %v6522, 7
          %v6524 = vsub.s32 0, %v6523
          %v6525 = vrot.slane %v6013, %v6524
          %v6526 = vlaneseq
          %v6527 = vshrl.u32 %v6526, 7
          %v6528 = vsub.s32 0, %v6527
          %v6529 = vrot.slane %v6017, %v6528
          %v6530 = vlaneseq
          %v6531 = vshrl.u32 %v6530, 7
          %v6532 = vsub.s32 0, %v6531
          %v6533 = vrot.slane %v6021, %v6532
          %v6534 = vlaneseq
          %v6535 = vshrl.u32 %v6534, 7
          %v6536 = vsub.s32 0, %v6535
          %v6537 = vrot.slane %v6025, %v6536
          %v6538 = vlaneseq
          %v6539 = vshrl.u32 %v6538, 7
          %v6540 = vsub.s32 0, %v6539
          %v6541 = vrot.slane %v6029, %v6540
          %v6542 = vlaneseq
          %v6543 = vshrl.u32 %v6542, 7
          %v6544 = vsub.s32 0, %v6543
          %v6545 = vrot.slane %v6033, %v6544
          %v6546 = vlaneseq
          %v6547 = vshrl.u32 %v6546, 7
          %v6548 = vsub.s32 0, %v6547
          %v6549 = vrot.slane %v6037, %v6548
          %v6550 = vlaneseq
          %v6551 = vshrl.u32 %v6550, 7
          %v6552 = vsub.s32 0, %v6551
          %v6553 = vrot.slane %v6041, %v6552
          %v6554 = vlaneseq
          %v6555 = vshrl.u32 %v6554, 7
          %v6556 = vsub.s32 0, %v6555
          %v6557 = vrot.slane %v6045, %v6556
          %v6558 = vlaneseq
          %v6559 = vshrl.u32 %v6558, 7
          %v6560 = vsub.s32 0, %v6559
          %v6561 = vrot.slane %v6049, %v6560
          %v6562 = vlaneseq
          %v6563 = vshrl.u32 %v6562, 7
          %v6564 = vsub.s32 0, %v6563
          %v6565 = vrot.slane %v6053, %v6564
          %v6566 = vlaneseq
          %v6567 = vshrl.u32 %v6566, 7
          %v6568 = vsub.s32 0, %v6567
          %v6569 = vrot.slane %v6057, %v6568
          %v6570 = vlaneseq
          %v6571 = vshrl.u32 %v6570, 7
          %v6572 = vsub.s32 0, %v6571
          %v6573 = vrot.slane %v6061, %v6572
          %v6574 = vlaneseq
          %v6575 = vshrl.u32 %v6574, 7
          %v6576 = vsub.s32 0, %v6575
          %v6577 = vrot.slane %v6065, %v6576
          %v6578 = vlaneseq
          %v6579 = vshrl.u32 %v6578, 7
          %v6580 = vsub.s32 0, %v6579
          %v6581 = vrot.slane %v6069, %v6580
          %v6582 = vlaneseq
          %v6583 = vshrl.u32 %v6582, 7
          %v6584 = vsub.s32 0, %v6583
          %v6585 = vrot.slane %v6073, %v6584
          %v6586 = vlaneseq
          %v6587 = vshrl.u32 %v6586, 7
          %v6588 = vsub.s32 0, %v6587
          %v6589 = vrot.slane %v6077, %v6588
          %v6590 = vlaneseq
          %v6591 = vshrl.u32 %v6590, 7
          %v6592 = vsub.s32 0, %v6591
          %v6593 = vrot.slane %v6081, %v6592
          %v6594 = vlaneseq
          %v6595 = vshrl.u32 %v6594, 7
          %v6596 = vsub.s32 0, %v6595
          %v6597 = vrot.slane %v6085, %v6596
          %v6598 = vlaneseq
          %v6599 = vshrl.u32 %v6598, 7
          %v6600 = vsub.s32 0, %v6599
          %v6601 = vrot.slane %v6089, %v6600
          %v6602 = vlaneseq
          %v6603 = vshrl.u32 %v6602, 7
          %v6604 = vsub.s32 0, %v6603
          %v6605 = vrot.slane %v6093, %v6604
          %v6606 = vlaneseq
          %v6607 = vshrl.u32 %v6606, 7
          %v6608 = vsub.s32 0, %v6607
          %v6609 = vrot.slane %v6097, %v6608
          %v6610 = vlaneseq
          %v6611 = vshrl.u32 %v6610, 7
          %v6612 = vsub.s32 0, %v6611
          %v6613 = vrot.slane %v6101, %v6612
          %v6614 = vlaneseq
          %v6615 = vshrl.u32 %v6614, 7
          %v6616 = vsub.s32 0, %v6615
          %v6617 = vrot.slane %v6105, %v6616
          %v6618 = vlaneseq
          %v6619 = vshrl.u32 %v6618, 7
          %v6620 = vsub.s32 0, %v6619
          %v6621 = vrot.slane %v6109, %v6620
          %v6622 = vlaneseq
          %v6623 = vshrl.u32 %v6622, 7
          %v6624 = vsub.s32 0, %v6623
          %v6625 = vrot.slane %v6113, %v6624
          %v6626 = vlaneseq
          %v6627 = vshrl.u32 %v6626, 7
          %v6628 = vsub.s32 0, %v6627
          %v6629 = vrot.slane %v6117, %v6628
          %v6630 = vlaneseq
          %v6631 = vshrl.u32 %v6630, 7
          %v6632 = vsub.s32 0, %v6631
          %v6633 = vrot.slane %v6121, %v6632
          %v6634 = vlaneseq
          %v6635 = vshrl.u32 %v6634, 7
          %v6636 = vsub.s32 0, %v6635
          %v6637 = vrot.slane %v6125, %v6636
          %v6638 = vlaneseq
          %v6639 = vshrl.u32 %v6638, 7
          %v6640 = vsub.s32 0, %v6639
          %v6641 = vrot.slane %v6129, %v6640
          %v6642 = vlaneseq
          %v6643 = vshrl.u32 %v6642, 7
          %v6644 = vsub.s32 0, %v6643
          %v6645 = vrot.slane %v6133, %v6644
          %v6646 = vlaneseq
          %v6647 = vshrl.u32 %v6646, 7
          %v6648 = vsub.s32 0, %v6647
          %v6649 = vrot.slane %v6137, %v6648
          %v6650 = vlaneseq
          %v6651 = vshrl.u32 %v6650, 7
          %v6652 = vsub.s32 0, %v6651
          %v6653 = vrot.slane %v6141, %v6652
          %v6654 = vlaneseq
          %v6655 = vshrl.u32 %v6654, 7
          %v6656 = vsub.s32 0, %v6655
          %v6657 = vrot.slane %v6145, %v6656
          %v6658 = vlaneseq
          %v6659 = vshrl.u32 %v6658, 7
          %v6660 = vsub.s32 0, %v6659
          %v6661 = vrot.slane %v6149, %v6660
          %v6662 = vlaneseq
          %v6663 = vshrl.u32 %v6662, 7
          %v6664 = vsub.s32 0, %v6663
          %v6665 = vrot.slane %v6153, %v6664
          %v6666 = vlaneseq
          %v6667 = vshrl.u32 %v6666, 7
          %v6668 = vsub.s32 0, %v6667
          %v6669 = vrot.slane %v6157, %v6668
          %v6670 = vlaneseq
          %v6671 = vshrl.u32 %v6670, 7
          %v6672 = vsub.s32 0, %v6671
          %v6673 = vrot.slane %v6161, %v6672
          %v6674 = vlaneseq
          %v6675 = vshrl.u32 %v6674, 7
          %v6676 = vsub.s32 0, %v6675
          %v6677 = vrot.slane %v6165, %v6676
          %v6678 = vlaneseq
          %v6679 = vshrl.u32 %v6678, 7
          %v6680 = vsub.s32 0, %v6679
          %v6681 = vrot.slane %v6169, %v6680
          %v6682 = vlaneseq
          %v6683 = vshrl.u32 %v6682, 7
          %v6684 = vsub.s32 0, %v6683
          %v6685 = vrot.slane %v6173, %v6684
          %v6686 = vlaneseq
          %v6687 = vshrl.u32 %v6686, 7
          %v6688 = vsub.s32 0, %v6687
          %v6689 = vrot.slane %v6177, %v6688
          %v6690 = vlaneseq
          %v6691 = vshrl.u32 %v6690, 7
          %v6692 = vsub.s32 0, %v6691
          %v6693 = vrot.slane %v6181, %v6692
          %v6694 = vlaneseq
          %v6695 = vshrl.u32 %v6694, 7
          %v6696 = vsub.s32 0, %v6695
          %v6697 = vrot.slane %v6185, %v6696
          %v6698 = vlaneseq
          %v6699 = vshrl.u32 %v6698, 7
          %v6700 = vsub.s32 0, %v6699
          %v6701 = vrot.slane %v6189, %v6700
          %v6702 = vlaneseq
          %v6703 = vshrl.u32 %v6702, 7
          %v6704 = vsub.s32 0, %v6703
          %v6705 = vrot.slane %v6193, %v6704
          %v6706 = vlaneseq
          %v6707 = vshrl.u32 %v6706, 7
          %v6708 = vsub.s32 0, %v6707
          %v6709 = vrot.slane %v6197, %v6708
          %v6710 = vlaneseq
          %v6711 = vshrl.u32 %v6710, 7
          %v6712 = vsub.s32 0, %v6711
          %v6713 = vrot.slane %v6201, %v6712
          %v6714 = vlaneseq
          %v6715 = vshrl.u32 %v6714, 7
          %v6716 = vsub.s32 0, %v6715
          %v6717 = vrot.slane %v6205, %v6716
          %v6718 = vlaneseq
          %v6719 = vshrl.u32 %v6718, 7
          %v6720 = vsub.s32 0, %v6719
          %v6721 = vrot.slane %v6209, %v6720
          %v6722 = vlaneseq
          %v6723 = vshrl.u32 %v6722, 7
          %v6724 = vsub.s32 0, %v6723
          %v6725 = vrot.slane %v6213, %v6724
          %v6726 = vlaneseq
          %v6727 = vshrl.u32 %v6726, 7
          %v6728 = vsub.s32 0, %v6727
          %v6729 = vrot.slane %v6217, %v6728
          %v6730 = vlaneseq
          %v6731 = vshrl.u32 %v6730, 7
          %v6732 = vsub.s32 0, %v6731
          %v6733 = vrot.slane %v6221, %v6732
          %v6734 = vlaneseq
          %v6735 = vshrl.u32 %v6734, 7
          %v6736 = vsub.s32 0, %v6735
          %v6737 = vrot.slane %v6225, %v6736
          %v6738 = vlaneseq
          %v6739 = vshrl.u32 %v6738, 7
          %v6740 = vsub.s32 0, %v6739
          %v6741 = vrot.slane %v6229, %v6740
          %v6742 = vlaneseq
          %v6743 = vshrl.u32 %v6742, 7
          %v6744 = vsub.s32 0, %v6743
          %v6745 = vrot.slane %v6233, %v6744
          %v6746 = vlaneseq
          %v6747 = vshrl.u32 %v6746, 7
          %v6748 = vsub.s32 0, %v6747
          %v6749 = vrot.slane %v6237, %v6748
          %v6750 = vlaneseq
          %v6751 = vshrl.u32 %v6750, 7
          %v6752 = vsub.s32 0, %v6751
          %v6753 = vrot.slane %v6241, %v6752
          %v6754 = vlaneseq
          %v6755 = vshrl.u32 %v6754, 7
          %v6756 = vsub.s32 0, %v6755
          %v6757 = vrot.slane %v6245, %v6756
          %v6758 = vlaneseq
          %v6759 = vshrl.u32 %v6758, 7
          %v6760 = vsub.s32 0, %v6759
          %v6761 = vrot.slane %v6249, %v6760
          %v6762 = vlaneseq
          %v6763 = vshrl.u32 %v6762, 7
          %v6764 = vsub.s32 0, %v6763
          %v6765 = vrot.slane %v6253, %v6764
          %v6766 = vlaneseq
          %v6767 = vshrl.u32 %v6766, 7
          %v6768 = vsub.s32 0, %v6767
          %v6769 = vrot.slane %v6257, %v6768
          %v6770 = vlaneseq
          %v6771 = vshrl.u32 %v6770, 7
          %v6772 = vsub.s32 0, %v6771
          %v6773 = vrot.slane %v6261, %v6772
          %v6774 = vlaneseq
          %v6775 = vshrl.u32 %v6774, 7
          %v6776 = vsub.s32 0, %v6775
          %v6777 = vrot.slane %v6265, %v6776
          %v6778 = vlaneseq
          %v6779 = vshrl.u32 %v6778, 7
          %v6780 = vsub.s32 0, %v6779
          %v6781 = vrot.slane %v6269, %v6780
          %v6782 = vlaneseq
          %v6783 = vshrl.u32 %v6782, 7
          %v6784 = vsub.s32 0, %v6783
          %v6785 = vrot.slane %v6273, %v6784
          %v6786 = vlaneseq
          %v6787 = vshrl.u32 %v6786, 7
          %v6788 = vsub.s32 0, %v6787
          %v6789 = vrot.slane %v6277, %v6788
          %v6790 = vlaneseq
          %v6791 = vshrl.u32 %v6790, 7
          %v6792 = vsub.s32 0, %v6791
          %v6793 = vrot.slane %v6281, %v6792
          %v6794 = vlaneseq
          %v6795 = vshrl.u32 %v6794, 7
          %v6796 = vsub.s32 0, %v6795
          %v6797 = vrot.slane %v6285, %v6796
          %v6798 = vlaneseq
          %v6799 = vshrl.u32 %v6798, 7
          %v6800 = vsub.s32 0, %v6799
          %v6801 = vrot.slane %v6289, %v6800
          %v6802 = vlaneseq
          %v6803 = vshrl.u32 %v6802, 7
          %v6804 = vsub.s32 0, %v6803
          %v6805 = vrot.slane %v6293, %v6804
          %v6806 = vlaneseq
          %v6807 = vshrl.u32 %v6806, 7
          %v6808 = vsub.s32 0, %v6807
          %v6809 = vrot.slane %v6297, %v6808
          %v6810 = vlaneseq
          %v6811 = vshrl.u32 %v6810, 7
          %v6812 = vsub.s32 0, %v6811
          %v6813 = vrot.slane %v6301, %v6812
          %vm6814 = vcmp.eq.s32.totalorder %v6305, 1
          %vm6815 = vcmp.eq.s32.totalorder %v6309, 1
          %vm6816 = vcmp.eq.s32.totalorder %v6313, 1
          %vm6817 = vcmp.eq.s32.totalorder %v6317, 1
          %vm6818 = vcmp.eq.s32.totalorder %v6321, 1
          %vm6819 = vcmp.eq.s32.totalorder %v6325, 1
          %vm6820 = vcmp.eq.s32.totalorder %v6329, 1
          %vm6821 = vcmp.eq.s32.totalorder %v6333, 1
          %vm6822 = vcmp.eq.s32.totalorder %v6337, 1
          %vm6823 = vcmp.eq.s32.totalorder %v6341, 1
          %vm6824 = vcmp.eq.s32.totalorder %v6345, 1
          %vm6825 = vcmp.eq.s32.totalorder %v6349, 1
          %vm6826 = vcmp.eq.s32.totalorder %v6353, 1
          %vm6827 = vcmp.eq.s32.totalorder %v6357, 1
          %vm6828 = vcmp.eq.s32.totalorder %v6361, 1
          %vm6829 = vcmp.eq.s32.totalorder %v6365, 1
          %vm6830 = vcmp.eq.s32.totalorder %v6369, 1
          %vm6831 = vcmp.eq.s32.totalorder %v6373, 1
          %vm6832 = vcmp.eq.s32.totalorder %v6377, 1
          %vm6833 = vcmp.eq.s32.totalorder %v6381, 1
          %vm6834 = vcmp.eq.s32.totalorder %v6385, 1
          %vm6835 = vcmp.eq.s32.totalorder %v6389, 1
          %vm6836 = vcmp.eq.s32.totalorder %v6393, 1
          %vm6837 = vcmp.eq.s32.totalorder %v6397, 1
          %vm6838 = vcmp.eq.s32.totalorder %v6401, 1
          %vm6839 = vcmp.eq.s32.totalorder %v6405, 1
          %vm6840 = vcmp.eq.s32.totalorder %v6409, 1
          %vm6841 = vcmp.eq.s32.totalorder %v6413, 1
          %vm6842 = vcmp.eq.s32.totalorder %v6417, 1
          %vm6843 = vcmp.eq.s32.totalorder %v6421, 1
          %vm6844 = vcmp.eq.s32.totalorder %v6425, 1
          %vm6845 = vcmp.eq.s32.totalorder %v6429, 1
          %vm6846 = vcmp.eq.s32.totalorder %v6433, 1
          %vm6847 = vcmp.eq.s32.totalorder %v6437, 1
          %vm6848 = vcmp.eq.s32.totalorder %v6441, 1
          %vm6849 = vcmp.eq.s32.totalorder %v6445, 1
          %vm6850 = vcmp.eq.s32.totalorder %v6449, 1
          %vm6851 = vcmp.eq.s32.totalorder %v6453, 1
          %vm6852 = vcmp.eq.s32.totalorder %v6457, 1
          %vm6853 = vcmp.eq.s32.totalorder %v6461, 1
          %vm6854 = vcmp.eq.s32.totalorder %v6465, 1
          %vm6855 = vcmp.eq.s32.totalorder %v6469, 1
          %vm6856 = vcmp.eq.s32.totalorder %v6473, 1
          %vm6857 = vcmp.eq.s32.totalorder %v6477, 1
          %vm6858 = vcmp.eq.s32.totalorder %v6481, 1
          %vm6859 = vcmp.eq.s32.totalorder %v6485, 1
          %vm6860 = vcmp.eq.s32.totalorder %v6489, 1
          %vm6861 = vcmp.eq.s32.totalorder %v6493, 1
          %vm6862 = vcmp.eq.s32.totalorder %v6497, 1
          %vm6863 = vcmp.eq.s32.totalorder %v6501, 1
          %vm6864 = vcmp.eq.s32.totalorder %v6505, 1
          %vm6865 = vcmp.eq.s32.totalorder %v6509, 1
          %vm6866 = vcmp.eq.s32.totalorder %v6513, 1
          %vm6867 = vcmp.eq.s32.totalorder %v6517, 1
          %vm6868 = vcmp.eq.s32.totalorder %v6521, 1
          %vm6869 = vcmp.eq.s32.totalorder %v6525, 1
          %vm6870 = vcmp.eq.s32.totalorder %v6529, 1
          %vm6871 = vcmp.eq.s32.totalorder %v6533, 1
          %vm6872 = vcmp.eq.s32.totalorder %v6537, 1
          %vm6873 = vcmp.eq.s32.totalorder %v6541, 1
          %vm6874 = vcmp.eq.s32.totalorder %v6545, 1
          %vm6875 = vcmp.eq.s32.totalorder %v6549, 1
          %vm6876 = vcmp.eq.s32.totalorder %v6553, 1
          %vm6877 = vcmp.eq.s32.totalorder %v6557, 1
          %vm6878 = vcmp.eq.s32.totalorder %v6561, 1
          %vm6879 = vcmp.eq.s32.totalorder %v6565, 1
          %vm6880 = vcmp.eq.s32.totalorder %v6569, 1
          %vm6881 = vcmp.eq.s32.totalorder %v6573, 1
          %vm6882 = vcmp.eq.s32.totalorder %v6577, 1
          %vm6883 = vcmp.eq.s32.totalorder %v6581, 1
          %vm6884 = vcmp.eq.s32.totalorder %v6585, 1
          %vm6885 = vcmp.eq.s32.totalorder %v6589, 1
          %vm6886 = vcmp.eq.s32.totalorder %v6593, 1
          %vm6887 = vcmp.eq.s32.totalorder %v6597, 1
          %vm6888 = vcmp.eq.s32.totalorder %v6601, 1
          %vm6889 = vcmp.eq.s32.totalorder %v6605, 1
          %vm6890 = vcmp.eq.s32.totalorder %v6609, 1
          %vm6891 = vcmp.eq.s32.totalorder %v6613, 1
          %vm6892 = vcmp.eq.s32.totalorder %v6617, 1
          %vm6893 = vcmp.eq.s32.totalorder %v6621, 1
          %vm6894 = vcmp.eq.s32.totalorder %v6625, 1
          %vm6895 = vcmp.eq.s32.totalorder %v6629, 1
          %vm6896 = vcmp.eq.s32.totalorder %v6633, 1
          %vm6897 = vcmp.eq.s32.totalorder %v6637, 1
          %vm6898 = vcmp.eq.s32.totalorder %v6641, 1
          %vm6899 = vcmp.eq.s32.totalorder %v6645, 1
          %vm6900 = vcmp.eq.s32.totalorder %v6649, 1
          %vm6901 = vcmp.eq.s32.totalorder %v6653, 1
          %vm6902 = vcmp.eq.s32.totalorder %v6657, 1
          %vm6903 = vcmp.eq.s32.totalorder %v6661, 1
          %vm6904 = vcmp.eq.s32.totalorder %v6665, 1
          %vm6905 = vcmp.eq.s32.totalorder %v6669, 1
          %vm6906 = vcmp.eq.s32.totalorder %v6673, 1
          %vm6907 = vcmp.eq.s32.totalorder %v6677, 1
          %vm6908 = vcmp.eq.s32.totalorder %v6681, 1
          %vm6909 = vcmp.eq.s32.totalorder %v6685, 1
          %vm6910 = vcmp.eq.s32.totalorder %v6689, 1
          %vm6911 = vcmp.eq.s32.totalorder %v6693, 1
          %vm6912 = vcmp.eq.s32.totalorder %v6697, 1
          %vm6913 = vcmp.eq.s32.totalorder %v6701, 1
          %vm6914 = vcmp.eq.s32.totalorder %v6705, 1
          %vm6915 = vcmp.eq.s32.totalorder %v6709, 1
          %vm6916 = vcmp.eq.s32.totalorder %v6713, 1
          %vm6917 = vcmp.eq.s32.totalorder %v6717, 1
          %vm6918 = vcmp.eq.s32.totalorder %v6721, 1
          %vm6919 = vcmp.eq.s32.totalorder %v6725, 1
          %vm6920 = vcmp.eq.s32.totalorder %v6729, 1
          %vm6921 = vcmp.eq.s32.totalorder %v6733, 1
          %vm6922 = vcmp.eq.s32.totalorder %v6737, 1
          %vm6923 = vcmp.eq.s32.totalorder %v6741, 1
          %vm6924 = vcmp.eq.s32.totalorder %v6745, 1
          %vm6925 = vcmp.eq.s32.totalorder %v6749, 1
          %vm6926 = vcmp.eq.s32.totalorder %v6753, 1
          %vm6927 = vcmp.eq.s32.totalorder %v6757, 1
          %vm6928 = vcmp.eq.s32.totalorder %v6761, 1
          %vm6929 = vcmp.eq.s32.totalorder %v6765, 1
          %vm6930 = vcmp.eq.s32.totalorder %v6769, 1
          %vm6931 = vcmp.eq.s32.totalorder %v6773, 1
          %vm6932 = vcmp.eq.s32.totalorder %v6777, 1
          %vm6933 = vcmp.eq.s32.totalorder %v6781, 1
          %vm6934 = vcmp.eq.s32.totalorder %v6785, 1
          %vm6935 = vcmp.eq.s32.totalorder %v6789, 1
          %vm6936 = vcmp.eq.s32.totalorder %v6793, 1
          %vm6937 = vcmp.eq.s32.totalorder %v6797, 1
          %vm6938 = vcmp.eq.s32.totalorder %v6801, 1
          %vm6939 = vcmp.eq.s32.totalorder %v6805, 1
          %vm6940 = vcmp.eq.s32.totalorder %v6809, 1
          %vm6941 = vcmp.eq.s32.totalorder %v6813, 1
          %v6942 = vsel %vm6814, %v5598, 0.0
          %v6943 = vsel %vm6815, %v5599, 0.0
          %v6944 = vsel %vm6816, %v5600, 0.0
          %v6945 = vsel %vm6817, %v5601, 0.0
          %v6946 = vsel %vm6818, %v5602, 0.0
          %v6947 = vsel %vm6819, %v5603, 0.0
          %v6948 = vsel %vm6820, %v5604, 0.0
          %v6949 = vsel %vm6821, %v5605, 0.0
          %v6950 = vsel %vm6822, %v5606, 0.0
          %v6951 = vsel %vm6823, %v5607, 0.0
          %v6952 = vsel %vm6824, %v5608, 0.0
          %v6953 = vsel %vm6825, %v5609, 0.0
          %v6954 = vsel %vm6826, %v5610, 0.0
          %v6955 = vsel %vm6827, %v5611, 0.0
          %v6956 = vsel %vm6828, %v5612, 0.0
          %v6957 = vsel %vm6829, %v5613, 0.0
          %v6958 = vsel %vm6830, %v5614, 0.0
          %v6959 = vsel %vm6831, %v5615, 0.0
          %v6960 = vsel %vm6832, %v5616, 0.0
          %v6961 = vsel %vm6833, %v5617, 0.0
          %v6962 = vsel %vm6834, %v5618, 0.0
          %v6963 = vsel %vm6835, %v5619, 0.0
          %v6964 = vsel %vm6836, %v5620, 0.0
          %v6965 = vsel %vm6837, %v5621, 0.0
          %v6966 = vsel %vm6838, %v5622, 0.0
          %v6967 = vsel %vm6839, %v5623, 0.0
          %v6968 = vsel %vm6840, %v5624, 0.0
          %v6969 = vsel %vm6841, %v5625, 0.0
          %v6970 = vsel %vm6842, %v5626, 0.0
          %v6971 = vsel %vm6843, %v5627, 0.0
          %v6972 = vsel %vm6844, %v5628, 0.0
          %v6973 = vsel %vm6845, %v5629, 0.0
          %v6974 = vsel %vm6846, %v5630, 0.0
          %v6975 = vsel %vm6847, %v5631, 0.0
          %v6976 = vsel %vm6848, %v5632, 0.0
          %v6977 = vsel %vm6849, %v5633, 0.0
          %v6978 = vsel %vm6850, %v5634, 0.0
          %v6979 = vsel %vm6851, %v5635, 0.0
          %v6980 = vsel %vm6852, %v5636, 0.0
          %v6981 = vsel %vm6853, %v5637, 0.0
          %v6982 = vsel %vm6854, %v5638, 0.0
          %v6983 = vsel %vm6855, %v5639, 0.0
          %v6984 = vsel %vm6856, %v5640, 0.0
          %v6985 = vsel %vm6857, %v5641, 0.0
          %v6986 = vsel %vm6858, %v5642, 0.0
          %v6987 = vsel %vm6859, %v5643, 0.0
          %v6988 = vsel %vm6860, %v5644, 0.0
          %v6989 = vsel %vm6861, %v5645, 0.0
          %v6990 = vsel %vm6862, %v5646, 0.0
          %v6991 = vsel %vm6863, %v5647, 0.0
          %v6992 = vsel %vm6864, %v5648, 0.0
          %v6993 = vsel %vm6865, %v5649, 0.0
          %v6994 = vsel %vm6866, %v5650, 0.0
          %v6995 = vsel %vm6867, %v5651, 0.0
          %v6996 = vsel %vm6868, %v5652, 0.0
          %v6997 = vsel %vm6869, %v5653, 0.0
          %v6998 = vsel %vm6870, %v5654, 0.0
          %v6999 = vsel %vm6871, %v5655, 0.0
          %v7000 = vsel %vm6872, %v5656, 0.0
          %v7001 = vsel %vm6873, %v5657, 0.0
          %v7002 = vsel %vm6874, %v5658, 0.0
          %v7003 = vsel %vm6875, %v5659, 0.0
          %v7004 = vsel %vm6876, %v5660, 0.0
          %v7005 = vsel %vm6877, %v5661, 0.0
          %v7006 = vsel %vm6878, %v5662, 0.0
          %v7007 = vsel %vm6879, %v5663, 0.0
          %v7008 = vsel %vm6880, %v5664, 0.0
          %v7009 = vsel %vm6881, %v5665, 0.0
          %v7010 = vsel %vm6882, %v5666, 0.0
          %v7011 = vsel %vm6883, %v5667, 0.0
          %v7012 = vsel %vm6884, %v5668, 0.0
          %v7013 = vsel %vm6885, %v5669, 0.0
          %v7014 = vsel %vm6886, %v5670, 0.0
          %v7015 = vsel %vm6887, %v5671, 0.0
          %v7016 = vsel %vm6888, %v5672, 0.0
          %v7017 = vsel %vm6889, %v5673, 0.0
          %v7018 = vsel %vm6890, %v5674, 0.0
          %v7019 = vsel %vm6891, %v5675, 0.0
          %v7020 = vsel %vm6892, %v5676, 0.0
          %v7021 = vsel %vm6893, %v5677, 0.0
          %v7022 = vsel %vm6894, %v5678, 0.0
          %v7023 = vsel %vm6895, %v5679, 0.0
          %v7024 = vsel %vm6896, %v5680, 0.0
          %v7025 = vsel %vm6897, %v5681, 0.0
          %v7026 = vsel %vm6898, %v5682, 0.0
          %v7027 = vsel %vm6899, %v5683, 0.0
          %v7028 = vsel %vm6900, %v5684, 0.0
          %v7029 = vsel %vm6901, %v5685, 0.0
          %v7030 = vsel %vm6902, %v5686, 0.0
          %v7031 = vsel %vm6903, %v5687, 0.0
          %v7032 = vsel %vm6904, %v5688, 0.0
          %v7033 = vsel %vm6905, %v5689, 0.0
          %v7034 = vsel %vm6906, %v5690, 0.0
          %v7035 = vsel %vm6907, %v5691, 0.0
          %v7036 = vsel %vm6908, %v5692, 0.0
          %v7037 = vsel %vm6909, %v5693, 0.0
          %v7038 = vsel %vm6910, %v5694, 0.0
          %v7039 = vsel %vm6911, %v5695, 0.0
          %v7040 = vsel %vm6912, %v5696, 0.0
          %v7041 = vsel %vm6913, %v5697, 0.0
          %v7042 = vsel %vm6914, %v5698, 0.0
          %v7043 = vsel %vm6915, %v5699, 0.0
          %v7044 = vsel %vm6916, %v5700, 0.0
          %v7045 = vsel %vm6917, %v5701, 0.0
          %v7046 = vsel %vm6918, %v5702, 0.0
          %v7047 = vsel %vm6919, %v5703, 0.0
          %v7048 = vsel %vm6920, %v5704, 0.0
          %v7049 = vsel %vm6921, %v5705, 0.0
          %v7050 = vsel %vm6922, %v5706, 0.0
          %v7051 = vsel %vm6923, %v5707, 0.0
          %v7052 = vsel %vm6924, %v5708, 0.0
          %v7053 = vsel %vm6925, %v5709, 0.0
          %v7054 = vsel %vm6926, %v5710, 0.0
          %v7055 = vsel %vm6927, %v5711, 0.0
          %v7056 = vsel %vm6928, %v5712, 0.0
          %v7057 = vsel %vm6929, %v5713, 0.0
          %v7058 = vsel %vm6930, %v5714, 0.0
          %v7059 = vsel %vm6931, %v5715, 0.0
          %v7060 = vsel %vm6932, %v5716, 0.0
          %v7061 = vsel %vm6933, %v5717, 0.0
          %v7062 = vsel %vm6934, %v5718, 0.0
          %v7063 = vsel %vm6935, %v5719, 0.0
          %v7064 = vsel %vm6936, %v5720, 0.0
          %v7065 = vsel %vm6937, %v5721, 0.0
          %v7066 = vsel %vm6938, %v5722, 0.0
          %v7067 = vsel %vm6939, %v5723, 0.0
          %v7068 = vsel %vm6940, %v5724, 0.0
          %v7069 = vsel %vm6941, %v5725, 0.0
          %v7070 = vsub.f32 %v4062, %v4318
          %v7071 = vsub.f32 %v4063, %v4319
          %v7072 = vsub.f32 %v4064, %v4320
          %v7073 = vsub.f32 %v4065, %v4321
          %v7074 = vsub.f32 %v4066, %v4322
          %v7075 = vsub.f32 %v4067, %v4323
          %v7076 = vsub.f32 %v4068, %v4324
          %v7077 = vsub.f32 %v4069, %v4325
          %v7078 = vsub.f32 %v4070, %v4326
          %v7079 = vsub.f32 %v4071, %v4327
          %v7080 = vsub.f32 %v4072, %v4328
          %v7081 = vsub.f32 %v4073, %v4329
          %v7082 = vsub.f32 %v4074, %v4330
          %v7083 = vsub.f32 %v4075, %v4331
          %v7084 = vsub.f32 %v4076, %v4332
          %v7085 = vsub.f32 %v4077, %v4333
          %v7086 = vsub.f32 %v4078, %v4334
          %v7087 = vsub.f32 %v4079, %v4335
          %v7088 = vsub.f32 %v4080, %v4336
          %v7089 = vsub.f32 %v4081, %v4337
          %v7090 = vsub.f32 %v4082, %v4338
          %v7091 = vsub.f32 %v4083, %v4339
          %v7092 = vsub.f32 %v4084, %v4340
          %v7093 = vsub.f32 %v4085, %v4341
          %v7094 = vsub.f32 %v4086, %v4342
          %v7095 = vsub.f32 %v4087, %v4343
          %v7096 = vsub.f32 %v4088, %v4344
          %v7097 = vsub.f32 %v4089, %v4345
          %v7098 = vsub.f32 %v4090, %v4346
          %v7099 = vsub.f32 %v4091, %v4347
          %v7100 = vsub.f32 %v4092, %v4348
          %v7101 = vsub.f32 %v4093, %v4349
          %v7102 = vsub.f32 %v4094, %v4350
          %v7103 = vsub.f32 %v4095, %v4351
          %v7104 = vsub.f32 %v4096, %v4352
          %v7105 = vsub.f32 %v4097, %v4353
          %v7106 = vsub.f32 %v4098, %v4354
          %v7107 = vsub.f32 %v4099, %v4355
          %v7108 = vsub.f32 %v4100, %v4356
          %v7109 = vsub.f32 %v4101, %v4357
          %v7110 = vsub.f32 %v4102, %v4358
          %v7111 = vsub.f32 %v4103, %v4359
          %v7112 = vsub.f32 %v4104, %v4360
          %v7113 = vsub.f32 %v4105, %v4361
          %v7114 = vsub.f32 %v4106, %v4362
          %v7115 = vsub.f32 %v4107, %v4363
          %v7116 = vsub.f32 %v4108, %v4364
          %v7117 = vsub.f32 %v4109, %v4365
          %v7118 = vsub.f32 %v4110, %v4366
          %v7119 = vsub.f32 %v4111, %v4367
          %v7120 = vsub.f32 %v4112, %v4368
          %v7121 = vsub.f32 %v4113, %v4369
          %v7122 = vsub.f32 %v4114, %v4370
          %v7123 = vsub.f32 %v4115, %v4371
          %v7124 = vsub.f32 %v4116, %v4372
          %v7125 = vsub.f32 %v4117, %v4373
          %v7126 = vsub.f32 %v4118, %v4374
          %v7127 = vsub.f32 %v4119, %v4375
          %v7128 = vsub.f32 %v4120, %v4376
          %v7129 = vsub.f32 %v4121, %v4377
          %v7130 = vsub.f32 %v4122, %v4378
          %v7131 = vsub.f32 %v4123, %v4379
          %v7132 = vsub.f32 %v4124, %v4380
          %v7133 = vsub.f32 %v4125, %v4381
          %v7134 = vsub.f32 %v4126, %v4382
          %v7135 = vsub.f32 %v4127, %v4383
          %v7136 = vsub.f32 %v4128, %v4384
          %v7137 = vsub.f32 %v4129, %v4385
          %v7138 = vsub.f32 %v4130, %v4386
          %v7139 = vsub.f32 %v4131, %v4387
          %v7140 = vsub.f32 %v4132, %v4388
          %v7141 = vsub.f32 %v4133, %v4389
          %v7142 = vsub.f32 %v4134, %v4390
          %v7143 = vsub.f32 %v4135, %v4391
          %v7144 = vsub.f32 %v4136, %v4392
          %v7145 = vsub.f32 %v4137, %v4393
          %v7146 = vsub.f32 %v4138, %v4394
          %v7147 = vsub.f32 %v4139, %v4395
          %v7148 = vsub.f32 %v4140, %v4396
          %v7149 = vsub.f32 %v4141, %v4397
          %v7150 = vsub.f32 %v4142, %v4398
          %v7151 = vsub.f32 %v4143, %v4399
          %v7152 = vsub.f32 %v4144, %v4400
          %v7153 = vsub.f32 %v4145, %v4401
          %v7154 = vsub.f32 %v4146, %v4402
          %v7155 = vsub.f32 %v4147, %v4403
          %v7156 = vsub.f32 %v4148, %v4404
          %v7157 = vsub.f32 %v4149, %v4405
          %v7158 = vsub.f32 %v4150, %v4406
          %v7159 = vsub.f32 %v4151, %v4407
          %v7160 = vsub.f32 %v4152, %v4408
          %v7161 = vsub.f32 %v4153, %v4409
          %v7162 = vsub.f32 %v4154, %v4410
          %v7163 = vsub.f32 %v4155, %v4411
          %v7164 = vsub.f32 %v4156, %v4412
          %v7165 = vsub.f32 %v4157, %v4413
          %v7166 = vsub.f32 %v4158, %v4414
          %v7167 = vsub.f32 %v4159, %v4415
          %v7168 = vsub.f32 %v4160, %v4416
          %v7169 = vsub.f32 %v4161, %v4417
          %v7170 = vsub.f32 %v4162, %v4418
          %v7171 = vsub.f32 %v4163, %v4419
          %v7172 = vsub.f32 %v4164, %v4420
          %v7173 = vsub.f32 %v4165, %v4421
          %v7174 = vsub.f32 %v4166, %v4422
          %v7175 = vsub.f32 %v4167, %v4423
          %v7176 = vsub.f32 %v4168, %v4424
          %v7177 = vsub.f32 %v4169, %v4425
          %v7178 = vsub.f32 %v4170, %v4426
          %v7179 = vsub.f32 %v4171, %v4427
          %v7180 = vsub.f32 %v4172, %v4428
          %v7181 = vsub.f32 %v4173, %v4429
          %v7182 = vsub.f32 %v4174, %v4430
          %v7183 = vsub.f32 %v4175, %v4431
          %v7184 = vsub.f32 %v4176, %v4432
          %v7185 = vsub.f32 %v4177, %v4433
          %v7186 = vsub.f32 %v4178, %v4434
          %v7187 = vsub.f32 %v4179, %v4435
          %v7188 = vsub.f32 %v4180, %v4436
          %v7189 = vsub.f32 %v4181, %v4437
          %v7190 = vsub.f32 %v4182, %v4438
          %v7191 = vsub.f32 %v4183, %v4439
          %v7192 = vsub.f32 %v4184, %v4440
          %v7193 = vsub.f32 %v4185, %v4441
          %v7194 = vsub.f32 %v4186, %v4442
          %v7195 = vsub.f32 %v4187, %v4443
          %v7196 = vsub.f32 %v4188, %v4444
          %v7197 = vsub.f32 %v4189, %v4445
          %v7198 = vmul.f32 %v1886, %v7070
          %v7199 = vmul.f32 %v1887, %v7071
          %v7200 = vmul.f32 %v1888, %v7072
          %v7201 = vmul.f32 %v1889, %v7073
          %v7202 = vmul.f32 %v1890, %v7074
          %v7203 = vmul.f32 %v1891, %v7075
          %v7204 = vmul.f32 %v1892, %v7076
          %v7205 = vmul.f32 %v1893, %v7077
          %v7206 = vmul.f32 %v1894, %v7078
          %v7207 = vmul.f32 %v1895, %v7079
          %v7208 = vmul.f32 %v1896, %v7080
          %v7209 = vmul.f32 %v1897, %v7081
          %v7210 = vmul.f32 %v1898, %v7082
          %v7211 = vmul.f32 %v1899, %v7083
          %v7212 = vmul.f32 %v1900, %v7084
          %v7213 = vmul.f32 %v1901, %v7085
          %v7214 = vmul.f32 %v1902, %v7086
          %v7215 = vmul.f32 %v1903, %v7087
          %v7216 = vmul.f32 %v1904, %v7088
          %v7217 = vmul.f32 %v1905, %v7089
          %v7218 = vmul.f32 %v1906, %v7090
          %v7219 = vmul.f32 %v1907, %v7091
          %v7220 = vmul.f32 %v1908, %v7092
          %v7221 = vmul.f32 %v1909, %v7093
          %v7222 = vmul.f32 %v1910, %v7094
          %v7223 = vmul.f32 %v1911, %v7095
          %v7224 = vmul.f32 %v1912, %v7096
          %v7225 = vmul.f32 %v1913, %v7097
          %v7226 = vmul.f32 %v1914, %v7098
          %v7227 = vmul.f32 %v1915, %v7099
          %v7228 = vmul.f32 %v1916, %v7100
          %v7229 = vmul.f32 %v1917, %v7101
          %v7230 = vmul.f32 %v1918, %v7102
          %v7231 = vmul.f32 %v1919, %v7103
          %v7232 = vmul.f32 %v1920, %v7104
          %v7233 = vmul.f32 %v1921, %v7105
          %v7234 = vmul.f32 %v1922, %v7106
          %v7235 = vmul.f32 %v1923, %v7107
          %v7236 = vmul.f32 %v1924, %v7108
          %v7237 = vmul.f32 %v1925, %v7109
          %v7238 = vmul.f32 %v1926, %v7110
          %v7239 = vmul.f32 %v1927, %v7111
          %v7240 = vmul.f32 %v1928, %v7112
          %v7241 = vmul.f32 %v1929, %v7113
          %v7242 = vmul.f32 %v1930, %v7114
          %v7243 = vmul.f32 %v1931, %v7115
          %v7244 = vmul.f32 %v1932, %v7116
          %v7245 = vmul.f32 %v1933, %v7117
          %v7246 = vmul.f32 %v1934, %v7118
          %v7247 = vmul.f32 %v1935, %v7119
          %v7248 = vmul.f32 %v1936, %v7120
          %v7249 = vmul.f32 %v1937, %v7121
          %v7250 = vmul.f32 %v1938, %v7122
          %v7251 = vmul.f32 %v1939, %v7123
          %v7252 = vmul.f32 %v1940, %v7124
          %v7253 = vmul.f32 %v1941, %v7125
          %v7254 = vmul.f32 %v1942, %v7126
          %v7255 = vmul.f32 %v1943, %v7127
          %v7256 = vmul.f32 %v1944, %v7128
          %v7257 = vmul.f32 %v1945, %v7129
          %v7258 = vmul.f32 %v1946, %v7130
          %v7259 = vmul.f32 %v1947, %v7131
          %v7260 = vmul.f32 %v1948, %v7132
          %v7261 = vmul.f32 %v1949, %v7133
          %v7262 = vmul.f32 %v1950, %v7134
          %v7263 = vmul.f32 %v1951, %v7135
          %v7264 = vmul.f32 %v1952, %v7136
          %v7265 = vmul.f32 %v1953, %v7137
          %v7266 = vmul.f32 %v1954, %v7138
          %v7267 = vmul.f32 %v1955, %v7139
          %v7268 = vmul.f32 %v1956, %v7140
          %v7269 = vmul.f32 %v1957, %v7141
          %v7270 = vmul.f32 %v1958, %v7142
          %v7271 = vmul.f32 %v1959, %v7143
          %v7272 = vmul.f32 %v1960, %v7144
          %v7273 = vmul.f32 %v1961, %v7145
          %v7274 = vmul.f32 %v1962, %v7146
          %v7275 = vmul.f32 %v1963, %v7147
          %v7276 = vmul.f32 %v1964, %v7148
          %v7277 = vmul.f32 %v1965, %v7149
          %v7278 = vmul.f32 %v1966, %v7150
          %v7279 = vmul.f32 %v1967, %v7151
          %v7280 = vmul.f32 %v1968, %v7152
          %v7281 = vmul.f32 %v1969, %v7153
          %v7282 = vmul.f32 %v1970, %v7154
          %v7283 = vmul.f32 %v1971, %v7155
          %v7284 = vmul.f32 %v1972, %v7156
          %v7285 = vmul.f32 %v1973, %v7157
          %v7286 = vmul.f32 %v1974, %v7158
          %v7287 = vmul.f32 %v1975, %v7159
          %v7288 = vmul.f32 %v1976, %v7160
          %v7289 = vmul.f32 %v1977, %v7161
          %v7290 = vmul.f32 %v1978, %v7162
          %v7291 = vmul.f32 %v1979, %v7163
          %v7292 = vmul.f32 %v1980, %v7164
          %v7293 = vmul.f32 %v1981, %v7165
          %v7294 = vmul.f32 %v1982, %v7166
          %v7295 = vmul.f32 %v1983, %v7167
          %v7296 = vmul.f32 %v1984, %v7168
          %v7297 = vmul.f32 %v1985, %v7169
          %v7298 = vmul.f32 %v1986, %v7170
          %v7299 = vmul.f32 %v1987, %v7171
          %v7300 = vmul.f32 %v1988, %v7172
          %v7301 = vmul.f32 %v1989, %v7173
          %v7302 = vmul.f32 %v1990, %v7174
          %v7303 = vmul.f32 %v1991, %v7175
          %v7304 = vmul.f32 %v1992, %v7176
          %v7305 = vmul.f32 %v1993, %v7177
          %v7306 = vmul.f32 %v1994, %v7178
          %v7307 = vmul.f32 %v1995, %v7179
          %v7308 = vmul.f32 %v1996, %v7180
          %v7309 = vmul.f32 %v1997, %v7181
          %v7310 = vmul.f32 %v1998, %v7182
          %v7311 = vmul.f32 %v1999, %v7183
          %v7312 = vmul.f32 %v2000, %v7184
          %v7313 = vmul.f32 %v2001, %v7185
          %v7314 = vmul.f32 %v2002, %v7186
          %v7315 = vmul.f32 %v2003, %v7187
          %v7316 = vmul.f32 %v2004, %v7188
          %v7317 = vmul.f32 %v2005, %v7189
          %v7318 = vmul.f32 %v2006, %v7190
          %v7319 = vmul.f32 %v2007, %v7191
          %v7320 = vmul.f32 %v2008, %v7192
          %v7321 = vmul.f32 %v2009, %v7193
          %v7322 = vmul.f32 %v2010, %v7194
          %v7323 = vmul.f32 %v2011, %v7195
          %v7324 = vmul.f32 %v2012, %v7196
          %v7325 = vmul.f32 %v2013, %v7197
          %v7326 = vadd.f32 %v4318, %v7198
          %v7327 = vadd.f32 %v4319, %v7199
          %v7328 = vadd.f32 %v4320, %v7200
          %v7329 = vadd.f32 %v4321, %v7201
          %v7330 = vadd.f32 %v4322, %v7202
          %v7331 = vadd.f32 %v4323, %v7203
          %v7332 = vadd.f32 %v4324, %v7204
          %v7333 = vadd.f32 %v4325, %v7205
          %v7334 = vadd.f32 %v4326, %v7206
          %v7335 = vadd.f32 %v4327, %v7207
          %v7336 = vadd.f32 %v4328, %v7208
          %v7337 = vadd.f32 %v4329, %v7209
          %v7338 = vadd.f32 %v4330, %v7210
          %v7339 = vadd.f32 %v4331, %v7211
          %v7340 = vadd.f32 %v4332, %v7212
          %v7341 = vadd.f32 %v4333, %v7213
          %v7342 = vadd.f32 %v4334, %v7214
          %v7343 = vadd.f32 %v4335, %v7215
          %v7344 = vadd.f32 %v4336, %v7216
          %v7345 = vadd.f32 %v4337, %v7217
          %v7346 = vadd.f32 %v4338, %v7218
          %v7347 = vadd.f32 %v4339, %v7219
          %v7348 = vadd.f32 %v4340, %v7220
          %v7349 = vadd.f32 %v4341, %v7221
          %v7350 = vadd.f32 %v4342, %v7222
          %v7351 = vadd.f32 %v4343, %v7223
          %v7352 = vadd.f32 %v4344, %v7224
          %v7353 = vadd.f32 %v4345, %v7225
          %v7354 = vadd.f32 %v4346, %v7226
          %v7355 = vadd.f32 %v4347, %v7227
          %v7356 = vadd.f32 %v4348, %v7228
          %v7357 = vadd.f32 %v4349, %v7229
          %v7358 = vadd.f32 %v4350, %v7230
          %v7359 = vadd.f32 %v4351, %v7231
          %v7360 = vadd.f32 %v4352, %v7232
          %v7361 = vadd.f32 %v4353, %v7233
          %v7362 = vadd.f32 %v4354, %v7234
          %v7363 = vadd.f32 %v4355, %v7235
          %v7364 = vadd.f32 %v4356, %v7236
          %v7365 = vadd.f32 %v4357, %v7237
          %v7366 = vadd.f32 %v4358, %v7238
          %v7367 = vadd.f32 %v4359, %v7239
          %v7368 = vadd.f32 %v4360, %v7240
          %v7369 = vadd.f32 %v4361, %v7241
          %v7370 = vadd.f32 %v4362, %v7242
          %v7371 = vadd.f32 %v4363, %v7243
          %v7372 = vadd.f32 %v4364, %v7244
          %v7373 = vadd.f32 %v4365, %v7245
          %v7374 = vadd.f32 %v4366, %v7246
          %v7375 = vadd.f32 %v4367, %v7247
          %v7376 = vadd.f32 %v4368, %v7248
          %v7377 = vadd.f32 %v4369, %v7249
          %v7378 = vadd.f32 %v4370, %v7250
          %v7379 = vadd.f32 %v4371, %v7251
          %v7380 = vadd.f32 %v4372, %v7252
          %v7381 = vadd.f32 %v4373, %v7253
          %v7382 = vadd.f32 %v4374, %v7254
          %v7383 = vadd.f32 %v4375, %v7255
          %v7384 = vadd.f32 %v4376, %v7256
          %v7385 = vadd.f32 %v4377, %v7257
          %v7386 = vadd.f32 %v4378, %v7258
          %v7387 = vadd.f32 %v4379, %v7259
          %v7388 = vadd.f32 %v4380, %v7260
          %v7389 = vadd.f32 %v4381, %v7261
          %v7390 = vadd.f32 %v4382, %v7262
          %v7391 = vadd.f32 %v4383, %v7263
          %v7392 = vadd.f32 %v4384, %v7264
          %v7393 = vadd.f32 %v4385, %v7265
          %v7394 = vadd.f32 %v4386, %v7266
          %v7395 = vadd.f32 %v4387, %v7267
          %v7396 = vadd.f32 %v4388, %v7268
          %v7397 = vadd.f32 %v4389, %v7269
          %v7398 = vadd.f32 %v4390, %v7270
          %v7399 = vadd.f32 %v4391, %v7271
          %v7400 = vadd.f32 %v4392, %v7272
          %v7401 = vadd.f32 %v4393, %v7273
          %v7402 = vadd.f32 %v4394, %v7274
          %v7403 = vadd.f32 %v4395, %v7275
          %v7404 = vadd.f32 %v4396, %v7276
          %v7405 = vadd.f32 %v4397, %v7277
          %v7406 = vadd.f32 %v4398, %v7278
          %v7407 = vadd.f32 %v4399, %v7279
          %v7408 = vadd.f32 %v4400, %v7280
          %v7409 = vadd.f32 %v4401, %v7281
          %v7410 = vadd.f32 %v4402, %v7282
          %v7411 = vadd.f32 %v4403, %v7283
          %v7412 = vadd.f32 %v4404, %v7284
          %v7413 = vadd.f32 %v4405, %v7285
          %v7414 = vadd.f32 %v4406, %v7286
          %v7415 = vadd.f32 %v4407, %v7287
          %v7416 = vadd.f32 %v4408, %v7288
          %v7417 = vadd.f32 %v4409, %v7289
          %v7418 = vadd.f32 %v4410, %v7290
          %v7419 = vadd.f32 %v4411, %v7291
          %v7420 = vadd.f32 %v4412, %v7292
          %v7421 = vadd.f32 %v4413, %v7293
          %v7422 = vadd.f32 %v4414, %v7294
          %v7423 = vadd.f32 %v4415, %v7295
          %v7424 = vadd.f32 %v4416, %v7296
          %v7425 = vadd.f32 %v4417, %v7297
          %v7426 = vadd.f32 %v4418, %v7298
          %v7427 = vadd.f32 %v4419, %v7299
          %v7428 = vadd.f32 %v4420, %v7300
          %v7429 = vadd.f32 %v4421, %v7301
          %v7430 = vadd.f32 %v4422, %v7302
          %v7431 = vadd.f32 %v4423, %v7303
          %v7432 = vadd.f32 %v4424, %v7304
          %v7433 = vadd.f32 %v4425, %v7305
          %v7434 = vadd.f32 %v4426, %v7306
          %v7435 = vadd.f32 %v4427, %v7307
          %v7436 = vadd.f32 %v4428, %v7308
          %v7437 = vadd.f32 %v4429, %v7309
          %v7438 = vadd.f32 %v4430, %v7310
          %v7439 = vadd.f32 %v4431, %v7311
          %v7440 = vadd.f32 %v4432, %v7312
          %v7441 = vadd.f32 %v4433, %v7313
          %v7442 = vadd.f32 %v4434, %v7314
          %v7443 = vadd.f32 %v4435, %v7315
          %v7444 = vadd.f32 %v4436, %v7316
          %v7445 = vadd.f32 %v4437, %v7317
          %v7446 = vadd.f32 %v4438, %v7318
          %v7447 = vadd.f32 %v4439, %v7319
          %v7448 = vadd.f32 %v4440, %v7320
          %v7449 = vadd.f32 %v4441, %v7321
          %v7450 = vadd.f32 %v4442, %v7322
          %v7451 = vadd.f32 %v4443, %v7323
          %v7452 = vadd.f32 %v4444, %v7324
          %v7453 = vadd.f32 %v4445, %v7325
          %v7454 = vsub.f32 0.0, %v7326
          %v7455 = vsub.f32 0.0, %v7327
          %v7456 = vsub.f32 0.0, %v7328
          %v7457 = vsub.f32 0.0, %v7329
          %v7458 = vsub.f32 0.0, %v7330
          %v7459 = vsub.f32 0.0, %v7331
          %v7460 = vsub.f32 0.0, %v7332
          %v7461 = vsub.f32 0.0, %v7333
          %v7462 = vsub.f32 0.0, %v7334
          %v7463 = vsub.f32 0.0, %v7335
          %v7464 = vsub.f32 0.0, %v7336
          %v7465 = vsub.f32 0.0, %v7337
          %v7466 = vsub.f32 0.0, %v7338
          %v7467 = vsub.f32 0.0, %v7339
          %v7468 = vsub.f32 0.0, %v7340
          %v7469 = vsub.f32 0.0, %v7341
          %v7470 = vsub.f32 0.0, %v7342
          %v7471 = vsub.f32 0.0, %v7343
          %v7472 = vsub.f32 0.0, %v7344
          %v7473 = vsub.f32 0.0, %v7345
          %v7474 = vsub.f32 0.0, %v7346
          %v7475 = vsub.f32 0.0, %v7347
          %v7476 = vsub.f32 0.0, %v7348
          %v7477 = vsub.f32 0.0, %v7349
          %v7478 = vsub.f32 0.0, %v7350
          %v7479 = vsub.f32 0.0, %v7351
          %v7480 = vsub.f32 0.0, %v7352
          %v7481 = vsub.f32 0.0, %v7353
          %v7482 = vsub.f32 0.0, %v7354
          %v7483 = vsub.f32 0.0, %v7355
          %v7484 = vsub.f32 0.0, %v7356
          %v7485 = vsub.f32 0.0, %v7357
          %v7486 = vsub.f32 0.0, %v7358
          %v7487 = vsub.f32 0.0, %v7359
          %v7488 = vsub.f32 0.0, %v7360
          %v7489 = vsub.f32 0.0, %v7361
          %v7490 = vsub.f32 0.0, %v7362
          %v7491 = vsub.f32 0.0, %v7363
          %v7492 = vsub.f32 0.0, %v7364
          %v7493 = vsub.f32 0.0, %v7365
          %v7494 = vsub.f32 0.0, %v7366
          %v7495 = vsub.f32 0.0, %v7367
          %v7496 = vsub.f32 0.0, %v7368
          %v7497 = vsub.f32 0.0, %v7369
          %v7498 = vsub.f32 0.0, %v7370
          %v7499 = vsub.f32 0.0, %v7371
          %v7500 = vsub.f32 0.0, %v7372
          %v7501 = vsub.f32 0.0, %v7373
          %v7502 = vsub.f32 0.0, %v7374
          %v7503 = vsub.f32 0.0, %v7375
          %v7504 = vsub.f32 0.0, %v7376
          %v7505 = vsub.f32 0.0, %v7377
          %v7506 = vsub.f32 0.0, %v7378
          %v7507 = vsub.f32 0.0, %v7379
          %v7508 = vsub.f32 0.0, %v7380
          %v7509 = vsub.f32 0.0, %v7381
          %v7510 = vsub.f32 0.0, %v7382
          %v7511 = vsub.f32 0.0, %v7383
          %v7512 = vsub.f32 0.0, %v7384
          %v7513 = vsub.f32 0.0, %v7385
          %v7514 = vsub.f32 0.0, %v7386
          %v7515 = vsub.f32 0.0, %v7387
          %v7516 = vsub.f32 0.0, %v7388
          %v7517 = vsub.f32 0.0, %v7389
          %v7518 = vsub.f32 0.0, %v7390
          %v7519 = vsub.f32 0.0, %v7391
          %v7520 = vsub.f32 0.0, %v7392
          %v7521 = vsub.f32 0.0, %v7393
          %v7522 = vsub.f32 0.0, %v7394
          %v7523 = vsub.f32 0.0, %v7395
          %v7524 = vsub.f32 0.0, %v7396
          %v7525 = vsub.f32 0.0, %v7397
          %v7526 = vsub.f32 0.0, %v7398
          %v7527 = vsub.f32 0.0, %v7399
          %v7528 = vsub.f32 0.0, %v7400
          %v7529 = vsub.f32 0.0, %v7401
          %v7530 = vsub.f32 0.0, %v7402
          %v7531 = vsub.f32 0.0, %v7403
          %v7532 = vsub.f32 0.0, %v7404
          %v7533 = vsub.f32 0.0, %v7405
          %v7534 = vsub.f32 0.0, %v7406
          %v7535 = vsub.f32 0.0, %v7407
          %v7536 = vsub.f32 0.0, %v7408
          %v7537 = vsub.f32 0.0, %v7409
          %v7538 = vsub.f32 0.0, %v7410
          %v7539 = vsub.f32 0.0, %v7411
          %v7540 = vsub.f32 0.0, %v7412
          %v7541 = vsub.f32 0.0, %v7413
          %v7542 = vsub.f32 0.0, %v7414
          %v7543 = vsub.f32 0.0, %v7415
          %v7544 = vsub.f32 0.0, %v7416
          %v7545 = vsub.f32 0.0, %v7417
          %v7546 = vsub.f32 0.0, %v7418
          %v7547 = vsub.f32 0.0, %v7419
          %v7548 = vsub.f32 0.0, %v7420
          %v7549 = vsub.f32 0.0, %v7421
          %v7550 = vsub.f32 0.0, %v7422
          %v7551 = vsub.f32 0.0, %v7423
          %v7552 = vsub.f32 0.0, %v7424
          %v7553 = vsub.f32 0.0, %v7425
          %v7554 = vsub.f32 0.0, %v7426
          %v7555 = vsub.f32 0.0, %v7427
          %v7556 = vsub.f32 0.0, %v7428
          %v7557 = vsub.f32 0.0, %v7429
          %v7558 = vsub.f32 0.0, %v7430
          %v7559 = vsub.f32 0.0, %v7431
          %v7560 = vsub.f32 0.0, %v7432
          %v7561 = vsub.f32 0.0, %v7433
          %v7562 = vsub.f32 0.0, %v7434
          %v7563 = vsub.f32 0.0, %v7435
          %v7564 = vsub.f32 0.0, %v7436
          %v7565 = vsub.f32 0.0, %v7437
          %v7566 = vsub.f32 0.0, %v7438
          %v7567 = vsub.f32 0.0, %v7439
          %v7568 = vsub.f32 0.0, %v7440
          %v7569 = vsub.f32 0.0, %v7441
          %v7570 = vsub.f32 0.0, %v7442
          %v7571 = vsub.f32 0.0, %v7443
          %v7572 = vsub.f32 0.0, %v7444
          %v7573 = vsub.f32 0.0, %v7445
          %v7574 = vsub.f32 0.0, %v7446
          %v7575 = vsub.f32 0.0, %v7447
          %v7576 = vsub.f32 0.0, %v7448
          %v7577 = vsub.f32 0.0, %v7449
          %v7578 = vsub.f32 0.0, %v7450
          %v7579 = vsub.f32 0.0, %v7451
          %v7580 = vsub.f32 0.0, %v7452
          %v7581 = vsub.f32 0.0, %v7453
          %v7582 = vsel %vm6814, %v7454, 0.0
          %v7583 = vsel %vm6815, %v7455, 0.0
          %v7584 = vsel %vm6816, %v7456, 0.0
          %v7585 = vsel %vm6817, %v7457, 0.0
          %v7586 = vsel %vm6818, %v7458, 0.0
          %v7587 = vsel %vm6819, %v7459, 0.0
          %v7588 = vsel %vm6820, %v7460, 0.0
          %v7589 = vsel %vm6821, %v7461, 0.0
          %v7590 = vsel %vm6822, %v7462, 0.0
          %v7591 = vsel %vm6823, %v7463, 0.0
          %v7592 = vsel %vm6824, %v7464, 0.0
          %v7593 = vsel %vm6825, %v7465, 0.0
          %v7594 = vsel %vm6826, %v7466, 0.0
          %v7595 = vsel %vm6827, %v7467, 0.0
          %v7596 = vsel %vm6828, %v7468, 0.0
          %v7597 = vsel %vm6829, %v7469, 0.0
          %v7598 = vsel %vm6830, %v7470, 0.0
          %v7599 = vsel %vm6831, %v7471, 0.0
          %v7600 = vsel %vm6832, %v7472, 0.0
          %v7601 = vsel %vm6833, %v7473, 0.0
          %v7602 = vsel %vm6834, %v7474, 0.0
          %v7603 = vsel %vm6835, %v7475, 0.0
          %v7604 = vsel %vm6836, %v7476, 0.0
          %v7605 = vsel %vm6837, %v7477, 0.0
          %v7606 = vsel %vm6838, %v7478, 0.0
          %v7607 = vsel %vm6839, %v7479, 0.0
          %v7608 = vsel %vm6840, %v7480, 0.0
          %v7609 = vsel %vm6841, %v7481, 0.0
          %v7610 = vsel %vm6842, %v7482, 0.0
          %v7611 = vsel %vm6843, %v7483, 0.0
          %v7612 = vsel %vm6844, %v7484, 0.0
          %v7613 = vsel %vm6845, %v7485, 0.0
          %v7614 = vsel %vm6846, %v7486, 0.0
          %v7615 = vsel %vm6847, %v7487, 0.0
          %v7616 = vsel %vm6848, %v7488, 0.0
          %v7617 = vsel %vm6849, %v7489, 0.0
          %v7618 = vsel %vm6850, %v7490, 0.0
          %v7619 = vsel %vm6851, %v7491, 0.0
          %v7620 = vsel %vm6852, %v7492, 0.0
          %v7621 = vsel %vm6853, %v7493, 0.0
          %v7622 = vsel %vm6854, %v7494, 0.0
          %v7623 = vsel %vm6855, %v7495, 0.0
          %v7624 = vsel %vm6856, %v7496, 0.0
          %v7625 = vsel %vm6857, %v7497, 0.0
          %v7626 = vsel %vm6858, %v7498, 0.0
          %v7627 = vsel %vm6859, %v7499, 0.0
          %v7628 = vsel %vm6860, %v7500, 0.0
          %v7629 = vsel %vm6861, %v7501, 0.0
          %v7630 = vsel %vm6862, %v7502, 0.0
          %v7631 = vsel %vm6863, %v7503, 0.0
          %v7632 = vsel %vm6864, %v7504, 0.0
          %v7633 = vsel %vm6865, %v7505, 0.0
          %v7634 = vsel %vm6866, %v7506, 0.0
          %v7635 = vsel %vm6867, %v7507, 0.0
          %v7636 = vsel %vm6868, %v7508, 0.0
          %v7637 = vsel %vm6869, %v7509, 0.0
          %v7638 = vsel %vm6870, %v7510, 0.0
          %v7639 = vsel %vm6871, %v7511, 0.0
          %v7640 = vsel %vm6872, %v7512, 0.0
          %v7641 = vsel %vm6873, %v7513, 0.0
          %v7642 = vsel %vm6874, %v7514, 0.0
          %v7643 = vsel %vm6875, %v7515, 0.0
          %v7644 = vsel %vm6876, %v7516, 0.0
          %v7645 = vsel %vm6877, %v7517, 0.0
          %v7646 = vsel %vm6878, %v7518, 0.0
          %v7647 = vsel %vm6879, %v7519, 0.0
          %v7648 = vsel %vm6880, %v7520, 0.0
          %v7649 = vsel %vm6881, %v7521, 0.0
          %v7650 = vsel %vm6882, %v7522, 0.0
          %v7651 = vsel %vm6883, %v7523, 0.0
          %v7652 = vsel %vm6884, %v7524, 0.0
          %v7653 = vsel %vm6885, %v7525, 0.0
          %v7654 = vsel %vm6886, %v7526, 0.0
          %v7655 = vsel %vm6887, %v7527, 0.0
          %v7656 = vsel %vm6888, %v7528, 0.0
          %v7657 = vsel %vm6889, %v7529, 0.0
          %v7658 = vsel %vm6890, %v7530, 0.0
          %v7659 = vsel %vm6891, %v7531, 0.0
          %v7660 = vsel %vm6892, %v7532, 0.0
          %v7661 = vsel %vm6893, %v7533, 0.0
          %v7662 = vsel %vm6894, %v7534, 0.0
          %v7663 = vsel %vm6895, %v7535, 0.0
          %v7664 = vsel %vm6896, %v7536, 0.0
          %v7665 = vsel %vm6897, %v7537, 0.0
          %v7666 = vsel %vm6898, %v7538, 0.0
          %v7667 = vsel %vm6899, %v7539, 0.0
          %v7668 = vsel %vm6900, %v7540, 0.0
          %v7669 = vsel %vm6901, %v7541, 0.0
          %v7670 = vsel %vm6902, %v7542, 0.0
          %v7671 = vsel %vm6903, %v7543, 0.0
          %v7672 = vsel %vm6904, %v7544, 0.0
          %v7673 = vsel %vm6905, %v7545, 0.0
          %v7674 = vsel %vm6906, %v7546, 0.0
          %v7675 = vsel %vm6907, %v7547, 0.0
          %v7676 = vsel %vm6908, %v7548, 0.0
          %v7677 = vsel %vm6909, %v7549, 0.0
          %v7678 = vsel %vm6910, %v7550, 0.0
          %v7679 = vsel %vm6911, %v7551, 0.0
          %v7680 = vsel %vm6912, %v7552, 0.0
          %v7681 = vsel %vm6913, %v7553, 0.0
          %v7682 = vsel %vm6914, %v7554, 0.0
          %v7683 = vsel %vm6915, %v7555, 0.0
          %v7684 = vsel %vm6916, %v7556, 0.0
          %v7685 = vsel %vm6917, %v7557, 0.0
          %v7686 = vsel %vm6918, %v7558, 0.0
          %v7687 = vsel %vm6919, %v7559, 0.0
          %v7688 = vsel %vm6920, %v7560, 0.0
          %v7689 = vsel %vm6921, %v7561, 0.0
          %v7690 = vsel %vm6922, %v7562, 0.0
          %v7691 = vsel %vm6923, %v7563, 0.0
          %v7692 = vsel %vm6924, %v7564, 0.0
          %v7693 = vsel %vm6925, %v7565, 0.0
          %v7694 = vsel %vm6926, %v7566, 0.0
          %v7695 = vsel %vm6927, %v7567, 0.0
          %v7696 = vsel %vm6928, %v7568, 0.0
          %v7697 = vsel %vm6929, %v7569, 0.0
          %v7698 = vsel %vm6930, %v7570, 0.0
          %v7699 = vsel %vm6931, %v7571, 0.0
          %v7700 = vsel %vm6932, %v7572, 0.0
          %v7701 = vsel %vm6933, %v7573, 0.0
          %v7702 = vsel %vm6934, %v7574, 0.0
          %v7703 = vsel %vm6935, %v7575, 0.0
          %v7704 = vsel %vm6936, %v7576, 0.0
          %v7705 = vsel %vm6937, %v7577, 0.0
          %v7706 = vsel %vm6938, %v7578, 0.0
          %v7707 = vsel %vm6939, %v7579, 0.0
          %v7708 = vsel %vm6940, %v7580, 0.0
          %v7709 = vsel %vm6941, %v7581, 0.0
          %v7710 = vld [vmem:[%s255] sm:$0xff]
          %v7711 = vmul.f32 %v6942, %v1886
          %v7712 = vmul.f32 %v6943, %v1887
          %v7713 = vmul.f32 %v6944, %v1888
          %v7714 = vmul.f32 %v6945, %v1889
          %v7715 = vmul.f32 %v6946, %v1890
          %v7716 = vmul.f32 %v6947, %v1891
          %v7717 = vmul.f32 %v6948, %v1892
          %v7718 = vmul.f32 %v6949, %v1893
          %v7719 = vmul.f32 %v6950, %v1894
          %v7720 = vmul.f32 %v6951, %v1895
          %v7721 = vmul.f32 %v6952, %v1896
          %v7722 = vmul.f32 %v6953, %v1897
          %v7723 = vmul.f32 %v6954, %v1898
          %v7724 = vmul.f32 %v6955, %v1899
          %v7725 = vmul.f32 %v6956, %v1900
          %v7726 = vmul.f32 %v6957, %v1901
          %v7727 = vmul.f32 %v6958, %v1902
          %v7728 = vmul.f32 %v6959, %v1903
          %v7729 = vmul.f32 %v6960, %v1904
          %v7730 = vmul.f32 %v6961, %v1905
          %v7731 = vmul.f32 %v6962, %v1906
          %v7732 = vmul.f32 %v6963, %v1907
          %v7733 = vmul.f32 %v6964, %v1908
          %v7734 = vmul.f32 %v6965, %v1909
          %v7735 = vmul.f32 %v6966, %v1910
          %v7736 = vmul.f32 %v6967, %v1911
          %v7737 = vmul.f32 %v6968, %v1912
          %v7738 = vmul.f32 %v6969, %v1913
          %v7739 = vmul.f32 %v6970, %v1914
          %v7740 = vmul.f32 %v6971, %v1915
          %v7741 = vmul.f32 %v6972, %v1916
          %v7742 = vmul.f32 %v6973, %v1917
          %v7743 = vmul.f32 %v6974, %v1918
          %v7744 = vmul.f32 %v6975, %v1919
          %v7745 = vmul.f32 %v6976, %v1920
          %v7746 = vmul.f32 %v6977, %v1921
          %v7747 = vmul.f32 %v6978, %v1922
          %v7748 = vmul.f32 %v6979, %v1923
          %v7749 = vmul.f32 %v6980, %v1924
          %v7750 = vmul.f32 %v6981, %v1925
          %v7751 = vmul.f32 %v6982, %v1926
          %v7752 = vmul.f32 %v6983, %v1927
          %v7753 = vmul.f32 %v6984, %v1928
          %v7754 = vmul.f32 %v6985, %v1929
          %v7755 = vmul.f32 %v6986, %v1930
          %v7756 = vmul.f32 %v6987, %v1931
          %v7757 = vmul.f32 %v6988, %v1932
          %v7758 = vmul.f32 %v6989, %v1933
          %v7759 = vmul.f32 %v6990, %v1934
          %v7760 = vmul.f32 %v6991, %v1935
          %v7761 = vmul.f32 %v6992, %v1936
          %v7762 = vmul.f32 %v6993, %v1937
          %v7763 = vmul.f32 %v6994, %v1938
          %v7764 = vmul.f32 %v6995, %v1939
          %v7765 = vmul.f32 %v6996, %v1940
          %v7766 = vmul.f32 %v6997, %v1941
          %v7767 = vmul.f32 %v6998, %v1942
          %v7768 = vmul.f32 %v6999, %v1943
          %v7769 = vmul.f32 %v7000, %v1944
          %v7770 = vmul.f32 %v7001, %v1945
          %v7771 = vmul.f32 %v7002, %v1946
          %v7772 = vmul.f32 %v7003, %v1947
          %v7773 = vmul.f32 %v7004, %v1948
          %v7774 = vmul.f32 %v7005, %v1949
          %v7775 = vmul.f32 %v7006, %v1950
          %v7776 = vmul.f32 %v7007, %v1951
          %v7777 = vmul.f32 %v7008, %v1952
          %v7778 = vmul.f32 %v7009, %v1953
          %v7779 = vmul.f32 %v7010, %v1954
          %v7780 = vmul.f32 %v7011, %v1955
          %v7781 = vmul.f32 %v7012, %v1956
          %v7782 = vmul.f32 %v7013, %v1957
          %v7783 = vmul.f32 %v7014, %v1958
          %v7784 = vmul.f32 %v7015, %v1959
          %v7785 = vmul.f32 %v7016, %v1960
          %v7786 = vmul.f32 %v7017, %v1961
          %v7787 = vmul.f32 %v7018, %v1962
          %v7788 = vmul.f32 %v7019, %v1963
          %v7789 = vmul.f32 %v7020, %v1964
          %v7790 = vmul.f32 %v7021, %v1965
          %v7791 = vmul.f32 %v7022, %v1966
          %v7792 = vmul.f32 %v7023, %v1967
          %v7793 = vmul.f32 %v7024, %v1968
          %v7794 = vmul.f32 %v7025, %v1969
          %v7795 = vmul.f32 %v7026, %v1970
          %v7796 = vmul.f32 %v7027, %v1971
          %v7797 = vmul.f32 %v7028, %v1972
          %v7798 = vmul.f32 %v7029, %v1973
          %v7799 = vmul.f32 %v7030, %v1974
          %v7800 = vmul.f32 %v7031, %v1975
          %v7801 = vmul.f32 %v7032, %v1976
          %v7802 = vmul.f32 %v7033, %v1977
          %v7803 = vmul.f32 %v7034, %v1978
          %v7804 = vmul.f32 %v7035, %v1979
          %v7805 = vmul.f32 %v7036, %v1980
          %v7806 = vmul.f32 %v7037, %v1981
          %v7807 = vmul.f32 %v7038, %v1982
          %v7808 = vmul.f32 %v7039, %v1983
          %v7809 = vmul.f32 %v7040, %v1984
          %v7810 = vmul.f32 %v7041, %v1985
          %v7811 = vmul.f32 %v7042, %v1986
          %v7812 = vmul.f32 %v7043, %v1987
          %v7813 = vmul.f32 %v7044, %v1988
          %v7814 = vmul.f32 %v7045, %v1989
          %v7815 = vmul.f32 %v7046, %v1990
          %v7816 = vmul.f32 %v7047, %v1991
          %v7817 = vmul.f32 %v7048, %v1992
          %v7818 = vmul.f32 %v7049, %v1993
          %v7819 = vmul.f32 %v7050, %v1994
          %v7820 = vmul.f32 %v7051, %v1995
          %v7821 = vmul.f32 %v7052, %v1996
          %v7822 = vmul.f32 %v7053, %v1997
          %v7823 = vmul.f32 %v7054, %v1998
          %v7824 = vmul.f32 %v7055, %v1999
          %v7825 = vmul.f32 %v7056, %v2000
          %v7826 = vmul.f32 %v7057, %v2001
          %v7827 = vmul.f32 %v7058, %v2002
          %v7828 = vmul.f32 %v7059, %v2003
          %v7829 = vmul.f32 %v7060, %v2004
          %v7830 = vmul.f32 %v7061, %v2005
          %v7831 = vmul.f32 %v7062, %v2006
          %v7832 = vmul.f32 %v7063, %v2007
          %v7833 = vmul.f32 %v7064, %v2008
          %v7834 = vmul.f32 %v7065, %v2009
          %v7835 = vmul.f32 %v7066, %v2010
          %v7836 = vmul.f32 %v7067, %v2011
          %v7837 = vmul.f32 %v7068, %v2012
          %v7838 = vmul.f32 %v7069, %v2013
          %v7839 = vadd.f32 %v7711, %v7712
          %v7840 = vadd.f32 %v7839, %v7713
          %v7841 = vadd.f32 %v7840, %v7714
          %v7842 = vadd.f32 %v7841, %v7715
          %v7843 = vadd.f32 %v7842, %v7716
          %v7844 = vadd.f32 %v7843, %v7717
          %v7845 = vadd.f32 %v7844, %v7718
          %v7846 = vadd.f32 %v7845, %v7719
          %v7847 = vadd.f32 %v7846, %v7720
          %v7848 = vadd.f32 %v7847, %v7721
          %v7849 = vadd.f32 %v7848, %v7722
          %v7850 = vadd.f32 %v7849, %v7723
          %v7851 = vadd.f32 %v7850, %v7724
          %v7852 = vadd.f32 %v7851, %v7725
          %v7853 = vadd.f32 %v7852, %v7726
          %v7854 = vadd.f32 %v7853, %v7727
          %v7855 = vadd.f32 %v7854, %v7728
          %v7856 = vadd.f32 %v7855, %v7729
          %v7857 = vadd.f32 %v7856, %v7730
          %v7858 = vadd.f32 %v7857, %v7731
          %v7859 = vadd.f32 %v7858, %v7732
          %v7860 = vadd.f32 %v7859, %v7733
          %v7861 = vadd.f32 %v7860, %v7734
          %v7862 = vadd.f32 %v7861, %v7735
          %v7863 = vadd.f32 %v7862, %v7736
          %v7864 = vadd.f32 %v7863, %v7737
          %v7865 = vadd.f32 %v7864, %v7738
          %v7866 = vadd.f32 %v7865, %v7739
          %v7867 = vadd.f32 %v7866, %v7740
          %v7868 = vadd.f32 %v7867, %v7741
          %v7869 = vadd.f32 %v7868, %v7742
          %v7870 = vadd.f32 %v7869, %v7743
          %v7871 = vadd.f32 %v7870, %v7744
          %v7872 = vadd.f32 %v7871, %v7745
          %v7873 = vadd.f32 %v7872, %v7746
          %v7874 = vadd.f32 %v7873, %v7747
          %v7875 = vadd.f32 %v7874, %v7748
          %v7876 = vadd.f32 %v7875, %v7749
          %v7877 = vadd.f32 %v7876, %v7750
          %v7878 = vadd.f32 %v7877, %v7751
          %v7879 = vadd.f32 %v7878, %v7752
          %v7880 = vadd.f32 %v7879, %v7753
          %v7881 = vadd.f32 %v7880, %v7754
          %v7882 = vadd.f32 %v7881, %v7755
          %v7883 = vadd.f32 %v7882, %v7756
          %v7884 = vadd.f32 %v7883, %v7757
          %v7885 = vadd.f32 %v7884, %v7758
          %v7886 = vadd.f32 %v7885, %v7759
          %v7887 = vadd.f32 %v7886, %v7760
          %v7888 = vadd.f32 %v7887, %v7761
          %v7889 = vadd.f32 %v7888, %v7762
          %v7890 = vadd.f32 %v7889, %v7763
          %v7891 = vadd.f32 %v7890, %v7764
          %v7892 = vadd.f32 %v7891, %v7765
          %v7893 = vadd.f32 %v7892, %v7766
          %v7894 = vadd.f32 %v7893, %v7767
          %v7895 = vadd.f32 %v7894, %v7768
          %v7896 = vadd.f32 %v7895, %v7769
          %v7897 = vadd.f32 %v7896, %v7770
          %v7898 = vadd.f32 %v7897, %v7771
          %v7899 = vadd.f32 %v7898, %v7772
          %v7900 = vadd.f32 %v7899, %v7773
          %v7901 = vadd.f32 %v7900, %v7774
          %v7902 = vadd.f32 %v7901, %v7775
          %v7903 = vadd.f32 %v7902, %v7776
          %v7904 = vadd.f32 %v7903, %v7777
          %v7905 = vadd.f32 %v7904, %v7778
          %v7906 = vadd.f32 %v7905, %v7779
          %v7907 = vadd.f32 %v7906, %v7780
          %v7908 = vadd.f32 %v7907, %v7781
          %v7909 = vadd.f32 %v7908, %v7782
          %v7910 = vadd.f32 %v7909, %v7783
          %v7911 = vadd.f32 %v7910, %v7784
          %v7912 = vadd.f32 %v7911, %v7785
          %v7913 = vadd.f32 %v7912, %v7786
          %v7914 = vadd.f32 %v7913, %v7787
          %v7915 = vadd.f32 %v7914, %v7788
          %v7916 = vadd.f32 %v7915, %v7789
          %v7917 = vadd.f32 %v7916, %v7790
          %v7918 = vadd.f32 %v7917, %v7791
          %v7919 = vadd.f32 %v7918, %v7792
          %v7920 = vadd.f32 %v7919, %v7793
          %v7921 = vadd.f32 %v7920, %v7794
          %v7922 = vadd.f32 %v7921, %v7795
          %v7923 = vadd.f32 %v7922, %v7796
          %v7924 = vadd.f32 %v7923, %v7797
          %v7925 = vadd.f32 %v7924, %v7798
          %v7926 = vadd.f32 %v7925, %v7799
          %v7927 = vadd.f32 %v7926, %v7800
          %v7928 = vadd.f32 %v7927, %v7801
          %v7929 = vadd.f32 %v7928, %v7802
          %v7930 = vadd.f32 %v7929, %v7803
          %v7931 = vadd.f32 %v7930, %v7804
          %v7932 = vadd.f32 %v7931, %v7805
          %v7933 = vadd.f32 %v7932, %v7806
          %v7934 = vadd.f32 %v7933, %v7807
          %v7935 = vadd.f32 %v7934, %v7808
          %v7936 = vadd.f32 %v7935, %v7809
          %v7937 = vadd.f32 %v7936, %v7810
          %v7938 = vadd.f32 %v7937, %v7811
          %v7939 = vadd.f32 %v7938, %v7812
          %v7940 = vadd.f32 %v7939, %v7813
          %v7941 = vadd.f32 %v7940, %v7814
          %v7942 = vadd.f32 %v7941, %v7815
          %v7943 = vadd.f32 %v7942, %v7816
          %v7944 = vadd.f32 %v7943, %v7817
          %v7945 = vadd.f32 %v7944, %v7818
          %v7946 = vadd.f32 %v7945, %v7819
          %v7947 = vadd.f32 %v7946, %v7820
          %v7948 = vadd.f32 %v7947, %v7821
          %v7949 = vadd.f32 %v7948, %v7822
          %v7950 = vadd.f32 %v7949, %v7823
          %v7951 = vadd.f32 %v7950, %v7824
          %v7952 = vadd.f32 %v7951, %v7825
          %v7953 = vadd.f32 %v7952, %v7826
          %v7954 = vadd.f32 %v7953, %v7827
          %v7955 = vadd.f32 %v7954, %v7828
          %v7956 = vadd.f32 %v7955, %v7829
          %v7957 = vadd.f32 %v7956, %v7830
          %v7958 = vadd.f32 %v7957, %v7831
          %v7959 = vadd.f32 %v7958, %v7832
          %v7960 = vadd.f32 %v7959, %v7833
          %v7961 = vadd.f32 %v7960, %v7834
          %v7962 = vadd.f32 %v7961, %v7835
          %v7963 = vadd.f32 %v7962, %v7836
          %v7964 = vadd.f32 %v7963, %v7837
          %v7965 = vadd.f32 %v7964, %v7838
          %7966 = vadd.xlane.f32.xlu0 %v7965
          %v7967 = vpop.xlane.xlu0 %7966
          %v7968 = vadd.f32 %v7710, %v7967
          %vm7969 = vcmask 7168
          %7970 = vst.msk [vmem:[%s255] sm:$0xff] %vm7969, %v7968
          %v7971 = vld [vmem:[%s255] sm:$0xff]
          %v7972 = vmul.f32 %v6942, %v6942
          %v7973 = vmul.f32 %v6943, %v6943
          %v7974 = vmul.f32 %v6944, %v6944
          %v7975 = vmul.f32 %v6945, %v6945
          %v7976 = vmul.f32 %v6946, %v6946
          %v7977 = vmul.f32 %v6947, %v6947
          %v7978 = vmul.f32 %v6948, %v6948
          %v7979 = vmul.f32 %v6949, %v6949
          %v7980 = vmul.f32 %v6950, %v6950
          %v7981 = vmul.f32 %v6951, %v6951
          %v7982 = vmul.f32 %v6952, %v6952
          %v7983 = vmul.f32 %v6953, %v6953
          %v7984 = vmul.f32 %v6954, %v6954
          %v7985 = vmul.f32 %v6955, %v6955
          %v7986 = vmul.f32 %v6956, %v6956
          %v7987 = vmul.f32 %v6957, %v6957
          %v7988 = vmul.f32 %v6958, %v6958
          %v7989 = vmul.f32 %v6959, %v6959
          %v7990 = vmul.f32 %v6960, %v6960
          %v7991 = vmul.f32 %v6961, %v6961
          %v7992 = vmul.f32 %v6962, %v6962
          %v7993 = vmul.f32 %v6963, %v6963
          %v7994 = vmul.f32 %v6964, %v6964
          %v7995 = vmul.f32 %v6965, %v6965
          %v7996 = vmul.f32 %v6966, %v6966
          %v7997 = vmul.f32 %v6967, %v6967
          %v7998 = vmul.f32 %v6968, %v6968
          %v7999 = vmul.f32 %v6969, %v6969
          %v8000 = vmul.f32 %v6970, %v6970
          %v8001 = vmul.f32 %v6971, %v6971
          %v8002 = vmul.f32 %v6972, %v6972
          %v8003 = vmul.f32 %v6973, %v6973
          %v8004 = vmul.f32 %v6974, %v6974
          %v8005 = vmul.f32 %v6975, %v6975
          %v8006 = vmul.f32 %v6976, %v6976
          %v8007 = vmul.f32 %v6977, %v6977
          %v8008 = vmul.f32 %v6978, %v6978
          %v8009 = vmul.f32 %v6979, %v6979
          %v8010 = vmul.f32 %v6980, %v6980
          %v8011 = vmul.f32 %v6981, %v6981
          %v8012 = vmul.f32 %v6982, %v6982
          %v8013 = vmul.f32 %v6983, %v6983
          %v8014 = vmul.f32 %v6984, %v6984
          %v8015 = vmul.f32 %v6985, %v6985
          %v8016 = vmul.f32 %v6986, %v6986
          %v8017 = vmul.f32 %v6987, %v6987
          %v8018 = vmul.f32 %v6988, %v6988
          %v8019 = vmul.f32 %v6989, %v6989
          %v8020 = vmul.f32 %v6990, %v6990
          %v8021 = vmul.f32 %v6991, %v6991
          %v8022 = vmul.f32 %v6992, %v6992
          %v8023 = vmul.f32 %v6993, %v6993
          %v8024 = vmul.f32 %v6994, %v6994
          %v8025 = vmul.f32 %v6995, %v6995
          %v8026 = vmul.f32 %v6996, %v6996
          %v8027 = vmul.f32 %v6997, %v6997
          %v8028 = vmul.f32 %v6998, %v6998
          %v8029 = vmul.f32 %v6999, %v6999
          %v8030 = vmul.f32 %v7000, %v7000
          %v8031 = vmul.f32 %v7001, %v7001
          %v8032 = vmul.f32 %v7002, %v7002
          %v8033 = vmul.f32 %v7003, %v7003
          %v8034 = vmul.f32 %v7004, %v7004
          %v8035 = vmul.f32 %v7005, %v7005
          %v8036 = vmul.f32 %v7006, %v7006
          %v8037 = vmul.f32 %v7007, %v7007
          %v8038 = vmul.f32 %v7008, %v7008
          %v8039 = vmul.f32 %v7009, %v7009
          %v8040 = vmul.f32 %v7010, %v7010
          %v8041 = vmul.f32 %v7011, %v7011
          %v8042 = vmul.f32 %v7012, %v7012
          %v8043 = vmul.f32 %v7013, %v7013
          %v8044 = vmul.f32 %v7014, %v7014
          %v8045 = vmul.f32 %v7015, %v7015
          %v8046 = vmul.f32 %v7016, %v7016
          %v8047 = vmul.f32 %v7017, %v7017
          %v8048 = vmul.f32 %v7018, %v7018
          %v8049 = vmul.f32 %v7019, %v7019
          %v8050 = vmul.f32 %v7020, %v7020
          %v8051 = vmul.f32 %v7021, %v7021
          %v8052 = vmul.f32 %v7022, %v7022
          %v8053 = vmul.f32 %v7023, %v7023
          %v8054 = vmul.f32 %v7024, %v7024
          %v8055 = vmul.f32 %v7025, %v7025
          %v8056 = vmul.f32 %v7026, %v7026
          %v8057 = vmul.f32 %v7027, %v7027
          %v8058 = vmul.f32 %v7028, %v7028
          %v8059 = vmul.f32 %v7029, %v7029
          %v8060 = vmul.f32 %v7030, %v7030
          %v8061 = vmul.f32 %v7031, %v7031
          %v8062 = vmul.f32 %v7032, %v7032
          %v8063 = vmul.f32 %v7033, %v7033
          %v8064 = vmul.f32 %v7034, %v7034
          %v8065 = vmul.f32 %v7035, %v7035
          %v8066 = vmul.f32 %v7036, %v7036
          %v8067 = vmul.f32 %v7037, %v7037
          %v8068 = vmul.f32 %v7038, %v7038
          %v8069 = vmul.f32 %v7039, %v7039
          %v8070 = vmul.f32 %v7040, %v7040
          %v8071 = vmul.f32 %v7041, %v7041
          %v8072 = vmul.f32 %v7042, %v7042
          %v8073 = vmul.f32 %v7043, %v7043
          %v8074 = vmul.f32 %v7044, %v7044
          %v8075 = vmul.f32 %v7045, %v7045
          %v8076 = vmul.f32 %v7046, %v7046
          %v8077 = vmul.f32 %v7047, %v7047
          %v8078 = vmul.f32 %v7048, %v7048
          %v8079 = vmul.f32 %v7049, %v7049
          %v8080 = vmul.f32 %v7050, %v7050
          %v8081 = vmul.f32 %v7051, %v7051
          %v8082 = vmul.f32 %v7052, %v7052
          %v8083 = vmul.f32 %v7053, %v7053
          %v8084 = vmul.f32 %v7054, %v7054
          %v8085 = vmul.f32 %v7055, %v7055
          %v8086 = vmul.f32 %v7056, %v7056
          %v8087 = vmul.f32 %v7057, %v7057
          %v8088 = vmul.f32 %v7058, %v7058
          %v8089 = vmul.f32 %v7059, %v7059
          %v8090 = vmul.f32 %v7060, %v7060
          %v8091 = vmul.f32 %v7061, %v7061
          %v8092 = vmul.f32 %v7062, %v7062
          %v8093 = vmul.f32 %v7063, %v7063
          %v8094 = vmul.f32 %v7064, %v7064
          %v8095 = vmul.f32 %v7065, %v7065
          %v8096 = vmul.f32 %v7066, %v7066
          %v8097 = vmul.f32 %v7067, %v7067
          %v8098 = vmul.f32 %v7068, %v7068
          %v8099 = vmul.f32 %v7069, %v7069
          %v8100 = vadd.f32 %v7972, %v7973
          %v8101 = vadd.f32 %v8100, %v7974
          %v8102 = vadd.f32 %v8101, %v7975
          %v8103 = vadd.f32 %v8102, %v7976
          %v8104 = vadd.f32 %v8103, %v7977
          %v8105 = vadd.f32 %v8104, %v7978
          %v8106 = vadd.f32 %v8105, %v7979
          %v8107 = vadd.f32 %v8106, %v7980
          %v8108 = vadd.f32 %v8107, %v7981
          %v8109 = vadd.f32 %v8108, %v7982
          %v8110 = vadd.f32 %v8109, %v7983
          %v8111 = vadd.f32 %v8110, %v7984
          %v8112 = vadd.f32 %v8111, %v7985
          %v8113 = vadd.f32 %v8112, %v7986
          %v8114 = vadd.f32 %v8113, %v7987
          %v8115 = vadd.f32 %v8114, %v7988
          %v8116 = vadd.f32 %v8115, %v7989
          %v8117 = vadd.f32 %v8116, %v7990
          %v8118 = vadd.f32 %v8117, %v7991
          %v8119 = vadd.f32 %v8118, %v7992
          %v8120 = vadd.f32 %v8119, %v7993
          %v8121 = vadd.f32 %v8120, %v7994
          %v8122 = vadd.f32 %v8121, %v7995
          %v8123 = vadd.f32 %v8122, %v7996
          %v8124 = vadd.f32 %v8123, %v7997
          %v8125 = vadd.f32 %v8124, %v7998
          %v8126 = vadd.f32 %v8125, %v7999
          %v8127 = vadd.f32 %v8126, %v8000
          %v8128 = vadd.f32 %v8127, %v8001
          %v8129 = vadd.f32 %v8128, %v8002
          %v8130 = vadd.f32 %v8129, %v8003
          %v8131 = vadd.f32 %v8130, %v8004
          %v8132 = vadd.f32 %v8131, %v8005
          %v8133 = vadd.f32 %v8132, %v8006
          %v8134 = vadd.f32 %v8133, %v8007
          %v8135 = vadd.f32 %v8134, %v8008
          %v8136 = vadd.f32 %v8135, %v8009
          %v8137 = vadd.f32 %v8136, %v8010
          %v8138 = vadd.f32 %v8137, %v8011
          %v8139 = vadd.f32 %v8138, %v8012
          %v8140 = vadd.f32 %v8139, %v8013
          %v8141 = vadd.f32 %v8140, %v8014
          %v8142 = vadd.f32 %v8141, %v8015
          %v8143 = vadd.f32 %v8142, %v8016
          %v8144 = vadd.f32 %v8143, %v8017
          %v8145 = vadd.f32 %v8144, %v8018
          %v8146 = vadd.f32 %v8145, %v8019
          %v8147 = vadd.f32 %v8146, %v8020
          %v8148 = vadd.f32 %v8147, %v8021
          %v8149 = vadd.f32 %v8148, %v8022
          %v8150 = vadd.f32 %v8149, %v8023
          %v8151 = vadd.f32 %v8150, %v8024
          %v8152 = vadd.f32 %v8151, %v8025
          %v8153 = vadd.f32 %v8152, %v8026
          %v8154 = vadd.f32 %v8153, %v8027
          %v8155 = vadd.f32 %v8154, %v8028
          %v8156 = vadd.f32 %v8155, %v8029
          %v8157 = vadd.f32 %v8156, %v8030
          %v8158 = vadd.f32 %v8157, %v8031
          %v8159 = vadd.f32 %v8158, %v8032
          %v8160 = vadd.f32 %v8159, %v8033
          %v8161 = vadd.f32 %v8160, %v8034
          %v8162 = vadd.f32 %v8161, %v8035
          %v8163 = vadd.f32 %v8162, %v8036
          %v8164 = vadd.f32 %v8163, %v8037
          %v8165 = vadd.f32 %v8164, %v8038
          %v8166 = vadd.f32 %v8165, %v8039
          %v8167 = vadd.f32 %v8166, %v8040
          %v8168 = vadd.f32 %v8167, %v8041
          %v8169 = vadd.f32 %v8168, %v8042
          %v8170 = vadd.f32 %v8169, %v8043
          %v8171 = vadd.f32 %v8170, %v8044
          %v8172 = vadd.f32 %v8171, %v8045
          %v8173 = vadd.f32 %v8172, %v8046
          %v8174 = vadd.f32 %v8173, %v8047
          %v8175 = vadd.f32 %v8174, %v8048
          %v8176 = vadd.f32 %v8175, %v8049
          %v8177 = vadd.f32 %v8176, %v8050
          %v8178 = vadd.f32 %v8177, %v8051
          %v8179 = vadd.f32 %v8178, %v8052
          %v8180 = vadd.f32 %v8179, %v8053
          %v8181 = vadd.f32 %v8180, %v8054
          %v8182 = vadd.f32 %v8181, %v8055
          %v8183 = vadd.f32 %v8182, %v8056
          %v8184 = vadd.f32 %v8183, %v8057
          %v8185 = vadd.f32 %v8184, %v8058
          %v8186 = vadd.f32 %v8185, %v8059
          %v8187 = vadd.f32 %v8186, %v8060
          %v8188 = vadd.f32 %v8187, %v8061
          %v8189 = vadd.f32 %v8188, %v8062
          %v8190 = vadd.f32 %v8189, %v8063
          %v8191 = vadd.f32 %v8190, %v8064
          %v8192 = vadd.f32 %v8191, %v8065
          %v8193 = vadd.f32 %v8192, %v8066
          %v8194 = vadd.f32 %v8193, %v8067
          %v8195 = vadd.f32 %v8194, %v8068
          %v8196 = vadd.f32 %v8195, %v8069
          %v8197 = vadd.f32 %v8196, %v8070
          %v8198 = vadd.f32 %v8197, %v8071
          %v8199 = vadd.f32 %v8198, %v8072
          %v8200 = vadd.f32 %v8199, %v8073
          %v8201 = vadd.f32 %v8200, %v8074
          %v8202 = vadd.f32 %v8201, %v8075
          %v8203 = vadd.f32 %v8202, %v8076
          %v8204 = vadd.f32 %v8203, %v8077
          %v8205 = vadd.f32 %v8204, %v8078
          %v8206 = vadd.f32 %v8205, %v8079
          %v8207 = vadd.f32 %v8206, %v8080
          %v8208 = vadd.f32 %v8207, %v8081
          %v8209 = vadd.f32 %v8208, %v8082
          %v8210 = vadd.f32 %v8209, %v8083
          %v8211 = vadd.f32 %v8210, %v8084
          %v8212 = vadd.f32 %v8211, %v8085
          %v8213 = vadd.f32 %v8212, %v8086
          %v8214 = vadd.f32 %v8213, %v8087
          %v8215 = vadd.f32 %v8214, %v8088
          %v8216 = vadd.f32 %v8215, %v8089
          %v8217 = vadd.f32 %v8216, %v8090
          %v8218 = vadd.f32 %v8217, %v8091
          %v8219 = vadd.f32 %v8218, %v8092
          %v8220 = vadd.f32 %v8219, %v8093
          %v8221 = vadd.f32 %v8220, %v8094
          %v8222 = vadd.f32 %v8221, %v8095
          %v8223 = vadd.f32 %v8222, %v8096
          %v8224 = vadd.f32 %v8223, %v8097
          %v8225 = vadd.f32 %v8224, %v8098
          %v8226 = vadd.f32 %v8225, %v8099
          %8227 = vadd.xlane.f32.xlu0 %v8226
          %v8228 = vpop.xlane.xlu0 %8227
          %v8229 = vadd.f32 %v7971, %v8228
          %vm8230 = vcmask 15368
          %8231 = vst.msk [vmem:[%s255] sm:$0xff] %vm8230, %v8229
          %v8232 = vld [vmem:[%s255] sm:$0xff]
          %v8233 = vadd.f32 %v1886, %v1887
          %v8234 = vadd.f32 %v8233, %v1888
          %v8235 = vadd.f32 %v8234, %v1889
          %v8236 = vadd.f32 %v8235, %v1890
          %v8237 = vadd.f32 %v8236, %v1891
          %v8238 = vadd.f32 %v8237, %v1892
          %v8239 = vadd.f32 %v8238, %v1893
          %v8240 = vadd.f32 %v8239, %v1894
          %v8241 = vadd.f32 %v8240, %v1895
          %v8242 = vadd.f32 %v8241, %v1896
          %v8243 = vadd.f32 %v8242, %v1897
          %v8244 = vadd.f32 %v8243, %v1898
          %v8245 = vadd.f32 %v8244, %v1899
          %v8246 = vadd.f32 %v8245, %v1900
          %v8247 = vadd.f32 %v8246, %v1901
          %v8248 = vadd.f32 %v8247, %v1902
          %v8249 = vadd.f32 %v8248, %v1903
          %v8250 = vadd.f32 %v8249, %v1904
          %v8251 = vadd.f32 %v8250, %v1905
          %v8252 = vadd.f32 %v8251, %v1906
          %v8253 = vadd.f32 %v8252, %v1907
          %v8254 = vadd.f32 %v8253, %v1908
          %v8255 = vadd.f32 %v8254, %v1909
          %v8256 = vadd.f32 %v8255, %v1910
          %v8257 = vadd.f32 %v8256, %v1911
          %v8258 = vadd.f32 %v8257, %v1912
          %v8259 = vadd.f32 %v8258, %v1913
          %v8260 = vadd.f32 %v8259, %v1914
          %v8261 = vadd.f32 %v8260, %v1915
          %v8262 = vadd.f32 %v8261, %v1916
          %v8263 = vadd.f32 %v8262, %v1917
          %v8264 = vadd.f32 %v8263, %v1918
          %v8265 = vadd.f32 %v8264, %v1919
          %v8266 = vadd.f32 %v8265, %v1920
          %v8267 = vadd.f32 %v8266, %v1921
          %v8268 = vadd.f32 %v8267, %v1922
          %v8269 = vadd.f32 %v8268, %v1923
          %v8270 = vadd.f32 %v8269, %v1924
          %v8271 = vadd.f32 %v8270, %v1925
          %v8272 = vadd.f32 %v8271, %v1926
          %v8273 = vadd.f32 %v8272, %v1927
          %v8274 = vadd.f32 %v8273, %v1928
          %v8275 = vadd.f32 %v8274, %v1929
          %v8276 = vadd.f32 %v8275, %v1930
          %v8277 = vadd.f32 %v8276, %v1931
          %v8278 = vadd.f32 %v8277, %v1932
          %v8279 = vadd.f32 %v8278, %v1933
          %v8280 = vadd.f32 %v8279, %v1934
          %v8281 = vadd.f32 %v8280, %v1935
          %v8282 = vadd.f32 %v8281, %v1936
          %v8283 = vadd.f32 %v8282, %v1937
          %v8284 = vadd.f32 %v8283, %v1938
          %v8285 = vadd.f32 %v8284, %v1939
          %v8286 = vadd.f32 %v8285, %v1940
          %v8287 = vadd.f32 %v8286, %v1941
          %v8288 = vadd.f32 %v8287, %v1942
          %v8289 = vadd.f32 %v8288, %v1943
          %v8290 = vadd.f32 %v8289, %v1944
          %v8291 = vadd.f32 %v8290, %v1945
          %v8292 = vadd.f32 %v8291, %v1946
          %v8293 = vadd.f32 %v8292, %v1947
          %v8294 = vadd.f32 %v8293, %v1948
          %v8295 = vadd.f32 %v8294, %v1949
          %v8296 = vadd.f32 %v8295, %v1950
          %v8297 = vadd.f32 %v8296, %v1951
          %v8298 = vadd.f32 %v8297, %v1952
          %v8299 = vadd.f32 %v8298, %v1953
          %v8300 = vadd.f32 %v8299, %v1954
          %v8301 = vadd.f32 %v8300, %v1955
          %v8302 = vadd.f32 %v8301, %v1956
          %v8303 = vadd.f32 %v8302, %v1957
          %v8304 = vadd.f32 %v8303, %v1958
          %v8305 = vadd.f32 %v8304, %v1959
          %v8306 = vadd.f32 %v8305, %v1960
          %v8307 = vadd.f32 %v8306, %v1961
          %v8308 = vadd.f32 %v8307, %v1962
          %v8309 = vadd.f32 %v8308, %v1963
          %v8310 = vadd.f32 %v8309, %v1964
          %v8311 = vadd.f32 %v8310, %v1965
          %v8312 = vadd.f32 %v8311, %v1966
          %v8313 = vadd.f32 %v8312, %v1967
          %v8314 = vadd.f32 %v8313, %v1968
          %v8315 = vadd.f32 %v8314, %v1969
          %v8316 = vadd.f32 %v8315, %v1970
          %v8317 = vadd.f32 %v8316, %v1971
          %v8318 = vadd.f32 %v8317, %v1972
          %v8319 = vadd.f32 %v8318, %v1973
          %v8320 = vadd.f32 %v8319, %v1974
          %v8321 = vadd.f32 %v8320, %v1975
          %v8322 = vadd.f32 %v8321, %v1976
          %v8323 = vadd.f32 %v8322, %v1977
          %v8324 = vadd.f32 %v8323, %v1978
          %v8325 = vadd.f32 %v8324, %v1979
          %v8326 = vadd.f32 %v8325, %v1980
          %v8327 = vadd.f32 %v8326, %v1981
          %v8328 = vadd.f32 %v8327, %v1982
          %v8329 = vadd.f32 %v8328, %v1983
          %v8330 = vadd.f32 %v8329, %v1984
          %v8331 = vadd.f32 %v8330, %v1985
          %v8332 = vadd.f32 %v8331, %v1986
          %v8333 = vadd.f32 %v8332, %v1987
          %v8334 = vadd.f32 %v8333, %v1988
          %v8335 = vadd.f32 %v8334, %v1989
          %v8336 = vadd.f32 %v8335, %v1990
          %v8337 = vadd.f32 %v8336, %v1991
          %v8338 = vadd.f32 %v8337, %v1992
          %v8339 = vadd.f32 %v8338, %v1993
          %v8340 = vadd.f32 %v8339, %v1994
          %v8341 = vadd.f32 %v8340, %v1995
          %v8342 = vadd.f32 %v8341, %v1996
          %v8343 = vadd.f32 %v8342, %v1997
          %v8344 = vadd.f32 %v8343, %v1998
          %v8345 = vadd.f32 %v8344, %v1999
          %v8346 = vadd.f32 %v8345, %v2000
          %v8347 = vadd.f32 %v8346, %v2001
          %v8348 = vadd.f32 %v8347, %v2002
          %v8349 = vadd.f32 %v8348, %v2003
          %v8350 = vadd.f32 %v8349, %v2004
          %v8351 = vadd.f32 %v8350, %v2005
          %v8352 = vadd.f32 %v8351, %v2006
          %v8353 = vadd.f32 %v8352, %v2007
          %v8354 = vadd.f32 %v8353, %v2008
          %v8355 = vadd.f32 %v8354, %v2009
          %v8356 = vadd.f32 %v8355, %v2010
          %v8357 = vadd.f32 %v8356, %v2011
          %v8358 = vadd.f32 %v8357, %v2012
          %v8359 = vadd.f32 %v8358, %v2013
          %8360 = vadd.xlane.f32.xlu0 %v8359
          %v8361 = vpop.xlane.xlu0 %8360
          %v8362 = vadd.f32 %v8232, %v8361
          %vm8363 = vcmask 23568
          %8364 = vst.msk [vmem:[%s255] sm:$0xff] %vm8363, %v8362
          %v8365 = vld [vmem:[%s255] sm:$0xff]
          %v8366 = vadd.f32 %v7582, %v7583
          %v8367 = vadd.f32 %v8366, %v7584
          %v8368 = vadd.f32 %v8367, %v7585
          %v8369 = vadd.f32 %v8368, %v7586
          %v8370 = vadd.f32 %v8369, %v7587
          %v8371 = vadd.f32 %v8370, %v7588
          %v8372 = vadd.f32 %v8371, %v7589
          %v8373 = vadd.f32 %v8372, %v7590
          %v8374 = vadd.f32 %v8373, %v7591
          %v8375 = vadd.f32 %v8374, %v7592
          %v8376 = vadd.f32 %v8375, %v7593
          %v8377 = vadd.f32 %v8376, %v7594
          %v8378 = vadd.f32 %v8377, %v7595
          %v8379 = vadd.f32 %v8378, %v7596
          %v8380 = vadd.f32 %v8379, %v7597
          %v8381 = vadd.f32 %v8380, %v7598
          %v8382 = vadd.f32 %v8381, %v7599
          %v8383 = vadd.f32 %v8382, %v7600
          %v8384 = vadd.f32 %v8383, %v7601
          %v8385 = vadd.f32 %v8384, %v7602
          %v8386 = vadd.f32 %v8385, %v7603
          %v8387 = vadd.f32 %v8386, %v7604
          %v8388 = vadd.f32 %v8387, %v7605
          %v8389 = vadd.f32 %v8388, %v7606
          %v8390 = vadd.f32 %v8389, %v7607
          %v8391 = vadd.f32 %v8390, %v7608
          %v8392 = vadd.f32 %v8391, %v7609
          %v8393 = vadd.f32 %v8392, %v7610
          %v8394 = vadd.f32 %v8393, %v7611
          %v8395 = vadd.f32 %v8394, %v7612
          %v8396 = vadd.f32 %v8395, %v7613
          %v8397 = vadd.f32 %v8396, %v7614
          %v8398 = vadd.f32 %v8397, %v7615
          %v8399 = vadd.f32 %v8398, %v7616
          %v8400 = vadd.f32 %v8399, %v7617
          %v8401 = vadd.f32 %v8400, %v7618
          %v8402 = vadd.f32 %v8401, %v7619
          %v8403 = vadd.f32 %v8402, %v7620
          %v8404 = vadd.f32 %v8403, %v7621
          %v8405 = vadd.f32 %v8404, %v7622
          %v8406 = vadd.f32 %v8405, %v7623
          %v8407 = vadd.f32 %v8406, %v7624
          %v8408 = vadd.f32 %v8407, %v7625
          %v8409 = vadd.f32 %v8408, %v7626
          %v8410 = vadd.f32 %v8409, %v7627
          %v8411 = vadd.f32 %v8410, %v7628
          %v8412 = vadd.f32 %v8411, %v7629
          %v8413 = vadd.f32 %v8412, %v7630
          %v8414 = vadd.f32 %v8413, %v7631
          %v8415 = vadd.f32 %v8414, %v7632
          %v8416 = vadd.f32 %v8415, %v7633
          %v8417 = vadd.f32 %v8416, %v7634
          %v8418 = vadd.f32 %v8417, %v7635
          %v8419 = vadd.f32 %v8418, %v7636
          %v8420 = vadd.f32 %v8419, %v7637
          %v8421 = vadd.f32 %v8420, %v7638
          %v8422 = vadd.f32 %v8421, %v7639
          %v8423 = vadd.f32 %v8422, %v7640
          %v8424 = vadd.f32 %v8423, %v7641
          %v8425 = vadd.f32 %v8424, %v7642
          %v8426 = vadd.f32 %v8425, %v7643
          %v8427 = vadd.f32 %v8426, %v7644
          %v8428 = vadd.f32 %v8427, %v7645
          %v8429 = vadd.f32 %v8428, %v7646
          %v8430 = vadd.f32 %v8429, %v7647
          %v8431 = vadd.f32 %v8430, %v7648
          %v8432 = vadd.f32 %v8431, %v7649
          %v8433 = vadd.f32 %v8432, %v7650
          %v8434 = vadd.f32 %v8433, %v7651
          %v8435 = vadd.f32 %v8434, %v7652
          %v8436 = vadd.f32 %v8435, %v7653
          %v8437 = vadd.f32 %v8436, %v7654
          %v8438 = vadd.f32 %v8437, %v7655
          %v8439 = vadd.f32 %v8438, %v7656
          %v8440 = vadd.f32 %v8439, %v7657
          %v8441 = vadd.f32 %v8440, %v7658
          %v8442 = vadd.f32 %v8441, %v7659
          %v8443 = vadd.f32 %v8442, %v7660
          %v8444 = vadd.f32 %v8443, %v7661
          %v8445 = vadd.f32 %v8444, %v7662
          %v8446 = vadd.f32 %v8445, %v7663
          %v8447 = vadd.f32 %v8446, %v7664
          %v8448 = vadd.f32 %v8447, %v7665
          %v8449 = vadd.f32 %v8448, %v7666
          %v8450 = vadd.f32 %v8449, %v7667
          %v8451 = vadd.f32 %v8450, %v7668
          %v8452 = vadd.f32 %v8451, %v7669
          %v8453 = vadd.f32 %v8452, %v7670
          %v8454 = vadd.f32 %v8453, %v7671
          %v8455 = vadd.f32 %v8454, %v7672
          %v8456 = vadd.f32 %v8455, %v7673
          %v8457 = vadd.f32 %v8456, %v7674
          %v8458 = vadd.f32 %v8457, %v7675
          %v8459 = vadd.f32 %v8458, %v7676
          %v8460 = vadd.f32 %v8459, %v7677
          %v8461 = vadd.f32 %v8460, %v7678
          %v8462 = vadd.f32 %v8461, %v7679
          %v8463 = vadd.f32 %v8462, %v7680
          %v8464 = vadd.f32 %v8463, %v7681
          %v8465 = vadd.f32 %v8464, %v7682
          %v8466 = vadd.f32 %v8465, %v7683
          %v8467 = vadd.f32 %v8466, %v7684
          %v8468 = vadd.f32 %v8467, %v7685
          %v8469 = vadd.f32 %v8468, %v7686
          %v8470 = vadd.f32 %v8469, %v7687
          %v8471 = vadd.f32 %v8470, %v7688
          %v8472 = vadd.f32 %v8471, %v7689
          %v8473 = vadd.f32 %v8472, %v7690
          %v8474 = vadd.f32 %v8473, %v7691
          %v8475 = vadd.f32 %v8474, %v7692
          %v8476 = vadd.f32 %v8475, %v7693
          %v8477 = vadd.f32 %v8476, %v7694
          %v8478 = vadd.f32 %v8477, %v7695
          %v8479 = vadd.f32 %v8478, %v7696
          %v8480 = vadd.f32 %v8479, %v7697
          %v8481 = vadd.f32 %v8480, %v7698
          %v8482 = vadd.f32 %v8481, %v7699
          %v8483 = vadd.f32 %v8482, %v7700
          %v8484 = vadd.f32 %v8483, %v7701
          %v8485 = vadd.f32 %v8484, %v7702
          %v8486 = vadd.f32 %v8485, %v7703
          %v8487 = vadd.f32 %v8486, %v7704
          %v8488 = vadd.f32 %v8487, %v7705
          %v8489 = vadd.f32 %v8488, %v7706
          %v8490 = vadd.f32 %v8489, %v7707
          %v8491 = vadd.f32 %v8490, %v7708
          %v8492 = vadd.f32 %v8491, %v7709
          %8493 = vadd.xlane.f32.xlu0 %v8492
          %v8494 = vpop.xlane.xlu0 %8493
          %v8495 = vadd.f32 %v8365, %v8494
          %vm8496 = vcmask 31768
          %8497 = vst.msk [vmem:[%s255] sm:$0xff] %vm8496, %v8495
        $region40: #{tpu_custom_call.1} parent=27 // pred_fallthru
          _
        %p8498 = scmp.lt.s32.totalorder %s21, 1
        %s8499 = scalar_select %p8498, %s21, 1
        %p8500 = scmp.lt.s32.totalorder %s22, 1
        %s8501 = scalar_select %p8500, %s22, 1
        %s8502 = smul.addr %s8499, 2
        %s8503 = sadd.s32 %s8501, %s8502
        %s8504 = smul.addr %s8503, 8
        %s8505 = scalar_lea.vmem %s2, %s8504
        // Predicated region
        $region41: #{tpu_custom_call.1} parent=27 // pred_check
          %p8506 = pneg %p119
        $region42: #{tpu_custom_call.1} parent=27 // pred_check_branch
          %8508 = sbr.rel (%p8506) target = $region44
        $region43: #{tpu_custom_call.1} parent=27 // pred_region
          _
        $region44: #{tpu_custom_call.1} parent=27 // pred_fallthru
          _
      $region28: #{tpu_custom_call.1} parent=5 // pred_fallthru
        _
      %p8509 = scmp.le.s32.totalorder 2, %s11
      // Predicated region
      $region45: #{tpu_custom_call.1} parent=5 // pred_check
        %p8510 = pneg %p8509
      $region46: #{tpu_custom_call.1} parent=5 // pred_check_branch
        %8512 = sbr.rel (%p8510) target = $region48
      $region47: #{tpu_custom_call.1} parent=5 // pred_region
        %s8513 = ssub.s32 %s11, 2
        // Predicated region
        $region49: #{tpu_custom_call.1} parent=47 // pred_check
          %p8514 = pneg %p125
        $region50: #{tpu_custom_call.1} parent=47 // pred_check_branch
          %8516 = sbr.rel (%p8514) target = $region52
        $region51: #{tpu_custom_call.1} parent=47 // pred_region
          %p8517 = scmp.lt.s32.totalorder %s24, 1
          %s8518 = scalar_select %p8517, %s24, 1
          %p8519 = scmp.lt.s32.totalorder %s25, 1
          %s8520 = scalar_select %p8519, %s25, 1
          %s8521 = smul.addr %s8518, 2
          %s8522 = sadd.s32 %s8520, %s8521
          %s8523 = smul.addr %s8522, 8
          %s8524 = scalar_lea.vmem %s2, %s8523
        $region52: #{tpu_custom_call.1} parent=47 // pred_fallthru
          _
      $region48: #{tpu_custom_call.1} parent=5 // pred_fallthru
        _
    $region6: #{tpu_custom_call.1} parent=1 // loop_footer
      %s15 = sadd.s32 1, %s11
    $region7: #{tpu_custom_call.1} parent=1 // loop_footer_branch
      %10 = sbr.rel target = $region3
    $region8: #{tpu_custom_call.1} parent=1 // loop_exit
      _
    %8525 = vsyncpa [#allocation3], 1
    %s8526 = scalar_lea.sflag [#allocation3], 1
    %8527 = vsyncpa %s8526, 1

</llo_original>
